<compile_context>
chip_gen: v6e
topology: v6e:2x2x1
jax: 0.10.0
libtpu: 0.0.40
codegen_flags: <defaults>
</compile_context>

<pallas_src>
import functools

import jax
import jax.numpy as jnp
from jax.experimental import pallas as pl
from jax.experimental.pallas import tpu as pltpu


def _round_up(x, m):
    return (x + m - 1) // m * m


# ----------------------------- Pallas kernels ------------------------------

def _matmul_bias_kernel(a_ref, w_ref, b_ref, o_ref, acc_ref):
    k = pl.program_id(2)

    @pl.when(k == 0)
    def _():
        acc_ref[...] = jnp.zeros_like(acc_ref)

    acc_ref[...] += jnp.dot(a_ref[...], w_ref[...],
                            preferred_element_type=jnp.float32)

    @pl.when(k == pl.num_programs(2) - 1)
    def _():
        o_ref[...] = (acc_ref[...] + b_ref[...]).astype(o_ref.dtype)


def _matmul_bias_add_kernel(a_ref, w_ref, b_ref, add_ref, o_ref, acc_ref):
    k = pl.program_id(2)

    @pl.when(k == 0)
    def _():
        acc_ref[...] = jnp.zeros_like(acc_ref)

    acc_ref[...] += jnp.dot(a_ref[...], w_ref[...],
                            preferred_element_type=jnp.float32)

    @pl.when(k == pl.num_programs(2) - 1)
    def _():
        o_ref[...] = (acc_ref[...] + b_ref[...] + add_ref[...]).astype(o_ref.dtype)


_TM, _TN_MAX, _TK_MAX = 256, 256, 512


def matmul_bias(a, w, b, add=None):
    """(M,K) @ (K,N) + (N,) [+ add(M,N)] -> f32. Tiled Pallas MXU kernel."""
    M, K = a.shape
    K2, N = w.shape
    assert K == K2

    # Tile selection: MXU / lane aligned, capped at problem size.
    tm = _TM if M >= _TM else _round_up(M, 8)
    Mp = _round_up(M, tm)
    Kp = _round_up(K, 128)
    tk = 128
    for cand in (_TK_MAX, 384, 256, 128):
        if Kp % cand == 0:
            tk = cand
            break
    Np = _round_up(N, 128)
    tn = _TN_MAX if Np % _TN_MAX == 0 else 128

    a_p = a.astype(jnp.bfloat16)
    w_p = w.astype(jnp.bfloat16)
    if (Mp, Kp) != (M, K):
        a_p = jnp.pad(a_p, ((0, Mp - M), (0, Kp - K)))
    if (Kp, Np) != (K, N):
        w_p = jnp.pad(w_p, ((0, Kp - K), (0, Np - N)))
    b_p = jnp.pad(b.astype(jnp.float32), (0, Np - N)).reshape(1, Np)

    in_specs = [
        pl.BlockSpec((tm, tk), lambda i, j, k: (i, k)),
        pl.BlockSpec((tk, tn), lambda i, j, k: (k, j)),
        pl.BlockSpec((1, tn), lambda i, j, k: (0, j)),
    ]
    operands = [a_p, w_p, b_p]
    kernel = _matmul_bias_kernel
    if add is not None:
        assert add.shape == (M, N)
        add_p = add.astype(jnp.float32)
        if (Mp, Np) != (M, N):
            add_p = jnp.pad(add_p, ((0, Mp - M), (0, Np - N)))
        # Block index independent of k -> stays resident across the k loop.
        in_specs.append(pl.BlockSpec((tm, tn), lambda i, j, k: (i, j)))
        operands.append(add_p)
        kernel = _matmul_bias_add_kernel

    out = pl.pallas_call(
        kernel,
        out_shape=jax.ShapeDtypeStruct((Mp, Np), jnp.float32),
        grid_spec=pltpu.PrefetchScalarGridSpec(
            num_scalar_prefetch=0,
            grid=(Mp // tm, Np // tn, Kp // tk),
            in_specs=in_specs,
            out_specs=pl.BlockSpec((tm, tn), lambda i, j, k: (i, j)),
            scratch_shapes=[pltpu.VMEM((tm, tn), jnp.float32)],
        ),
        compiler_params=pltpu.CompilerParams(
            dimension_semantics=("parallel", "parallel", "arbitrary"),
            vmem_limit_bytes=48 * 1024 * 1024),
    )(*operands)

    if (Mp, Np) != (M, N):
        out = out[:M, :N]
    return out


# ---------------- InstanceNorm (+LeakyReLU) & gated-conv fusion -------------

_HW_TILE = 1024
_SINGLE_PASS_LIMIT = 4 * 1024 * 1024   # bytes of one image's input slab


def _norm_tiles(HW):
    thw = min(_HW_TILE, _round_up(HW, 8))
    return thw, _round_up(HW, thw)


# ---- single-pass kernels (whole (HW, C) slab resident in VMEM) -------------

def _norm_single_kernel(x_ref, o_ref, *, hw, slope, eps):
    x = x_ref[...]                                       # (1, HWp, C) f32
    s = jnp.sum(x, axis=1, keepdims=True)
    q = jnp.sum(x * x, axis=1, keepdims=True)
    mean = s / hw
    var = jnp.maximum(q / hw - mean * mean, 0.0)
    rstd = jax.lax.rsqrt(var + eps)
    y = (x - mean) * rstd
    if slope is not None:
        y = jnp.where(y >= 0, y, slope * y)              # LeakyReLU
    o_ref[...] = y


def _gated_norm_single_kernel(fg_ref, o_ref, *, hw, cout, slope, eps):
    fg = fg_ref[...]                                     # (1, HWp, 2*cout)
    f = fg[:, :, :cout]
    g = fg[:, :, cout:]
    act = jnp.where(f >= 0, f, slope * f)                # LeakyReLU(0.2)
    gated = act * jax.nn.sigmoid(g)
    s = jnp.sum(gated, axis=1, keepdims=True)
    q = jnp.sum(gated * gated, axis=1, keepdims=True)
    mean = s / hw
    var = jnp.maximum(q / hw - mean * mean, 0.0)
    rstd = jax.lax.rsqrt(var + eps)
    o_ref[...] = (gated - mean) * rstd


# ---- two-pass fallback kernels (tiled over HW, for large slabs) ------------

def _stats_kernel(x_ref, s_ref, q_ref):
    @pl.when(pl.program_id(1) == 0)
    def _():
        s_ref[...] = jnp.zeros_like(s_ref)
        q_ref[...] = jnp.zeros_like(q_ref)

    x = x_ref[...]                                       # (1, thw, C)
    s_ref[...] += jnp.sum(x, axis=1, keepdims=True)
    q_ref[...] += jnp.sum(x * x, axis=1, keepdims=True)


def _gated_stats_kernel(fg_ref, g_out_ref, s_ref, q_ref, *, slope, cout):
    @pl.when(pl.program_id(1) == 0)
    def _():
        s_ref[...] = jnp.zeros_like(s_ref)
        q_ref[...] = jnp.zeros_like(q_ref)

    fg = fg_ref[...]                                     # (1, thw, 2*cout)
    f = fg[:, :, :cout]
    g = fg[:, :, cout:]
    act = jnp.where(f >= 0, f, slope * f)
    gated = act * jax.nn.sigmoid(g)
    g_out_ref[...] = gated
    s_ref[...] += jnp.sum(gated, axis=1, keepdims=True)
    q_ref[...] += jnp.sum(gated * gated, axis=1, keepdims=True)


def _norm_apply_kernel(x_ref, m_ref, r_ref, o_ref, *, slope):
    y = (x_ref[...] - m_ref[...]) * r_ref[...]
    if slope is not None:
        y = jnp.where(y >= 0, y, slope * y)
    o_ref[...] = y


def _finish_norm(x_pad, s, q, HW, C, thw, slope, eps):
    """Second pass: per-(n,c) normalization (+ optional LeakyReLU)."""
    N, HWp, _ = x_pad.shape
    mean = s / HW
    var = jnp.maximum(q / HW - mean * mean, 0.0)
    rstd = jax.lax.rsqrt(var + eps)
    nT = HWp // thw
    y = pl.pallas_call(
        functools.partial(_norm_apply_kernel, slope=slope),
        out_shape=jax.ShapeDtypeStruct((N, HWp, C), jnp.float32),
        grid=(N, nT),
        in_specs=[pl.BlockSpec((1, thw, C), lambda n, t: (n, t, 0)),
                  pl.BlockSpec((1, 1, C), lambda n, t: (n, 0, 0)),
                  pl.BlockSpec((1, 1, C), lambda n, t: (n, 0, 0))],
        out_specs=pl.BlockSpec((1, thw, C), lambda n, t: (n, t, 0)),
        compiler_params=pltpu.CompilerParams(
            dimension_semantics=("parallel", "parallel")),
    )(x_pad, mean, rstd)
    return y[:, :HW, :] if HWp != HW else y


# ---- public wrappers --------------------------------------------------------

def instance_norm_act(x_nhwc, slope=None, eps=1e-5):
    """InstanceNorm2d (affine=False) optionally fused with LeakyReLU."""
    N, H, W, C = x_nhwc.shape
    HW = H * W
    HWp = _round_up(HW, 8)
    x = x_nhwc.reshape(N, HW, C).astype(jnp.float32)

    if HWp * C * 4 <= _SINGLE_PASS_LIMIT:
        if HWp != HW:
            x = jnp.pad(x, ((0, 0), (0, HWp - HW), (0, 0)))   # zeros: sums unaffected
        y = pl.pallas_call(
            functools.partial(_norm_single_kernel, hw=float(HW), slope=slope,
                              eps=eps),
            out_shape=jax.ShapeDtypeStruct((N, HWp, C), jnp.float32),
            grid=(N,),
            in_specs=[pl.BlockSpec((1, HWp, C), lambda n: (n, 0, 0))],
            out_specs=pl.BlockSpec((1, HWp, C), lambda n: (n, 0, 0)),
            compiler_params=pltpu.CompilerParams(
                dimension_semantics=("parallel",)),
        )(x)
        if HWp != HW:
            y = y[:, :HW, :]
        return y.reshape(N, H, W, C)

    # Two-pass fallback for large HW slabs.
    thw, HWp2 = _norm_tiles(HW)
    if HWp2 != HW:
        x = jnp.pad(x, ((0, 0), (0, HWp2 - HW), (0, 0)))
    nT = HWp2 // thw
    s, q = pl.pallas_call(
        _stats_kernel,
        out_shape=(jax.ShapeDtypeStruct((N, 1, C), jnp.float32),
                   jax.ShapeDtypeStruct((N, 1, C), jnp.float32)),
        grid=(N, nT),
        in_specs=[pl.BlockSpec((1, thw, C), lambda n, t: (n, t, 0))],
        out_specs=(pl.BlockSpec((1, 1, C), lambda n, t: (n, 0, 0)),
                   pl.BlockSpec((1, 1, C), lambda n, t: (n, 0, 0))),
        compiler_params=pltpu.CompilerParams(
            dimension_semantics=("parallel", "arbitrary")),
    )(x)
    y = _finish_norm(x, s, q, HW, C, thw, slope, eps)
    return y.reshape(N, H, W, C)


def gated_fuse_norm(fg_nhwc, cout, slope=0.2, eps=1e-5):
    """leaky_relu(feature)*sigmoid(gate) -> InstanceNorm.  fg has 2*cout channels."""
    N, H, W, C2 = fg_nhwc.shape
    assert C2 == 2 * cout
    HW = H * W
    HWp = _round_up(HW, 8)
    fg = fg_nhwc.reshape(N, HW, C2).astype(jnp.float32)

    if HWp * C2 * 4 <= _SINGLE_PASS_LIMIT:
        if HWp != HW:
            fg = jnp.pad(fg, ((0, 0), (0, HWp - HW), (0, 0)))
        y = pl.pallas_call(
            functools.partial(_gated_norm_single_kernel, hw=float(HW),
                              cout=cout, slope=slope, eps=eps),
            out_shape=jax.ShapeDtypeStruct((N, HWp, cout), jnp.float32),
            grid=(N,),
            in_specs=[pl.BlockSpec((1, HWp, C2), lambda n: (n, 0, 0))],
            out_specs=pl.BlockSpec((1, HWp, cout), lambda n: (n, 0, 0)),
            compiler_params=pltpu.CompilerParams(
                dimension_semantics=("parallel",)),
        )(fg)
        if HWp != HW:
            y = y[:, :HW, :]
        return y.reshape(N, H, W, cout)

    # Two-pass fallback.
    thw, HWp2 = _norm_tiles(HW)
    if HWp2 != HW:
        fg = jnp.pad(fg, ((0, 0), (0, HWp2 - HW), (0, 0)))
    nT = HWp2 // thw
    gated, s, q = pl.pallas_call(
        functools.partial(_gated_stats_kernel, slope=slope, cout=cout),
        out_shape=(jax.ShapeDtypeStruct((N, HWp2, cout), jnp.float32),
                   jax.ShapeDtypeStruct((N, 1, cout), jnp.float32),
                   jax.ShapeDtypeStruct((N, 1, cout), jnp.float32)),
        grid=(N, nT),
        in_specs=[pl.BlockSpec((1, thw, C2), lambda n, t: (n, t, 0))],
        out_specs=(pl.BlockSpec((1, thw, cout), lambda n, t: (n, t, 0)),
                   pl.BlockSpec((1, 1, cout), lambda n, t: (n, 0, 0)),
                   pl.BlockSpec((1, 1, cout), lambda n, t: (n, 0, 0))),
        compiler_params=pltpu.CompilerParams(
            dimension_semantics=("parallel", "arbitrary")),
    )(fg)
    y = _finish_norm(gated, s, q, HW, cout, thw, None, eps)
    return y.reshape(N, H, W, cout)


# --------------------------- conv glue (im2col) -----------------------------

def conv2d(x, w, b, stride, padding, add=None):
    """x: (N,H,W,Cin) NHWC; w: (Cout,Cin,KH,KW) torch layout; b: (Cout,).
    Optional `add` (N,Ho,Wo,Cout) is fused into the matmul epilogue."""
    N, H, W, Cin = x.shape
    Cout, Cin2, KH, KW = w.shape
    assert Cin == Cin2
    xb = x.astype(jnp.bfloat16)                       # halve im2col HBM traffic
    if padding:
        xb = jnp.pad(xb, ((0, 0), (padding, padding), (padding, padding), (0, 0)))
    Ho = (H + 2 * padding - KH) // stride + 1
    Wo = (W + 2 * padding - KW) // stride + 1
    cols = []
    for kh in range(KH):
        for kw in range(KW):
            patch = xb[:, kh:kh + stride * (Ho - 1) + 1:stride,
                          kw:kw + stride * (Wo - 1) + 1:stride, :]
            cols.append(patch)
    a = jnp.stack(cols, axis=3)                       # (N,Ho,Wo,KH*KW,Cin)
    a = a.reshape(N * Ho * Wo, KH * KW * Cin)
    w_mat = jnp.transpose(w, (2, 3, 1, 0)).reshape(KH * KW * Cin, Cout)
    add_mat = None
    if add is not None:
        assert add.shape == (N, Ho, Wo, Cout)
        add_mat = add.reshape(N * Ho * Wo, Cout)
    out = matmul_bias(a, w_mat.astype(jnp.bfloat16), b, add=add_mat)
    return out.reshape(N, Ho, Wo, Cout)


def _convt_equivalent_weights(w, b):
    """ConvTranspose2d(k3 s2 p1 op1) -> equivalent 2x2 stride-1 conv with
    4*Cout sub-pixel phase channels (phase p = 2*row_parity + col_parity)."""
    Cin, Cout, KH, KW = w.shape
    assert (KH, KW) == (3, 3)
    w_eq = jnp.zeros((4 * Cout, Cin, 2, 2), w.dtype)
    for a in range(2):
        for bp in range(2):
            p = 2 * a + bp
            for dh in range(2):
                kh = a + 1 - 2 * dh
                if not (0 <= kh < 3):
                    continue
                for dw in range(2):
                    kw = bp + 1 - 2 * dw
                    if not (0 <= kw < 3):
                        continue
                    w_eq = w_eq.at[p * Cout:(p + 1) * Cout, :, dh, dw].set(
                        jnp.transpose(w[:, :, kh, kw], (1, 0)))
    b_eq = jnp.tile(b, 4)
    return w_eq, b_eq


def conv_transpose2d_pre(x, w, b, add=None):
    """Sub-pixel decomposition: returns pre-pixel-shuffle phases (N,H,W,4*Cout).
    `add` (same shape) is fused into the matmul epilogue."""
    N, H, W, Cin = x.shape
    assert w.shape[0] == Cin and w.shape[2:] == (3, 3)
    w_eq, b_eq = _convt_equivalent_weights(w, b)
    xp = jnp.pad(x, ((0, 0), (0, 1), (0, 1), (0, 0)))     # high-side zero pad
    return conv2d(xp, w_eq, b_eq, stride=1, padding=0, add=add)


def pixel_shuffle_phases(y, cout):
    """(N,H,W,4*Cout) phase layout -> (N,2H,2W,Cout)."""
    N, H, W, _ = y.shape
    y = y.reshape(N, H, W, 2, 2, cout)                    # (..., a, bp, Cout)
    return jnp.transpose(y, (0, 1, 3, 2, 4, 5)).reshape(N, 2 * H, 2 * W, cout)


def conv_transpose2d(x, w, b):
    """ConvTranspose2d k3 s2 p1 op1 (standalone)."""
    cout = w.shape[1]
    return pixel_shuffle_phases(conv_transpose2d_pre(x, w, b), cout)


# ------------------------ parameters (deterministic) ------------------------

def spectral_normalize(w, dim, key, n_iters=5, eps=1e-12):
    """Weight preprocessing mimicking torch spectral_norm (power iteration)."""
    perm = (dim,) + tuple(i for i in range(w.ndim) if i != dim)
    w_mat = jnp.transpose(w, perm).reshape(w.shape[dim], -1)
    u = jax.random.normal(key, (w.shape[dim],), jnp.float32)
    u = u / (jnp.linalg.norm(u) + eps)
    v = None
    for _ in range(n_iters):
        v = w_mat.T @ u
        v = v / (jnp.linalg.norm(v) + eps)
        u = w_mat @ v
        u = u / (jnp.linalg.norm(u) + eps)
    sigma = u @ (w_mat @ v)
    return w / sigma


def init_conv_params(key, cout, cin, kh, kw, spectral=False, transpose=False,
                     kaiming_normal=False):
    k1, k2, k3 = jax.random.split(key, 3)
    shape = (cin, cout, kh, kw) if transpose else (cout, cin, kh, kw)
    if kaiming_normal:                      # Gated_Conv init (fan_out, relu)
        fan_out = cout * kh * kw
        w = jax.random.normal(k1, shape, jnp.float32) * jnp.sqrt(2.0 / fan_out)
        b = jnp.zeros((cout,), jnp.float32)
    else:                                   # torch default-ish uniform
        fan_in = cin * kh * kw
        bound = 1.0 / jnp.sqrt(fan_in)
        w = jax.random.uniform(k1, shape, jnp.float32, -bound, bound)
        b = jax.random.uniform(k2, (cout,), jnp.float32, -bound, bound)
    if spectral:
        w = spectral_normalize(w, dim=(1 if transpose else 0), key=k3)
    return w, b


def init_encoder2_params(key, input_nc, gf):
    keys = iter(jax.random.split(key, 64))

    def enc_block(cin, cout):
        hid = cout
        w1, b1 = init_conv_params(next(keys), hid, cin, 4, 4, spectral=True)
        w2, b2 = init_conv_params(next(keys), cout, hid, 3, 3, spectral=True)
        return dict(w1=w1, b1=b1, w2=w2, b2=b2)

    def gated(c):
        wf, bf = init_conv_params(next(keys), c, c, 3, 3, kaiming_normal=True)
        wg, bg = init_conv_params(next(keys), c, c, 3, 3, kaiming_normal=True)
        return dict(wf=wf, bf=bf, wg=wg, bg=bg)

    def res_block(cin, cout, hid):
        w1, b1 = init_conv_params(next(keys), hid, cin, 3, 3, spectral=True)
        w2, b2 = init_conv_params(next(keys), cout, hid, 3, 3, spectral=True,
                                  transpose=True)
        ws, bs = init_conv_params(next(keys), cout, cin, 3, 3, spectral=True,
                                  transpose=True)
        return dict(w1=w1, b1=b1, w2=w2, b2=b2, ws=ws, bs=bs)

    c2, c4 = gf * 2, gf * 4
    return dict(
        encoder_blocks=[enc_block(input_nc, c2), enc_block(c2, c4),
                        enc_block(c4, c4), enc_block(c4, c4)],
        gated_convs=[gated(c4), gated(c4)],
        res_blocks=[res_block(c4, c4, c4), res_block(c4, c4, c4)],
    )


# ------------------------------ forward pass --------------------------------

def encoder_block_fwd(x, p):
    # Sequential(InstanceNorm, LeakyReLU(0.1), Conv k4s2p1, InstanceNorm,
    #            LeakyReLU(0.1), Conv k3s1p1)
    x = instance_norm_act(x, slope=0.1)
    x = conv2d(x, p['w1'], p['b1'], stride=2, padding=1)
    x = instance_norm_act(x, slope=0.1)
    x = conv2d(x, p['w2'], p['b2'], stride=1, padding=1)
    return x


def gated_conv_fwd(x, p):
    # feature + gate computed with a single conv (Cout doubled), then fused
    # leaky*sigmoid gating + InstanceNorm in one Pallas kernel.
    cout = p['wf'].shape[0]
    w_cat = jnp.concatenate([p['wf'], p['wg']], axis=0)   # (2C, C, 3, 3)
    b_cat = jnp.concatenate([p['bf'], p['bg']], axis=0)
    fg = conv2d(x, w_cat, b_cat, stride=1, padding=1)
    return gated_fuse_norm(fg, cout, slope=0.2)


def res_block_decoder_fwd(x, p):
    h = instance_norm_act(x, slope=0.1)
    h = conv2d(h, p['w1'], p['b1'], stride=1, padding=1)
    h = instance_norm_act(h, slope=0.1)
    # Shortcut transpose-conv computed first (pre pixel-shuffle phase layout),
    # then fused as an addend into the main branch's matmul epilogue; a single
    # pixel shuffle produces the final residual sum.
    s_pre = conv_transpose2d_pre(x, p['ws'], p['bs'])
    h_pre = conv_transpose2d_pre(h, p['w2'], p['b2'], add=s_pre)
    cout = p['w2'].shape[1]
    return pixel_shuffle_phases(h_pre, cout)


def encoder_2_forward(x_nchw, params):
    x = jnp.transpose(x_nchw, (0, 2, 3, 1))          # NCHW -> NHWC
    for p in params['encoder_blocks']:
        x = encoder_block_fwd(x, p)
    for p in params['gated_convs']:
        x = gated_conv_fwd(x, p)
    for p in params['res_blocks']:
        x = res_block_decoder_fwd(x, p)
    return jnp.transpose(x, (0, 3, 1, 2))            # NHWC -> NCHW


# ----------------------------------- main -----------------------------------

if __name__ == "__main__":
    key = jax.random.PRNGKey(0)
    k_x, k_p = jax.random.split(key)

    input_nc, gf = 3, 8           # small synthetic config (gf=64 in the module)
    N, H, W = 2, 32, 32
    x = jax.random.normal(k_x, (N, input_nc, H, W), jnp.float32)

    params = init_encoder2_params(k_p, input_nc, gf)

    fwd = jax.jit(encoder_2_forward)
    out = fwd(x, params)
    jax.block_until_ready(out)

    # 4 stride-2 encoder downsamples (÷16), 2 transposed-conv upsamples (×4)
    expected = (N, gf * 4, H // 4, W // 4)
    assert out.shape == expected, (out.shape, expected)
    assert jnp.all(jnp.isfinite(out))
    print("KERNEL_OK")
</pallas_src>

<mosaic_0001>
module attributes {stable_mosaic.version = 11 : i64} {
  func.func @_norm_single_kernel(%arg0: i32, %arg1: memref<1x1024x3xf32, #tpu.memory_space<vmem>>, %arg2: memref<1x1024x3xf32, #tpu.memory_space<vmem>>) attributes {dimension_semantics = [#tpu.dimension_semantics<parallel>], iteration_bounds = array<i64: 2>, scalar_prefetch = 0 : i64, scratch_operands = 0 : i64, tpu.core_type = #tpu.core_type<tc>, window_params = [{transform_indices = @transform_0, window_bounds = array<i64: 1, 1024, 3>}, {transform_indices = @transform_1, window_bounds = array<i64: 1, 1024, 3>}]} {
    %c0 = arith.constant 0 : index
    %c0_0 = arith.constant 0 : index
    %c0_1 = arith.constant 0 : index
    %0 = vector.load %arg1[%c0, %c0_0, %c0_1] : memref<1x1024x3xf32, #tpu.memory_space<vmem>>, vector<1x1024x3xf32>
    %cst = arith.constant dense<0.000000e+00> : vector<1x3xf32>
    %1 = vector.multi_reduction <add>, %0, %cst [1] : vector<1x1024x3xf32> to vector<1x3xf32>
    %2 = vector.shape_cast %1 : vector<1x3xf32> to vector<1x1x3xf32>
    %3 = arith.mulf %0, %0 : vector<1x1024x3xf32>
    %cst_2 = arith.constant dense<0.000000e+00> : vector<1x3xf32>
    %4 = vector.multi_reduction <add>, %3, %cst_2 [1] : vector<1x1024x3xf32> to vector<1x3xf32>
    %5 = vector.shape_cast %4 : vector<1x3xf32> to vector<1x1x3xf32>
    %cst_3 = arith.constant 1.024000e+03 : f32
    %6 = vector.broadcast %cst_3 : f32 to vector<1x1x3xf32>
    %7 = arith.divf %2, %6 : vector<1x1x3xf32>
    %cst_4 = arith.constant 1.024000e+03 : f32
    %8 = vector.broadcast %cst_4 : f32 to vector<1x1x3xf32>
    %9 = arith.divf %5, %8 : vector<1x1x3xf32>
    %10 = arith.mulf %7, %7 : vector<1x1x3xf32>
    %11 = arith.subf %9, %10 : vector<1x1x3xf32>
    %cst_5 = arith.constant 0.000000e+00 : f32
    %12 = vector.broadcast %cst_5 : f32 to vector<1x1x3xf32>
    %13 = arith.maximumf %11, %12 : vector<1x1x3xf32>
    %cst_6 = arith.constant 9.99999974E-6 : f32
    %14 = vector.broadcast %cst_6 : f32 to vector<1x1x3xf32>
    %15 = arith.addf %13, %14 : vector<1x1x3xf32>
    %16 = math.rsqrt %15 : vector<1x1x3xf32>
    %17 = vector.broadcast %7 : vector<1x1x3xf32> to vector<1x1024x3xf32>
    %18 = arith.subf %0, %17 : vector<1x1024x3xf32>
    %19 = vector.broadcast %16 : vector<1x1x3xf32> to vector<1x1024x3xf32>
    %20 = arith.mulf %18, %19 : vector<1x1024x3xf32>
    %cst_7 = arith.constant 0.000000e+00 : f32
    %21 = vector.broadcast %cst_7 : f32 to vector<1x1024x3xf32>
    %22 = arith.cmpf oge, %20, %21 : vector<1x1024x3xf32>
    %cst_8 = arith.constant 1.000000e-01 : f32
    %23 = vector.broadcast %cst_8 : f32 to vector<1x1024x3xf32>
    %24 = arith.mulf %23, %20 : vector<1x1024x3xf32>
    %25 = arith.select %22, %20, %24 : vector<1x1024x3xi1>, vector<1x1024x3xf32>
    %c0_9 = arith.constant 0 : index
    %c0_10 = arith.constant 0 : index
    %c0_11 = arith.constant 0 : index
    %26 = vector.load %arg2[%c0_9, %c0_10, %c0_11] : memref<1x1024x3xf32, #tpu.memory_space<vmem>>, vector<1x1024x3xf32>
    tpu.vector_store %arg2[%c0_9, %c0_10, %c0_11], %25 {strides = array<i32>} : memref<1x1024x3xf32, #tpu.memory_space<vmem>>, vector<1x1024x3xf32>,
    return
  }
  func.func @transform_0(%arg0: i32) -> (i32, i32, i32) {
    %c0_i32 = arith.constant 0 : i32
    %c0_i32_0 = arith.constant 0 : i32
    %c0_i32_1 = arith.constant 0 : i32
    return %arg0, %c0_i32, %c0_i32_0 : i32, i32, i32
  }
  func.func @transform_1(%arg0: i32) -> (i32, i32, i32) {
    %c0_i32 = arith.constant 0 : i32
    %c0_i32_0 = arith.constant 0 : i32
    %c0_i32_1 = arith.constant 0 : i32
    return %arg0, %c0_i32, %c0_i32_0 : i32, i32, i32
  }
}

module attributes {stable_mosaic.version = 11 : i64} {
  func.func @_matmul_bias_kernel(%arg0: i32, %arg1: i32, %arg2: i32, %arg3: memref<256x128xbf16, #tpu.memory_space<vmem>>, %arg4: memref<128x128xbf16, #tpu.memory_space<vmem>>, %arg5: memref<1x128xf32, #tpu.memory_space<vmem>>, %arg6: memref<256x128xf32, #tpu.memory_space<vmem>>, %arg7: memref<256x128xf32, #tpu.memory_space<vmem>>) attributes {dimension_semantics = [#tpu.dimension_semantics<parallel>, #tpu.dimension_semantics<parallel>, #tpu.dimension_semantics<arbitrary>], iteration_bounds = array<i64: 2, 1, 1>, scalar_prefetch = 0 : i64, scratch_operands = 1 : i64, tpu.core_type = #tpu.core_type<tc>, window_params = [{transform_indices = @transform_0, window_bounds = array<i64: 256, 128>}, {transform_indices = @transform_1, window_bounds = array<i64: 128, 128>}, {transform_indices = @transform_2, window_bounds = array<i64: 1, 128>}, {transform_indices = @transform_3, window_bounds = array<i64: 256, 128>}]} {
    %c0_i32 = arith.constant 0 : i32
    %0 = arith.cmpi eq, %arg2, %c0_i32 : i32
    %1 = arith.extui %0 : i1 to i32
    %c0_i32_0 = arith.constant 0 : i32
    %2 = arith.cmpi ne, %1, %c0_i32_0 : i32
    scf.if %2 {
      %cst_10 = arith.constant 0.000000e+00 : f32
      %12 = vector.broadcast %cst_10 : f32 to vector<256x128xf32>
      %c0_11 = arith.constant 0 : index
      %c0_12 = arith.constant 0 : index
      %13 = vector.load %arg7[%c0_11, %c0_12] : memref<256x128xf32, #tpu.memory_space<vmem>>, vector<256x128xf32>
      tpu.vector_store %arg7[%c0_11, %c0_12], %12 {strides = array<i32>} : memref<256x128xf32, #tpu.memory_space<vmem>>, vector<256x128xf32>,
    } else {
    }
    %c0 = arith.constant 0 : index
    %c0_1 = arith.constant 0 : index
    %3 = vector.load %arg7[%c0, %c0_1] : memref<256x128xf32, #tpu.memory_space<vmem>>, vector<256x128xf32>
    %c0_2 = arith.constant 0 : index
    %c0_3 = arith.constant 0 : index
    %4 = vector.load %arg3[%c0_2, %c0_3] : memref<256x128xbf16, #tpu.memory_space<vmem>>, vector<256x128xbf16>
    %c0_4 = arith.constant 0 : index
    %c0_5 = arith.constant 0 : index
    %5 = vector.load %arg4[%c0_4, %c0_5] : memref<128x128xbf16, #tpu.memory_space<vmem>>, vector<128x128xbf16>
    %cst = arith.constant dense<0.000000e+00> : vector<256x128xf32>
    %6 = tpu.matmul %4, %5, %cst {dimension_numbers = #tpu.dot_dimension_numbers<[1], [0], [0], [1], [0, 0, 1, 1], [], []>} : vector<256x128xbf16>, vector<128x128xbf16>, vector<256x128xf32> -> vector<256x128xf32>
    %7 = arith.addf %3, %6 : vector<256x128xf32>
    %c0_6 = arith.constant 0 : index
    %c0_7 = arith.constant 0 : index
    %8 = vector.load %arg7[%c0_6, %c0_7] : memref<256x128xf32, #tpu.memory_space<vmem>>, vector<256x128xf32>
    tpu.vector_store %arg7[%c0_6, %c0_7], %7 {strides = array<i32>} : memref<256x128xf32, #tpu.memory_space<vmem>>, vector<256x128xf32>,
    %c0_i32_8 = arith.constant 0 : i32
    %9 = arith.cmpi eq, %arg2, %c0_i32_8 : i32
    %10 = arith.extui %9 : i1 to i32
    %c0_i32_9 = arith.constant 0 : i32
    %11 = arith.cmpi ne, %10, %c0_i32_9 : i32
    scf.if %11 {
      %c0_10 = arith.constant 0 : index
      %c0_11 = arith.constant 0 : index
      %12 = vector.load %arg7[%c0_10, %c0_11] : memref<256x128xf32, #tpu.memory_space<vmem>>, vector<256x128xf32>
      %c0_12 = arith.constant 0 : index
      %c0_13 = arith.constant 0 : index
      %13 = vector.load %arg5[%c0_12, %c0_13] : memref<1x128xf32, #tpu.memory_space<vmem>>, vector<1x128xf32>
      %14 = vector.broadcast %13 : vector<1x128xf32> to vector<256x128xf32>
      %15 = arith.addf %12, %14 : vector<256x128xf32>
      %c0_14 = arith.constant 0 : index
      %c0_15 = arith.constant 0 : index
      %16 = vector.load %arg6[%c0_14, %c0_15] : memref<256x128xf32, #tpu.memory_space<vmem>>, vector<256x128xf32>
      tpu.vector_store %arg6[%c0_14, %c0_15], %15 {strides = array<i32>} : memref<256x128xf32, #tpu.memory_space<vmem>>, vector<256x128xf32>,
    } else {
    }
    return
  }
  func.func @transform_0(%arg0: i32, %arg1: i32, %arg2: i32) -> (i32, i32) {
    %c0_i32 = arith.constant 0 : i32
    return %arg0, %arg2 : i32, i32
  }
  func.func @transform_1(%arg0: i32, %arg1: i32, %arg2: i32) -> (i32, i32) {
    %c0_i32 = arith.constant 0 : i32
    return %arg2, %arg1 : i32, i32
  }
  func.func @transform_2(%arg0: i32, %arg1: i32, %arg2: i32) -> (i32, i32) {
    %c0_i32 = arith.constant 0 : i32
    %c0_i32_0 = arith.constant 0 : i32
    return %c0_i32, %arg1 : i32, i32
  }
  func.func @transform_3(%arg0: i32, %arg1: i32, %arg2: i32) -> (i32, i32) {
    %c0_i32 = arith.constant 0 : i32
    return %arg0, %arg1 : i32, i32
  }
}

module attributes {stable_mosaic.version = 11 : i64} {
  func.func @_norm_single_kernel(%arg0: i32, %arg1: memref<1x256x16xf32, #tpu.memory_space<vmem>>, %arg2: memref<1x256x16xf32, #tpu.memory_space<vmem>>) attributes {dimension_semantics = [#tpu.dimension_semantics<parallel>], iteration_bounds = array<i64: 2>, scalar_prefetch = 0 : i64, scratch_operands = 0 : i64, tpu.core_type = #tpu.core_type<tc>, window_params = [{transform_indices = @transform_0, window_bounds = array<i64: 1, 256, 16>}, {transform_indices = @transform_1, window_bounds = array<i64: 1, 256, 16>}]} {
    %c0 = arith.constant 0 : index
    %c0_0 = arith.constant 0 : index
    %c0_1 = arith.constant 0 : index
    %0 = vector.load %arg1[%c0, %c0_0, %c0_1] : memref<1x256x16xf32, #tpu.memory_space<vmem>>, vector<1x256x16xf32>
    %cst = arith.constant dense<0.000000e+00> : vector<1x16xf32>
    %1 = vector.multi_reduction <add>, %0, %cst [1] : vector<1x256x16xf32> to vector<1x16xf32>
    %2 = vector.shape_cast %1 : vector<1x16xf32> to vector<1x1x16xf32>
    %3 = arith.mulf %0, %0 : vector<1x256x16xf32>
    %cst_2 = arith.constant dense<0.000000e+00> : vector<1x16xf32>
    %4 = vector.multi_reduction <add>, %3, %cst_2 [1] : vector<1x256x16xf32> to vector<1x16xf32>
    %5 = vector.shape_cast %4 : vector<1x16xf32> to vector<1x1x16xf32>
    %cst_3 = arith.constant 2.560000e+02 : f32
    %6 = vector.broadcast %cst_3 : f32 to vector<1x1x16xf32>
    %7 = arith.divf %2, %6 : vector<1x1x16xf32>
    %cst_4 = arith.constant 2.560000e+02 : f32
    %8 = vector.broadcast %cst_4 : f32 to vector<1x1x16xf32>
    %9 = arith.divf %5, %8 : vector<1x1x16xf32>
    %10 = arith.mulf %7, %7 : vector<1x1x16xf32>
    %11 = arith.subf %9, %10 : vector<1x1x16xf32>
    %cst_5 = arith.constant 0.000000e+00 : f32
    %12 = vector.broadcast %cst_5 : f32 to vector<1x1x16xf32>
    %13 = arith.maximumf %11, %12 : vector<1x1x16xf32>
    %cst_6 = arith.constant 9.99999974E-6 : f32
    %14 = vector.broadcast %cst_6 : f32 to vector<1x1x16xf32>
    %15 = arith.addf %13, %14 : vector<1x1x16xf32>
    %16 = math.rsqrt %15 : vector<1x1x16xf32>
    %17 = vector.broadcast %7 : vector<1x1x16xf32> to vector<1x256x16xf32>
    %18 = arith.subf %0, %17 : vector<1x256x16xf32>
    %19 = vector.broadcast %16 : vector<1x1x16xf32> to vector<1x256x16xf32>
    %20 = arith.mulf %18, %19 : vector<1x256x16xf32>
    %cst_7 = arith.constant 0.000000e+00 : f32
    %21 = vector.broadcast %cst_7 : f32 to vector<1x256x16xf32>
    %22 = arith.cmpf oge, %20, %21 : vector<1x256x16xf32>
    %cst_8 = arith.constant 1.000000e-01 : f32
    %23 = vector.broadcast %cst_8 : f32 to vector<1x256x16xf32>
    %24 = arith.mulf %23, %20 : vector<1x256x16xf32>
    %25 = arith.select %22, %20, %24 : vector<1x256x16xi1>, vector<1x256x16xf32>
    %c0_9 = arith.constant 0 : index
    %c0_10 = arith.constant 0 : index
    %c0_11 = arith.constant 0 : index
    %26 = vector.load %arg2[%c0_9, %c0_10, %c0_11] : memref<1x256x16xf32, #tpu.memory_space<vmem>>, vector<1x256x16xf32>
    tpu.vector_store %arg2[%c0_9, %c0_10, %c0_11], %25 {strides = array<i32>} : memref<1x256x16xf32, #tpu.memory_space<vmem>>, vector<1x256x16xf32>,
    return
  }
  func.func @transform_0(%arg0: i32) -> (i32, i32, i32) {
    %c0_i32 = arith.constant 0 : i32
    %c0_i32_0 = arith.constant 0 : i32
    %c0_i32_1 = arith.constant 0 : i32
    return %arg0, %c0_i32, %c0_i32_0 : i32, i32, i32
  }
  func.func @transform_1(%arg0: i32) -> (i32, i32, i32) {
    %c0_i32 = arith.constant 0 : i32
    %c0_i32_0 = arith.constant 0 : i32
    %c0_i32_1 = arith.constant 0 : i32
    return %arg0, %c0_i32, %c0_i32_0 : i32, i32, i32
  }
}

module attributes {stable_mosaic.version = 11 : i64} {
  func.func @_matmul_bias_kernel(%arg0: i32, %arg1: i32, %arg2: i32, %arg3: memref<256x256xbf16, #tpu.memory_space<vmem>>, %arg4: memref<256x128xbf16, #tpu.memory_space<vmem>>, %arg5: memref<1x128xf32, #tpu.memory_space<vmem>>, %arg6: memref<256x128xf32, #tpu.memory_space<vmem>>, %arg7: memref<256x128xf32, #tpu.memory_space<vmem>>) attributes {dimension_semantics = [#tpu.dimension_semantics<parallel>, #tpu.dimension_semantics<parallel>, #tpu.dimension_semantics<arbitrary>], iteration_bounds = array<i64: 2, 1, 1>, scalar_prefetch = 0 : i64, scratch_operands = 1 : i64, tpu.core_type = #tpu.core_type<tc>, window_params = [{transform_indices = @transform_0, window_bounds = array<i64: 256, 256>}, {transform_indices = @transform_1, window_bounds = array<i64: 256, 128>}, {transform_indices = @transform_2, window_bounds = array<i64: 1, 128>}, {transform_indices = @transform_3, window_bounds = array<i64: 256, 128>}]} {
    %c0_i32 = arith.constant 0 : i32
    %0 = arith.cmpi eq, %arg2, %c0_i32 : i32
    %1 = arith.extui %0 : i1 to i32
    %c0_i32_0 = arith.constant 0 : i32
    %2 = arith.cmpi ne, %1, %c0_i32_0 : i32
    scf.if %2 {
      %cst_10 = arith.constant 0.000000e+00 : f32
      %12 = vector.broadcast %cst_10 : f32 to vector<256x128xf32>
      %c0_11 = arith.constant 0 : index
      %c0_12 = arith.constant 0 : index
      %13 = vector.load %arg7[%c0_11, %c0_12] : memref<256x128xf32, #tpu.memory_space<vmem>>, vector<256x128xf32>
      tpu.vector_store %arg7[%c0_11, %c0_12], %12 {strides = array<i32>} : memref<256x128xf32, #tpu.memory_space<vmem>>, vector<256x128xf32>,
    } else {
    }
    %c0 = arith.constant 0 : index
    %c0_1 = arith.constant 0 : index
    %3 = vector.load %arg7[%c0, %c0_1] : memref<256x128xf32, #tpu.memory_space<vmem>>, vector<256x128xf32>
    %c0_2 = arith.constant 0 : index
    %c0_3 = arith.constant 0 : index
    %4 = vector.load %arg3[%c0_2, %c0_3] : memref<256x256xbf16, #tpu.memory_space<vmem>>, vector<256x256xbf16>
    %c0_4 = arith.constant 0 : index
    %c0_5 = arith.constant 0 : index
    %5 = vector.load %arg4[%c0_4, %c0_5] : memref<256x128xbf16, #tpu.memory_space<vmem>>, vector<256x128xbf16>
    %cst = arith.constant dense<0.000000e+00> : vector<256x128xf32>
    %6 = tpu.matmul %4, %5, %cst {dimension_numbers = #tpu.dot_dimension_numbers<[1], [0], [0], [1], [0, 0, 1, 1], [], []>} : vector<256x256xbf16>, vector<256x128xbf16>, vector<256x128xf32> -> vector<256x128xf32>
    %7 = arith.addf %3, %6 : vector<256x128xf32>
    %c0_6 = arith.constant 0 : index
    %c0_7 = arith.constant 0 : index
    %8 = vector.load %arg7[%c0_6, %c0_7] : memref<256x128xf32, #tpu.memory_space<vmem>>, vector<256x128xf32>
    tpu.vector_store %arg7[%c0_6, %c0_7], %7 {strides = array<i32>} : memref<256x128xf32, #tpu.memory_space<vmem>>, vector<256x128xf32>,
    %c0_i32_8 = arith.constant 0 : i32
    %9 = arith.cmpi eq, %arg2, %c0_i32_8 : i32
    %10 = arith.extui %9 : i1 to i32
    %c0_i32_9 = arith.constant 0 : i32
    %11 = arith.cmpi ne, %10, %c0_i32_9 : i32
    scf.if %11 {
      %c0_10 = arith.constant 0 : index
      %c0_11 = arith.constant 0 : index
      %12 = vector.load %arg7[%c0_10, %c0_11] : memref<256x128xf32, #tpu.memory_space<vmem>>, vector<256x128xf32>
      %c0_12 = arith.constant 0 : index
      %c0_13 = arith.constant 0 : index
      %13 = vector.load %arg5[%c0_12, %c0_13] : memref<1x128xf32, #tpu.memory_space<vmem>>, vector<1x128xf32>
      %14 = vector.broadcast %13 : vector<1x128xf32> to vector<256x128xf32>
      %15 = arith.addf %12, %14 : vector<256x128xf32>
      %c0_14 = arith.constant 0 : index
      %c0_15 = arith.constant 0 : index
      %16 = vector.load %arg6[%c0_14, %c0_15] : memref<256x128xf32, #tpu.memory_space<vmem>>, vector<256x128xf32>
      tpu.vector_store %arg6[%c0_14, %c0_15], %15 {strides = array<i32>} : memref<256x128xf32, #tpu.memory_space<vmem>>, vector<256x128xf32>,
    } else {
    }
    return
  }
  func.func @transform_0(%arg0: i32, %arg1: i32, %arg2: i32) -> (i32, i32) {
    %c0_i32 = arith.constant 0 : i32
    return %arg0, %arg2 : i32, i32
  }
  func.func @transform_1(%arg0: i32, %arg1: i32, %arg2: i32) -> (i32, i32) {
    %c0_i32 = arith.constant 0 : i32
    return %arg2, %arg1 : i32, i32
  }
  func.func @transform_2(%arg0: i32, %arg1: i32, %arg2: i32) -> (i32, i32) {
    %c0_i32 = arith.constant 0 : i32
    %c0_i32_0 = arith.constant 0 : i32
    return %c0_i32, %arg1 : i32, i32
  }
  func.func @transform_3(%arg0: i32, %arg1: i32, %arg2: i32) -> (i32, i32) {
    %c0_i32 = arith.constant 0 : i32
    return %arg0, %arg1 : i32, i32
  }
}

module attributes {stable_mosaic.version = 11 : i64} {
  func.func @_matmul_bias_kernel(%arg0: i32, %arg1: i32, %arg2: i32, %arg3: memref<128x256xbf16, #tpu.memory_space<vmem>>, %arg4: memref<256x128xbf16, #tpu.memory_space<vmem>>, %arg5: memref<1x128xf32, #tpu.memory_space<vmem>>, %arg6: memref<128x128xf32, #tpu.memory_space<vmem>>, %arg7: memref<128x128xf32, #tpu.memory_space<vmem>>) attributes {dimension_semantics = [#tpu.dimension_semantics<parallel>, #tpu.dimension_semantics<parallel>, #tpu.dimension_semantics<arbitrary>], iteration_bounds = array<i64: 1, 1, 1>, scalar_prefetch = 0 : i64, scratch_operands = 1 : i64, tpu.core_type = #tpu.core_type<tc>, window_params = [{transform_indices = @transform_0, window_bounds = array<i64: 128, 256>}, {transform_indices = @transform_1, window_bounds = array<i64: 256, 128>}, {transform_indices = @transform_2, window_bounds = array<i64: 1, 128>}, {transform_indices = @transform_3, window_bounds = array<i64: 128, 128>}]} {
    %c0_i32 = arith.constant 0 : i32
    %0 = arith.cmpi eq, %arg2, %c0_i32 : i32
    %1 = arith.extui %0 : i1 to i32
    %c0_i32_0 = arith.constant 0 : i32
    %2 = arith.cmpi ne, %1, %c0_i32_0 : i32
    scf.if %2 {
      %cst_10 = arith.constant 0.000000e+00 : f32
      %12 = vector.broadcast %cst_10 : f32 to vector<128x128xf32>
      %c0_11 = arith.constant 0 : index
      %c0_12 = arith.constant 0 : index
      %13 = vector.load %arg7[%c0_11, %c0_12] : memref<128x128xf32, #tpu.memory_space<vmem>>, vector<128x128xf32>
      tpu.vector_store %arg7[%c0_11, %c0_12], %12 {strides = array<i32>} : memref<128x128xf32, #tpu.memory_space<vmem>>, vector<128x128xf32>,
    } else {
    }
    %c0 = arith.constant 0 : index
    %c0_1 = arith.constant 0 : index
    %3 = vector.load %arg7[%c0, %c0_1] : memref<128x128xf32, #tpu.memory_space<vmem>>, vector<128x128xf32>
    %c0_2 = arith.constant 0 : index
    %c0_3 = arith.constant 0 : index
    %4 = vector.load %arg3[%c0_2, %c0_3] : memref<128x256xbf16, #tpu.memory_space<vmem>>, vector<128x256xbf16>
    %c0_4 = arith.constant 0 : index
    %c0_5 = arith.constant 0 : index
    %5 = vector.load %arg4[%c0_4, %c0_5] : memref<256x128xbf16, #tpu.memory_space<vmem>>, vector<256x128xbf16>
    %cst = arith.constant dense<0.000000e+00> : vector<128x128xf32>
    %6 = tpu.matmul %4, %5, %cst {dimension_numbers = #tpu.dot_dimension_numbers<[1], [0], [0], [1], [0, 0, 1, 1], [], []>} : vector<128x256xbf16>, vector<256x128xbf16>, vector<128x128xf32> -> vector<128x128xf32>
    %7 = arith.addf %3, %6 : vector<128x128xf32>
    %c0_6 = arith.constant 0 : index
    %c0_7 = arith.constant 0 : index
    %8 = vector.load %arg7[%c0_6, %c0_7] : memref<128x128xf32, #tpu.memory_space<vmem>>, vector<128x128xf32>
    tpu.vector_store %arg7[%c0_6, %c0_7], %7 {strides = array<i32>} : memref<128x128xf32, #tpu.memory_space<vmem>>, vector<128x128xf32>,
    %c0_i32_8 = arith.constant 0 : i32
    %9 = arith.cmpi eq, %arg2, %c0_i32_8 : i32
    %10 = arith.extui %9 : i1 to i32
    %c0_i32_9 = arith.constant 0 : i32
    %11 = arith.cmpi ne, %10, %c0_i32_9 : i32
    scf.if %11 {
      %c0_10 = arith.constant 0 : index
      %c0_11 = arith.constant 0 : index
      %12 = vector.load %arg7[%c0_10, %c0_11] : memref<128x128xf32, #tpu.memory_space<vmem>>, vector<128x128xf32>
      %c0_12 = arith.constant 0 : index
      %c0_13 = arith.constant 0 : index
      %13 = vector.load %arg5[%c0_12, %c0_13] : memref<1x128xf32, #tpu.memory_space<vmem>>, vector<1x128xf32>
      %14 = vector.broadcast %13 : vector<1x128xf32> to vector<128x128xf32>
      %15 = arith.addf %12, %14 : vector<128x128xf32>
      %c0_14 = arith.constant 0 : index
      %c0_15 = arith.constant 0 : index
      %16 = vector.load %arg6[%c0_14, %c0_15] : memref<128x128xf32, #tpu.memory_space<vmem>>, vector<128x128xf32>
      tpu.vector_store %arg6[%c0_14, %c0_15], %15 {strides = array<i32>} : memref<128x128xf32, #tpu.memory_space<vmem>>, vector<128x128xf32>,
    } else {
    }
    return
  }
  func.func @transform_0(%arg0: i32, %arg1: i32, %arg2: i32) -> (i32, i32) {
    %c0_i32 = arith.constant 0 : i32
    return %arg0, %arg2 : i32, i32
  }
  func.func @transform_1(%arg0: i32, %arg1: i32, %arg2: i32) -> (i32, i32) {
    %c0_i32 = arith.constant 0 : i32
    return %arg2, %arg1 : i32, i32
  }
  func.func @transform_2(%arg0: i32, %arg1: i32, %arg2: i32) -> (i32, i32) {
    %c0_i32 = arith.constant 0 : i32
    %c0_i32_0 = arith.constant 0 : i32
    return %c0_i32, %arg1 : i32, i32
  }
  func.func @transform_3(%arg0: i32, %arg1: i32, %arg2: i32) -> (i32, i32) {
    %c0_i32 = arith.constant 0 : i32
    return %arg0, %arg1 : i32, i32
  }
}

module attributes {stable_mosaic.version = 11 : i64} {
  func.func @_norm_single_kernel(%arg0: i32, %arg1: memref<1x64x32xf32, #tpu.memory_space<vmem>>, %arg2: memref<1x64x32xf32, #tpu.memory_space<vmem>>) attributes {dimension_semantics = [#tpu.dimension_semantics<parallel>], iteration_bounds = array<i64: 2>, scalar_prefetch = 0 : i64, scratch_operands = 0 : i64, tpu.core_type = #tpu.core_type<tc>, window_params = [{transform_indices = @transform_0, window_bounds = array<i64: 1, 64, 32>}, {transform_indices = @transform_1, window_bounds = array<i64: 1, 64, 32>}]} {
    %c0 = arith.constant 0 : index
    %c0_0 = arith.constant 0 : index
    %c0_1 = arith.constant 0 : index
    %0 = vector.load %arg1[%c0, %c0_0, %c0_1] : memref<1x64x32xf32, #tpu.memory_space<vmem>>, vector<1x64x32xf32>
    %cst = arith.constant dense<0.000000e+00> : vector<1x32xf32>
    %1 = vector.multi_reduction <add>, %0, %cst [1] : vector<1x64x32xf32> to vector<1x32xf32>
    %2 = vector.shape_cast %1 : vector<1x32xf32> to vector<1x1x32xf32>
    %3 = arith.mulf %0, %0 : vector<1x64x32xf32>
    %cst_2 = arith.constant dense<0.000000e+00> : vector<1x32xf32>
    %4 = vector.multi_reduction <add>, %3, %cst_2 [1] : vector<1x64x32xf32> to vector<1x32xf32>
    %5 = vector.shape_cast %4 : vector<1x32xf32> to vector<1x1x32xf32>
    %cst_3 = arith.constant 6.400000e+01 : f32
    %6 = vector.broadcast %cst_3 : f32 to vector<1x1x32xf32>
    %7 = arith.divf %2, %6 : vector<1x1x32xf32>
    %cst_4 = arith.constant 6.400000e+01 : f32
    %8 = vector.broadcast %cst_4 : f32 to vector<1x1x32xf32>
    %9 = arith.divf %5, %8 : vector<1x1x32xf32>
    %10 = arith.mulf %7, %7 : vector<1x1x32xf32>
    %11 = arith.subf %9, %10 : vector<1x1x32xf32>
    %cst_5 = arith.constant 0.000000e+00 : f32
    %12 = vector.broadcast %cst_5 : f32 to vector<1x1x32xf32>
    %13 = arith.maximumf %11, %12 : vector<1x1x32xf32>
    %cst_6 = arith.constant 9.99999974E-6 : f32
    %14 = vector.broadcast %cst_6 : f32 to vector<1x1x32xf32>
    %15 = arith.addf %13, %14 : vector<1x1x32xf32>
    %16 = math.rsqrt %15 : vector<1x1x32xf32>
    %17 = vector.broadcast %7 : vector<1x1x32xf32> to vector<1x64x32xf32>
    %18 = arith.subf %0, %17 : vector<1x64x32xf32>
    %19 = vector.broadcast %16 : vector<1x1x32xf32> to vector<1x64x32xf32>
    %20 = arith.mulf %18, %19 : vector<1x64x32xf32>
    %cst_7 = arith.constant 0.000000e+00 : f32
    %21 = vector.broadcast %cst_7 : f32 to vector<1x64x32xf32>
    %22 = arith.cmpf oge, %20, %21 : vector<1x64x32xf32>
    %cst_8 = arith.constant 1.000000e-01 : f32
    %23 = vector.broadcast %cst_8 : f32 to vector<1x64x32xf32>
    %24 = arith.mulf %23, %20 : vector<1x64x32xf32>
    %25 = arith.select %22, %20, %24 : vector<1x64x32xi1>, vector<1x64x32xf32>
    %c0_9 = arith.constant 0 : index
    %c0_10 = arith.constant 0 : index
    %c0_11 = arith.constant 0 : index
    %26 = vector.load %arg2[%c0_9, %c0_10, %c0_11] : memref<1x64x32xf32, #tpu.memory_space<vmem>>, vector<1x64x32xf32>
    tpu.vector_store %arg2[%c0_9, %c0_10, %c0_11], %25 {strides = array<i32>} : memref<1x64x32xf32, #tpu.memory_space<vmem>>, vector<1x64x32xf32>,
    return
  }
  func.func @transform_0(%arg0: i32) -> (i32, i32, i32) {
    %c0_i32 = arith.constant 0 : i32
    %c0_i32_0 = arith.constant 0 : i32
    %c0_i32_1 = arith.constant 0 : i32
    return %arg0, %c0_i32, %c0_i32_0 : i32, i32, i32
  }
  func.func @transform_1(%arg0: i32) -> (i32, i32, i32) {
    %c0_i32 = arith.constant 0 : i32
    %c0_i32_0 = arith.constant 0 : i32
    %c0_i32_1 = arith.constant 0 : i32
    return %arg0, %c0_i32, %c0_i32_0 : i32, i32, i32
  }
}

module attributes {stable_mosaic.version = 11 : i64} {
  func.func @_matmul_bias_kernel(%arg0: i32, %arg1: i32, %arg2: i32, %arg3: memref<128x384xbf16, #tpu.memory_space<vmem>>, %arg4: memref<384x128xbf16, #tpu.memory_space<vmem>>, %arg5: memref<1x128xf32, #tpu.memory_space<vmem>>, %arg6: memref<128x128xf32, #tpu.memory_space<vmem>>, %arg7: memref<128x128xf32, #tpu.memory_space<vmem>>) attributes {dimension_semantics = [#tpu.dimension_semantics<parallel>, #tpu.dimension_semantics<parallel>, #tpu.dimension_semantics<arbitrary>], iteration_bounds = array<i64: 1, 1, 1>, scalar_prefetch = 0 : i64, scratch_operands = 1 : i64, tpu.core_type = #tpu.core_type<tc>, window_params = [{transform_indices = @transform_0, window_bounds = array<i64: 128, 384>}, {transform_indices = @transform_1, window_bounds = array<i64: 384, 128>}, {transform_indices = @transform_2, window_bounds = array<i64: 1, 128>}, {transform_indices = @transform_3, window_bounds = array<i64: 128, 128>}]} {
    %c0_i32 = arith.constant 0 : i32
    %0 = arith.cmpi eq, %arg2, %c0_i32 : i32
    %1 = arith.extui %0 : i1 to i32
    %c0_i32_0 = arith.constant 0 : i32
    %2 = arith.cmpi ne, %1, %c0_i32_0 : i32
    scf.if %2 {
      %cst_10 = arith.constant 0.000000e+00 : f32
      %12 = vector.broadcast %cst_10 : f32 to vector<128x128xf32>
      %c0_11 = arith.constant 0 : index
      %c0_12 = arith.constant 0 : index
      %13 = vector.load %arg7[%c0_11, %c0_12] : memref<128x128xf32, #tpu.memory_space<vmem>>, vector<128x128xf32>
      tpu.vector_store %arg7[%c0_11, %c0_12], %12 {strides = array<i32>} : memref<128x128xf32, #tpu.memory_space<vmem>>, vector<128x128xf32>,
    } else {
    }
    %c0 = arith.constant 0 : index
    %c0_1 = arith.constant 0 : index
    %3 = vector.load %arg7[%c0, %c0_1] : memref<128x128xf32, #tpu.memory_space<vmem>>, vector<128x128xf32>
    %c0_2 = arith.constant 0 : index
    %c0_3 = arith.constant 0 : index
    %4 = vector.load %arg3[%c0_2, %c0_3] : memref<128x384xbf16, #tpu.memory_space<vmem>>, vector<128x384xbf16>
    %c0_4 = arith.constant 0 : index
    %c0_5 = arith.constant 0 : index
    %5 = vector.load %arg4[%c0_4, %c0_5] : memref<384x128xbf16, #tpu.memory_space<vmem>>, vector<384x128xbf16>
    %cst = arith.constant dense<0.000000e+00> : vector<128x128xf32>
    %6 = tpu.matmul %4, %5, %cst {dimension_numbers = #tpu.dot_dimension_numbers<[1], [0], [0], [1], [0, 0, 1, 1], [], []>} : vector<128x384xbf16>, vector<384x128xbf16>, vector<128x128xf32> -> vector<128x128xf32>
    %7 = arith.addf %3, %6 : vector<128x128xf32>
    %c0_6 = arith.constant 0 : index
    %c0_7 = arith.constant 0 : index
    %8 = vector.load %arg7[%c0_6, %c0_7] : memref<128x128xf32, #tpu.memory_space<vmem>>, vector<128x128xf32>
    tpu.vector_store %arg7[%c0_6, %c0_7], %7 {strides = array<i32>} : memref<128x128xf32, #tpu.memory_space<vmem>>, vector<128x128xf32>,
    %c0_i32_8 = arith.constant 0 : i32
    %9 = arith.cmpi eq, %arg2, %c0_i32_8 : i32
    %10 = arith.extui %9 : i1 to i32
    %c0_i32_9 = arith.constant 0 : i32
    %11 = arith.cmpi ne, %10, %c0_i32_9 : i32
    scf.if %11 {
      %c0_10 = arith.constant 0 : index
      %c0_11 = arith.constant 0 : index
      %12 = vector.load %arg7[%c0_10, %c0_11] : memref<128x128xf32, #tpu.memory_space<vmem>>, vector<128x128xf32>
      %c0_12 = arith.constant 0 : index
      %c0_13 = arith.constant 0 : index
      %13 = vector.load %arg5[%c0_12, %c0_13] : memref<1x128xf32, #tpu.memory_space<vmem>>, vector<1x128xf32>
      %14 = vector.broadcast %13 : vector<1x128xf32> to vector<128x128xf32>
      %15 = arith.addf %12, %14 : vector<128x128xf32>
      %c0_14 = arith.constant 0 : index
      %c0_15 = arith.constant 0 : index
      %16 = vector.load %arg6[%c0_14, %c0_15] : memref<128x128xf32, #tpu.memory_space<vmem>>, vector<128x128xf32>
      tpu.vector_store %arg6[%c0_14, %c0_15], %15 {strides = array<i32>} : memref<128x128xf32, #tpu.memory_space<vmem>>, vector<128x128xf32>,
    } else {
    }
    return
  }
  func.func @transform_0(%arg0: i32, %arg1: i32, %arg2: i32) -> (i32, i32) {
    %c0_i32 = arith.constant 0 : i32
    return %arg0, %arg2 : i32, i32
  }
  func.func @transform_1(%arg0: i32, %arg1: i32, %arg2: i32) -> (i32, i32) {
    %c0_i32 = arith.constant 0 : i32
    return %arg2, %arg1 : i32, i32
  }
  func.func @transform_2(%arg0: i32, %arg1: i32, %arg2: i32) -> (i32, i32) {
    %c0_i32 = arith.constant 0 : i32
    %c0_i32_0 = arith.constant 0 : i32
    return %c0_i32, %arg1 : i32, i32
  }
  func.func @transform_3(%arg0: i32, %arg1: i32, %arg2: i32) -> (i32, i32) {
    %c0_i32 = arith.constant 0 : i32
    return %arg0, %arg1 : i32, i32
  }
}

module attributes {stable_mosaic.version = 11 : i64} {
  func.func @_norm_single_kernel(%arg0: i32, %arg1: memref<1x16x32xf32, #tpu.memory_space<vmem>>, %arg2: memref<1x16x32xf32, #tpu.memory_space<vmem>>) attributes {dimension_semantics = [#tpu.dimension_semantics<parallel>], iteration_bounds = array<i64: 2>, scalar_prefetch = 0 : i64, scratch_operands = 0 : i64, tpu.core_type = #tpu.core_type<tc>, window_params = [{transform_indices = @transform_0, window_bounds = array<i64: 1, 16, 32>}, {transform_indices = @transform_1, window_bounds = array<i64: 1, 16, 32>}]} {
    %c0 = arith.constant 0 : index
    %c0_0 = arith.constant 0 : index
    %c0_1 = arith.constant 0 : index
    %0 = vector.load %arg1[%c0, %c0_0, %c0_1] : memref<1x16x32xf32, #tpu.memory_space<vmem>>, vector<1x16x32xf32>
    %cst = arith.constant dense<0.000000e+00> : vector<1x32xf32>
    %1 = vector.multi_reduction <add>, %0, %cst [1] : vector<1x16x32xf32> to vector<1x32xf32>
    %2 = vector.shape_cast %1 : vector<1x32xf32> to vector<1x1x32xf32>
    %3 = arith.mulf %0, %0 : vector<1x16x32xf32>
    %cst_2 = arith.constant dense<0.000000e+00> : vector<1x32xf32>
    %4 = vector.multi_reduction <add>, %3, %cst_2 [1] : vector<1x16x32xf32> to vector<1x32xf32>
    %5 = vector.shape_cast %4 : vector<1x32xf32> to vector<1x1x32xf32>
    %cst_3 = arith.constant 1.600000e+01 : f32
    %6 = vector.broadcast %cst_3 : f32 to vector<1x1x32xf32>
    %7 = arith.divf %2, %6 : vector<1x1x32xf32>
    %cst_4 = arith.constant 1.600000e+01 : f32
    %8 = vector.broadcast %cst_4 : f32 to vector<1x1x32xf32>
    %9 = arith.divf %5, %8 : vector<1x1x32xf32>
    %10 = arith.mulf %7, %7 : vector<1x1x32xf32>
    %11 = arith.subf %9, %10 : vector<1x1x32xf32>
    %cst_5 = arith.constant 0.000000e+00 : f32
    %12 = vector.broadcast %cst_5 : f32 to vector<1x1x32xf32>
    %13 = arith.maximumf %11, %12 : vector<1x1x32xf32>
    %cst_6 = arith.constant 9.99999974E-6 : f32
    %14 = vector.broadcast %cst_6 : f32 to vector<1x1x32xf32>
    %15 = arith.addf %13, %14 : vector<1x1x32xf32>
    %16 = math.rsqrt %15 : vector<1x1x32xf32>
    %17 = vector.broadcast %7 : vector<1x1x32xf32> to vector<1x16x32xf32>
    %18 = arith.subf %0, %17 : vector<1x16x32xf32>
    %19 = vector.broadcast %16 : vector<1x1x32xf32> to vector<1x16x32xf32>
    %20 = arith.mulf %18, %19 : vector<1x16x32xf32>
    %cst_7 = arith.constant 0.000000e+00 : f32
    %21 = vector.broadcast %cst_7 : f32 to vector<1x16x32xf32>
    %22 = arith.cmpf oge, %20, %21 : vector<1x16x32xf32>
    %cst_8 = arith.constant 1.000000e-01 : f32
    %23 = vector.broadcast %cst_8 : f32 to vector<1x16x32xf32>
    %24 = arith.mulf %23, %20 : vector<1x16x32xf32>
    %25 = arith.select %22, %20, %24 : vector<1x16x32xi1>, vector<1x16x32xf32>
    %c0_9 = arith.constant 0 : index
    %c0_10 = arith.constant 0 : index
    %c0_11 = arith.constant 0 : index
    %26 = vector.load %arg2[%c0_9, %c0_10, %c0_11] : memref<1x16x32xf32, #tpu.memory_space<vmem>>, vector<1x16x32xf32>
    tpu.vector_store %arg2[%c0_9, %c0_10, %c0_11], %25 {strides = array<i32>} : memref<1x16x32xf32, #tpu.memory_space<vmem>>, vector<1x16x32xf32>,
    return
  }
  func.func @transform_0(%arg0: i32) -> (i32, i32, i32) {
    %c0_i32 = arith.constant 0 : i32
    %c0_i32_0 = arith.constant 0 : i32
    %c0_i32_1 = arith.constant 0 : i32
    return %arg0, %c0_i32, %c0_i32_0 : i32, i32, i32
  }
  func.func @transform_1(%arg0: i32) -> (i32, i32, i32) {
    %c0_i32 = arith.constant 0 : i32
    %c0_i32_0 = arith.constant 0 : i32
    %c0_i32_1 = arith.constant 0 : i32
    return %arg0, %c0_i32, %c0_i32_0 : i32, i32, i32
  }
}

module attributes {stable_mosaic.version = 11 : i64} {
  func.func @_matmul_bias_kernel(%arg0: i32, %arg1: i32, %arg2: i32, %arg3: memref<32x512xbf16, #tpu.memory_space<vmem>>, %arg4: memref<512x128xbf16, #tpu.memory_space<vmem>>, %arg5: memref<1x128xf32, #tpu.memory_space<vmem>>, %arg6: memref<32x128xf32, #tpu.memory_space<vmem>>, %arg7: memref<32x128xf32, #tpu.memory_space<vmem>>) attributes {dimension_semantics = [#tpu.dimension_semantics<parallel>, #tpu.dimension_semantics<parallel>, #tpu.dimension_semantics<arbitrary>], iteration_bounds = array<i64: 1, 1, 1>, scalar_prefetch = 0 : i64, scratch_operands = 1 : i64, tpu.core_type = #tpu.core_type<tc>, window_params = [{transform_indices = @transform_0, window_bounds = array<i64: 32, 512>}, {transform_indices = @transform_1, window_bounds = array<i64: 512, 128>}, {transform_indices = @transform_2, window_bounds = array<i64: 1, 128>}, {transform_indices = @transform_3, window_bounds = array<i64: 32, 128>}]} {
    %c0_i32 = arith.constant 0 : i32
    %0 = arith.cmpi eq, %arg2, %c0_i32 : i32
    %1 = arith.extui %0 : i1 to i32
    %c0_i32_0 = arith.constant 0 : i32
    %2 = arith.cmpi ne, %1, %c0_i32_0 : i32
    scf.if %2 {
      %cst_10 = arith.constant 0.000000e+00 : f32
      %12 = vector.broadcast %cst_10 : f32 to vector<32x128xf32>
      %c0_11 = arith.constant 0 : index
      %c0_12 = arith.constant 0 : index
      %13 = vector.load %arg7[%c0_11, %c0_12] : memref<32x128xf32, #tpu.memory_space<vmem>>, vector<32x128xf32>
      tpu.vector_store %arg7[%c0_11, %c0_12], %12 {strides = array<i32>} : memref<32x128xf32, #tpu.memory_space<vmem>>, vector<32x128xf32>,
    } else {
    }
    %c0 = arith.constant 0 : index
    %c0_1 = arith.constant 0 : index
    %3 = vector.load %arg7[%c0, %c0_1] : memref<32x128xf32, #tpu.memory_space<vmem>>, vector<32x128xf32>
    %c0_2 = arith.constant 0 : index
    %c0_3 = arith.constant 0 : index
    %4 = vector.load %arg3[%c0_2, %c0_3] : memref<32x512xbf16, #tpu.memory_space<vmem>>, vector<32x512xbf16>
    %c0_4 = arith.constant 0 : index
    %c0_5 = arith.constant 0 : index
    %5 = vector.load %arg4[%c0_4, %c0_5] : memref<512x128xbf16, #tpu.memory_space<vmem>>, vector<512x128xbf16>
    %cst = arith.constant dense<0.000000e+00> : vector<32x128xf32>
    %6 = tpu.matmul %4, %5, %cst {dimension_numbers = #tpu.dot_dimension_numbers<[1], [0], [0], [1], [0, 0, 1, 1], [], []>} : vector<32x512xbf16>, vector<512x128xbf16>, vector<32x128xf32> -> vector<32x128xf32>
    %7 = arith.addf %3, %6 : vector<32x128xf32>
    %c0_6 = arith.constant 0 : index
    %c0_7 = arith.constant 0 : index
    %8 = vector.load %arg7[%c0_6, %c0_7] : memref<32x128xf32, #tpu.memory_space<vmem>>, vector<32x128xf32>
    tpu.vector_store %arg7[%c0_6, %c0_7], %7 {strides = array<i32>} : memref<32x128xf32, #tpu.memory_space<vmem>>, vector<32x128xf32>,
    %c0_i32_8 = arith.constant 0 : i32
    %9 = arith.cmpi eq, %arg2, %c0_i32_8 : i32
    %10 = arith.extui %9 : i1 to i32
    %c0_i32_9 = arith.constant 0 : i32
    %11 = arith.cmpi ne, %10, %c0_i32_9 : i32
    scf.if %11 {
      %c0_10 = arith.constant 0 : index
      %c0_11 = arith.constant 0 : index
      %12 = vector.load %arg7[%c0_10, %c0_11] : memref<32x128xf32, #tpu.memory_space<vmem>>, vector<32x128xf32>
      %c0_12 = arith.constant 0 : index
      %c0_13 = arith.constant 0 : index
      %13 = vector.load %arg5[%c0_12, %c0_13] : memref<1x128xf32, #tpu.memory_space<vmem>>, vector<1x128xf32>
      %14 = vector.broadcast %13 : vector<1x128xf32> to vector<32x128xf32>
      %15 = arith.addf %12, %14 : vector<32x128xf32>
      %c0_14 = arith.constant 0 : index
      %c0_15 = arith.constant 0 : index
      %16 = vector.load %arg6[%c0_14, %c0_15] : memref<32x128xf32, #tpu.memory_space<vmem>>, vector<32x128xf32>
      tpu.vector_store %arg6[%c0_14, %c0_15], %15 {strides = array<i32>} : memref<32x128xf32, #tpu.memory_space<vmem>>, vector<32x128xf32>,
    } else {
    }
    return
  }
  func.func @transform_0(%arg0: i32, %arg1: i32, %arg2: i32) -> (i32, i32) {
    %c0_i32 = arith.constant 0 : i32
    return %arg0, %arg2 : i32, i32
  }
  func.func @transform_1(%arg0: i32, %arg1: i32, %arg2: i32) -> (i32, i32) {
    %c0_i32 = arith.constant 0 : i32
    return %arg2, %arg1 : i32, i32
  }
  func.func @transform_2(%arg0: i32, %arg1: i32, %arg2: i32) -> (i32, i32) {
    %c0_i32 = arith.constant 0 : i32
    %c0_i32_0 = arith.constant 0 : i32
    return %c0_i32, %arg1 : i32, i32
  }
  func.func @transform_3(%arg0: i32, %arg1: i32, %arg2: i32) -> (i32, i32) {
    %c0_i32 = arith.constant 0 : i32
    return %arg0, %arg1 : i32, i32
  }
}

module attributes {stable_mosaic.version = 11 : i64} {
  func.func @_matmul_bias_kernel(%arg0: i32, %arg1: i32, %arg2: i32, %arg3: memref<32x384xbf16, #tpu.memory_space<vmem>>, %arg4: memref<384x128xbf16, #tpu.memory_space<vmem>>, %arg5: memref<1x128xf32, #tpu.memory_space<vmem>>, %arg6: memref<32x128xf32, #tpu.memory_space<vmem>>, %arg7: memref<32x128xf32, #tpu.memory_space<vmem>>) attributes {dimension_semantics = [#tpu.dimension_semantics<parallel>, #tpu.dimension_semantics<parallel>, #tpu.dimension_semantics<arbitrary>], iteration_bounds = array<i64: 1, 1, 1>, scalar_prefetch = 0 : i64, scratch_operands = 1 : i64, tpu.core_type = #tpu.core_type<tc>, window_params = [{transform_indices = @transform_0, window_bounds = array<i64: 32, 384>}, {transform_indices = @transform_1, window_bounds = array<i64: 384, 128>}, {transform_indices = @transform_2, window_bounds = array<i64: 1, 128>}, {transform_indices = @transform_3, window_bounds = array<i64: 32, 128>}]} {
    %c0_i32 = arith.constant 0 : i32
    %0 = arith.cmpi eq, %arg2, %c0_i32 : i32
    %1 = arith.extui %0 : i1 to i32
    %c0_i32_0 = arith.constant 0 : i32
    %2 = arith.cmpi ne, %1, %c0_i32_0 : i32
    scf.if %2 {
      %cst_10 = arith.constant 0.000000e+00 : f32
      %12 = vector.broadcast %cst_10 : f32 to vector<32x128xf32>
      %c0_11 = arith.constant 0 : index
      %c0_12 = arith.constant 0 : index
      %13 = vector.load %arg7[%c0_11, %c0_12] : memref<32x128xf32, #tpu.memory_space<vmem>>, vector<32x128xf32>
      tpu.vector_store %arg7[%c0_11, %c0_12], %12 {strides = array<i32>} : memref<32x128xf32, #tpu.memory_space<vmem>>, vector<32x128xf32>,
    } else {
    }
    %c0 = arith.constant 0 : index
    %c0_1 = arith.constant 0 : index
    %3 = vector.load %arg7[%c0, %c0_1] : memref<32x128xf32, #tpu.memory_space<vmem>>, vector<32x128xf32>
    %c0_2 = arith.constant 0 : index
    %c0_3 = arith.constant 0 : index
    %4 = vector.load %arg3[%c0_2, %c0_3] : memref<32x384xbf16, #tpu.memory_space<vmem>>, vector<32x384xbf16>
    %c0_4 = arith.constant 0 : index
    %c0_5 = arith.constant 0 : index
    %5 = vector.load %arg4[%c0_4, %c0_5] : memref<384x128xbf16, #tpu.memory_space<vmem>>, vector<384x128xbf16>
    %cst = arith.constant dense<0.000000e+00> : vector<32x128xf32>
    %6 = tpu.matmul %4, %5, %cst {dimension_numbers = #tpu.dot_dimension_numbers<[1], [0], [0], [1], [0, 0, 1, 1], [], []>} : vector<32x384xbf16>, vector<384x128xbf16>, vector<32x128xf32> -> vector<32x128xf32>
    %7 = arith.addf %3, %6 : vector<32x128xf32>
    %c0_6 = arith.constant 0 : index
    %c0_7 = arith.constant 0 : index
    %8 = vector.load %arg7[%c0_6, %c0_7] : memref<32x128xf32, #tpu.memory_space<vmem>>, vector<32x128xf32>
    tpu.vector_store %arg7[%c0_6, %c0_7], %7 {strides = array<i32>} : memref<32x128xf32, #tpu.memory_space<vmem>>, vector<32x128xf32>,
    %c0_i32_8 = arith.constant 0 : i32
    %9 = arith.cmpi eq, %arg2, %c0_i32_8 : i32
    %10 = arith.extui %9 : i1 to i32
    %c0_i32_9 = arith.constant 0 : i32
    %11 = arith.cmpi ne, %10, %c0_i32_9 : i32
    scf.if %11 {
      %c0_10 = arith.constant 0 : index
      %c0_11 = arith.constant 0 : index
      %12 = vector.load %arg7[%c0_10, %c0_11] : memref<32x128xf32, #tpu.memory_space<vmem>>, vector<32x128xf32>
      %c0_12 = arith.constant 0 : index
      %c0_13 = arith.constant 0 : index
      %13 = vector.load %arg5[%c0_12, %c0_13] : memref<1x128xf32, #tpu.memory_space<vmem>>, vector<1x128xf32>
      %14 = vector.broadcast %13 : vector<1x128xf32> to vector<32x128xf32>
      %15 = arith.addf %12, %14 : vector<32x128xf32>
      %c0_14 = arith.constant 0 : index
      %c0_15 = arith.constant 0 : index
      %16 = vector.load %arg6[%c0_14, %c0_15] : memref<32x128xf32, #tpu.memory_space<vmem>>, vector<32x128xf32>
      tpu.vector_store %arg6[%c0_14, %c0_15], %15 {strides = array<i32>} : memref<32x128xf32, #tpu.memory_space<vmem>>, vector<32x128xf32>,
    } else {
    }
    return
  }
  func.func @transform_0(%arg0: i32, %arg1: i32, %arg2: i32) -> (i32, i32) {
    %c0_i32 = arith.constant 0 : i32
    return %arg0, %arg2 : i32, i32
  }
  func.func @transform_1(%arg0: i32, %arg1: i32, %arg2: i32) -> (i32, i32) {
    %c0_i32 = arith.constant 0 : i32
    return %arg2, %arg1 : i32, i32
  }
  func.func @transform_2(%arg0: i32, %arg1: i32, %arg2: i32) -> (i32, i32) {
    %c0_i32 = arith.constant 0 : i32
    %c0_i32_0 = arith.constant 0 : i32
    return %c0_i32, %arg1 : i32, i32
  }
  func.func @transform_3(%arg0: i32, %arg1: i32, %arg2: i32) -> (i32, i32) {
    %c0_i32 = arith.constant 0 : i32
    return %arg0, %arg1 : i32, i32
  }
}

module attributes {stable_mosaic.version = 11 : i64} {
  func.func @_matmul_bias_kernel(%arg0: i32, %arg1: i32, %arg2: i32, %arg3: memref<8x512xbf16, #tpu.memory_space<vmem>>, %arg4: memref<512x128xbf16, #tpu.memory_space<vmem>>, %arg5: memref<1x128xf32, #tpu.memory_space<vmem>>, %arg6: memref<8x128xf32, #tpu.memory_space<vmem>>, %arg7: memref<8x128xf32, #tpu.memory_space<vmem>>) attributes {dimension_semantics = [#tpu.dimension_semantics<parallel>, #tpu.dimension_semantics<parallel>, #tpu.dimension_semantics<arbitrary>], iteration_bounds = array<i64: 1, 1, 1>, scalar_prefetch = 0 : i64, scratch_operands = 1 : i64, tpu.core_type = #tpu.core_type<tc>, window_params = [{transform_indices = @transform_0, window_bounds = array<i64: 8, 512>}, {transform_indices = @transform_1, window_bounds = array<i64: 512, 128>}, {transform_indices = @transform_2, window_bounds = array<i64: 1, 128>}, {transform_indices = @transform_3, window_bounds = array<i64: 8, 128>}]} {
    %c0_i32 = arith.constant 0 : i32
    %0 = arith.cmpi eq, %arg2, %c0_i32 : i32
    %1 = arith.extui %0 : i1 to i32
    %c0_i32_0 = arith.constant 0 : i32
    %2 = arith.cmpi ne, %1, %c0_i32_0 : i32
    scf.if %2 {
      %cst_10 = arith.constant 0.000000e+00 : f32
      %12 = vector.broadcast %cst_10 : f32 to vector<8x128xf32>
      %c0_11 = arith.constant 0 : index
      %c0_12 = arith.constant 0 : index
      %13 = vector.load %arg7[%c0_11, %c0_12] : memref<8x128xf32, #tpu.memory_space<vmem>>, vector<8x128xf32>
      tpu.vector_store %arg7[%c0_11, %c0_12], %12 {strides = array<i32>} : memref<8x128xf32, #tpu.memory_space<vmem>>, vector<8x128xf32>,
    } else {
    }
    %c0 = arith.constant 0 : index
    %c0_1 = arith.constant 0 : index
    %3 = vector.load %arg7[%c0, %c0_1] : memref<8x128xf32, #tpu.memory_space<vmem>>, vector<8x128xf32>
    %c0_2 = arith.constant 0 : index
    %c0_3 = arith.constant 0 : index
    %4 = vector.load %arg3[%c0_2, %c0_3] : memref<8x512xbf16, #tpu.memory_space<vmem>>, vector<8x512xbf16>
    %c0_4 = arith.constant 0 : index
    %c0_5 = arith.constant 0 : index
    %5 = vector.load %arg4[%c0_4, %c0_5] : memref<512x128xbf16, #tpu.memory_space<vmem>>, vector<512x128xbf16>
    %cst = arith.constant dense<0.000000e+00> : vector<8x128xf32>
    %6 = tpu.matmul %4, %5, %cst {dimension_numbers = #tpu.dot_dimension_numbers<[1], [0], [0], [1], [0, 0, 1, 1], [], []>} : vector<8x512xbf16>, vector<512x128xbf16>, vector<8x128xf32> -> vector<8x128xf32>
    %7 = arith.addf %3, %6 : vector<8x128xf32>
    %c0_6 = arith.constant 0 : index
    %c0_7 = arith.constant 0 : index
    %8 = vector.load %arg7[%c0_6, %c0_7] : memref<8x128xf32, #tpu.memory_space<vmem>>, vector<8x128xf32>
    tpu.vector_store %arg7[%c0_6, %c0_7], %7 {strides = array<i32>} : memref<8x128xf32, #tpu.memory_space<vmem>>, vector<8x128xf32>,
    %c0_i32_8 = arith.constant 0 : i32
    %9 = arith.cmpi eq, %arg2, %c0_i32_8 : i32
    %10 = arith.extui %9 : i1 to i32
    %c0_i32_9 = arith.constant 0 : i32
    %11 = arith.cmpi ne, %10, %c0_i32_9 : i32
    scf.if %11 {
      %c0_10 = arith.constant 0 : index
      %c0_11 = arith.constant 0 : index
      %12 = vector.load %arg7[%c0_10, %c0_11] : memref<8x128xf32, #tpu.memory_space<vmem>>, vector<8x128xf32>
      %c0_12 = arith.constant 0 : index
      %c0_13 = arith.constant 0 : index
      %13 = vector.load %arg5[%c0_12, %c0_13] : memref<1x128xf32, #tpu.memory_space<vmem>>, vector<1x128xf32>
      %14 = vector.broadcast %13 : vector<1x128xf32> to vector<8x128xf32>
      %15 = arith.addf %12, %14 : vector<8x128xf32>
      %c0_14 = arith.constant 0 : index
      %c0_15 = arith.constant 0 : index
      %16 = vector.load %arg6[%c0_14, %c0_15] : memref<8x128xf32, #tpu.memory_space<vmem>>, vector<8x128xf32>
      tpu.vector_store %arg6[%c0_14, %c0_15], %15 {strides = array<i32>} : memref<8x128xf32, #tpu.memory_space<vmem>>, vector<8x128xf32>,
    } else {
    }
    return
  }
  func.func @transform_0(%arg0: i32, %arg1: i32, %arg2: i32) -> (i32, i32) {
    %c0_i32 = arith.constant 0 : i32
    return %arg0, %arg2 : i32, i32
  }
  func.func @transform_1(%arg0: i32, %arg1: i32, %arg2: i32) -> (i32, i32) {
    %c0_i32 = arith.constant 0 : i32
    return %arg2, %arg1 : i32, i32
  }
  func.func @transform_2(%arg0: i32, %arg1: i32, %arg2: i32) -> (i32, i32) {
    %c0_i32 = arith.constant 0 : i32
    %c0_i32_0 = arith.constant 0 : i32
    return %c0_i32, %arg1 : i32, i32
  }
  func.func @transform_3(%arg0: i32, %arg1: i32, %arg2: i32) -> (i32, i32) {
    %c0_i32 = arith.constant 0 : i32
    return %arg0, %arg1 : i32, i32
  }
}

module attributes {stable_mosaic.version = 11 : i64} {
  func.func @_norm_single_kernel(%arg0: i32, %arg1: memref<1x8x32xf32, #tpu.memory_space<vmem>>, %arg2: memref<1x8x32xf32, #tpu.memory_space<vmem>>) attributes {dimension_semantics = [#tpu.dimension_semantics<parallel>], iteration_bounds = array<i64: 2>, scalar_prefetch = 0 : i64, scratch_operands = 0 : i64, tpu.core_type = #tpu.core_type<tc>, window_params = [{transform_indices = @transform_0, window_bounds = array<i64: 1, 8, 32>}, {transform_indices = @transform_1, window_bounds = array<i64: 1, 8, 32>}]} {
    %c0 = arith.constant 0 : index
    %c0_0 = arith.constant 0 : index
    %c0_1 = arith.constant 0 : index
    %0 = vector.load %arg1[%c0, %c0_0, %c0_1] : memref<1x8x32xf32, #tpu.memory_space<vmem>>, vector<1x8x32xf32>
    %cst = arith.constant dense<0.000000e+00> : vector<1x32xf32>
    %1 = vector.multi_reduction <add>, %0, %cst [1] : vector<1x8x32xf32> to vector<1x32xf32>
    %2 = vector.shape_cast %1 : vector<1x32xf32> to vector<1x1x32xf32>
    %3 = arith.mulf %0, %0 : vector<1x8x32xf32>
    %cst_2 = arith.constant dense<0.000000e+00> : vector<1x32xf32>
    %4 = vector.multi_reduction <add>, %3, %cst_2 [1] : vector<1x8x32xf32> to vector<1x32xf32>
    %5 = vector.shape_cast %4 : vector<1x32xf32> to vector<1x1x32xf32>
    %cst_3 = arith.constant 4.000000e+00 : f32
    %6 = vector.broadcast %cst_3 : f32 to vector<1x1x32xf32>
    %7 = arith.divf %2, %6 : vector<1x1x32xf32>
    %cst_4 = arith.constant 4.000000e+00 : f32
    %8 = vector.broadcast %cst_4 : f32 to vector<1x1x32xf32>
    %9 = arith.divf %5, %8 : vector<1x1x32xf32>
    %10 = arith.mulf %7, %7 : vector<1x1x32xf32>
    %11 = arith.subf %9, %10 : vector<1x1x32xf32>
    %cst_5 = arith.constant 0.000000e+00 : f32
    %12 = vector.broadcast %cst_5 : f32 to vector<1x1x32xf32>
    %13 = arith.maximumf %11, %12 : vector<1x1x32xf32>
    %cst_6 = arith.constant 9.99999974E-6 : f32
    %14 = vector.broadcast %cst_6 : f32 to vector<1x1x32xf32>
    %15 = arith.addf %13, %14 : vector<1x1x32xf32>
    %16 = math.rsqrt %15 : vector<1x1x32xf32>
    %17 = vector.broadcast %7 : vector<1x1x32xf32> to vector<1x8x32xf32>
    %18 = arith.subf %0, %17 : vector<1x8x32xf32>
    %19 = vector.broadcast %16 : vector<1x1x32xf32> to vector<1x8x32xf32>
    %20 = arith.mulf %18, %19 : vector<1x8x32xf32>
    %cst_7 = arith.constant 0.000000e+00 : f32
    %21 = vector.broadcast %cst_7 : f32 to vector<1x8x32xf32>
    %22 = arith.cmpf oge, %20, %21 : vector<1x8x32xf32>
    %cst_8 = arith.constant 1.000000e-01 : f32
    %23 = vector.broadcast %cst_8 : f32 to vector<1x8x32xf32>
    %24 = arith.mulf %23, %20 : vector<1x8x32xf32>
    %25 = arith.select %22, %20, %24 : vector<1x8x32xi1>, vector<1x8x32xf32>
    %c0_9 = arith.constant 0 : index
    %c0_10 = arith.constant 0 : index
    %c0_11 = arith.constant 0 : index
    %26 = vector.load %arg2[%c0_9, %c0_10, %c0_11] : memref<1x8x32xf32, #tpu.memory_space<vmem>>, vector<1x8x32xf32>
    tpu.vector_store %arg2[%c0_9, %c0_10, %c0_11], %25 {strides = array<i32>} : memref<1x8x32xf32, #tpu.memory_space<vmem>>, vector<1x8x32xf32>,
    return
  }
  func.func @transform_0(%arg0: i32) -> (i32, i32, i32) {
    %c0_i32 = arith.constant 0 : i32
    %c0_i32_0 = arith.constant 0 : i32
    %c0_i32_1 = arith.constant 0 : i32
    return %arg0, %c0_i32, %c0_i32_0 : i32, i32, i32
  }
  func.func @transform_1(%arg0: i32) -> (i32, i32, i32) {
    %c0_i32 = arith.constant 0 : i32
    %c0_i32_0 = arith.constant 0 : i32
    %c0_i32_1 = arith.constant 0 : i32
    return %arg0, %c0_i32, %c0_i32_0 : i32, i32, i32
  }
}

module attributes {stable_mosaic.version = 11 : i64} {
  func.func @_matmul_bias_kernel(%arg0: i32, %arg1: i32, %arg2: i32, %arg3: memref<8x384xbf16, #tpu.memory_space<vmem>>, %arg4: memref<384x128xbf16, #tpu.memory_space<vmem>>, %arg5: memref<1x128xf32, #tpu.memory_space<vmem>>, %arg6: memref<8x128xf32, #tpu.memory_space<vmem>>, %arg7: memref<8x128xf32, #tpu.memory_space<vmem>>) attributes {dimension_semantics = [#tpu.dimension_semantics<parallel>, #tpu.dimension_semantics<parallel>, #tpu.dimension_semantics<arbitrary>], iteration_bounds = array<i64: 1, 1, 1>, scalar_prefetch = 0 : i64, scratch_operands = 1 : i64, tpu.core_type = #tpu.core_type<tc>, window_params = [{transform_indices = @transform_0, window_bounds = array<i64: 8, 384>}, {transform_indices = @transform_1, window_bounds = array<i64: 384, 128>}, {transform_indices = @transform_2, window_bounds = array<i64: 1, 128>}, {transform_indices = @transform_3, window_bounds = array<i64: 8, 128>}]} {
    %c0_i32 = arith.constant 0 : i32
    %0 = arith.cmpi eq, %arg2, %c0_i32 : i32
    %1 = arith.extui %0 : i1 to i32
    %c0_i32_0 = arith.constant 0 : i32
    %2 = arith.cmpi ne, %1, %c0_i32_0 : i32
    scf.if %2 {
      %cst_10 = arith.constant 0.000000e+00 : f32
      %12 = vector.broadcast %cst_10 : f32 to vector<8x128xf32>
      %c0_11 = arith.constant 0 : index
      %c0_12 = arith.constant 0 : index
      %13 = vector.load %arg7[%c0_11, %c0_12] : memref<8x128xf32, #tpu.memory_space<vmem>>, vector<8x128xf32>
      tpu.vector_store %arg7[%c0_11, %c0_12], %12 {strides = array<i32>} : memref<8x128xf32, #tpu.memory_space<vmem>>, vector<8x128xf32>,
    } else {
    }
    %c0 = arith.constant 0 : index
    %c0_1 = arith.constant 0 : index
    %3 = vector.load %arg7[%c0, %c0_1] : memref<8x128xf32, #tpu.memory_space<vmem>>, vector<8x128xf32>
    %c0_2 = arith.constant 0 : index
    %c0_3 = arith.constant 0 : index
    %4 = vector.load %arg3[%c0_2, %c0_3] : memref<8x384xbf16, #tpu.memory_space<vmem>>, vector<8x384xbf16>
    %c0_4 = arith.constant 0 : index
    %c0_5 = arith.constant 0 : index
    %5 = vector.load %arg4[%c0_4, %c0_5] : memref<384x128xbf16, #tpu.memory_space<vmem>>, vector<384x128xbf16>
    %cst = arith.constant dense<0.000000e+00> : vector<8x128xf32>
    %6 = tpu.matmul %4, %5, %cst {dimension_numbers = #tpu.dot_dimension_numbers<[1], [0], [0], [1], [0, 0, 1, 1], [], []>} : vector<8x384xbf16>, vector<384x128xbf16>, vector<8x128xf32> -> vector<8x128xf32>
    %7 = arith.addf %3, %6 : vector<8x128xf32>
    %c0_6 = arith.constant 0 : index
    %c0_7 = arith.constant 0 : index
    %8 = vector.load %arg7[%c0_6, %c0_7] : memref<8x128xf32, #tpu.memory_space<vmem>>, vector<8x128xf32>
    tpu.vector_store %arg7[%c0_6, %c0_7], %7 {strides = array<i32>} : memref<8x128xf32, #tpu.memory_space<vmem>>, vector<8x128xf32>,
    %c0_i32_8 = arith.constant 0 : i32
    %9 = arith.cmpi eq, %arg2, %c0_i32_8 : i32
    %10 = arith.extui %9 : i1 to i32
    %c0_i32_9 = arith.constant 0 : i32
    %11 = arith.cmpi ne, %10, %c0_i32_9 : i32
    scf.if %11 {
      %c0_10 = arith.constant 0 : index
      %c0_11 = arith.constant 0 : index
      %12 = vector.load %arg7[%c0_10, %c0_11] : memref<8x128xf32, #tpu.memory_space<vmem>>, vector<8x128xf32>
      %c0_12 = arith.constant 0 : index
      %c0_13 = arith.constant 0 : index
      %13 = vector.load %arg5[%c0_12, %c0_13] : memref<1x128xf32, #tpu.memory_space<vmem>>, vector<1x128xf32>
      %14 = vector.broadcast %13 : vector<1x128xf32> to vector<8x128xf32>
      %15 = arith.addf %12, %14 : vector<8x128xf32>
      %c0_14 = arith.constant 0 : index
      %c0_15 = arith.constant 0 : index
      %16 = vector.load %arg6[%c0_14, %c0_15] : memref<8x128xf32, #tpu.memory_space<vmem>>, vector<8x128xf32>
      tpu.vector_store %arg6[%c0_14, %c0_15], %15 {strides = array<i32>} : memref<8x128xf32, #tpu.memory_space<vmem>>, vector<8x128xf32>,
    } else {
    }
    return
  }
  func.func @transform_0(%arg0: i32, %arg1: i32, %arg2: i32) -> (i32, i32) {
    %c0_i32 = arith.constant 0 : i32
    return %arg0, %arg2 : i32, i32
  }
  func.func @transform_1(%arg0: i32, %arg1: i32, %arg2: i32) -> (i32, i32) {
    %c0_i32 = arith.constant 0 : i32
    return %arg2, %arg1 : i32, i32
  }
  func.func @transform_2(%arg0: i32, %arg1: i32, %arg2: i32) -> (i32, i32) {
    %c0_i32 = arith.constant 0 : i32
    %c0_i32_0 = arith.constant 0 : i32
    return %c0_i32, %arg1 : i32, i32
  }
  func.func @transform_3(%arg0: i32, %arg1: i32, %arg2: i32) -> (i32, i32) {
    %c0_i32 = arith.constant 0 : i32
    return %arg0, %arg1 : i32, i32
  }
}

module attributes {stable_mosaic.version = 11 : i64} {
  func.func @_gated_norm_single_kernel(%arg0: i32, %arg1: memref<1x8x64xf32, #tpu.memory_space<vmem>>, %arg2: memref<1x8x32xf32, #tpu.memory_space<vmem>>) attributes {dimension_semantics = [#tpu.dimension_semantics<parallel>], iteration_bounds = array<i64: 2>, scalar_prefetch = 0 : i64, scratch_operands = 0 : i64, tpu.core_type = #tpu.core_type<tc>, window_params = [{transform_indices = @transform_0, window_bounds = array<i64: 1, 8, 64>}, {transform_indices = @transform_1, window_bounds = array<i64: 1, 8, 32>}]} {
    %c0 = arith.constant 0 : index
    %c0_0 = arith.constant 0 : index
    %c0_1 = arith.constant 0 : index
    %0 = vector.load %arg1[%c0, %c0_0, %c0_1] : memref<1x8x64xf32, #tpu.memory_space<vmem>>, vector<1x8x64xf32>
    %1 = vector.extract_strided_slice %0 {offsets = [0, 0, 0], sizes = [1, 8, 32], strides = [1, 1, 1]} : vector<1x8x64xf32> to vector<1x8x32xf32>
    %2 = vector.extract_strided_slice %0 {offsets = [0, 0, 32], sizes = [1, 8, 32], strides = [1, 1, 1]} : vector<1x8x64xf32> to vector<1x8x32xf32>
    %cst = arith.constant 0.000000e+00 : f32
    %3 = vector.broadcast %cst : f32 to vector<1x8x32xf32>
    %4 = arith.cmpf oge, %1, %3 : vector<1x8x32xf32>
    %cst_2 = arith.constant 2.000000e-01 : f32
    %5 = vector.broadcast %cst_2 : f32 to vector<1x8x32xf32>
    %6 = arith.mulf %5, %1 : vector<1x8x32xf32>
    %7 = arith.select %4, %1, %6 : vector<1x8x32xi1>, vector<1x8x32xf32>
    %8 = arith.negf %2 : vector<1x8x32xf32>
    %9 = math.exp %8 : vector<1x8x32xf32>
    %cst_3 = arith.constant 1.000000e+00 : f32
    %10 = vector.broadcast %cst_3 : f32 to vector<1x8x32xf32>
    %11 = arith.addf %10, %9 : vector<1x8x32xf32>
    %12 = arith.divf %10, %11 : vector<1x8x32xf32>
    %13 = arith.mulf %7, %12 : vector<1x8x32xf32>
    %cst_4 = arith.constant dense<0.000000e+00> : vector<1x32xf32>
    %14 = vector.multi_reduction <add>, %13, %cst_4 [1] : vector<1x8x32xf32> to vector<1x32xf32>
    %15 = vector.shape_cast %14 : vector<1x32xf32> to vector<1x1x32xf32>
    %16 = arith.mulf %13, %13 : vector<1x8x32xf32>
    %cst_5 = arith.constant dense<0.000000e+00> : vector<1x32xf32>
    %17 = vector.multi_reduction <add>, %16, %cst_5 [1] : vector<1x8x32xf32> to vector<1x32xf32>
    %18 = vector.shape_cast %17 : vector<1x32xf32> to vector<1x1x32xf32>
    %cst_6 = arith.constant 4.000000e+00 : f32
    %19 = vector.broadcast %cst_6 : f32 to vector<1x1x32xf32>
    %20 = arith.divf %15, %19 : vector<1x1x32xf32>
    %cst_7 = arith.constant 4.000000e+00 : f32
    %21 = vector.broadcast %cst_7 : f32 to vector<1x1x32xf32>
    %22 = arith.divf %18, %21 : vector<1x1x32xf32>
    %23 = arith.mulf %20, %20 : vector<1x1x32xf32>
    %24 = arith.subf %22, %23 : vector<1x1x32xf32>
    %cst_8 = arith.constant 0.000000e+00 : f32
    %25 = vector.broadcast %cst_8 : f32 to vector<1x1x32xf32>
    %26 = arith.maximumf %24, %25 : vector<1x1x32xf32>
    %cst_9 = arith.constant 9.99999974E-6 : f32
    %27 = vector.broadcast %cst_9 : f32 to vector<1x1x32xf32>
    %28 = arith.addf %26, %27 : vector<1x1x32xf32>
    %29 = math.rsqrt %28 : vector<1x1x32xf32>
    %30 = vector.broadcast %20 : vector<1x1x32xf32> to vector<1x8x32xf32>
    %31 = arith.subf %13, %30 : vector<1x8x32xf32>
    %32 = vector.broadcast %29 : vector<1x1x32xf32> to vector<1x8x32xf32>
    %33 = arith.mulf %31, %32 : vector<1x8x32xf32>
    %c0_10 = arith.constant 0 : index
    %c0_11 = arith.constant 0 : index
    %c0_12 = arith.constant 0 : index
    %34 = vector.load %arg2[%c0_10, %c0_11, %c0_12] : memref<1x8x32xf32, #tpu.memory_space<vmem>>, vector<1x8x32xf32>
    tpu.vector_store %arg2[%c0_10, %c0_11, %c0_12], %33 {strides = array<i32>} : memref<1x8x32xf32, #tpu.memory_space<vmem>>, vector<1x8x32xf32>,
    return
  }
  func.func @transform_0(%arg0: i32) -> (i32, i32, i32) {
    %c0_i32 = arith.constant 0 : i32
    %c0_i32_0 = arith.constant 0 : i32
    %c0_i32_1 = arith.constant 0 : i32
    return %arg0, %c0_i32, %c0_i32_0 : i32, i32, i32
  }
  func.func @transform_1(%arg0: i32) -> (i32, i32, i32) {
    %c0_i32 = arith.constant 0 : i32
    %c0_i32_0 = arith.constant 0 : i32
    %c0_i32_1 = arith.constant 0 : i32
    return %arg0, %c0_i32, %c0_i32_0 : i32, i32, i32
  }
}

module attributes {stable_mosaic.version = 11 : i64} {
  func.func @_matmul_bias_kernel(%arg0: i32, %arg1: i32, %arg2: i32, %arg3: memref<8x128xbf16, #tpu.memory_space<vmem>>, %arg4: memref<128x128xbf16, #tpu.memory_space<vmem>>, %arg5: memref<1x128xf32, #tpu.memory_space<vmem>>, %arg6: memref<8x128xf32, #tpu.memory_space<vmem>>, %arg7: memref<8x128xf32, #tpu.memory_space<vmem>>) attributes {dimension_semantics = [#tpu.dimension_semantics<parallel>, #tpu.dimension_semantics<parallel>, #tpu.dimension_semantics<arbitrary>], iteration_bounds = array<i64: 1, 1, 1>, scalar_prefetch = 0 : i64, scratch_operands = 1 : i64, tpu.core_type = #tpu.core_type<tc>, window_params = [{transform_indices = @transform_0, window_bounds = array<i64: 8, 128>}, {transform_indices = @transform_1, window_bounds = array<i64: 128, 128>}, {transform_indices = @transform_2, window_bounds = array<i64: 1, 128>}, {transform_indices = @transform_3, window_bounds = array<i64: 8, 128>}]} {
    %c0_i32 = arith.constant 0 : i32
    %0 = arith.cmpi eq, %arg2, %c0_i32 : i32
    %1 = arith.extui %0 : i1 to i32
    %c0_i32_0 = arith.constant 0 : i32
    %2 = arith.cmpi ne, %1, %c0_i32_0 : i32
    scf.if %2 {
      %cst_10 = arith.constant 0.000000e+00 : f32
      %12 = vector.broadcast %cst_10 : f32 to vector<8x128xf32>
      %c0_11 = arith.constant 0 : index
      %c0_12 = arith.constant 0 : index
      %13 = vector.load %arg7[%c0_11, %c0_12] : memref<8x128xf32, #tpu.memory_space<vmem>>, vector<8x128xf32>
      tpu.vector_store %arg7[%c0_11, %c0_12], %12 {strides = array<i32>} : memref<8x128xf32, #tpu.memory_space<vmem>>, vector<8x128xf32>,
    } else {
    }
    %c0 = arith.constant 0 : index
    %c0_1 = arith.constant 0 : index
    %3 = vector.load %arg7[%c0, %c0_1] : memref<8x128xf32, #tpu.memory_space<vmem>>, vector<8x128xf32>
    %c0_2 = arith.constant 0 : index
    %c0_3 = arith.constant 0 : index
    %4 = vector.load %arg3[%c0_2, %c0_3] : memref<8x128xbf16, #tpu.memory_space<vmem>>, vector<8x128xbf16>
    %c0_4 = arith.constant 0 : index
    %c0_5 = arith.constant 0 : index
    %5 = vector.load %arg4[%c0_4, %c0_5] : memref<128x128xbf16, #tpu.memory_space<vmem>>, vector<128x128xbf16>
    %cst = arith.constant dense<0.000000e+00> : vector<8x128xf32>
    %6 = tpu.matmul %4, %5, %cst {dimension_numbers = #tpu.dot_dimension_numbers<[1], [0], [0], [1], [0, 0, 1, 1], [], []>} : vector<8x128xbf16>, vector<128x128xbf16>, vector<8x128xf32> -> vector<8x128xf32>
    %7 = arith.addf %3, %6 : vector<8x128xf32>
    %c0_6 = arith.constant 0 : index
    %c0_7 = arith.constant 0 : index
    %8 = vector.load %arg7[%c0_6, %c0_7] : memref<8x128xf32, #tpu.memory_space<vmem>>, vector<8x128xf32>
    tpu.vector_store %arg7[%c0_6, %c0_7], %7 {strides = array<i32>} : memref<8x128xf32, #tpu.memory_space<vmem>>, vector<8x128xf32>,
    %c0_i32_8 = arith.constant 0 : i32
    %9 = arith.cmpi eq, %arg2, %c0_i32_8 : i32
    %10 = arith.extui %9 : i1 to i32
    %c0_i32_9 = arith.constant 0 : i32
    %11 = arith.cmpi ne, %10, %c0_i32_9 : i32
    scf.if %11 {
      %c0_10 = arith.constant 0 : index
      %c0_11 = arith.constant 0 : index
      %12 = vector.load %arg7[%c0_10, %c0_11] : memref<8x128xf32, #tpu.memory_space<vmem>>, vector<8x128xf32>
      %c0_12 = arith.constant 0 : index
      %c0_13 = arith.constant 0 : index
      %13 = vector.load %arg5[%c0_12, %c0_13] : memref<1x128xf32, #tpu.memory_space<vmem>>, vector<1x128xf32>
      %14 = vector.broadcast %13 : vector<1x128xf32> to vector<8x128xf32>
      %15 = arith.addf %12, %14 : vector<8x128xf32>
      %c0_14 = arith.constant 0 : index
      %c0_15 = arith.constant 0 : index
      %16 = vector.load %arg6[%c0_14, %c0_15] : memref<8x128xf32, #tpu.memory_space<vmem>>, vector<8x128xf32>
      tpu.vector_store %arg6[%c0_14, %c0_15], %15 {strides = array<i32>} : memref<8x128xf32, #tpu.memory_space<vmem>>, vector<8x128xf32>,
    } else {
    }
    return
  }
  func.func @transform_0(%arg0: i32, %arg1: i32, %arg2: i32) -> (i32, i32) {
    %c0_i32 = arith.constant 0 : i32
    return %arg0, %arg2 : i32, i32
  }
  func.func @transform_1(%arg0: i32, %arg1: i32, %arg2: i32) -> (i32, i32) {
    %c0_i32 = arith.constant 0 : i32
    return %arg2, %arg1 : i32, i32
  }
  func.func @transform_2(%arg0: i32, %arg1: i32, %arg2: i32) -> (i32, i32) {
    %c0_i32 = arith.constant 0 : i32
    %c0_i32_0 = arith.constant 0 : i32
    return %c0_i32, %arg1 : i32, i32
  }
  func.func @transform_3(%arg0: i32, %arg1: i32, %arg2: i32) -> (i32, i32) {
    %c0_i32 = arith.constant 0 : i32
    return %arg0, %arg1 : i32, i32
  }
}

module attributes {stable_mosaic.version = 11 : i64} {
  func.func @_matmul_bias_add_kernel(%arg0: i32, %arg1: i32, %arg2: i32, %arg3: memref<8x128xbf16, #tpu.memory_space<vmem>>, %arg4: memref<128x128xbf16, #tpu.memory_space<vmem>>, %arg5: memref<1x128xf32, #tpu.memory_space<vmem>>, %arg6: memref<8x128xf32, #tpu.memory_space<vmem>>, %arg7: memref<8x128xf32, #tpu.memory_space<vmem>>, %arg8: memref<8x128xf32, #tpu.memory_space<vmem>>) attributes {dimension_semantics = [#tpu.dimension_semantics<parallel>, #tpu.dimension_semantics<parallel>, #tpu.dimension_semantics<arbitrary>], iteration_bounds = array<i64: 1, 1, 1>, scalar_prefetch = 0 : i64, scratch_operands = 1 : i64, tpu.core_type = #tpu.core_type<tc>, window_params = [{transform_indices = @transform_0, window_bounds = array<i64: 8, 128>}, {transform_indices = @transform_1, window_bounds = array<i64: 128, 128>}, {transform_indices = @transform_2, window_bounds = array<i64: 1, 128>}, {transform_indices = @transform_3, window_bounds = array<i64: 8, 128>}, {transform_indices = @transform_4, window_bounds = array<i64: 8, 128>}]} {
    %c0_i32 = arith.constant 0 : i32
    %0 = arith.cmpi eq, %arg2, %c0_i32 : i32
    %1 = arith.extui %0 : i1 to i32
    %c0_i32_0 = arith.constant 0 : i32
    %2 = arith.cmpi ne, %1, %c0_i32_0 : i32
    scf.if %2 {
      %cst_10 = arith.constant 0.000000e+00 : f32
      %12 = vector.broadcast %cst_10 : f32 to vector<8x128xf32>
      %c0_11 = arith.constant 0 : index
      %c0_12 = arith.constant 0 : index
      %13 = vector.load %arg8[%c0_11, %c0_12] : memref<8x128xf32, #tpu.memory_space<vmem>>, vector<8x128xf32>
      tpu.vector_store %arg8[%c0_11, %c0_12], %12 {strides = array<i32>} : memref<8x128xf32, #tpu.memory_space<vmem>>, vector<8x128xf32>,
    } else {
    }
    %c0 = arith.constant 0 : index
    %c0_1 = arith.constant 0 : index
    %3 = vector.load %arg8[%c0, %c0_1] : memref<8x128xf32, #tpu.memory_space<vmem>>, vector<8x128xf32>
    %c0_2 = arith.constant 0 : index
    %c0_3 = arith.constant 0 : index
    %4 = vector.load %arg3[%c0_2, %c0_3] : memref<8x128xbf16, #tpu.memory_space<vmem>>, vector<8x128xbf16>
    %c0_4 = arith.constant 0 : index
    %c0_5 = arith.constant 0 : index
    %5 = vector.load %arg4[%c0_4, %c0_5] : memref<128x128xbf16, #tpu.memory_space<vmem>>, vector<128x128xbf16>
    %cst = arith.constant dense<0.000000e+00> : vector<8x128xf32>
    %6 = tpu.matmul %4, %5, %cst {dimension_numbers = #tpu.dot_dimension_numbers<[1], [0], [0], [1], [0, 0, 1, 1], [], []>} : vector<8x128xbf16>, vector<128x128xbf16>, vector<8x128xf32> -> vector<8x128xf32>
    %7 = arith.addf %3, %6 : vector<8x128xf32>
    %c0_6 = arith.constant 0 : index
    %c0_7 = arith.constant 0 : index
    %8 = vector.load %arg8[%c0_6, %c0_7] : memref<8x128xf32, #tpu.memory_space<vmem>>, vector<8x128xf32>
    tpu.vector_store %arg8[%c0_6, %c0_7], %7 {strides = array<i32>} : memref<8x128xf32, #tpu.memory_space<vmem>>, vector<8x128xf32>,
    %c0_i32_8 = arith.constant 0 : i32
    %9 = arith.cmpi eq, %arg2, %c0_i32_8 : i32
    %10 = arith.extui %9 : i1 to i32
    %c0_i32_9 = arith.constant 0 : i32
    %11 = arith.cmpi ne, %10, %c0_i32_9 : i32
    scf.if %11 {
      %c0_10 = arith.constant 0 : index
      %c0_11 = arith.constant 0 : index
      %12 = vector.load %arg8[%c0_10, %c0_11] : memref<8x128xf32, #tpu.memory_space<vmem>>, vector<8x128xf32>
      %c0_12 = arith.constant 0 : index
      %c0_13 = arith.constant 0 : index
      %13 = vector.load %arg5[%c0_12, %c0_13] : memref<1x128xf32, #tpu.memory_space<vmem>>, vector<1x128xf32>
      %14 = vector.broadcast %13 : vector<1x128xf32> to vector<8x128xf32>
      %15 = arith.addf %12, %14 : vector<8x128xf32>
      %c0_14 = arith.constant 0 : index
      %c0_15 = arith.constant 0 : index
      %16 = vector.load %arg6[%c0_14, %c0_15] : memref<8x128xf32, #tpu.memory_space<vmem>>, vector<8x128xf32>
      %17 = arith.addf %15, %16 : vector<8x128xf32>
      %c0_16 = arith.constant 0 : index
      %c0_17 = arith.constant 0 : index
      %18 = vector.load %arg7[%c0_16, %c0_17] : memref<8x128xf32, #tpu.memory_space<vmem>>, vector<8x128xf32>
      tpu.vector_store %arg7[%c0_16, %c0_17], %17 {strides = array<i32>} : memref<8x128xf32, #tpu.memory_space<vmem>>, vector<8x128xf32>,
    } else {
    }
    return
  }
  func.func @transform_0(%arg0: i32, %arg1: i32, %arg2: i32) -> (i32, i32) {
    %c0_i32 = arith.constant 0 : i32
    return %arg0, %arg2 : i32, i32
  }
  func.func @transform_1(%arg0: i32, %arg1: i32, %arg2: i32) -> (i32, i32) {
    %c0_i32 = arith.constant 0 : i32
    return %arg2, %arg1 : i32, i32
  }
  func.func @transform_2(%arg0: i32, %arg1: i32, %arg2: i32) -> (i32, i32) {
    %c0_i32 = arith.constant 0 : i32
    %c0_i32_0 = arith.constant 0 : i32
    return %c0_i32, %arg1 : i32, i32
  }
  func.func @transform_3(%arg0: i32, %arg1: i32, %arg2: i32) -> (i32, i32) {
    %c0_i32 = arith.constant 0 : i32
    return %arg0, %arg1 : i32, i32
  }
  func.func @transform_4(%arg0: i32, %arg1: i32, %arg2: i32) -> (i32, i32) {
    %c0_i32 = arith.constant 0 : i32
    return %arg0, %arg1 : i32, i32
  }
}

module attributes {stable_mosaic.version = 11 : i64} {
  func.func @_matmul_bias_kernel(%arg0: i32, %arg1: i32, %arg2: i32, %arg3: memref<32x128xbf16, #tpu.memory_space<vmem>>, %arg4: memref<128x128xbf16, #tpu.memory_space<vmem>>, %arg5: memref<1x128xf32, #tpu.memory_space<vmem>>, %arg6: memref<32x128xf32, #tpu.memory_space<vmem>>, %arg7: memref<32x128xf32, #tpu.memory_space<vmem>>) attributes {dimension_semantics = [#tpu.dimension_semantics<parallel>, #tpu.dimension_semantics<parallel>, #tpu.dimension_semantics<arbitrary>], iteration_bounds = array<i64: 1, 1, 1>, scalar_prefetch = 0 : i64, scratch_operands = 1 : i64, tpu.core_type = #tpu.core_type<tc>, window_params = [{transform_indices = @transform_0, window_bounds = array<i64: 32, 128>}, {transform_indices = @transform_1, window_bounds = array<i64: 128, 128>}, {transform_indices = @transform_2, window_bounds = array<i64: 1, 128>}, {transform_indices = @transform_3, window_bounds = array<i64: 32, 128>}]} {
    %c0_i32 = arith.constant 0 : i32
    %0 = arith.cmpi eq, %arg2, %c0_i32 : i32
    %1 = arith.extui %0 : i1 to i32
    %c0_i32_0 = arith.constant 0 : i32
    %2 = arith.cmpi ne, %1, %c0_i32_0 : i32
    scf.if %2 {
      %cst_10 = arith.constant 0.000000e+00 : f32
      %12 = vector.broadcast %cst_10 : f32 to vector<32x128xf32>
      %c0_11 = arith.constant 0 : index
      %c0_12 = arith.constant 0 : index
      %13 = vector.load %arg7[%c0_11, %c0_12] : memref<32x128xf32, #tpu.memory_space<vmem>>, vector<32x128xf32>
      tpu.vector_store %arg7[%c0_11, %c0_12], %12 {strides = array<i32>} : memref<32x128xf32, #tpu.memory_space<vmem>>, vector<32x128xf32>,
    } else {
    }
    %c0 = arith.constant 0 : index
    %c0_1 = arith.constant 0 : index
    %3 = vector.load %arg7[%c0, %c0_1] : memref<32x128xf32, #tpu.memory_space<vmem>>, vector<32x128xf32>
    %c0_2 = arith.constant 0 : index
    %c0_3 = arith.constant 0 : index
    %4 = vector.load %arg3[%c0_2, %c0_3] : memref<32x128xbf16, #tpu.memory_space<vmem>>, vector<32x128xbf16>
    %c0_4 = arith.constant 0 : index
    %c0_5 = arith.constant 0 : index
    %5 = vector.load %arg4[%c0_4, %c0_5] : memref<128x128xbf16, #tpu.memory_space<vmem>>, vector<128x128xbf16>
    %cst = arith.constant dense<0.000000e+00> : vector<32x128xf32>
    %6 = tpu.matmul %4, %5, %cst {dimension_numbers = #tpu.dot_dimension_numbers<[1], [0], [0], [1], [0, 0, 1, 1], [], []>} : vector<32x128xbf16>, vector<128x128xbf16>, vector<32x128xf32> -> vector<32x128xf32>
    %7 = arith.addf %3, %6 : vector<32x128xf32>
    %c0_6 = arith.constant 0 : index
    %c0_7 = arith.constant 0 : index
    %8 = vector.load %arg7[%c0_6, %c0_7] : memref<32x128xf32, #tpu.memory_space<vmem>>, vector<32x128xf32>
    tpu.vector_store %arg7[%c0_6, %c0_7], %7 {strides = array<i32>} : memref<32x128xf32, #tpu.memory_space<vmem>>, vector<32x128xf32>,
    %c0_i32_8 = arith.constant 0 : i32
    %9 = arith.cmpi eq, %arg2, %c0_i32_8 : i32
    %10 = arith.extui %9 : i1 to i32
    %c0_i32_9 = arith.constant 0 : i32
    %11 = arith.cmpi ne, %10, %c0_i32_9 : i32
    scf.if %11 {
      %c0_10 = arith.constant 0 : index
      %c0_11 = arith.constant 0 : index
      %12 = vector.load %arg7[%c0_10, %c0_11] : memref<32x128xf32, #tpu.memory_space<vmem>>, vector<32x128xf32>
      %c0_12 = arith.constant 0 : index
      %c0_13 = arith.constant 0 : index
      %13 = vector.load %arg5[%c0_12, %c0_13] : memref<1x128xf32, #tpu.memory_space<vmem>>, vector<1x128xf32>
      %14 = vector.broadcast %13 : vector<1x128xf32> to vector<32x128xf32>
      %15 = arith.addf %12, %14 : vector<32x128xf32>
      %c0_14 = arith.constant 0 : index
      %c0_15 = arith.constant 0 : index
      %16 = vector.load %arg6[%c0_14, %c0_15] : memref<32x128xf32, #tpu.memory_space<vmem>>, vector<32x128xf32>
      tpu.vector_store %arg6[%c0_14, %c0_15], %15 {strides = array<i32>} : memref<32x128xf32, #tpu.memory_space<vmem>>, vector<32x128xf32>,
    } else {
    }
    return
  }
  func.func @transform_0(%arg0: i32, %arg1: i32, %arg2: i32) -> (i32, i32) {
    %c0_i32 = arith.constant 0 : i32
    return %arg0, %arg2 : i32, i32
  }
  func.func @transform_1(%arg0: i32, %arg1: i32, %arg2: i32) -> (i32, i32) {
    %c0_i32 = arith.constant 0 : i32
    return %arg2, %arg1 : i32, i32
  }
  func.func @transform_2(%arg0: i32, %arg1: i32, %arg2: i32) -> (i32, i32) {
    %c0_i32 = arith.constant 0 : i32
    %c0_i32_0 = arith.constant 0 : i32
    return %c0_i32, %arg1 : i32, i32
  }
  func.func @transform_3(%arg0: i32, %arg1: i32, %arg2: i32) -> (i32, i32) {
    %c0_i32 = arith.constant 0 : i32
    return %arg0, %arg1 : i32, i32
  }
}

module attributes {stable_mosaic.version = 11 : i64} {
  func.func @_matmul_bias_add_kernel(%arg0: i32, %arg1: i32, %arg2: i32, %arg3: memref<32x128xbf16, #tpu.memory_space<vmem>>, %arg4: memref<128x128xbf16, #tpu.memory_space<vmem>>, %arg5: memref<1x128xf32, #tpu.memory_space<vmem>>, %arg6: memref<32x128xf32, #tpu.memory_space<vmem>>, %arg7: memref<32x128xf32, #tpu.memory_space<vmem>>, %arg8: memref<32x128xf32, #tpu.memory_space<vmem>>) attributes {dimension_semantics = [#tpu.dimension_semantics<parallel>, #tpu.dimension_semantics<parallel>, #tpu.dimension_semantics<arbitrary>], iteration_bounds = array<i64: 1, 1, 1>, scalar_prefetch = 0 : i64, scratch_operands = 1 : i64, tpu.core_type = #tpu.core_type<tc>, window_params = [{transform_indices = @transform_0, window_bounds = array<i64: 32, 128>}, {transform_indices = @transform_1, window_bounds = array<i64: 128, 128>}, {transform_indices = @transform_2, window_bounds = array<i64: 1, 128>}, {transform_indices = @transform_3, window_bounds = array<i64: 32, 128>}, {transform_indices = @transform_4, window_bounds = array<i64: 32, 128>}]} {
    %c0_i32 = arith.constant 0 : i32
    %0 = arith.cmpi eq, %arg2, %c0_i32 : i32
    %1 = arith.extui %0 : i1 to i32
    %c0_i32_0 = arith.constant 0 : i32
    %2 = arith.cmpi ne, %1, %c0_i32_0 : i32
    scf.if %2 {
      %cst_10 = arith.constant 0.000000e+00 : f32
      %12 = vector.broadcast %cst_10 : f32 to vector<32x128xf32>
      %c0_11 = arith.constant 0 : index
      %c0_12 = arith.constant 0 : index
      %13 = vector.load %arg8[%c0_11, %c0_12] : memref<32x128xf32, #tpu.memory_space<vmem>>, vector<32x128xf32>
      tpu.vector_store %arg8[%c0_11, %c0_12], %12 {strides = array<i32>} : memref<32x128xf32, #tpu.memory_space<vmem>>, vector<32x128xf32>,
    } else {
    }
    %c0 = arith.constant 0 : index
    %c0_1 = arith.constant 0 : index
    %3 = vector.load %arg8[%c0, %c0_1] : memref<32x128xf32, #tpu.memory_space<vmem>>, vector<32x128xf32>
    %c0_2 = arith.constant 0 : index
    %c0_3 = arith.constant 0 : index
    %4 = vector.load %arg3[%c0_2, %c0_3] : memref<32x128xbf16, #tpu.memory_space<vmem>>, vector<32x128xbf16>
    %c0_4 = arith.constant 0 : index
    %c0_5 = arith.constant 0 : index
    %5 = vector.load %arg4[%c0_4, %c0_5] : memref<128x128xbf16, #tpu.memory_space<vmem>>, vector<128x128xbf16>
    %cst = arith.constant dense<0.000000e+00> : vector<32x128xf32>
    %6 = tpu.matmul %4, %5, %cst {dimension_numbers = #tpu.dot_dimension_numbers<[1], [0], [0], [1], [0, 0, 1, 1], [], []>} : vector<32x128xbf16>, vector<128x128xbf16>, vector<32x128xf32> -> vector<32x128xf32>
    %7 = arith.addf %3, %6 : vector<32x128xf32>
    %c0_6 = arith.constant 0 : index
    %c0_7 = arith.constant 0 : index
    %8 = vector.load %arg8[%c0_6, %c0_7] : memref<32x128xf32, #tpu.memory_space<vmem>>, vector<32x128xf32>
    tpu.vector_store %arg8[%c0_6, %c0_7], %7 {strides = array<i32>} : memref<32x128xf32, #tpu.memory_space<vmem>>, vector<32x128xf32>,
    %c0_i32_8 = arith.constant 0 : i32
    %9 = arith.cmpi eq, %arg2, %c0_i32_8 : i32
    %10 = arith.extui %9 : i1 to i32
    %c0_i32_9 = arith.constant 0 : i32
    %11 = arith.cmpi ne, %10, %c0_i32_9 : i32
    scf.if %11 {
      %c0_10 = arith.constant 0 : index
      %c0_11 = arith.constant 0 : index
      %12 = vector.load %arg8[%c0_10, %c0_11] : memref<32x128xf32, #tpu.memory_space<vmem>>, vector<32x128xf32>
      %c0_12 = arith.constant 0 : index
      %c0_13 = arith.constant 0 : index
      %13 = vector.load %arg5[%c0_12, %c0_13] : memref<1x128xf32, #tpu.memory_space<vmem>>, vector<1x128xf32>
      %14 = vector.broadcast %13 : vector<1x128xf32> to vector<32x128xf32>
      %15 = arith.addf %12, %14 : vector<32x128xf32>
      %c0_14 = arith.constant 0 : index
      %c0_15 = arith.constant 0 : index
      %16 = vector.load %arg6[%c0_14, %c0_15] : memref<32x128xf32, #tpu.memory_space<vmem>>, vector<32x128xf32>
      %17 = arith.addf %15, %16 : vector<32x128xf32>
      %c0_16 = arith.constant 0 : index
      %c0_17 = arith.constant 0 : index
      %18 = vector.load %arg7[%c0_16, %c0_17] : memref<32x128xf32, #tpu.memory_space<vmem>>, vector<32x128xf32>
      tpu.vector_store %arg7[%c0_16, %c0_17], %17 {strides = array<i32>} : memref<32x128xf32, #tpu.memory_space<vmem>>, vector<32x128xf32>,
    } else {
    }
    return
  }
  func.func @transform_0(%arg0: i32, %arg1: i32, %arg2: i32) -> (i32, i32) {
    %c0_i32 = arith.constant 0 : i32
    return %arg0, %arg2 : i32, i32
  }
  func.func @transform_1(%arg0: i32, %arg1: i32, %arg2: i32) -> (i32, i32) {
    %c0_i32 = arith.constant 0 : i32
    return %arg2, %arg1 : i32, i32
  }
  func.func @transform_2(%arg0: i32, %arg1: i32, %arg2: i32) -> (i32, i32) {
    %c0_i32 = arith.constant 0 : i32
    %c0_i32_0 = arith.constant 0 : i32
    return %c0_i32, %arg1 : i32, i32
  }
  func.func @transform_3(%arg0: i32, %arg1: i32, %arg2: i32) -> (i32, i32) {
    %c0_i32 = arith.constant 0 : i32
    return %arg0, %arg1 : i32, i32
  }
  func.func @transform_4(%arg0: i32, %arg1: i32, %arg2: i32) -> (i32, i32) {
    %c0_i32 = arith.constant 0 : i32
    return %arg0, %arg1 : i32, i32
  }
}

</mosaic_0001>

<llo_original>
// kernel: encoder_2_forward.30
$region0: #{encoder_2_forward.30}
  #allocation0 [shape = 'u32[]', space=smem, size = 0x4, offset = 0x4, fixed_abs, tag = 'smem constant byte address 0x4 - core index']
  #allocation1 [shape = 'u32[144,128]{1,0:T(1,128)}', space=vmem, size = 0x12000, scoped, tag = 'internal scratch']
  %s0 = inlined_call_operand.vmem [shape: f32[2,1024,3], index: 0, kind: input, shape index: {}]
  %s1 = inlined_call_operand.vmem [shape: f32[2,1024,3], index: 1, kind: output, shape index: {}]
  %s2 = sld [smem:[#allocation0]]
  $region37: #{encoder_2_forward.30} parent=0
    _
  %s4 = ssub.s32 1, %s2
  %s5 = scalar_select 0, %s4, %s2
  loop: start=0, step=1, limit=4
  $region2: #{encoder_2_forward.30} parent=0 // loop_pre_header
    _
  $region3: #{encoder_2_forward.30} parent=0 // loop_header
    %s7 = sphi 0, %s11
    %p8 = scmp.ge.s32.totalorder %s7, 4
    %s17 = sphi 0, %s19
    %s20 = sphi 0, %s17
    %s21 = sphi 0, %s20
    %s37 = sphi 0, %s21
    %s43 = sphi 0, %s45
    %s46 = sphi 0, %s43
    %s47 = sphi 0, %s46
    %s63 = sphi 0, %s47
  $region4: #{encoder_2_forward.30} parent=0 // loop_header_branch
    %10 = sbr.rel (%p8) target = $region8
  $region5: #{encoder_2_forward.30} parent=0 // loop_body
    %s12 = ssub.s32 %s7, 1
    %s13 = ssub.s32 %s7, 2
    %s14 = sadd.s32 %s7, 1
    %s15 = ssub.s32 %s7, %s14
    %p16 = scmp.eq.s32.totalorder %s15, 0
    %s18 = sadd.s32 %s17, 1
    %s19 = scalar_select %p16, %s17, %s18
    %p22 = pneg %p16
    %p23 = scmp.eq.s32.totalorder %s7, 1
    %p24 = por %p22, %p23
    %p25 = scmp.ne.s32.totalorder %s17, %s20
    %p26 = scmp.eq.s32.totalorder %s7, 0
    %p27 = por %p25, %p26
    %p28 = scmp.ne.s32.totalorder %s17, %s20
    %p29 = scmp.eq.s32.totalorder %s12, 1
    %p30 = por %p28, %p29
    %p31 = scmp.ne.s32.totalorder %s20, %s21
    %p32 = scmp.eq.s32.totalorder %s12, 0
    %p33 = por %p31, %p32
    %p34 = scmp.ne.s32.totalorder %s20, %s21
    %p35 = scmp.eq.s32.totalorder %s13, 1
    %p36 = por %p34, %p35
    %p38 = scmp.ne.s32.totalorder %s21, %s37
    %p39 = scmp.eq.s32.totalorder %s13, 0
    %p40 = por %p38, %p39
    %s41 = ssub.s32 %s7, %s14
    %p42 = scmp.eq.s32.totalorder %s41, 0
    %s44 = sadd.s32 %s43, 1
    %s45 = scalar_select %p42, %s43, %s44
    %p48 = pneg %p42
    %p49 = scmp.eq.s32.totalorder %s7, 1
    %p50 = por %p48, %p49
    %p51 = scmp.ne.s32.totalorder %s43, %s46
    %p52 = scmp.eq.s32.totalorder %s7, 0
    %p53 = por %p51, %p52
    %p54 = scmp.ne.s32.totalorder %s43, %s46
    %p55 = scmp.eq.s32.totalorder %s12, 1
    %p56 = por %p54, %p55
    %p57 = scmp.ne.s32.totalorder %s46, %s47
    %p58 = scmp.eq.s32.totalorder %s12, 0
    %p59 = por %p57, %p58
    %p60 = scmp.ne.s32.totalorder %s46, %s47
    %p61 = scmp.eq.s32.totalorder %s13, 1
    %p62 = por %p60, %p61
    %p64 = scmp.ne.s32.totalorder %s47, %s63
    %p65 = scmp.eq.s32.totalorder %s13, 0
    %p66 = por %p64, %p65
    %p67 = scmp.le.s32.totalorder 1, %s7
    %p68 = scmp.lt.s32.totalorder %s7, 3
    %p69 = pnand %p67, %p68
    %p70 = pneg %p69
    // Predicated region
    $region9: #{encoder_2_forward.30} parent=5 // pred_check
      _
    $region10: #{encoder_2_forward.30} parent=5 // pred_check_branch
      %72 = sbr.rel (%p69) target = $region12
    $region11: #{encoder_2_forward.30} parent=5 // pred_region
      %s73 = ssub.s32 %s7, 1
    $region12: #{encoder_2_forward.30} parent=5 // pred_fallthru
      _
    %p74 = scmp.lt.s32.totalorder %s7, 2
    // Predicated region
    $region13: #{encoder_2_forward.30} parent=5 // pred_check
      %p75 = pneg %p74
    $region14: #{encoder_2_forward.30} parent=5 // pred_check_branch
      %77 = sbr.rel (%p75) target = $region16
    $region15: #{encoder_2_forward.30} parent=5 // pred_region
      // Predicated region
      $region17: #{encoder_2_forward.30} parent=15 // pred_check
        %p78 = pneg %p27
      $region18: #{encoder_2_forward.30} parent=15 // pred_check_branch
        %80 = sbr.rel (%p78) target = $region20
      $region19: #{encoder_2_forward.30} parent=15 // pred_region
        %p81 = scmp.lt.s32.totalorder %s7, 1
        %s82 = scalar_select %p81, %s7, 1
        %s83 = smul.addr %s82, 128
        %s84 = smul.addr %s83, 8
        %s85 = scalar_lea.vmem %s0, %s84
      $region20: #{encoder_2_forward.30} parent=15 // pred_fallthru
        _
    $region16: #{encoder_2_forward.30} parent=5 // pred_fallthru
      _
    %p86 = scmp.le.s32.totalorder 1, %s7
    %p87 = scmp.lt.s32.totalorder %s7, 3
    %p88 = pnand %p86, %p87
    %p89 = pneg %p88
    // Predicated region
    $region21: #{encoder_2_forward.30} parent=5 // pred_check
      _
    $region22: #{encoder_2_forward.30} parent=5 // pred_check_branch
      %91 = sbr.rel (%p88) target = $region24
    $region23: #{encoder_2_forward.30} parent=5 // pred_region
      %s92 = ssub.s32 %s7, 1
      %p93 = scmp.lt.s32.totalorder %s12, 1
      %s94 = scalar_select %p93, %s12, 1
      %s95 = smul.addr %s94, 128
      %s96 = smul.addr %s95, 8
      %s97 = scalar_lea.vmem %s0, %s96
      %p98 = pneg %p33
      %p99 = pneg %p30
      %p100 = pneg %p59
      %p101 = pneg %p56
      %p102 = scmp.lt.s32.totalorder %s12, 1
      %s103 = scalar_select %p102, %s12, 1
      %s104 = smul.addr %s103, 128
      %s105 = smul.addr %s104, 8
      %s106 = scalar_lea.vmem %s1, %s105
      %p107 = scmp.lt.s32.totalorder %s12, 1
      %s108 = scalar_select %p107, %s12, 1
      %s109 = smul.addr %s108, 128
      %s110 = smul.addr %s109, 8
      %s111 = scalar_lea.vmem %s0, %s110
      %p112 = scmp.lt.s32.totalorder %s12, 1
      %s113 = scalar_select %p112, %s12, 1
      %s114 = smul.addr %s113, 128
      %s115 = smul.addr %s114, 8
      %s116 = scalar_lea.vmem %s1, %s115
      %v117 = vld [vmem:[%s111] sm:$0xff]
      %v118 = vld [vmem:[%s111 + $0x8] sm:$0xff]
      %v119 = vld [vmem:[%s111 + $0x10] sm:$0xff]
      %v120 = vld [vmem:[%s111 + $0x18] sm:$0xff]
      %v121 = vld [vmem:[%s111 + $0x20] sm:$0xff]
      %v122 = vld [vmem:[%s111 + $0x28] sm:$0xff]
      %v123 = vld [vmem:[%s111 + $0x30] sm:$0xff]
      %v124 = vld [vmem:[%s111 + $0x38] sm:$0xff]
      %v125 = vld [vmem:[%s111 + $0x40] sm:$0xff]
      %v126 = vld [vmem:[%s111 + $0x48] sm:$0xff]
      %v127 = vld [vmem:[%s111 + $0x50] sm:$0xff]
      %v128 = vld [vmem:[%s111 + $0x58] sm:$0xff]
      %v129 = vld [vmem:[%s111 + $0x60] sm:$0xff]
      %v130 = vld [vmem:[%s111 + $0x68] sm:$0xff]
      %v131 = vld [vmem:[%s111 + $0x70] sm:$0xff]
      %v132 = vld [vmem:[%s111 + $0x78] sm:$0xff]
      %v133 = vld [vmem:[%s111 + $0x80] sm:$0xff]
      %v134 = vld [vmem:[%s111 + $0x88] sm:$0xff]
      %v135 = vld [vmem:[%s111 + $0x90] sm:$0xff]
      %v136 = vld [vmem:[%s111 + $0x98] sm:$0xff]
      %v137 = vld [vmem:[%s111 + $0xa0] sm:$0xff]
      %v138 = vld [vmem:[%s111 + $0xa8] sm:$0xff]
      %v139 = vld [vmem:[%s111 + $0xb0] sm:$0xff]
      %v140 = vld [vmem:[%s111 + $0xb8] sm:$0xff]
      %v141 = vld [vmem:[%s111 + $0xc0] sm:$0xff]
      %v142 = vld [vmem:[%s111 + $0xc8] sm:$0xff]
      %v143 = vld [vmem:[%s111 + $0xd0] sm:$0xff]
      %v144 = vld [vmem:[%s111 + $0xd8] sm:$0xff]
      %v145 = vld [vmem:[%s111 + $0xe0] sm:$0xff]
      %v146 = vld [vmem:[%s111 + $0xe8] sm:$0xff]
      %v147 = vld [vmem:[%s111 + $0xf0] sm:$0xff]
      %v148 = vld [vmem:[%s111 + $0xf8] sm:$0xff]
      %v149 = vld [vmem:[%s111 + $0x100] sm:$0xff]
      %v150 = vld [vmem:[%s111 + $0x108] sm:$0xff]
      %v151 = vld [vmem:[%s111 + $0x110] sm:$0xff]
      %v152 = vld [vmem:[%s111 + $0x118] sm:$0xff]
      %v153 = vld [vmem:[%s111 + $0x120] sm:$0xff]
      %v154 = vld [vmem:[%s111 + $0x128] sm:$0xff]
      %v155 = vld [vmem:[%s111 + $0x130] sm:$0xff]
      %v156 = vld [vmem:[%s111 + $0x138] sm:$0xff]
      %v157 = vld [vmem:[%s111 + $0x140] sm:$0xff]
      %v158 = vld [vmem:[%s111 + $0x148] sm:$0xff]
      %v159 = vld [vmem:[%s111 + $0x150] sm:$0xff]
      %v160 = vld [vmem:[%s111 + $0x158] sm:$0xff]
      %v161 = vld [vmem:[%s111 + $0x160] sm:$0xff]
      %v162 = vld [vmem:[%s111 + $0x168] sm:$0xff]
      %v163 = vld [vmem:[%s111 + $0x170] sm:$0xff]
      %v164 = vld [vmem:[%s111 + $0x178] sm:$0xff]
      %v165 = vld [vmem:[%s111 + $0x180] sm:$0xff]
      %v166 = vld [vmem:[%s111 + $0x188] sm:$0xff]
      %v167 = vld [vmem:[%s111 + $0x190] sm:$0xff]
      %v168 = vld [vmem:[%s111 + $0x198] sm:$0xff]
      %v169 = vld [vmem:[%s111 + $0x1a0] sm:$0xff]
      %v170 = vld [vmem:[%s111 + $0x1a8] sm:$0xff]
      %v171 = vld [vmem:[%s111 + $0x1b0] sm:$0xff]
      %v172 = vld [vmem:[%s111 + $0x1b8] sm:$0xff]
      %v173 = vld [vmem:[%s111 + $0x1c0] sm:$0xff]
      %v174 = vld [vmem:[%s111 + $0x1c8] sm:$0xff]
      %v175 = vld [vmem:[%s111 + $0x1d0] sm:$0xff]
      %v176 = vld [vmem:[%s111 + $0x1d8] sm:$0xff]
      %v177 = vld [vmem:[%s111 + $0x1e0] sm:$0xff]
      %v178 = vld [vmem:[%s111 + $0x1e8] sm:$0xff]
      %v179 = vld [vmem:[%s111 + $0x1f0] sm:$0xff]
      %v180 = vld [vmem:[%s111 + $0x1f8] sm:$0xff]
      %v181 = vld [vmem:[%s111 + $0x200] sm:$0xff]
      %v182 = vld [vmem:[%s111 + $0x208] sm:$0xff]
      %v183 = vld [vmem:[%s111 + $0x210] sm:$0xff]
      %v184 = vld [vmem:[%s111 + $0x218] sm:$0xff]
      %v185 = vld [vmem:[%s111 + $0x220] sm:$0xff]
      %v186 = vld [vmem:[%s111 + $0x228] sm:$0xff]
      %v187 = vld [vmem:[%s111 + $0x230] sm:$0xff]
      %v188 = vld [vmem:[%s111 + $0x238] sm:$0xff]
      %v189 = vld [vmem:[%s111 + $0x240] sm:$0xff]
      %v190 = vld [vmem:[%s111 + $0x248] sm:$0xff]
      %v191 = vld [vmem:[%s111 + $0x250] sm:$0xff]
      %v192 = vld [vmem:[%s111 + $0x258] sm:$0xff]
      %v193 = vld [vmem:[%s111 + $0x260] sm:$0xff]
      %v194 = vld [vmem:[%s111 + $0x268] sm:$0xff]
      %v195 = vld [vmem:[%s111 + $0x270] sm:$0xff]
      %v196 = vld [vmem:[%s111 + $0x278] sm:$0xff]
      %v197 = vld [vmem:[%s111 + $0x280] sm:$0xff]
      %v198 = vld [vmem:[%s111 + $0x288] sm:$0xff]
      %v199 = vld [vmem:[%s111 + $0x290] sm:$0xff]
      %v200 = vld [vmem:[%s111 + $0x298] sm:$0xff]
      %v201 = vld [vmem:[%s111 + $0x2a0] sm:$0xff]
      %v202 = vld [vmem:[%s111 + $0x2a8] sm:$0xff]
      %v203 = vld [vmem:[%s111 + $0x2b0] sm:$0xff]
      %v204 = vld [vmem:[%s111 + $0x2b8] sm:$0xff]
      %v205 = vld [vmem:[%s111 + $0x2c0] sm:$0xff]
      %v206 = vld [vmem:[%s111 + $0x2c8] sm:$0xff]
      %v207 = vld [vmem:[%s111 + $0x2d0] sm:$0xff]
      %v208 = vld [vmem:[%s111 + $0x2d8] sm:$0xff]
      %v209 = vld [vmem:[%s111 + $0x2e0] sm:$0xff]
      %v210 = vld [vmem:[%s111 + $0x2e8] sm:$0xff]
      %v211 = vld [vmem:[%s111 + $0x2f0] sm:$0xff]
      %v212 = vld [vmem:[%s111 + $0x2f8] sm:$0xff]
      %v213 = vld [vmem:[%s111 + $0x300] sm:$0xff]
      %v214 = vld [vmem:[%s111 + $0x308] sm:$0xff]
      %v215 = vld [vmem:[%s111 + $0x310] sm:$0xff]
      %v216 = vld [vmem:[%s111 + $0x318] sm:$0xff]
      %v217 = vld [vmem:[%s111 + $0x320] sm:$0xff]
      %v218 = vld [vmem:[%s111 + $0x328] sm:$0xff]
      %v219 = vld [vmem:[%s111 + $0x330] sm:$0xff]
      %v220 = vld [vmem:[%s111 + $0x338] sm:$0xff]
      %v221 = vld [vmem:[%s111 + $0x340] sm:$0xff]
      %v222 = vld [vmem:[%s111 + $0x348] sm:$0xff]
      %v223 = vld [vmem:[%s111 + $0x350] sm:$0xff]
      %v224 = vld [vmem:[%s111 + $0x358] sm:$0xff]
      %v225 = vld [vmem:[%s111 + $0x360] sm:$0xff]
      %v226 = vld [vmem:[%s111 + $0x368] sm:$0xff]
      %v227 = vld [vmem:[%s111 + $0x370] sm:$0xff]
      %v228 = vld [vmem:[%s111 + $0x378] sm:$0xff]
      %v229 = vld [vmem:[%s111 + $0x380] sm:$0xff]
      %v230 = vld [vmem:[%s111 + $0x388] sm:$0xff]
      %v231 = vld [vmem:[%s111 + $0x390] sm:$0xff]
      %v232 = vld [vmem:[%s111 + $0x398] sm:$0xff]
      %v233 = vld [vmem:[%s111 + $0x3a0] sm:$0xff]
      %v234 = vld [vmem:[%s111 + $0x3a8] sm:$0xff]
      %v235 = vld [vmem:[%s111 + $0x3b0] sm:$0xff]
      %v236 = vld [vmem:[%s111 + $0x3b8] sm:$0xff]
      %v237 = vld [vmem:[%s111 + $0x3c0] sm:$0xff]
      %v238 = vld [vmem:[%s111 + $0x3c8] sm:$0xff]
      %v239 = vld [vmem:[%s111 + $0x3d0] sm:$0xff]
      %v240 = vld [vmem:[%s111 + $0x3d8] sm:$0xff]
      %v241 = vld [vmem:[%s111 + $0x3e0] sm:$0xff]
      %v242 = vld [vmem:[%s111 + $0x3e8] sm:$0xff]
      %v243 = vld [vmem:[%s111 + $0x3f0] sm:$0xff]
      %v244 = vld [vmem:[%s111 + $0x3f8] sm:$0xff]
      %vm245 = vcmask 23552
      %v246 = vsel %vm245, %v117, 0.0
      %v247 = vsel %vm245, %v118, 0.0
      %v248 = vadd.f32 %v246, %v247
      %v249 = vsel %vm245, %v119, 0.0
      %v250 = vadd.f32 %v248, %v249
      %v251 = vsel %vm245, %v120, 0.0
      %v252 = vadd.f32 %v250, %v251
      %v253 = vsel %vm245, %v121, 0.0
      %v254 = vadd.f32 %v252, %v253
      %v255 = vsel %vm245, %v122, 0.0
      %v256 = vadd.f32 %v254, %v255
      %v257 = vsel %vm245, %v123, 0.0
      %v258 = vadd.f32 %v256, %v257
      %v259 = vsel %vm245, %v124, 0.0
      %v260 = vadd.f32 %v258, %v259
      %v261 = vsel %vm245, %v125, 0.0
      %v262 = vadd.f32 %v260, %v261
      %v263 = vsel %vm245, %v126, 0.0
      %v264 = vadd.f32 %v262, %v263
      %v265 = vsel %vm245, %v127, 0.0
      %v266 = vadd.f32 %v264, %v265
      %v267 = vsel %vm245, %v128, 0.0
      %v268 = vadd.f32 %v266, %v267
      %v269 = vsel %vm245, %v129, 0.0
      %v270 = vadd.f32 %v268, %v269
      %v271 = vsel %vm245, %v130, 0.0
      %v272 = vadd.f32 %v270, %v271
      %v273 = vsel %vm245, %v131, 0.0
      %v274 = vadd.f32 %v272, %v273
      %v275 = vsel %vm245, %v132, 0.0
      %v276 = vadd.f32 %v274, %v275
      %v277 = vsel %vm245, %v133, 0.0
      %v278 = vadd.f32 %v276, %v277
      %v279 = vsel %vm245, %v134, 0.0
      %v280 = vadd.f32 %v278, %v279
      %v281 = vsel %vm245, %v135, 0.0
      %v282 = vadd.f32 %v280, %v281
      %v283 = vsel %vm245, %v136, 0.0
      %v284 = vadd.f32 %v282, %v283
      %v285 = vsel %vm245, %v137, 0.0
      %v286 = vadd.f32 %v284, %v285
      %v287 = vsel %vm245, %v138, 0.0
      %v288 = vadd.f32 %v286, %v287
      %v289 = vsel %vm245, %v139, 0.0
      %v290 = vadd.f32 %v288, %v289
      %v291 = vsel %vm245, %v140, 0.0
      %v292 = vadd.f32 %v290, %v291
      %v293 = vsel %vm245, %v141, 0.0
      %v294 = vadd.f32 %v292, %v293
      %v295 = vsel %vm245, %v142, 0.0
      %v296 = vadd.f32 %v294, %v295
      %v297 = vsel %vm245, %v143, 0.0
      %v298 = vadd.f32 %v296, %v297
      %v299 = vsel %vm245, %v144, 0.0
      %v300 = vadd.f32 %v298, %v299
      %v301 = vsel %vm245, %v145, 0.0
      %v302 = vadd.f32 %v300, %v301
      %v303 = vsel %vm245, %v146, 0.0
      %v304 = vadd.f32 %v302, %v303
      %v305 = vsel %vm245, %v147, 0.0
      %v306 = vadd.f32 %v304, %v305
      %v307 = vsel %vm245, %v148, 0.0
      %v308 = vadd.f32 %v306, %v307
      %v309 = vsel %vm245, %v149, 0.0
      %v310 = vadd.f32 %v308, %v309
      %v311 = vsel %vm245, %v150, 0.0
      %v312 = vadd.f32 %v310, %v311
      %v313 = vsel %vm245, %v151, 0.0
      %v314 = vadd.f32 %v312, %v313
      %v315 = vsel %vm245, %v152, 0.0
      %v316 = vadd.f32 %v314, %v315
      %v317 = vsel %vm245, %v153, 0.0
      %v318 = vadd.f32 %v316, %v317
      %v319 = vsel %vm245, %v154, 0.0
      %v320 = vadd.f32 %v318, %v319
      %v321 = vsel %vm245, %v155, 0.0
      %v322 = vadd.f32 %v320, %v321
      %v323 = vsel %vm245, %v156, 0.0
      %v324 = vadd.f32 %v322, %v323
      %v325 = vsel %vm245, %v157, 0.0
      %v326 = vadd.f32 %v324, %v325
      %v327 = vsel %vm245, %v158, 0.0
      %v328 = vadd.f32 %v326, %v327
      %v329 = vsel %vm245, %v159, 0.0
      %v330 = vadd.f32 %v328, %v329
      %v331 = vsel %vm245, %v160, 0.0
      %v332 = vadd.f32 %v330, %v331
      %v333 = vsel %vm245, %v161, 0.0
      %v334 = vadd.f32 %v332, %v333
      %v335 = vsel %vm245, %v162, 0.0
      %v336 = vadd.f32 %v334, %v335
      %v337 = vsel %vm245, %v163, 0.0
      %v338 = vadd.f32 %v336, %v337
      %v339 = vsel %vm245, %v164, 0.0
      %v340 = vadd.f32 %v338, %v339
      %v341 = vsel %vm245, %v165, 0.0
      %v342 = vadd.f32 %v340, %v341
      %v343 = vsel %vm245, %v166, 0.0
      %v344 = vadd.f32 %v342, %v343
      %v345 = vsel %vm245, %v167, 0.0
      %v346 = vadd.f32 %v344, %v345
      %v347 = vsel %vm245, %v168, 0.0
      %v348 = vadd.f32 %v346, %v347
      %v349 = vsel %vm245, %v169, 0.0
      %v350 = vadd.f32 %v348, %v349
      %v351 = vsel %vm245, %v170, 0.0
      %v352 = vadd.f32 %v350, %v351
      %v353 = vsel %vm245, %v171, 0.0
      %v354 = vadd.f32 %v352, %v353
      %v355 = vsel %vm245, %v172, 0.0
      %v356 = vadd.f32 %v354, %v355
      %v357 = vsel %vm245, %v173, 0.0
      %v358 = vadd.f32 %v356, %v357
      %v359 = vsel %vm245, %v174, 0.0
      %v360 = vadd.f32 %v358, %v359
      %v361 = vsel %vm245, %v175, 0.0
      %v362 = vadd.f32 %v360, %v361
      %v363 = vsel %vm245, %v176, 0.0
      %v364 = vadd.f32 %v362, %v363
      %v365 = vsel %vm245, %v177, 0.0
      %v366 = vadd.f32 %v364, %v365
      %v367 = vsel %vm245, %v178, 0.0
      %v368 = vadd.f32 %v366, %v367
      %v369 = vsel %vm245, %v179, 0.0
      %v370 = vadd.f32 %v368, %v369
      %v371 = vsel %vm245, %v180, 0.0
      %v372 = vadd.f32 %v370, %v371
      %v373 = vsel %vm245, %v181, 0.0
      %v374 = vadd.f32 %v372, %v373
      %v375 = vsel %vm245, %v182, 0.0
      %v376 = vadd.f32 %v374, %v375
      %v377 = vsel %vm245, %v183, 0.0
      %v378 = vadd.f32 %v376, %v377
      %v379 = vsel %vm245, %v184, 0.0
      %v380 = vadd.f32 %v378, %v379
      %v381 = vsel %vm245, %v185, 0.0
      %v382 = vadd.f32 %v380, %v381
      %v383 = vsel %vm245, %v186, 0.0
      %v384 = vadd.f32 %v382, %v383
      %v385 = vsel %vm245, %v187, 0.0
      %v386 = vadd.f32 %v384, %v385
      %v387 = vsel %vm245, %v188, 0.0
      %v388 = vadd.f32 %v386, %v387
      %v389 = vsel %vm245, %v189, 0.0
      %v390 = vadd.f32 %v388, %v389
      %v391 = vsel %vm245, %v190, 0.0
      %v392 = vadd.f32 %v390, %v391
      %v393 = vsel %vm245, %v191, 0.0
      %v394 = vadd.f32 %v392, %v393
      %v395 = vsel %vm245, %v192, 0.0
      %v396 = vadd.f32 %v394, %v395
      %v397 = vsel %vm245, %v193, 0.0
      %v398 = vadd.f32 %v396, %v397
      %v399 = vsel %vm245, %v194, 0.0
      %v400 = vadd.f32 %v398, %v399
      %v401 = vsel %vm245, %v195, 0.0
      %v402 = vadd.f32 %v400, %v401
      %v403 = vsel %vm245, %v196, 0.0
      %v404 = vadd.f32 %v402, %v403
      %v405 = vsel %vm245, %v197, 0.0
      %v406 = vadd.f32 %v404, %v405
      %v407 = vsel %vm245, %v198, 0.0
      %v408 = vadd.f32 %v406, %v407
      %v409 = vsel %vm245, %v199, 0.0
      %v410 = vadd.f32 %v408, %v409
      %v411 = vsel %vm245, %v200, 0.0
      %v412 = vadd.f32 %v410, %v411
      %v413 = vsel %vm245, %v201, 0.0
      %v414 = vadd.f32 %v412, %v413
      %v415 = vsel %vm245, %v202, 0.0
      %v416 = vadd.f32 %v414, %v415
      %v417 = vsel %vm245, %v203, 0.0
      %v418 = vadd.f32 %v416, %v417
      %v419 = vsel %vm245, %v204, 0.0
      %v420 = vadd.f32 %v418, %v419
      %v421 = vsel %vm245, %v205, 0.0
      %v422 = vadd.f32 %v420, %v421
      %v423 = vsel %vm245, %v206, 0.0
      %v424 = vadd.f32 %v422, %v423
      %v425 = vsel %vm245, %v207, 0.0
      %v426 = vadd.f32 %v424, %v425
      %v427 = vsel %vm245, %v208, 0.0
      %v428 = vadd.f32 %v426, %v427
      %v429 = vsel %vm245, %v209, 0.0
      %v430 = vadd.f32 %v428, %v429
      %v431 = vsel %vm245, %v210, 0.0
      %v432 = vadd.f32 %v430, %v431
      %v433 = vsel %vm245, %v211, 0.0
      %v434 = vadd.f32 %v432, %v433
      %v435 = vsel %vm245, %v212, 0.0
      %v436 = vadd.f32 %v434, %v435
      %v437 = vsel %vm245, %v213, 0.0
      %v438 = vadd.f32 %v436, %v437
      %v439 = vsel %vm245, %v214, 0.0
      %v440 = vadd.f32 %v438, %v439
      %v441 = vsel %vm245, %v215, 0.0
      %v442 = vadd.f32 %v440, %v441
      %v443 = vsel %vm245, %v216, 0.0
      %v444 = vadd.f32 %v442, %v443
      %v445 = vsel %vm245, %v217, 0.0
      %v446 = vadd.f32 %v444, %v445
      %v447 = vsel %vm245, %v218, 0.0
      %v448 = vadd.f32 %v446, %v447
      %v449 = vsel %vm245, %v219, 0.0
      %v450 = vadd.f32 %v448, %v449
      %v451 = vsel %vm245, %v220, 0.0
      %v452 = vadd.f32 %v450, %v451
      %v453 = vsel %vm245, %v221, 0.0
      %v454 = vadd.f32 %v452, %v453
      %v455 = vsel %vm245, %v222, 0.0
      %v456 = vadd.f32 %v454, %v455
      %v457 = vsel %vm245, %v223, 0.0
      %v458 = vadd.f32 %v456, %v457
      %v459 = vsel %vm245, %v224, 0.0
      %v460 = vadd.f32 %v458, %v459
      %v461 = vsel %vm245, %v225, 0.0
      %v462 = vadd.f32 %v460, %v461
      %v463 = vsel %vm245, %v226, 0.0
      %v464 = vadd.f32 %v462, %v463
      %v465 = vsel %vm245, %v227, 0.0
      %v466 = vadd.f32 %v464, %v465
      %v467 = vsel %vm245, %v228, 0.0
      %v468 = vadd.f32 %v466, %v467
      %v469 = vsel %vm245, %v229, 0.0
      %v470 = vadd.f32 %v468, %v469
      %v471 = vsel %vm245, %v230, 0.0
      %v472 = vadd.f32 %v470, %v471
      %v473 = vsel %vm245, %v231, 0.0
      %v474 = vadd.f32 %v472, %v473
      %v475 = vsel %vm245, %v232, 0.0
      %v476 = vadd.f32 %v474, %v475
      %v477 = vsel %vm245, %v233, 0.0
      %v478 = vadd.f32 %v476, %v477
      %v479 = vsel %vm245, %v234, 0.0
      %v480 = vadd.f32 %v478, %v479
      %v481 = vsel %vm245, %v235, 0.0
      %v482 = vadd.f32 %v480, %v481
      %v483 = vsel %vm245, %v236, 0.0
      %v484 = vadd.f32 %v482, %v483
      %v485 = vsel %vm245, %v237, 0.0
      %v486 = vadd.f32 %v484, %v485
      %v487 = vsel %vm245, %v238, 0.0
      %v488 = vadd.f32 %v486, %v487
      %v489 = vsel %vm245, %v239, 0.0
      %v490 = vadd.f32 %v488, %v489
      %v491 = vsel %vm245, %v240, 0.0
      %v492 = vadd.f32 %v490, %v491
      %v493 = vsel %vm245, %v241, 0.0
      %v494 = vadd.f32 %v492, %v493
      %v495 = vsel %vm245, %v242, 0.0
      %v496 = vadd.f32 %v494, %v495
      %v497 = vsel %vm245, %v243, 0.0
      %v498 = vadd.f32 %v496, %v497
      %v499 = vsel %vm245, %v244, 0.0
      %v500 = vadd.f32 %v498, %v499
      %v501 = vrot.slane %v500, 4
      %v502 = vadd.f32 %v500, %v501
      %v503 = vrot.slane %v502, 2
      %v504 = vadd.f32 %v502, %v503
      %v505 = vrot.slane %v504, 1
      %v506 = vadd.f32 %v504, %v505
      %v507 = vmul.f32 %v117, %v117
      %v508 = vmul.f32 %v118, %v118
      %v509 = vmul.f32 %v119, %v119
      %v510 = vmul.f32 %v120, %v120
      %v511 = vmul.f32 %v121, %v121
      %v512 = vmul.f32 %v122, %v122
      %v513 = vmul.f32 %v123, %v123
      %v514 = vmul.f32 %v124, %v124
      %v515 = vmul.f32 %v125, %v125
      %v516 = vmul.f32 %v126, %v126
      %v517 = vmul.f32 %v127, %v127
      %v518 = vmul.f32 %v128, %v128
      %v519 = vmul.f32 %v129, %v129
      %v520 = vmul.f32 %v130, %v130
      %v521 = vmul.f32 %v131, %v131
      %v522 = vmul.f32 %v132, %v132
      %v523 = vmul.f32 %v133, %v133
      %v524 = vmul.f32 %v134, %v134
      %v525 = vmul.f32 %v135, %v135
      %v526 = vmul.f32 %v136, %v136
      %v527 = vmul.f32 %v137, %v137
      %v528 = vmul.f32 %v138, %v138
      %v529 = vmul.f32 %v139, %v139
      %v530 = vmul.f32 %v140, %v140
      %v531 = vmul.f32 %v141, %v141
      %v532 = vmul.f32 %v142, %v142
      %v533 = vmul.f32 %v143, %v143
      %v534 = vmul.f32 %v144, %v144
      %v535 = vmul.f32 %v145, %v145
      %v536 = vmul.f32 %v146, %v146
      %v537 = vmul.f32 %v147, %v147
      %v538 = vmul.f32 %v148, %v148
      %v539 = vmul.f32 %v149, %v149
      %v540 = vmul.f32 %v150, %v150
      %v541 = vmul.f32 %v151, %v151
      %v542 = vmul.f32 %v152, %v152
      %v543 = vmul.f32 %v153, %v153
      %v544 = vmul.f32 %v154, %v154
      %v545 = vmul.f32 %v155, %v155
      %v546 = vmul.f32 %v156, %v156
      %v547 = vmul.f32 %v157, %v157
      %v548 = vmul.f32 %v158, %v158
      %v549 = vmul.f32 %v159, %v159
      %v550 = vmul.f32 %v160, %v160
      %v551 = vmul.f32 %v161, %v161
      %v552 = vmul.f32 %v162, %v162
      %v553 = vmul.f32 %v163, %v163
      %v554 = vmul.f32 %v164, %v164
      %v555 = vmul.f32 %v165, %v165
      %v556 = vmul.f32 %v166, %v166
      %v557 = vmul.f32 %v167, %v167
      %v558 = vmul.f32 %v168, %v168
      %v559 = vmul.f32 %v169, %v169
      %v560 = vmul.f32 %v170, %v170
      %v561 = vmul.f32 %v171, %v171
      %v562 = vmul.f32 %v172, %v172
      %v563 = vmul.f32 %v173, %v173
      %v564 = vmul.f32 %v174, %v174
      %v565 = vmul.f32 %v175, %v175
      %v566 = vmul.f32 %v176, %v176
      %v567 = vmul.f32 %v177, %v177
      %v568 = vmul.f32 %v178, %v178
      %v569 = vmul.f32 %v179, %v179
      %v570 = vmul.f32 %v180, %v180
      %v571 = vmul.f32 %v181, %v181
      %v572 = vmul.f32 %v182, %v182
      %v573 = vmul.f32 %v183, %v183
      %v574 = vmul.f32 %v184, %v184
      %v575 = vmul.f32 %v185, %v185
      %v576 = vmul.f32 %v186, %v186
      %v577 = vmul.f32 %v187, %v187
      %v578 = vmul.f32 %v188, %v188
      %v579 = vmul.f32 %v189, %v189
      %v580 = vmul.f32 %v190, %v190
      %v581 = vmul.f32 %v191, %v191
      %v582 = vmul.f32 %v192, %v192
      %v583 = vmul.f32 %v193, %v193
      %v584 = vmul.f32 %v194, %v194
      %v585 = vmul.f32 %v195, %v195
      %v586 = vmul.f32 %v196, %v196
      %v587 = vmul.f32 %v197, %v197
      %v588 = vmul.f32 %v198, %v198
      %v589 = vmul.f32 %v199, %v199
      %v590 = vmul.f32 %v200, %v200
      %v591 = vmul.f32 %v201, %v201
      %v592 = vmul.f32 %v202, %v202
      %v593 = vmul.f32 %v203, %v203
      %v594 = vmul.f32 %v204, %v204
      %v595 = vmul.f32 %v205, %v205
      %v596 = vmul.f32 %v206, %v206
      %v597 = vmul.f32 %v207, %v207
      %v598 = vmul.f32 %v208, %v208
      %v599 = vmul.f32 %v209, %v209
      %v600 = vmul.f32 %v210, %v210
      %v601 = vmul.f32 %v211, %v211
      %v602 = vmul.f32 %v212, %v212
      %v603 = vmul.f32 %v213, %v213
      %v604 = vmul.f32 %v214, %v214
      %v605 = vmul.f32 %v215, %v215
      %v606 = vmul.f32 %v216, %v216
      %v607 = vmul.f32 %v217, %v217
      %v608 = vmul.f32 %v218, %v218
      %v609 = vmul.f32 %v219, %v219
      %v610 = vmul.f32 %v220, %v220
      %v611 = vmul.f32 %v221, %v221
      %v612 = vmul.f32 %v222, %v222
      %v613 = vmul.f32 %v223, %v223
      %v614 = vmul.f32 %v224, %v224
      %v615 = vmul.f32 %v225, %v225
      %v616 = vmul.f32 %v226, %v226
      %v617 = vmul.f32 %v227, %v227
      %v618 = vmul.f32 %v228, %v228
      %v619 = vmul.f32 %v229, %v229
      %v620 = vmul.f32 %v230, %v230
      %v621 = vmul.f32 %v231, %v231
      %v622 = vmul.f32 %v232, %v232
      %v623 = vmul.f32 %v233, %v233
      %v624 = vmul.f32 %v234, %v234
      %v625 = vmul.f32 %v235, %v235
      %v626 = vmul.f32 %v236, %v236
      %v627 = vmul.f32 %v237, %v237
      %v628 = vmul.f32 %v238, %v238
      %v629 = vmul.f32 %v239, %v239
      %v630 = vmul.f32 %v240, %v240
      %v631 = vmul.f32 %v241, %v241
      %v632 = vmul.f32 %v242, %v242
      %v633 = vmul.f32 %v243, %v243
      %v634 = vmul.f32 %v244, %v244
      %v635 = vsel %vm245, %v507, 0.0
      %v636 = vsel %vm245, %v508, 0.0
      %v637 = vadd.f32 %v635, %v636
      %v638 = vsel %vm245, %v509, 0.0
      %v639 = vadd.f32 %v637, %v638
      %v640 = vsel %vm245, %v510, 0.0
      %v641 = vadd.f32 %v639, %v640
      %v642 = vsel %vm245, %v511, 0.0
      %v643 = vadd.f32 %v641, %v642
      %v644 = vsel %vm245, %v512, 0.0
      %v645 = vadd.f32 %v643, %v644
      %v646 = vsel %vm245, %v513, 0.0
      %v647 = vadd.f32 %v645, %v646
      %v648 = vsel %vm245, %v514, 0.0
      %v649 = vadd.f32 %v647, %v648
      %v650 = vsel %vm245, %v515, 0.0
      %v651 = vadd.f32 %v649, %v650
      %v652 = vsel %vm245, %v516, 0.0
      %v653 = vadd.f32 %v651, %v652
      %v654 = vsel %vm245, %v517, 0.0
      %v655 = vadd.f32 %v653, %v654
      %v656 = vsel %vm245, %v518, 0.0
      %v657 = vadd.f32 %v655, %v656
      %v658 = vsel %vm245, %v519, 0.0
      %v659 = vadd.f32 %v657, %v658
      %v660 = vsel %vm245, %v520, 0.0
      %v661 = vadd.f32 %v659, %v660
      %v662 = vsel %vm245, %v521, 0.0
      %v663 = vadd.f32 %v661, %v662
      %v664 = vsel %vm245, %v522, 0.0
      %v665 = vadd.f32 %v663, %v664
      %v666 = vsel %vm245, %v523, 0.0
      %v667 = vadd.f32 %v665, %v666
      %v668 = vsel %vm245, %v524, 0.0
      %v669 = vadd.f32 %v667, %v668
      %v670 = vsel %vm245, %v525, 0.0
      %v671 = vadd.f32 %v669, %v670
      %v672 = vsel %vm245, %v526, 0.0
      %v673 = vadd.f32 %v671, %v672
      %v674 = vsel %vm245, %v527, 0.0
      %v675 = vadd.f32 %v673, %v674
      %v676 = vsel %vm245, %v528, 0.0
      %v677 = vadd.f32 %v675, %v676
      %v678 = vsel %vm245, %v529, 0.0
      %v679 = vadd.f32 %v677, %v678
      %v680 = vsel %vm245, %v530, 0.0
      %v681 = vadd.f32 %v679, %v680
      %v682 = vsel %vm245, %v531, 0.0
      %v683 = vadd.f32 %v681, %v682
      %v684 = vsel %vm245, %v532, 0.0
      %v685 = vadd.f32 %v683, %v684
      %v686 = vsel %vm245, %v533, 0.0
      %v687 = vadd.f32 %v685, %v686
      %v688 = vsel %vm245, %v534, 0.0
      %v689 = vadd.f32 %v687, %v688
      %v690 = vsel %vm245, %v535, 0.0
      %v691 = vadd.f32 %v689, %v690
      %v692 = vsel %vm245, %v536, 0.0
      %v693 = vadd.f32 %v691, %v692
      %v694 = vsel %vm245, %v537, 0.0
      %v695 = vadd.f32 %v693, %v694
      %v696 = vsel %vm245, %v538, 0.0
      %v697 = vadd.f32 %v695, %v696
      %v698 = vsel %vm245, %v539, 0.0
      %v699 = vadd.f32 %v697, %v698
      %v700 = vsel %vm245, %v540, 0.0
      %v701 = vadd.f32 %v699, %v700
      %v702 = vsel %vm245, %v541, 0.0
      %v703 = vadd.f32 %v701, %v702
      %v704 = vsel %vm245, %v542, 0.0
      %v705 = vadd.f32 %v703, %v704
      %v706 = vsel %vm245, %v543, 0.0
      %v707 = vadd.f32 %v705, %v706
      %v708 = vsel %vm245, %v544, 0.0
      %v709 = vadd.f32 %v707, %v708
      %v710 = vsel %vm245, %v545, 0.0
      %v711 = vadd.f32 %v709, %v710
      %v712 = vsel %vm245, %v546, 0.0
      %v713 = vadd.f32 %v711, %v712
      %v714 = vsel %vm245, %v547, 0.0
      %v715 = vadd.f32 %v713, %v714
      %v716 = vsel %vm245, %v548, 0.0
      %v717 = vadd.f32 %v715, %v716
      %v718 = vsel %vm245, %v549, 0.0
      %v719 = vadd.f32 %v717, %v718
      %v720 = vsel %vm245, %v550, 0.0
      %v721 = vadd.f32 %v719, %v720
      %v722 = vsel %vm245, %v551, 0.0
      %v723 = vadd.f32 %v721, %v722
      %v724 = vsel %vm245, %v552, 0.0
      %v725 = vadd.f32 %v723, %v724
      %v726 = vsel %vm245, %v553, 0.0
      %v727 = vadd.f32 %v725, %v726
      %v728 = vsel %vm245, %v554, 0.0
      %v729 = vadd.f32 %v727, %v728
      %v730 = vsel %vm245, %v555, 0.0
      %v731 = vadd.f32 %v729, %v730
      %v732 = vsel %vm245, %v556, 0.0
      %v733 = vadd.f32 %v731, %v732
      %v734 = vsel %vm245, %v557, 0.0
      %v735 = vadd.f32 %v733, %v734
      %v736 = vsel %vm245, %v558, 0.0
      %v737 = vadd.f32 %v735, %v736
      %v738 = vsel %vm245, %v559, 0.0
      %v739 = vadd.f32 %v737, %v738
      %v740 = vsel %vm245, %v560, 0.0
      %v741 = vadd.f32 %v739, %v740
      %v742 = vsel %vm245, %v561, 0.0
      %v743 = vadd.f32 %v741, %v742
      %v744 = vsel %vm245, %v562, 0.0
      %v745 = vadd.f32 %v743, %v744
      %v746 = vsel %vm245, %v563, 0.0
      %v747 = vadd.f32 %v745, %v746
      %v748 = vsel %vm245, %v564, 0.0
      %v749 = vadd.f32 %v747, %v748
      %v750 = vsel %vm245, %v565, 0.0
      %v751 = vadd.f32 %v749, %v750
      %v752 = vsel %vm245, %v566, 0.0
      %v753 = vadd.f32 %v751, %v752
      %v754 = vsel %vm245, %v567, 0.0
      %v755 = vadd.f32 %v753, %v754
      %v756 = vsel %vm245, %v568, 0.0
      %v757 = vadd.f32 %v755, %v756
      %v758 = vsel %vm245, %v569, 0.0
      %v759 = vadd.f32 %v757, %v758
      %v760 = vsel %vm245, %v570, 0.0
      %v761 = vadd.f32 %v759, %v760
      %v762 = vsel %vm245, %v571, 0.0
      %v763 = vadd.f32 %v761, %v762
      %v764 = vsel %vm245, %v572, 0.0
      %v765 = vadd.f32 %v763, %v764
      %v766 = vsel %vm245, %v573, 0.0
      %v767 = vadd.f32 %v765, %v766
      %v768 = vsel %vm245, %v574, 0.0
      %v769 = vadd.f32 %v767, %v768
      %v770 = vsel %vm245, %v575, 0.0
      %v771 = vadd.f32 %v769, %v770
      %v772 = vsel %vm245, %v576, 0.0
      %v773 = vadd.f32 %v771, %v772
      %v774 = vsel %vm245, %v577, 0.0
      %v775 = vadd.f32 %v773, %v774
      %v776 = vsel %vm245, %v578, 0.0
      %v777 = vadd.f32 %v775, %v776
      %v778 = vsel %vm245, %v579, 0.0
      %v779 = vadd.f32 %v777, %v778
      %v780 = vsel %vm245, %v580, 0.0
      %v781 = vadd.f32 %v779, %v780
      %v782 = vsel %vm245, %v581, 0.0
      %v783 = vadd.f32 %v781, %v782
      %v784 = vsel %vm245, %v582, 0.0
      %v785 = vadd.f32 %v783, %v784
      %v786 = vsel %vm245, %v583, 0.0
      %v787 = vadd.f32 %v785, %v786
      %v788 = vsel %vm245, %v584, 0.0
      %v789 = vadd.f32 %v787, %v788
      %v790 = vsel %vm245, %v585, 0.0
      %v791 = vadd.f32 %v789, %v790
      %v792 = vsel %vm245, %v586, 0.0
      %v793 = vadd.f32 %v791, %v792
      %v794 = vsel %vm245, %v587, 0.0
      %v795 = vadd.f32 %v793, %v794
      %v796 = vsel %vm245, %v588, 0.0
      %v797 = vadd.f32 %v795, %v796
      %v798 = vsel %vm245, %v589, 0.0
      %v799 = vadd.f32 %v797, %v798
      %v800 = vsel %vm245, %v590, 0.0
      %v801 = vadd.f32 %v799, %v800
      %v802 = vsel %vm245, %v591, 0.0
      %v803 = vadd.f32 %v801, %v802
      %v804 = vsel %vm245, %v592, 0.0
      %v805 = vadd.f32 %v803, %v804
      %v806 = vsel %vm245, %v593, 0.0
      %v807 = vadd.f32 %v805, %v806
      %v808 = vsel %vm245, %v594, 0.0
      %v809 = vadd.f32 %v807, %v808
      %v810 = vsel %vm245, %v595, 0.0
      %v811 = vadd.f32 %v809, %v810
      %v812 = vsel %vm245, %v596, 0.0
      %v813 = vadd.f32 %v811, %v812
      %v814 = vsel %vm245, %v597, 0.0
      %v815 = vadd.f32 %v813, %v814
      %v816 = vsel %vm245, %v598, 0.0
      %v817 = vadd.f32 %v815, %v816
      %v818 = vsel %vm245, %v599, 0.0
      %v819 = vadd.f32 %v817, %v818
      %v820 = vsel %vm245, %v600, 0.0
      %v821 = vadd.f32 %v819, %v820
      %v822 = vsel %vm245, %v601, 0.0
      %v823 = vadd.f32 %v821, %v822
      %v824 = vsel %vm245, %v602, 0.0
      %v825 = vadd.f32 %v823, %v824
      %v826 = vsel %vm245, %v603, 0.0
      %v827 = vadd.f32 %v825, %v826
      %v828 = vsel %vm245, %v604, 0.0
      %v829 = vadd.f32 %v827, %v828
      %v830 = vsel %vm245, %v605, 0.0
      %v831 = vadd.f32 %v829, %v830
      %v832 = vsel %vm245, %v606, 0.0
      %v833 = vadd.f32 %v831, %v832
      %v834 = vsel %vm245, %v607, 0.0
      %v835 = vadd.f32 %v833, %v834
      %v836 = vsel %vm245, %v608, 0.0
      %v837 = vadd.f32 %v835, %v836
      %v838 = vsel %vm245, %v609, 0.0
      %v839 = vadd.f32 %v837, %v838
      %v840 = vsel %vm245, %v610, 0.0
      %v841 = vadd.f32 %v839, %v840
      %v842 = vsel %vm245, %v611, 0.0
      %v843 = vadd.f32 %v841, %v842
      %v844 = vsel %vm245, %v612, 0.0
      %v845 = vadd.f32 %v843, %v844
      %v846 = vsel %vm245, %v613, 0.0
      %v847 = vadd.f32 %v845, %v846
      %v848 = vsel %vm245, %v614, 0.0
      %v849 = vadd.f32 %v847, %v848
      %v850 = vsel %vm245, %v615, 0.0
      %v851 = vadd.f32 %v849, %v850
      %v852 = vsel %vm245, %v616, 0.0
      %v853 = vadd.f32 %v851, %v852
      %v854 = vsel %vm245, %v617, 0.0
      %v855 = vadd.f32 %v853, %v854
      %v856 = vsel %vm245, %v618, 0.0
      %v857 = vadd.f32 %v855, %v856
      %v858 = vsel %vm245, %v619, 0.0
      %v859 = vadd.f32 %v857, %v858
      %v860 = vsel %vm245, %v620, 0.0
      %v861 = vadd.f32 %v859, %v860
      %v862 = vsel %vm245, %v621, 0.0
      %v863 = vadd.f32 %v861, %v862
      %v864 = vsel %vm245, %v622, 0.0
      %v865 = vadd.f32 %v863, %v864
      %v866 = vsel %vm245, %v623, 0.0
      %v867 = vadd.f32 %v865, %v866
      %v868 = vsel %vm245, %v624, 0.0
      %v869 = vadd.f32 %v867, %v868
      %v870 = vsel %vm245, %v625, 0.0
      %v871 = vadd.f32 %v869, %v870
      %v872 = vsel %vm245, %v626, 0.0
      %v873 = vadd.f32 %v871, %v872
      %v874 = vsel %vm245, %v627, 0.0
      %v875 = vadd.f32 %v873, %v874
      %v876 = vsel %vm245, %v628, 0.0
      %v877 = vadd.f32 %v875, %v876
      %v878 = vsel %vm245, %v629, 0.0
      %v879 = vadd.f32 %v877, %v878
      %v880 = vsel %vm245, %v630, 0.0
      %v881 = vadd.f32 %v879, %v880
      %v882 = vsel %vm245, %v631, 0.0
      %v883 = vadd.f32 %v881, %v882
      %v884 = vsel %vm245, %v632, 0.0
      %v885 = vadd.f32 %v883, %v884
      %v886 = vsel %vm245, %v633, 0.0
      %v887 = vadd.f32 %v885, %v886
      %v888 = vsel %vm245, %v634, 0.0
      %v889 = vadd.f32 %v887, %v888
      %v890 = vrot.slane %v889, 4
      %v891 = vadd.f32 %v889, %v890
      %v892 = vrot.slane %v891, 2
      %v893 = vadd.f32 %v891, %v892
      %v894 = vrot.slane %v893, 1
      %v895 = vadd.f32 %v893, %v894
      %v896 = vrcp.pop 1024.0
      %v897 = vmul.f32 %v506, %v896
      %v898 = vmul.f32 %v895, %v896
      %v899 = vmul.f32 %v897, %v897
      %v900 = vsub.f32 %v898, %v899
      %v901 = vmax.f32 %v900, 0.0
      %v902 = vadd.f32 %v901, 1e-05
      %v903 = vrsqrt.pop %v902
      %v904 = vsub.f32 %v117, %v897
      %v905 = vsub.f32 %v118, %v897
      %v906 = vsub.f32 %v119, %v897
      %v907 = vsub.f32 %v120, %v897
      %v908 = vsub.f32 %v121, %v897
      %v909 = vsub.f32 %v122, %v897
      %v910 = vsub.f32 %v123, %v897
      %v911 = vsub.f32 %v124, %v897
      %v912 = vsub.f32 %v125, %v897
      %v913 = vsub.f32 %v126, %v897
      %v914 = vsub.f32 %v127, %v897
      %v915 = vsub.f32 %v128, %v897
      %v916 = vsub.f32 %v129, %v897
      %v917 = vsub.f32 %v130, %v897
      %v918 = vsub.f32 %v131, %v897
      %v919 = vsub.f32 %v132, %v897
      %v920 = vsub.f32 %v133, %v897
      %v921 = vsub.f32 %v134, %v897
      %v922 = vsub.f32 %v135, %v897
      %v923 = vsub.f32 %v136, %v897
      %v924 = vsub.f32 %v137, %v897
      %v925 = vsub.f32 %v138, %v897
      %v926 = vsub.f32 %v139, %v897
      %v927 = vsub.f32 %v140, %v897
      %v928 = vsub.f32 %v141, %v897
      %v929 = vsub.f32 %v142, %v897
      %v930 = vsub.f32 %v143, %v897
      %v931 = vsub.f32 %v144, %v897
      %v932 = vsub.f32 %v145, %v897
      %v933 = vsub.f32 %v146, %v897
      %v934 = vsub.f32 %v147, %v897
      %v935 = vsub.f32 %v148, %v897
      %v936 = vsub.f32 %v149, %v897
      %v937 = vsub.f32 %v150, %v897
      %v938 = vsub.f32 %v151, %v897
      %v939 = vsub.f32 %v152, %v897
      %v940 = vsub.f32 %v153, %v897
      %v941 = vsub.f32 %v154, %v897
      %v942 = vsub.f32 %v155, %v897
      %v943 = vsub.f32 %v156, %v897
      %v944 = vsub.f32 %v157, %v897
      %v945 = vsub.f32 %v158, %v897
      %v946 = vsub.f32 %v159, %v897
      %v947 = vsub.f32 %v160, %v897
      %v948 = vsub.f32 %v161, %v897
      %v949 = vsub.f32 %v162, %v897
      %v950 = vsub.f32 %v163, %v897
      %v951 = vsub.f32 %v164, %v897
      %v952 = vsub.f32 %v165, %v897
      %v953 = vsub.f32 %v166, %v897
      %v954 = vsub.f32 %v167, %v897
      %v955 = vsub.f32 %v168, %v897
      %v956 = vsub.f32 %v169, %v897
      %v957 = vsub.f32 %v170, %v897
      %v958 = vsub.f32 %v171, %v897
      %v959 = vsub.f32 %v172, %v897
      %v960 = vsub.f32 %v173, %v897
      %v961 = vsub.f32 %v174, %v897
      %v962 = vsub.f32 %v175, %v897
      %v963 = vsub.f32 %v176, %v897
      %v964 = vsub.f32 %v177, %v897
      %v965 = vsub.f32 %v178, %v897
      %v966 = vsub.f32 %v179, %v897
      %v967 = vsub.f32 %v180, %v897
      %v968 = vsub.f32 %v181, %v897
      %v969 = vsub.f32 %v182, %v897
      %v970 = vsub.f32 %v183, %v897
      %v971 = vsub.f32 %v184, %v897
      %v972 = vsub.f32 %v185, %v897
      %v973 = vsub.f32 %v186, %v897
      %v974 = vsub.f32 %v187, %v897
      %v975 = vsub.f32 %v188, %v897
      %v976 = vsub.f32 %v189, %v897
      %v977 = vsub.f32 %v190, %v897
      %v978 = vsub.f32 %v191, %v897
      %v979 = vsub.f32 %v192, %v897
      %v980 = vsub.f32 %v193, %v897
      %v981 = vsub.f32 %v194, %v897
      %v982 = vsub.f32 %v195, %v897
      %v983 = vsub.f32 %v196, %v897
      %v984 = vsub.f32 %v197, %v897
      %v985 = vsub.f32 %v198, %v897
      %v986 = vsub.f32 %v199, %v897
      %v987 = vsub.f32 %v200, %v897
      %v988 = vsub.f32 %v201, %v897
      %v989 = vsub.f32 %v202, %v897
      %v990 = vsub.f32 %v203, %v897
      %v991 = vsub.f32 %v204, %v897
      %v992 = vsub.f32 %v205, %v897
      %v993 = vsub.f32 %v206, %v897
      %v994 = vsub.f32 %v207, %v897
      %v995 = vsub.f32 %v208, %v897
      %v996 = vsub.f32 %v209, %v897
      %v997 = vsub.f32 %v210, %v897
      %v998 = vsub.f32 %v211, %v897
      %v999 = vsub.f32 %v212, %v897
      %v1000 = vsub.f32 %v213, %v897
      %v1001 = vsub.f32 %v214, %v897
      %v1002 = vsub.f32 %v215, %v897
      %v1003 = vsub.f32 %v216, %v897
      %v1004 = vsub.f32 %v217, %v897
      %v1005 = vsub.f32 %v218, %v897
      %v1006 = vsub.f32 %v219, %v897
      %v1007 = vsub.f32 %v220, %v897
      %v1008 = vsub.f32 %v221, %v897
      %v1009 = vsub.f32 %v222, %v897
      %v1010 = vsub.f32 %v223, %v897
      %v1011 = vsub.f32 %v224, %v897
      %v1012 = vsub.f32 %v225, %v897
      %v1013 = vsub.f32 %v226, %v897
      %v1014 = vsub.f32 %v227, %v897
      %v1015 = vsub.f32 %v228, %v897
      %v1016 = vsub.f32 %v229, %v897
      %v1017 = vsub.f32 %v230, %v897
      %v1018 = vsub.f32 %v231, %v897
      %v1019 = vsub.f32 %v232, %v897
      %v1020 = vsub.f32 %v233, %v897
      %v1021 = vsub.f32 %v234, %v897
      %v1022 = vsub.f32 %v235, %v897
      %v1023 = vsub.f32 %v236, %v897
      %v1024 = vsub.f32 %v237, %v897
      %v1025 = vsub.f32 %v238, %v897
      %v1026 = vsub.f32 %v239, %v897
      %v1027 = vsub.f32 %v240, %v897
      %v1028 = vsub.f32 %v241, %v897
      %v1029 = vsub.f32 %v242, %v897
      %v1030 = vsub.f32 %v243, %v897
      %v1031 = vsub.f32 %v244, %v897
      %v1032 = vmul.f32 %v904, %v903
      %v1033 = vmul.f32 %v905, %v903
      %v1034 = vmul.f32 %v906, %v903
      %v1035 = vmul.f32 %v907, %v903
      %v1036 = vmul.f32 %v908, %v903
      %v1037 = vmul.f32 %v909, %v903
      %v1038 = vmul.f32 %v910, %v903
      %v1039 = vmul.f32 %v911, %v903
      %v1040 = vmul.f32 %v912, %v903
      %v1041 = vmul.f32 %v913, %v903
      %v1042 = vmul.f32 %v914, %v903
      %v1043 = vmul.f32 %v915, %v903
      %v1044 = vmul.f32 %v916, %v903
      %v1045 = vmul.f32 %v917, %v903
      %v1046 = vmul.f32 %v918, %v903
      %v1047 = vmul.f32 %v919, %v903
      %v1048 = vmul.f32 %v920, %v903
      %v1049 = vmul.f32 %v921, %v903
      %v1050 = vmul.f32 %v922, %v903
      %v1051 = vmul.f32 %v923, %v903
      %v1052 = vmul.f32 %v924, %v903
      %v1053 = vmul.f32 %v925, %v903
      %v1054 = vmul.f32 %v926, %v903
      %v1055 = vmul.f32 %v927, %v903
      %v1056 = vmul.f32 %v928, %v903
      %v1057 = vmul.f32 %v929, %v903
      %v1058 = vmul.f32 %v930, %v903
      %v1059 = vmul.f32 %v931, %v903
      %v1060 = vmul.f32 %v932, %v903
      %v1061 = vmul.f32 %v933, %v903
      %v1062 = vmul.f32 %v934, %v903
      %v1063 = vmul.f32 %v935, %v903
      %v1064 = vmul.f32 %v936, %v903
      %v1065 = vmul.f32 %v937, %v903
      %v1066 = vmul.f32 %v938, %v903
      %v1067 = vmul.f32 %v939, %v903
      %v1068 = vmul.f32 %v940, %v903
      %v1069 = vmul.f32 %v941, %v903
      %v1070 = vmul.f32 %v942, %v903
      %v1071 = vmul.f32 %v943, %v903
      %v1072 = vmul.f32 %v944, %v903
      %v1073 = vmul.f32 %v945, %v903
      %v1074 = vmul.f32 %v946, %v903
      %v1075 = vmul.f32 %v947, %v903
      %v1076 = vmul.f32 %v948, %v903
      %v1077 = vmul.f32 %v949, %v903
      %v1078 = vmul.f32 %v950, %v903
      %v1079 = vmul.f32 %v951, %v903
      %v1080 = vmul.f32 %v952, %v903
      %v1081 = vmul.f32 %v953, %v903
      %v1082 = vmul.f32 %v954, %v903
      %v1083 = vmul.f32 %v955, %v903
      %v1084 = vmul.f32 %v956, %v903
      %v1085 = vmul.f32 %v957, %v903
      %v1086 = vmul.f32 %v958, %v903
      %v1087 = vmul.f32 %v959, %v903
      %v1088 = vmul.f32 %v960, %v903
      %v1089 = vmul.f32 %v961, %v903
      %v1090 = vmul.f32 %v962, %v903
      %v1091 = vmul.f32 %v963, %v903
      %v1092 = vmul.f32 %v964, %v903
      %v1093 = vmul.f32 %v965, %v903
      %v1094 = vmul.f32 %v966, %v903
      %v1095 = vmul.f32 %v967, %v903
      %v1096 = vmul.f32 %v968, %v903
      %v1097 = vmul.f32 %v969, %v903
      %v1098 = vmul.f32 %v970, %v903
      %v1099 = vmul.f32 %v971, %v903
      %v1100 = vmul.f32 %v972, %v903
      %v1101 = vmul.f32 %v973, %v903
      %v1102 = vmul.f32 %v974, %v903
      %v1103 = vmul.f32 %v975, %v903
      %v1104 = vmul.f32 %v976, %v903
      %v1105 = vmul.f32 %v977, %v903
      %v1106 = vmul.f32 %v978, %v903
      %v1107 = vmul.f32 %v979, %v903
      %v1108 = vmul.f32 %v980, %v903
      %v1109 = vmul.f32 %v981, %v903
      %v1110 = vmul.f32 %v982, %v903
      %v1111 = vmul.f32 %v983, %v903
      %v1112 = vmul.f32 %v984, %v903
      %v1113 = vmul.f32 %v985, %v903
      %v1114 = vmul.f32 %v986, %v903
      %v1115 = vmul.f32 %v987, %v903
      %v1116 = vmul.f32 %v988, %v903
      %v1117 = vmul.f32 %v989, %v903
      %v1118 = vmul.f32 %v990, %v903
      %v1119 = vmul.f32 %v991, %v903
      %v1120 = vmul.f32 %v992, %v903
      %v1121 = vmul.f32 %v993, %v903
      %v1122 = vmul.f32 %v994, %v903
      %v1123 = vmul.f32 %v995, %v903
      %v1124 = vmul.f32 %v996, %v903
      %v1125 = vmul.f32 %v997, %v903
      %v1126 = vmul.f32 %v998, %v903
      %v1127 = vmul.f32 %v999, %v903
      %v1128 = vmul.f32 %v1000, %v903
      %v1129 = vmul.f32 %v1001, %v903
      %v1130 = vmul.f32 %v1002, %v903
      %v1131 = vmul.f32 %v1003, %v903
      %v1132 = vmul.f32 %v1004, %v903
      %v1133 = vmul.f32 %v1005, %v903
      %v1134 = vmul.f32 %v1006, %v903
      %v1135 = vmul.f32 %v1007, %v903
      %v1136 = vmul.f32 %v1008, %v903
      %v1137 = vmul.f32 %v1009, %v903
      %v1138 = vmul.f32 %v1010, %v903
      %v1139 = vmul.f32 %v1011, %v903
      %v1140 = vmul.f32 %v1012, %v903
      %v1141 = vmul.f32 %v1013, %v903
      %v1142 = vmul.f32 %v1014, %v903
      %v1143 = vmul.f32 %v1015, %v903
      %v1144 = vmul.f32 %v1016, %v903
      %v1145 = vmul.f32 %v1017, %v903
      %v1146 = vmul.f32 %v1018, %v903
      %v1147 = vmul.f32 %v1019, %v903
      %v1148 = vmul.f32 %v1020, %v903
      %v1149 = vmul.f32 %v1021, %v903
      %v1150 = vmul.f32 %v1022, %v903
      %v1151 = vmul.f32 %v1023, %v903
      %v1152 = vmul.f32 %v1024, %v903
      %v1153 = vmul.f32 %v1025, %v903
      %v1154 = vmul.f32 %v1026, %v903
      %v1155 = vmul.f32 %v1027, %v903
      %v1156 = vmul.f32 %v1028, %v903
      %v1157 = vmul.f32 %v1029, %v903
      %v1158 = vmul.f32 %v1030, %v903
      %v1159 = vmul.f32 %v1031, %v903
      %vm1160 = vcmp.ge.f32.partialorder %v1032, 0.0
      %vm1161 = vcmp.ge.f32.partialorder %v1033, 0.0
      %vm1162 = vcmp.ge.f32.partialorder %v1034, 0.0
      %vm1163 = vcmp.ge.f32.partialorder %v1035, 0.0
      %vm1164 = vcmp.ge.f32.partialorder %v1036, 0.0
      %vm1165 = vcmp.ge.f32.partialorder %v1037, 0.0
      %vm1166 = vcmp.ge.f32.partialorder %v1038, 0.0
      %vm1167 = vcmp.ge.f32.partialorder %v1039, 0.0
      %vm1168 = vcmp.ge.f32.partialorder %v1040, 0.0
      %vm1169 = vcmp.ge.f32.partialorder %v1041, 0.0
      %vm1170 = vcmp.ge.f32.partialorder %v1042, 0.0
      %vm1171 = vcmp.ge.f32.partialorder %v1043, 0.0
      %vm1172 = vcmp.ge.f32.partialorder %v1044, 0.0
      %vm1173 = vcmp.ge.f32.partialorder %v1045, 0.0
      %vm1174 = vcmp.ge.f32.partialorder %v1046, 0.0
      %vm1175 = vcmp.ge.f32.partialorder %v1047, 0.0
      %vm1176 = vcmp.ge.f32.partialorder %v1048, 0.0
      %vm1177 = vcmp.ge.f32.partialorder %v1049, 0.0
      %vm1178 = vcmp.ge.f32.partialorder %v1050, 0.0
      %vm1179 = vcmp.ge.f32.partialorder %v1051, 0.0
      %vm1180 = vcmp.ge.f32.partialorder %v1052, 0.0
      %vm1181 = vcmp.ge.f32.partialorder %v1053, 0.0
      %vm1182 = vcmp.ge.f32.partialorder %v1054, 0.0
      %vm1183 = vcmp.ge.f32.partialorder %v1055, 0.0
      %vm1184 = vcmp.ge.f32.partialorder %v1056, 0.0
      %vm1185 = vcmp.ge.f32.partialorder %v1057, 0.0
      %vm1186 = vcmp.ge.f32.partialorder %v1058, 0.0
      %vm1187 = vcmp.ge.f32.partialorder %v1059, 0.0
      %vm1188 = vcmp.ge.f32.partialorder %v1060, 0.0
      %vm1189 = vcmp.ge.f32.partialorder %v1061, 0.0
      %vm1190 = vcmp.ge.f32.partialorder %v1062, 0.0
      %vm1191 = vcmp.ge.f32.partialorder %v1063, 0.0
      %vm1192 = vcmp.ge.f32.partialorder %v1064, 0.0
      %vm1193 = vcmp.ge.f32.partialorder %v1065, 0.0
      %vm1194 = vcmp.ge.f32.partialorder %v1066, 0.0
      %vm1195 = vcmp.ge.f32.partialorder %v1067, 0.0
      %vm1196 = vcmp.ge.f32.partialorder %v1068, 0.0
      %vm1197 = vcmp.ge.f32.partialorder %v1069, 0.0
      %vm1198 = vcmp.ge.f32.partialorder %v1070, 0.0
      %vm1199 = vcmp.ge.f32.partialorder %v1071, 0.0
      %vm1200 = vcmp.ge.f32.partialorder %v1072, 0.0
      %vm1201 = vcmp.ge.f32.partialorder %v1073, 0.0
      %vm1202 = vcmp.ge.f32.partialorder %v1074, 0.0
      %vm1203 = vcmp.ge.f32.partialorder %v1075, 0.0
      %vm1204 = vcmp.ge.f32.partialorder %v1076, 0.0
      %vm1205 = vcmp.ge.f32.partialorder %v1077, 0.0
      %vm1206 = vcmp.ge.f32.partialorder %v1078, 0.0
      %vm1207 = vcmp.ge.f32.partialorder %v1079, 0.0
      %vm1208 = vcmp.ge.f32.partialorder %v1080, 0.0
      %vm1209 = vcmp.ge.f32.partialorder %v1081, 0.0
      %vm1210 = vcmp.ge.f32.partialorder %v1082, 0.0
      %vm1211 = vcmp.ge.f32.partialorder %v1083, 0.0
      %vm1212 = vcmp.ge.f32.partialorder %v1084, 0.0
      %vm1213 = vcmp.ge.f32.partialorder %v1085, 0.0
      %vm1214 = vcmp.ge.f32.partialorder %v1086, 0.0
      %vm1215 = vcmp.ge.f32.partialorder %v1087, 0.0
      %vm1216 = vcmp.ge.f32.partialorder %v1088, 0.0
      %vm1217 = vcmp.ge.f32.partialorder %v1089, 0.0
      %vm1218 = vcmp.ge.f32.partialorder %v1090, 0.0
      %vm1219 = vcmp.ge.f32.partialorder %v1091, 0.0
      %vm1220 = vcmp.ge.f32.partialorder %v1092, 0.0
      %vm1221 = vcmp.ge.f32.partialorder %v1093, 0.0
      %vm1222 = vcmp.ge.f32.partialorder %v1094, 0.0
      %vm1223 = vcmp.ge.f32.partialorder %v1095, 0.0
      %vm1224 = vcmp.ge.f32.partialorder %v1096, 0.0
      %vm1225 = vcmp.ge.f32.partialorder %v1097, 0.0
      %vm1226 = vcmp.ge.f32.partialorder %v1098, 0.0
      %vm1227 = vcmp.ge.f32.partialorder %v1099, 0.0
      %vm1228 = vcmp.ge.f32.partialorder %v1100, 0.0
      %vm1229 = vcmp.ge.f32.partialorder %v1101, 0.0
      %vm1230 = vcmp.ge.f32.partialorder %v1102, 0.0
      %vm1231 = vcmp.ge.f32.partialorder %v1103, 0.0
      %vm1232 = vcmp.ge.f32.partialorder %v1104, 0.0
      %vm1233 = vcmp.ge.f32.partialorder %v1105, 0.0
      %vm1234 = vcmp.ge.f32.partialorder %v1106, 0.0
      %vm1235 = vcmp.ge.f32.partialorder %v1107, 0.0
      %vm1236 = vcmp.ge.f32.partialorder %v1108, 0.0
      %vm1237 = vcmp.ge.f32.partialorder %v1109, 0.0
      %vm1238 = vcmp.ge.f32.partialorder %v1110, 0.0
      %vm1239 = vcmp.ge.f32.partialorder %v1111, 0.0
      %vm1240 = vcmp.ge.f32.partialorder %v1112, 0.0
      %vm1241 = vcmp.ge.f32.partialorder %v1113, 0.0
      %vm1242 = vcmp.ge.f32.partialorder %v1114, 0.0
      %vm1243 = vcmp.ge.f32.partialorder %v1115, 0.0
      %vm1244 = vcmp.ge.f32.partialorder %v1116, 0.0
      %vm1245 = vcmp.ge.f32.partialorder %v1117, 0.0
      %vm1246 = vcmp.ge.f32.partialorder %v1118, 0.0
      %vm1247 = vcmp.ge.f32.partialorder %v1119, 0.0
      %vm1248 = vcmp.ge.f32.partialorder %v1120, 0.0
      %vm1249 = vcmp.ge.f32.partialorder %v1121, 0.0
      %vm1250 = vcmp.ge.f32.partialorder %v1122, 0.0
      %vm1251 = vcmp.ge.f32.partialorder %v1123, 0.0
      %vm1252 = vcmp.ge.f32.partialorder %v1124, 0.0
      %vm1253 = vcmp.ge.f32.partialorder %v1125, 0.0
      %vm1254 = vcmp.ge.f32.partialorder %v1126, 0.0
      %vm1255 = vcmp.ge.f32.partialorder %v1127, 0.0
      %vm1256 = vcmp.ge.f32.partialorder %v1128, 0.0
      %vm1257 = vcmp.ge.f32.partialorder %v1129, 0.0
      %vm1258 = vcmp.ge.f32.partialorder %v1130, 0.0
      %vm1259 = vcmp.ge.f32.partialorder %v1131, 0.0
      %vm1260 = vcmp.ge.f32.partialorder %v1132, 0.0
      %vm1261 = vcmp.ge.f32.partialorder %v1133, 0.0
      %vm1262 = vcmp.ge.f32.partialorder %v1134, 0.0
      %vm1263 = vcmp.ge.f32.partialorder %v1135, 0.0
      %vm1264 = vcmp.ge.f32.partialorder %v1136, 0.0
      %vm1265 = vcmp.ge.f32.partialorder %v1137, 0.0
      %vm1266 = vcmp.ge.f32.partialorder %v1138, 0.0
      %vm1267 = vcmp.ge.f32.partialorder %v1139, 0.0
      %vm1268 = vcmp.ge.f32.partialorder %v1140, 0.0
      %vm1269 = vcmp.ge.f32.partialorder %v1141, 0.0
      %vm1270 = vcmp.ge.f32.partialorder %v1142, 0.0
      %vm1271 = vcmp.ge.f32.partialorder %v1143, 0.0
      %vm1272 = vcmp.ge.f32.partialorder %v1144, 0.0
      %vm1273 = vcmp.ge.f32.partialorder %v1145, 0.0
      %vm1274 = vcmp.ge.f32.partialorder %v1146, 0.0
      %vm1275 = vcmp.ge.f32.partialorder %v1147, 0.0
      %vm1276 = vcmp.ge.f32.partialorder %v1148, 0.0
      %vm1277 = vcmp.ge.f32.partialorder %v1149, 0.0
      %vm1278 = vcmp.ge.f32.partialorder %v1150, 0.0
      %vm1279 = vcmp.ge.f32.partialorder %v1151, 0.0
      %vm1280 = vcmp.ge.f32.partialorder %v1152, 0.0
      %vm1281 = vcmp.ge.f32.partialorder %v1153, 0.0
      %vm1282 = vcmp.ge.f32.partialorder %v1154, 0.0
      %vm1283 = vcmp.ge.f32.partialorder %v1155, 0.0
      %vm1284 = vcmp.ge.f32.partialorder %v1156, 0.0
      %vm1285 = vcmp.ge.f32.partialorder %v1157, 0.0
      %vm1286 = vcmp.ge.f32.partialorder %v1158, 0.0
      %vm1287 = vcmp.ge.f32.partialorder %v1159, 0.0
      %v1288 = vmul.f32 %v1032, 0.1
      %v1289 = vmul.f32 %v1033, 0.1
      %v1290 = vmul.f32 %v1034, 0.1
      %v1291 = vmul.f32 %v1035, 0.1
      %v1292 = vmul.f32 %v1036, 0.1
      %v1293 = vmul.f32 %v1037, 0.1
      %v1294 = vmul.f32 %v1038, 0.1
      %v1295 = vmul.f32 %v1039, 0.1
      %v1296 = vmul.f32 %v1040, 0.1
      %v1297 = vmul.f32 %v1041, 0.1
      %v1298 = vmul.f32 %v1042, 0.1
      %v1299 = vmul.f32 %v1043, 0.1
      %v1300 = vmul.f32 %v1044, 0.1
      %v1301 = vmul.f32 %v1045, 0.1
      %v1302 = vmul.f32 %v1046, 0.1
      %v1303 = vmul.f32 %v1047, 0.1
      %v1304 = vmul.f32 %v1048, 0.1
      %v1305 = vmul.f32 %v1049, 0.1
      %v1306 = vmul.f32 %v1050, 0.1
      %v1307 = vmul.f32 %v1051, 0.1
      %v1308 = vmul.f32 %v1052, 0.1
      %v1309 = vmul.f32 %v1053, 0.1
      %v1310 = vmul.f32 %v1054, 0.1
      %v1311 = vmul.f32 %v1055, 0.1
      %v1312 = vmul.f32 %v1056, 0.1
      %v1313 = vmul.f32 %v1057, 0.1
      %v1314 = vmul.f32 %v1058, 0.1
      %v1315 = vmul.f32 %v1059, 0.1
      %v1316 = vmul.f32 %v1060, 0.1
      %v1317 = vmul.f32 %v1061, 0.1
      %v1318 = vmul.f32 %v1062, 0.1
      %v1319 = vmul.f32 %v1063, 0.1
      %v1320 = vmul.f32 %v1064, 0.1
      %v1321 = vmul.f32 %v1065, 0.1
      %v1322 = vmul.f32 %v1066, 0.1
      %v1323 = vmul.f32 %v1067, 0.1
      %v1324 = vmul.f32 %v1068, 0.1
      %v1325 = vmul.f32 %v1069, 0.1
      %v1326 = vmul.f32 %v1070, 0.1
      %v1327 = vmul.f32 %v1071, 0.1
      %v1328 = vmul.f32 %v1072, 0.1
      %v1329 = vmul.f32 %v1073, 0.1
      %v1330 = vmul.f32 %v1074, 0.1
      %v1331 = vmul.f32 %v1075, 0.1
      %v1332 = vmul.f32 %v1076, 0.1
      %v1333 = vmul.f32 %v1077, 0.1
      %v1334 = vmul.f32 %v1078, 0.1
      %v1335 = vmul.f32 %v1079, 0.1
      %v1336 = vmul.f32 %v1080, 0.1
      %v1337 = vmul.f32 %v1081, 0.1
      %v1338 = vmul.f32 %v1082, 0.1
      %v1339 = vmul.f32 %v1083, 0.1
      %v1340 = vmul.f32 %v1084, 0.1
      %v1341 = vmul.f32 %v1085, 0.1
      %v1342 = vmul.f32 %v1086, 0.1
      %v1343 = vmul.f32 %v1087, 0.1
      %v1344 = vmul.f32 %v1088, 0.1
      %v1345 = vmul.f32 %v1089, 0.1
      %v1346 = vmul.f32 %v1090, 0.1
      %v1347 = vmul.f32 %v1091, 0.1
      %v1348 = vmul.f32 %v1092, 0.1
      %v1349 = vmul.f32 %v1093, 0.1
      %v1350 = vmul.f32 %v1094, 0.1
      %v1351 = vmul.f32 %v1095, 0.1
      %v1352 = vmul.f32 %v1096, 0.1
      %v1353 = vmul.f32 %v1097, 0.1
      %v1354 = vmul.f32 %v1098, 0.1
      %v1355 = vmul.f32 %v1099, 0.1
      %v1356 = vmul.f32 %v1100, 0.1
      %v1357 = vmul.f32 %v1101, 0.1
      %v1358 = vmul.f32 %v1102, 0.1
      %v1359 = vmul.f32 %v1103, 0.1
      %v1360 = vmul.f32 %v1104, 0.1
      %v1361 = vmul.f32 %v1105, 0.1
      %v1362 = vmul.f32 %v1106, 0.1
      %v1363 = vmul.f32 %v1107, 0.1
      %v1364 = vmul.f32 %v1108, 0.1
      %v1365 = vmul.f32 %v1109, 0.1
      %v1366 = vmul.f32 %v1110, 0.1
      %v1367 = vmul.f32 %v1111, 0.1
      %v1368 = vmul.f32 %v1112, 0.1
      %v1369 = vmul.f32 %v1113, 0.1
      %v1370 = vmul.f32 %v1114, 0.1
      %v1371 = vmul.f32 %v1115, 0.1
      %v1372 = vmul.f32 %v1116, 0.1
      %v1373 = vmul.f32 %v1117, 0.1
      %v1374 = vmul.f32 %v1118, 0.1
      %v1375 = vmul.f32 %v1119, 0.1
      %v1376 = vmul.f32 %v1120, 0.1
      %v1377 = vmul.f32 %v1121, 0.1
      %v1378 = vmul.f32 %v1122, 0.1
      %v1379 = vmul.f32 %v1123, 0.1
      %v1380 = vmul.f32 %v1124, 0.1
      %v1381 = vmul.f32 %v1125, 0.1
      %v1382 = vmul.f32 %v1126, 0.1
      %v1383 = vmul.f32 %v1127, 0.1
      %v1384 = vmul.f32 %v1128, 0.1
      %v1385 = vmul.f32 %v1129, 0.1
      %v1386 = vmul.f32 %v1130, 0.1
      %v1387 = vmul.f32 %v1131, 0.1
      %v1388 = vmul.f32 %v1132, 0.1
      %v1389 = vmul.f32 %v1133, 0.1
      %v1390 = vmul.f32 %v1134, 0.1
      %v1391 = vmul.f32 %v1135, 0.1
      %v1392 = vmul.f32 %v1136, 0.1
      %v1393 = vmul.f32 %v1137, 0.1
      %v1394 = vmul.f32 %v1138, 0.1
      %v1395 = vmul.f32 %v1139, 0.1
      %v1396 = vmul.f32 %v1140, 0.1
      %v1397 = vmul.f32 %v1141, 0.1
      %v1398 = vmul.f32 %v1142, 0.1
      %v1399 = vmul.f32 %v1143, 0.1
      %v1400 = vmul.f32 %v1144, 0.1
      %v1401 = vmul.f32 %v1145, 0.1
      %v1402 = vmul.f32 %v1146, 0.1
      %v1403 = vmul.f32 %v1147, 0.1
      %v1404 = vmul.f32 %v1148, 0.1
      %v1405 = vmul.f32 %v1149, 0.1
      %v1406 = vmul.f32 %v1150, 0.1
      %v1407 = vmul.f32 %v1151, 0.1
      %v1408 = vmul.f32 %v1152, 0.1
      %v1409 = vmul.f32 %v1153, 0.1
      %v1410 = vmul.f32 %v1154, 0.1
      %v1411 = vmul.f32 %v1155, 0.1
      %v1412 = vmul.f32 %v1156, 0.1
      %v1413 = vmul.f32 %v1157, 0.1
      %v1414 = vmul.f32 %v1158, 0.1
      %v1415 = vmul.f32 %v1159, 0.1
      %v1416 = vsel %vm1160, %v1032, %v1288
      %v1417 = vsel %vm1161, %v1033, %v1289
      %v1418 = vsel %vm1162, %v1034, %v1290
      %v1419 = vsel %vm1163, %v1035, %v1291
      %v1420 = vsel %vm1164, %v1036, %v1292
      %v1421 = vsel %vm1165, %v1037, %v1293
      %v1422 = vsel %vm1166, %v1038, %v1294
      %v1423 = vsel %vm1167, %v1039, %v1295
      %v1424 = vsel %vm1168, %v1040, %v1296
      %v1425 = vsel %vm1169, %v1041, %v1297
      %v1426 = vsel %vm1170, %v1042, %v1298
      %v1427 = vsel %vm1171, %v1043, %v1299
      %v1428 = vsel %vm1172, %v1044, %v1300
      %v1429 = vsel %vm1173, %v1045, %v1301
      %v1430 = vsel %vm1174, %v1046, %v1302
      %v1431 = vsel %vm1175, %v1047, %v1303
      %v1432 = vsel %vm1176, %v1048, %v1304
      %v1433 = vsel %vm1177, %v1049, %v1305
      %v1434 = vsel %vm1178, %v1050, %v1306
      %v1435 = vsel %vm1179, %v1051, %v1307
      %v1436 = vsel %vm1180, %v1052, %v1308
      %v1437 = vsel %vm1181, %v1053, %v1309
      %v1438 = vsel %vm1182, %v1054, %v1310
      %v1439 = vsel %vm1183, %v1055, %v1311
      %v1440 = vsel %vm1184, %v1056, %v1312
      %v1441 = vsel %vm1185, %v1057, %v1313
      %v1442 = vsel %vm1186, %v1058, %v1314
      %v1443 = vsel %vm1187, %v1059, %v1315
      %v1444 = vsel %vm1188, %v1060, %v1316
      %v1445 = vsel %vm1189, %v1061, %v1317
      %v1446 = vsel %vm1190, %v1062, %v1318
      %v1447 = vsel %vm1191, %v1063, %v1319
      %v1448 = vsel %vm1192, %v1064, %v1320
      %v1449 = vsel %vm1193, %v1065, %v1321
      %v1450 = vsel %vm1194, %v1066, %v1322
      %v1451 = vsel %vm1195, %v1067, %v1323
      %v1452 = vsel %vm1196, %v1068, %v1324
      %v1453 = vsel %vm1197, %v1069, %v1325
      %v1454 = vsel %vm1198, %v1070, %v1326
      %v1455 = vsel %vm1199, %v1071, %v1327
      %v1456 = vsel %vm1200, %v1072, %v1328
      %v1457 = vsel %vm1201, %v1073, %v1329
      %v1458 = vsel %vm1202, %v1074, %v1330
      %v1459 = vsel %vm1203, %v1075, %v1331
      %v1460 = vsel %vm1204, %v1076, %v1332
      %v1461 = vsel %vm1205, %v1077, %v1333
      %v1462 = vsel %vm1206, %v1078, %v1334
      %v1463 = vsel %vm1207, %v1079, %v1335
      %v1464 = vsel %vm1208, %v1080, %v1336
      %v1465 = vsel %vm1209, %v1081, %v1337
      %v1466 = vsel %vm1210, %v1082, %v1338
      %v1467 = vsel %vm1211, %v1083, %v1339
      %v1468 = vsel %vm1212, %v1084, %v1340
      %v1469 = vsel %vm1213, %v1085, %v1341
      %v1470 = vsel %vm1214, %v1086, %v1342
      %v1471 = vsel %vm1215, %v1087, %v1343
      %v1472 = vsel %vm1216, %v1088, %v1344
      %v1473 = vsel %vm1217, %v1089, %v1345
      %v1474 = vsel %vm1218, %v1090, %v1346
      %v1475 = vsel %vm1219, %v1091, %v1347
      %v1476 = vsel %vm1220, %v1092, %v1348
      %v1477 = vsel %vm1221, %v1093, %v1349
      %v1478 = vsel %vm1222, %v1094, %v1350
      %v1479 = vsel %vm1223, %v1095, %v1351
      %v1480 = vsel %vm1224, %v1096, %v1352
      %v1481 = vsel %vm1225, %v1097, %v1353
      %v1482 = vsel %vm1226, %v1098, %v1354
      %v1483 = vsel %vm1227, %v1099, %v1355
      %v1484 = vsel %vm1228, %v1100, %v1356
      %v1485 = vsel %vm1229, %v1101, %v1357
      %v1486 = vsel %vm1230, %v1102, %v1358
      %v1487 = vsel %vm1231, %v1103, %v1359
      %v1488 = vsel %vm1232, %v1104, %v1360
      %v1489 = vsel %vm1233, %v1105, %v1361
      %v1490 = vsel %vm1234, %v1106, %v1362
      %v1491 = vsel %vm1235, %v1107, %v1363
      %v1492 = vsel %vm1236, %v1108, %v1364
      %v1493 = vsel %vm1237, %v1109, %v1365
      %v1494 = vsel %vm1238, %v1110, %v1366
      %v1495 = vsel %vm1239, %v1111, %v1367
      %v1496 = vsel %vm1240, %v1112, %v1368
      %v1497 = vsel %vm1241, %v1113, %v1369
      %v1498 = vsel %vm1242, %v1114, %v1370
      %v1499 = vsel %vm1243, %v1115, %v1371
      %v1500 = vsel %vm1244, %v1116, %v1372
      %v1501 = vsel %vm1245, %v1117, %v1373
      %v1502 = vsel %vm1246, %v1118, %v1374
      %v1503 = vsel %vm1247, %v1119, %v1375
      %v1504 = vsel %vm1248, %v1120, %v1376
      %v1505 = vsel %vm1249, %v1121, %v1377
      %v1506 = vsel %vm1250, %v1122, %v1378
      %v1507 = vsel %vm1251, %v1123, %v1379
      %v1508 = vsel %vm1252, %v1124, %v1380
      %v1509 = vsel %vm1253, %v1125, %v1381
      %v1510 = vsel %vm1254, %v1126, %v1382
      %v1511 = vsel %vm1255, %v1127, %v1383
      %v1512 = vsel %vm1256, %v1128, %v1384
      %v1513 = vsel %vm1257, %v1129, %v1385
      %v1514 = vsel %vm1258, %v1130, %v1386
      %v1515 = vsel %vm1259, %v1131, %v1387
      %v1516 = vsel %vm1260, %v1132, %v1388
      %v1517 = vsel %vm1261, %v1133, %v1389
      %v1518 = vsel %vm1262, %v1134, %v1390
      %v1519 = vsel %vm1263, %v1135, %v1391
      %v1520 = vsel %vm1264, %v1136, %v1392
      %v1521 = vsel %vm1265, %v1137, %v1393
      %v1522 = vsel %vm1266, %v1138, %v1394
      %v1523 = vsel %vm1267, %v1139, %v1395
      %v1524 = vsel %vm1268, %v1140, %v1396
      %v1525 = vsel %vm1269, %v1141, %v1397
      %v1526 = vsel %vm1270, %v1142, %v1398
      %v1527 = vsel %vm1271, %v1143, %v1399
      %v1528 = vsel %vm1272, %v1144, %v1400
      %v1529 = vsel %vm1273, %v1145, %v1401
      %v1530 = vsel %vm1274, %v1146, %v1402
      %v1531 = vsel %vm1275, %v1147, %v1403
      %v1532 = vsel %vm1276, %v1148, %v1404
      %v1533 = vsel %vm1277, %v1149, %v1405
      %v1534 = vsel %vm1278, %v1150, %v1406
      %v1535 = vsel %vm1279, %v1151, %v1407
      %v1536 = vsel %vm1280, %v1152, %v1408
      %v1537 = vsel %vm1281, %v1153, %v1409
      %v1538 = vsel %vm1282, %v1154, %v1410
      %v1539 = vsel %vm1283, %v1155, %v1411
      %v1540 = vsel %vm1284, %v1156, %v1412
      %v1541 = vsel %vm1285, %v1157, %v1413
      %v1542 = vsel %vm1286, %v1158, %v1414
      %v1543 = vsel %vm1287, %v1159, %v1415
      %1544 = vst.msk [vmem:[%s116] sm:$0xff] %vm245, %v1416
      %1545 = vst.msk [vmem:[%s116 + $0x8] sm:$0xff] %vm245, %v1417
      %1546 = vst.msk [vmem:[%s116 + $0x10] sm:$0xff] %vm245, %v1418
      %1547 = vst.msk [vmem:[%s116 + $0x18] sm:$0xff] %vm245, %v1419
      %1548 = vst.msk [vmem:[%s116 + $0x20] sm:$0xff] %vm245, %v1420
      %1549 = vst.msk [vmem:[%s116 + $0x28] sm:$0xff] %vm245, %v1421
      %1550 = vst.msk [vmem:[%s116 + $0x30] sm:$0xff] %vm245, %v1422
      %1551 = vst.msk [vmem:[%s116 + $0x38] sm:$0xff] %vm245, %v1423
      %1552 = vst.msk [vmem:[%s116 + $0x40] sm:$0xff] %vm245, %v1424
      %1553 = vst.msk [vmem:[%s116 + $0x48] sm:$0xff] %vm245, %v1425
      %1554 = vst.msk [vmem:[%s116 + $0x50] sm:$0xff] %vm245, %v1426
      %1555 = vst.msk [vmem:[%s116 + $0x58] sm:$0xff] %vm245, %v1427
      %1556 = vst.msk [vmem:[%s116 + $0x60] sm:$0xff] %vm245, %v1428
      %1557 = vst.msk [vmem:[%s116 + $0x68] sm:$0xff] %vm245, %v1429
      %1558 = vst.msk [vmem:[%s116 + $0x70] sm:$0xff] %vm245, %v1430
      %1559 = vst.msk [vmem:[%s116 + $0x78] sm:$0xff] %vm245, %v1431
      %1560 = vst.msk [vmem:[%s116 + $0x80] sm:$0xff] %vm245, %v1432
      %1561 = vst.msk [vmem:[%s116 + $0x88] sm:$0xff] %vm245, %v1433
      %1562 = vst.msk [vmem:[%s116 + $0x90] sm:$0xff] %vm245, %v1434
      %1563 = vst.msk [vmem:[%s116 + $0x98] sm:$0xff] %vm245, %v1435
      %1564 = vst.msk [vmem:[%s116 + $0xa0] sm:$0xff] %vm245, %v1436
      %1565 = vst.msk [vmem:[%s116 + $0xa8] sm:$0xff] %vm245, %v1437
      %1566 = vst.msk [vmem:[%s116 + $0xb0] sm:$0xff] %vm245, %v1438
      %1567 = vst.msk [vmem:[%s116 + $0xb8] sm:$0xff] %vm245, %v1439
      %1568 = vst.msk [vmem:[%s116 + $0xc0] sm:$0xff] %vm245, %v1440
      %1569 = vst.msk [vmem:[%s116 + $0xc8] sm:$0xff] %vm245, %v1441
      %1570 = vst.msk [vmem:[%s116 + $0xd0] sm:$0xff] %vm245, %v1442
      %1571 = vst.msk [vmem:[%s116 + $0xd8] sm:$0xff] %vm245, %v1443
      %1572 = vst.msk [vmem:[%s116 + $0xe0] sm:$0xff] %vm245, %v1444
      %1573 = vst.msk [vmem:[%s116 + $0xe8] sm:$0xff] %vm245, %v1445
      %1574 = vst.msk [vmem:[%s116 + $0xf0] sm:$0xff] %vm245, %v1446
      %1575 = vst.msk [vmem:[%s116 + $0xf8] sm:$0xff] %vm245, %v1447
      %1576 = vst.msk [vmem:[%s116 + $0x100] sm:$0xff] %vm245, %v1448
      %1577 = vst.msk [vmem:[%s116 + $0x108] sm:$0xff] %vm245, %v1449
      %1578 = vst.msk [vmem:[%s116 + $0x110] sm:$0xff] %vm245, %v1450
      %1579 = vst.msk [vmem:[%s116 + $0x118] sm:$0xff] %vm245, %v1451
      %1580 = vst.msk [vmem:[%s116 + $0x120] sm:$0xff] %vm245, %v1452
      %1581 = vst.msk [vmem:[%s116 + $0x128] sm:$0xff] %vm245, %v1453
      %1582 = vst.msk [vmem:[%s116 + $0x130] sm:$0xff] %vm245, %v1454
      %1583 = vst.msk [vmem:[%s116 + $0x138] sm:$0xff] %vm245, %v1455
      %1584 = vst.msk [vmem:[%s116 + $0x140] sm:$0xff] %vm245, %v1456
      %1585 = vst.msk [vmem:[%s116 + $0x148] sm:$0xff] %vm245, %v1457
      %1586 = vst.msk [vmem:[%s116 + $0x150] sm:$0xff] %vm245, %v1458
      %1587 = vst.msk [vmem:[%s116 + $0x158] sm:$0xff] %vm245, %v1459
      %1588 = vst.msk [vmem:[%s116 + $0x160] sm:$0xff] %vm245, %v1460
      %1589 = vst.msk [vmem:[%s116 + $0x168] sm:$0xff] %vm245, %v1461
      %1590 = vst.msk [vmem:[%s116 + $0x170] sm:$0xff] %vm245, %v1462
      %1591 = vst.msk [vmem:[%s116 + $0x178] sm:$0xff] %vm245, %v1463
      %1592 = vst.msk [vmem:[%s116 + $0x180] sm:$0xff] %vm245, %v1464
      %1593 = vst.msk [vmem:[%s116 + $0x188] sm:$0xff] %vm245, %v1465
      %1594 = vst.msk [vmem:[%s116 + $0x190] sm:$0xff] %vm245, %v1466
      %1595 = vst.msk [vmem:[%s116 + $0x198] sm:$0xff] %vm245, %v1467
      %1596 = vst.msk [vmem:[%s116 + $0x1a0] sm:$0xff] %vm245, %v1468
      %1597 = vst.msk [vmem:[%s116 + $0x1a8] sm:$0xff] %vm245, %v1469
      %1598 = vst.msk [vmem:[%s116 + $0x1b0] sm:$0xff] %vm245, %v1470
      %1599 = vst.msk [vmem:[%s116 + $0x1b8] sm:$0xff] %vm245, %v1471
      %1600 = vst.msk [vmem:[%s116 + $0x1c0] sm:$0xff] %vm245, %v1472
      %1601 = vst.msk [vmem:[%s116 + $0x1c8] sm:$0xff] %vm245, %v1473
      %1602 = vst.msk [vmem:[%s116 + $0x1d0] sm:$0xff] %vm245, %v1474
      %1603 = vst.msk [vmem:[%s116 + $0x1d8] sm:$0xff] %vm245, %v1475
      %1604 = vst.msk [vmem:[%s116 + $0x1e0] sm:$0xff] %vm245, %v1476
      %1605 = vst.msk [vmem:[%s116 + $0x1e8] sm:$0xff] %vm245, %v1477
      %1606 = vst.msk [vmem:[%s116 + $0x1f0] sm:$0xff] %vm245, %v1478
      %1607 = vst.msk [vmem:[%s116 + $0x1f8] sm:$0xff] %vm245, %v1479
      %1608 = vst.msk [vmem:[%s116 + $0x200] sm:$0xff] %vm245, %v1480
      %1609 = vst.msk [vmem:[%s116 + $0x208] sm:$0xff] %vm245, %v1481
      %1610 = vst.msk [vmem:[%s116 + $0x210] sm:$0xff] %vm245, %v1482
      %1611 = vst.msk [vmem:[%s116 + $0x218] sm:$0xff] %vm245, %v1483
      %1612 = vst.msk [vmem:[%s116 + $0x220] sm:$0xff] %vm245, %v1484
      %1613 = vst.msk [vmem:[%s116 + $0x228] sm:$0xff] %vm245, %v1485
      %1614 = vst.msk [vmem:[%s116 + $0x230] sm:$0xff] %vm245, %v1486
      %1615 = vst.msk [vmem:[%s116 + $0x238] sm:$0xff] %vm245, %v1487
      %1616 = vst.msk [vmem:[%s116 + $0x240] sm:$0xff] %vm245, %v1488
      %1617 = vst.msk [vmem:[%s116 + $0x248] sm:$0xff] %vm245, %v1489
      %1618 = vst.msk [vmem:[%s116 + $0x250] sm:$0xff] %vm245, %v1490
      %1619 = vst.msk [vmem:[%s116 + $0x258] sm:$0xff] %vm245, %v1491
      %1620 = vst.msk [vmem:[%s116 + $0x260] sm:$0xff] %vm245, %v1492
      %1621 = vst.msk [vmem:[%s116 + $0x268] sm:$0xff] %vm245, %v1493
      %1622 = vst.msk [vmem:[%s116 + $0x270] sm:$0xff] %vm245, %v1494
      %1623 = vst.msk [vmem:[%s116 + $0x278] sm:$0xff] %vm245, %v1495
      %1624 = vst.msk [vmem:[%s116 + $0x280] sm:$0xff] %vm245, %v1496
      %1625 = vst.msk [vmem:[%s116 + $0x288] sm:$0xff] %vm245, %v1497
      %1626 = vst.msk [vmem:[%s116 + $0x290] sm:$0xff] %vm245, %v1498
      %1627 = vst.msk [vmem:[%s116 + $0x298] sm:$0xff] %vm245, %v1499
      %1628 = vst.msk [vmem:[%s116 + $0x2a0] sm:$0xff] %vm245, %v1500
      %1629 = vst.msk [vmem:[%s116 + $0x2a8] sm:$0xff] %vm245, %v1501
      %1630 = vst.msk [vmem:[%s116 + $0x2b0] sm:$0xff] %vm245, %v1502
      %1631 = vst.msk [vmem:[%s116 + $0x2b8] sm:$0xff] %vm245, %v1503
      %1632 = vst.msk [vmem:[%s116 + $0x2c0] sm:$0xff] %vm245, %v1504
      %1633 = vst.msk [vmem:[%s116 + $0x2c8] sm:$0xff] %vm245, %v1505
      %1634 = vst.msk [vmem:[%s116 + $0x2d0] sm:$0xff] %vm245, %v1506
      %1635 = vst.msk [vmem:[%s116 + $0x2d8] sm:$0xff] %vm245, %v1507
      %1636 = vst.msk [vmem:[%s116 + $0x2e0] sm:$0xff] %vm245, %v1508
      %1637 = vst.msk [vmem:[%s116 + $0x2e8] sm:$0xff] %vm245, %v1509
      %1638 = vst.msk [vmem:[%s116 + $0x2f0] sm:$0xff] %vm245, %v1510
      %1639 = vst.msk [vmem:[%s116 + $0x2f8] sm:$0xff] %vm245, %v1511
      %1640 = vst.msk [vmem:[%s116 + $0x300] sm:$0xff] %vm245, %v1512
      %1641 = vst.msk [vmem:[%s116 + $0x308] sm:$0xff] %vm245, %v1513
      %1642 = vst.msk [vmem:[%s116 + $0x310] sm:$0xff] %vm245, %v1514
      %1643 = vst.msk [vmem:[%s116 + $0x318] sm:$0xff] %vm245, %v1515
      %1644 = vst.msk [vmem:[%s116 + $0x320] sm:$0xff] %vm245, %v1516
      %1645 = vst.msk [vmem:[%s116 + $0x328] sm:$0xff] %vm245, %v1517
      %1646 = vst.msk [vmem:[%s116 + $0x330] sm:$0xff] %vm245, %v1518
      %1647 = vst.msk [vmem:[%s116 + $0x338] sm:$0xff] %vm245, %v1519
      %1648 = vst.msk [vmem:[%s116 + $0x340] sm:$0xff] %vm245, %v1520
      %1649 = vst.msk [vmem:[%s116 + $0x348] sm:$0xff] %vm245, %v1521
      %1650 = vst.msk [vmem:[%s116 + $0x350] sm:$0xff] %vm245, %v1522
      %1651 = vst.msk [vmem:[%s116 + $0x358] sm:$0xff] %vm245, %v1523
      %1652 = vst.msk [vmem:[%s116 + $0x360] sm:$0xff] %vm245, %v1524
      %1653 = vst.msk [vmem:[%s116 + $0x368] sm:$0xff] %vm245, %v1525
      %1654 = vst.msk [vmem:[%s116 + $0x370] sm:$0xff] %vm245, %v1526
      %1655 = vst.msk [vmem:[%s116 + $0x378] sm:$0xff] %vm245, %v1527
      %1656 = vst.msk [vmem:[%s116 + $0x380] sm:$0xff] %vm245, %v1528
      %1657 = vst.msk [vmem:[%s116 + $0x388] sm:$0xff] %vm245, %v1529
      %1658 = vst.msk [vmem:[%s116 + $0x390] sm:$0xff] %vm245, %v1530
      %1659 = vst.msk [vmem:[%s116 + $0x398] sm:$0xff] %vm245, %v1531
      %1660 = vst.msk [vmem:[%s116 + $0x3a0] sm:$0xff] %vm245, %v1532
      %1661 = vst.msk [vmem:[%s116 + $0x3a8] sm:$0xff] %vm245, %v1533
      %1662 = vst.msk [vmem:[%s116 + $0x3b0] sm:$0xff] %vm245, %v1534
      %1663 = vst.msk [vmem:[%s116 + $0x3b8] sm:$0xff] %vm245, %v1535
      %1664 = vst.msk [vmem:[%s116 + $0x3c0] sm:$0xff] %vm245, %v1536
      %1665 = vst.msk [vmem:[%s116 + $0x3c8] sm:$0xff] %vm245, %v1537
      %1666 = vst.msk [vmem:[%s116 + $0x3d0] sm:$0xff] %vm245, %v1538
      %1667 = vst.msk [vmem:[%s116 + $0x3d8] sm:$0xff] %vm245, %v1539
      %1668 = vst.msk [vmem:[%s116 + $0x3e0] sm:$0xff] %vm245, %v1540
      %1669 = vst.msk [vmem:[%s116 + $0x3e8] sm:$0xff] %vm245, %v1541
      %1670 = vst.msk [vmem:[%s116 + $0x3f0] sm:$0xff] %vm245, %v1542
      %1671 = vst.msk [vmem:[%s116 + $0x3f8] sm:$0xff] %vm245, %v1543
      %p1672 = scmp.lt.s32.totalorder %s12, 1
      %s1673 = scalar_select %p1672, %s12, 1
      %s1674 = smul.addr %s1673, 128
      %s1675 = smul.addr %s1674, 8
      %s1676 = scalar_lea.vmem %s1, %s1675
      // Predicated region
      $region25: #{encoder_2_forward.30} parent=23 // pred_check
        %p1677 = pneg %p56
      $region26: #{encoder_2_forward.30} parent=23 // pred_check_branch
        %1679 = sbr.rel (%p1677) target = $region28
      $region27: #{encoder_2_forward.30} parent=23 // pred_region
        _
      $region28: #{encoder_2_forward.30} parent=23 // pred_fallthru
        _
    $region24: #{encoder_2_forward.30} parent=5 // pred_fallthru
      _
    %p1680 = scmp.le.s32.totalorder 2, %s7
    // Predicated region
    $region29: #{encoder_2_forward.30} parent=5 // pred_check
      %p1681 = pneg %p1680
    $region30: #{encoder_2_forward.30} parent=5 // pred_check_branch
      %1683 = sbr.rel (%p1681) target = $region32
    $region31: #{encoder_2_forward.30} parent=5 // pred_region
      %s1684 = ssub.s32 %s7, 2
      // Predicated region
      $region33: #{encoder_2_forward.30} parent=31 // pred_check
        %p1685 = pneg %p62
      $region34: #{encoder_2_forward.30} parent=31 // pred_check_branch
        %1687 = sbr.rel (%p1685) target = $region36
      $region35: #{encoder_2_forward.30} parent=31 // pred_region
        %p1688 = scmp.lt.s32.totalorder %s13, 1
        %s1689 = scalar_select %p1688, %s13, 1
        %s1690 = smul.addr %s1689, 128
        %s1691 = smul.addr %s1690, 8
        %s1692 = scalar_lea.vmem %s1, %s1691
      $region36: #{encoder_2_forward.30} parent=31 // pred_fallthru
        _
    $region32: #{encoder_2_forward.30} parent=5 // pred_fallthru
      _
  $region6: #{encoder_2_forward.30} parent=0 // loop_footer
    %s11 = sadd.s32 1, %s7
  $region7: #{encoder_2_forward.30} parent=0 // loop_footer_branch
    %6 = sbr.rel target = $region3
  $region8: #{encoder_2_forward.30} parent=0 // loop_exit
    _

// kernel: encoder_2_forward.32
$region0: #{encoder_2_forward.32}
  #allocation0 [shape = 'u32[]', space=smem, size = 0x4, offset = 0x4, fixed_abs, tag = 'smem constant byte address 0x4 - core index']
  #allocation1 [shape = 'u32[144,128]{1,0:T(1,128)}', space=vmem, size = 0x12000, scoped, tag = 'internal scratch']
  %s0 = inlined_call_operand.vmem [shape: f32[2,256,16], index: 0, kind: input, shape index: {}]
  %s1 = inlined_call_operand.vmem [shape: f32[2,256,16], index: 1, kind: output, shape index: {}]
  %s2 = sld [smem:[#allocation0]]
  $region37: #{encoder_2_forward.32} parent=0
    _
  %s4 = ssub.s32 1, %s2
  %s5 = scalar_select 0, %s4, %s2
  loop: start=0, step=1, limit=4
  $region2: #{encoder_2_forward.32} parent=0 // loop_pre_header
    _
  $region3: #{encoder_2_forward.32} parent=0 // loop_header
    %s7 = sphi 0, %s11
    %p8 = scmp.ge.s32.totalorder %s7, 4
    %s17 = sphi 0, %s19
    %s20 = sphi 0, %s17
    %s21 = sphi 0, %s20
    %s37 = sphi 0, %s21
    %s43 = sphi 0, %s45
    %s46 = sphi 0, %s43
    %s47 = sphi 0, %s46
    %s63 = sphi 0, %s47
  $region4: #{encoder_2_forward.32} parent=0 // loop_header_branch
    %10 = sbr.rel (%p8) target = $region8
  $region5: #{encoder_2_forward.32} parent=0 // loop_body
    %s12 = ssub.s32 %s7, 1
    %s13 = ssub.s32 %s7, 2
    %s14 = sadd.s32 %s7, 1
    %s15 = ssub.s32 %s7, %s14
    %p16 = scmp.eq.s32.totalorder %s15, 0
    %s18 = sadd.s32 %s17, 1
    %s19 = scalar_select %p16, %s17, %s18
    %p22 = pneg %p16
    %p23 = scmp.eq.s32.totalorder %s7, 1
    %p24 = por %p22, %p23
    %p25 = scmp.ne.s32.totalorder %s17, %s20
    %p26 = scmp.eq.s32.totalorder %s7, 0
    %p27 = por %p25, %p26
    %p28 = scmp.ne.s32.totalorder %s17, %s20
    %p29 = scmp.eq.s32.totalorder %s12, 1
    %p30 = por %p28, %p29
    %p31 = scmp.ne.s32.totalorder %s20, %s21
    %p32 = scmp.eq.s32.totalorder %s12, 0
    %p33 = por %p31, %p32
    %p34 = scmp.ne.s32.totalorder %s20, %s21
    %p35 = scmp.eq.s32.totalorder %s13, 1
    %p36 = por %p34, %p35
    %p38 = scmp.ne.s32.totalorder %s21, %s37
    %p39 = scmp.eq.s32.totalorder %s13, 0
    %p40 = por %p38, %p39
    %s41 = ssub.s32 %s7, %s14
    %p42 = scmp.eq.s32.totalorder %s41, 0
    %s44 = sadd.s32 %s43, 1
    %s45 = scalar_select %p42, %s43, %s44
    %p48 = pneg %p42
    %p49 = scmp.eq.s32.totalorder %s7, 1
    %p50 = por %p48, %p49
    %p51 = scmp.ne.s32.totalorder %s43, %s46
    %p52 = scmp.eq.s32.totalorder %s7, 0
    %p53 = por %p51, %p52
    %p54 = scmp.ne.s32.totalorder %s43, %s46
    %p55 = scmp.eq.s32.totalorder %s12, 1
    %p56 = por %p54, %p55
    %p57 = scmp.ne.s32.totalorder %s46, %s47
    %p58 = scmp.eq.s32.totalorder %s12, 0
    %p59 = por %p57, %p58
    %p60 = scmp.ne.s32.totalorder %s46, %s47
    %p61 = scmp.eq.s32.totalorder %s13, 1
    %p62 = por %p60, %p61
    %p64 = scmp.ne.s32.totalorder %s47, %s63
    %p65 = scmp.eq.s32.totalorder %s13, 0
    %p66 = por %p64, %p65
    %p67 = scmp.le.s32.totalorder 1, %s7
    %p68 = scmp.lt.s32.totalorder %s7, 3
    %p69 = pnand %p67, %p68
    %p70 = pneg %p69
    // Predicated region
    $region9: #{encoder_2_forward.32} parent=5 // pred_check
      _
    $region10: #{encoder_2_forward.32} parent=5 // pred_check_branch
      %72 = sbr.rel (%p69) target = $region12
    $region11: #{encoder_2_forward.32} parent=5 // pred_region
      %s73 = ssub.s32 %s7, 1
    $region12: #{encoder_2_forward.32} parent=5 // pred_fallthru
      _
    %p74 = scmp.lt.s32.totalorder %s7, 2
    // Predicated region
    $region13: #{encoder_2_forward.32} parent=5 // pred_check
      %p75 = pneg %p74
    $region14: #{encoder_2_forward.32} parent=5 // pred_check_branch
      %77 = sbr.rel (%p75) target = $region16
    $region15: #{encoder_2_forward.32} parent=5 // pred_region
      // Predicated region
      $region17: #{encoder_2_forward.32} parent=15 // pred_check
        %p78 = pneg %p27
      $region18: #{encoder_2_forward.32} parent=15 // pred_check_branch
        %80 = sbr.rel (%p78) target = $region20
      $region19: #{encoder_2_forward.32} parent=15 // pred_region
        %p81 = scmp.lt.s32.totalorder %s7, 1
        %s82 = scalar_select %p81, %s7, 1
        %s83 = smul.addr %s82, 32
        %s84 = smul.addr %s83, 8
        %s85 = scalar_lea.vmem %s0, %s84
      $region20: #{encoder_2_forward.32} parent=15 // pred_fallthru
        _
    $region16: #{encoder_2_forward.32} parent=5 // pred_fallthru
      _
    %p86 = scmp.le.s32.totalorder 1, %s7
    %p87 = scmp.lt.s32.totalorder %s7, 3
    %p88 = pnand %p86, %p87
    %p89 = pneg %p88
    // Predicated region
    $region21: #{encoder_2_forward.32} parent=5 // pred_check
      _
    $region22: #{encoder_2_forward.32} parent=5 // pred_check_branch
      %91 = sbr.rel (%p88) target = $region24
    $region23: #{encoder_2_forward.32} parent=5 // pred_region
      %s92 = ssub.s32 %s7, 1
      %p93 = scmp.lt.s32.totalorder %s12, 1
      %s94 = scalar_select %p93, %s12, 1
      %s95 = smul.addr %s94, 32
      %s96 = smul.addr %s95, 8
      %s97 = scalar_lea.vmem %s0, %s96
      %p98 = pneg %p33
      %p99 = pneg %p30
      %p100 = pneg %p59
      %p101 = pneg %p56
      %p102 = scmp.lt.s32.totalorder %s12, 1
      %s103 = scalar_select %p102, %s12, 1
      %s104 = smul.addr %s103, 32
      %s105 = smul.addr %s104, 8
      %s106 = scalar_lea.vmem %s1, %s105
      %p107 = scmp.lt.s32.totalorder %s12, 1
      %s108 = scalar_select %p107, %s12, 1
      %s109 = smul.addr %s108, 32
      %s110 = smul.addr %s109, 8
      %s111 = scalar_lea.vmem %s0, %s110
      %p112 = scmp.lt.s32.totalorder %s12, 1
      %s113 = scalar_select %p112, %s12, 1
      %s114 = smul.addr %s113, 32
      %s115 = smul.addr %s114, 8
      %s116 = scalar_lea.vmem %s1, %s115
      %v117 = vld [vmem:[%s111] sm:$0xff]
      %v118 = vld [vmem:[%s111 + $0x8] sm:$0xff]
      %v119 = vld [vmem:[%s111 + $0x10] sm:$0xff]
      %v120 = vld [vmem:[%s111 + $0x18] sm:$0xff]
      %v121 = vld [vmem:[%s111 + $0x20] sm:$0xff]
      %v122 = vld [vmem:[%s111 + $0x28] sm:$0xff]
      %v123 = vld [vmem:[%s111 + $0x30] sm:$0xff]
      %v124 = vld [vmem:[%s111 + $0x38] sm:$0xff]
      %v125 = vld [vmem:[%s111 + $0x40] sm:$0xff]
      %v126 = vld [vmem:[%s111 + $0x48] sm:$0xff]
      %v127 = vld [vmem:[%s111 + $0x50] sm:$0xff]
      %v128 = vld [vmem:[%s111 + $0x58] sm:$0xff]
      %v129 = vld [vmem:[%s111 + $0x60] sm:$0xff]
      %v130 = vld [vmem:[%s111 + $0x68] sm:$0xff]
      %v131 = vld [vmem:[%s111 + $0x70] sm:$0xff]
      %v132 = vld [vmem:[%s111 + $0x78] sm:$0xff]
      %v133 = vld [vmem:[%s111 + $0x80] sm:$0xff]
      %v134 = vld [vmem:[%s111 + $0x88] sm:$0xff]
      %v135 = vld [vmem:[%s111 + $0x90] sm:$0xff]
      %v136 = vld [vmem:[%s111 + $0x98] sm:$0xff]
      %v137 = vld [vmem:[%s111 + $0xa0] sm:$0xff]
      %v138 = vld [vmem:[%s111 + $0xa8] sm:$0xff]
      %v139 = vld [vmem:[%s111 + $0xb0] sm:$0xff]
      %v140 = vld [vmem:[%s111 + $0xb8] sm:$0xff]
      %v141 = vld [vmem:[%s111 + $0xc0] sm:$0xff]
      %v142 = vld [vmem:[%s111 + $0xc8] sm:$0xff]
      %v143 = vld [vmem:[%s111 + $0xd0] sm:$0xff]
      %v144 = vld [vmem:[%s111 + $0xd8] sm:$0xff]
      %v145 = vld [vmem:[%s111 + $0xe0] sm:$0xff]
      %v146 = vld [vmem:[%s111 + $0xe8] sm:$0xff]
      %v147 = vld [vmem:[%s111 + $0xf0] sm:$0xff]
      %v148 = vld [vmem:[%s111 + $0xf8] sm:$0xff]
      %vm149 = vcmask 130048
      %v150 = vsel %vm149, %v117, 0.0
      %v151 = vsel %vm149, %v118, 0.0
      %v152 = vadd.f32 %v150, %v151
      %v153 = vsel %vm149, %v119, 0.0
      %v154 = vadd.f32 %v152, %v153
      %v155 = vsel %vm149, %v120, 0.0
      %v156 = vadd.f32 %v154, %v155
      %v157 = vsel %vm149, %v121, 0.0
      %v158 = vadd.f32 %v156, %v157
      %v159 = vsel %vm149, %v122, 0.0
      %v160 = vadd.f32 %v158, %v159
      %v161 = vsel %vm149, %v123, 0.0
      %v162 = vadd.f32 %v160, %v161
      %v163 = vsel %vm149, %v124, 0.0
      %v164 = vadd.f32 %v162, %v163
      %v165 = vsel %vm149, %v125, 0.0
      %v166 = vadd.f32 %v164, %v165
      %v167 = vsel %vm149, %v126, 0.0
      %v168 = vadd.f32 %v166, %v167
      %v169 = vsel %vm149, %v127, 0.0
      %v170 = vadd.f32 %v168, %v169
      %v171 = vsel %vm149, %v128, 0.0
      %v172 = vadd.f32 %v170, %v171
      %v173 = vsel %vm149, %v129, 0.0
      %v174 = vadd.f32 %v172, %v173
      %v175 = vsel %vm149, %v130, 0.0
      %v176 = vadd.f32 %v174, %v175
      %v177 = vsel %vm149, %v131, 0.0
      %v178 = vadd.f32 %v176, %v177
      %v179 = vsel %vm149, %v132, 0.0
      %v180 = vadd.f32 %v178, %v179
      %v181 = vsel %vm149, %v133, 0.0
      %v182 = vadd.f32 %v180, %v181
      %v183 = vsel %vm149, %v134, 0.0
      %v184 = vadd.f32 %v182, %v183
      %v185 = vsel %vm149, %v135, 0.0
      %v186 = vadd.f32 %v184, %v185
      %v187 = vsel %vm149, %v136, 0.0
      %v188 = vadd.f32 %v186, %v187
      %v189 = vsel %vm149, %v137, 0.0
      %v190 = vadd.f32 %v188, %v189
      %v191 = vsel %vm149, %v138, 0.0
      %v192 = vadd.f32 %v190, %v191
      %v193 = vsel %vm149, %v139, 0.0
      %v194 = vadd.f32 %v192, %v193
      %v195 = vsel %vm149, %v140, 0.0
      %v196 = vadd.f32 %v194, %v195
      %v197 = vsel %vm149, %v141, 0.0
      %v198 = vadd.f32 %v196, %v197
      %v199 = vsel %vm149, %v142, 0.0
      %v200 = vadd.f32 %v198, %v199
      %v201 = vsel %vm149, %v143, 0.0
      %v202 = vadd.f32 %v200, %v201
      %v203 = vsel %vm149, %v144, 0.0
      %v204 = vadd.f32 %v202, %v203
      %v205 = vsel %vm149, %v145, 0.0
      %v206 = vadd.f32 %v204, %v205
      %v207 = vsel %vm149, %v146, 0.0
      %v208 = vadd.f32 %v206, %v207
      %v209 = vsel %vm149, %v147, 0.0
      %v210 = vadd.f32 %v208, %v209
      %v211 = vsel %vm149, %v148, 0.0
      %v212 = vadd.f32 %v210, %v211
      %v213 = vrot.slane %v212, 4
      %v214 = vadd.f32 %v212, %v213
      %v215 = vrot.slane %v214, 2
      %v216 = vadd.f32 %v214, %v215
      %v217 = vrot.slane %v216, 1
      %v218 = vadd.f32 %v216, %v217
      %v219 = vmul.f32 %v117, %v117
      %v220 = vmul.f32 %v118, %v118
      %v221 = vmul.f32 %v119, %v119
      %v222 = vmul.f32 %v120, %v120
      %v223 = vmul.f32 %v121, %v121
      %v224 = vmul.f32 %v122, %v122
      %v225 = vmul.f32 %v123, %v123
      %v226 = vmul.f32 %v124, %v124
      %v227 = vmul.f32 %v125, %v125
      %v228 = vmul.f32 %v126, %v126
      %v229 = vmul.f32 %v127, %v127
      %v230 = vmul.f32 %v128, %v128
      %v231 = vmul.f32 %v129, %v129
      %v232 = vmul.f32 %v130, %v130
      %v233 = vmul.f32 %v131, %v131
      %v234 = vmul.f32 %v132, %v132
      %v235 = vmul.f32 %v133, %v133
      %v236 = vmul.f32 %v134, %v134
      %v237 = vmul.f32 %v135, %v135
      %v238 = vmul.f32 %v136, %v136
      %v239 = vmul.f32 %v137, %v137
      %v240 = vmul.f32 %v138, %v138
      %v241 = vmul.f32 %v139, %v139
      %v242 = vmul.f32 %v140, %v140
      %v243 = vmul.f32 %v141, %v141
      %v244 = vmul.f32 %v142, %v142
      %v245 = vmul.f32 %v143, %v143
      %v246 = vmul.f32 %v144, %v144
      %v247 = vmul.f32 %v145, %v145
      %v248 = vmul.f32 %v146, %v146
      %v249 = vmul.f32 %v147, %v147
      %v250 = vmul.f32 %v148, %v148
      %v251 = vsel %vm149, %v219, 0.0
      %v252 = vsel %vm149, %v220, 0.0
      %v253 = vadd.f32 %v251, %v252
      %v254 = vsel %vm149, %v221, 0.0
      %v255 = vadd.f32 %v253, %v254
      %v256 = vsel %vm149, %v222, 0.0
      %v257 = vadd.f32 %v255, %v256
      %v258 = vsel %vm149, %v223, 0.0
      %v259 = vadd.f32 %v257, %v258
      %v260 = vsel %vm149, %v224, 0.0
      %v261 = vadd.f32 %v259, %v260
      %v262 = vsel %vm149, %v225, 0.0
      %v263 = vadd.f32 %v261, %v262
      %v264 = vsel %vm149, %v226, 0.0
      %v265 = vadd.f32 %v263, %v264
      %v266 = vsel %vm149, %v227, 0.0
      %v267 = vadd.f32 %v265, %v266
      %v268 = vsel %vm149, %v228, 0.0
      %v269 = vadd.f32 %v267, %v268
      %v270 = vsel %vm149, %v229, 0.0
      %v271 = vadd.f32 %v269, %v270
      %v272 = vsel %vm149, %v230, 0.0
      %v273 = vadd.f32 %v271, %v272
      %v274 = vsel %vm149, %v231, 0.0
      %v275 = vadd.f32 %v273, %v274
      %v276 = vsel %vm149, %v232, 0.0
      %v277 = vadd.f32 %v275, %v276
      %v278 = vsel %vm149, %v233, 0.0
      %v279 = vadd.f32 %v277, %v278
      %v280 = vsel %vm149, %v234, 0.0
      %v281 = vadd.f32 %v279, %v280
      %v282 = vsel %vm149, %v235, 0.0
      %v283 = vadd.f32 %v281, %v282
      %v284 = vsel %vm149, %v236, 0.0
      %v285 = vadd.f32 %v283, %v284
      %v286 = vsel %vm149, %v237, 0.0
      %v287 = vadd.f32 %v285, %v286
      %v288 = vsel %vm149, %v238, 0.0
      %v289 = vadd.f32 %v287, %v288
      %v290 = vsel %vm149, %v239, 0.0
      %v291 = vadd.f32 %v289, %v290
      %v292 = vsel %vm149, %v240, 0.0
      %v293 = vadd.f32 %v291, %v292
      %v294 = vsel %vm149, %v241, 0.0
      %v295 = vadd.f32 %v293, %v294
      %v296 = vsel %vm149, %v242, 0.0
      %v297 = vadd.f32 %v295, %v296
      %v298 = vsel %vm149, %v243, 0.0
      %v299 = vadd.f32 %v297, %v298
      %v300 = vsel %vm149, %v244, 0.0
      %v301 = vadd.f32 %v299, %v300
      %v302 = vsel %vm149, %v245, 0.0
      %v303 = vadd.f32 %v301, %v302
      %v304 = vsel %vm149, %v246, 0.0
      %v305 = vadd.f32 %v303, %v304
      %v306 = vsel %vm149, %v247, 0.0
      %v307 = vadd.f32 %v305, %v306
      %v308 = vsel %vm149, %v248, 0.0
      %v309 = vadd.f32 %v307, %v308
      %v310 = vsel %vm149, %v249, 0.0
      %v311 = vadd.f32 %v309, %v310
      %v312 = vsel %vm149, %v250, 0.0
      %v313 = vadd.f32 %v311, %v312
      %v314 = vrot.slane %v313, 4
      %v315 = vadd.f32 %v313, %v314
      %v316 = vrot.slane %v315, 2
      %v317 = vadd.f32 %v315, %v316
      %v318 = vrot.slane %v317, 1
      %v319 = vadd.f32 %v317, %v318
      %v320 = vrcp.pop 256.0
      %v321 = vmul.f32 %v218, %v320
      %v322 = vmul.f32 %v319, %v320
      %v323 = vmul.f32 %v321, %v321
      %v324 = vsub.f32 %v322, %v323
      %v325 = vmax.f32 %v324, 0.0
      %v326 = vadd.f32 %v325, 1e-05
      %v327 = vrsqrt.pop %v326
      %v328 = vsub.f32 %v117, %v321
      %v329 = vsub.f32 %v118, %v321
      %v330 = vsub.f32 %v119, %v321
      %v331 = vsub.f32 %v120, %v321
      %v332 = vsub.f32 %v121, %v321
      %v333 = vsub.f32 %v122, %v321
      %v334 = vsub.f32 %v123, %v321
      %v335 = vsub.f32 %v124, %v321
      %v336 = vsub.f32 %v125, %v321
      %v337 = vsub.f32 %v126, %v321
      %v338 = vsub.f32 %v127, %v321
      %v339 = vsub.f32 %v128, %v321
      %v340 = vsub.f32 %v129, %v321
      %v341 = vsub.f32 %v130, %v321
      %v342 = vsub.f32 %v131, %v321
      %v343 = vsub.f32 %v132, %v321
      %v344 = vsub.f32 %v133, %v321
      %v345 = vsub.f32 %v134, %v321
      %v346 = vsub.f32 %v135, %v321
      %v347 = vsub.f32 %v136, %v321
      %v348 = vsub.f32 %v137, %v321
      %v349 = vsub.f32 %v138, %v321
      %v350 = vsub.f32 %v139, %v321
      %v351 = vsub.f32 %v140, %v321
      %v352 = vsub.f32 %v141, %v321
      %v353 = vsub.f32 %v142, %v321
      %v354 = vsub.f32 %v143, %v321
      %v355 = vsub.f32 %v144, %v321
      %v356 = vsub.f32 %v145, %v321
      %v357 = vsub.f32 %v146, %v321
      %v358 = vsub.f32 %v147, %v321
      %v359 = vsub.f32 %v148, %v321
      %v360 = vmul.f32 %v328, %v327
      %v361 = vmul.f32 %v329, %v327
      %v362 = vmul.f32 %v330, %v327
      %v363 = vmul.f32 %v331, %v327
      %v364 = vmul.f32 %v332, %v327
      %v365 = vmul.f32 %v333, %v327
      %v366 = vmul.f32 %v334, %v327
      %v367 = vmul.f32 %v335, %v327
      %v368 = vmul.f32 %v336, %v327
      %v369 = vmul.f32 %v337, %v327
      %v370 = vmul.f32 %v338, %v327
      %v371 = vmul.f32 %v339, %v327
      %v372 = vmul.f32 %v340, %v327
      %v373 = vmul.f32 %v341, %v327
      %v374 = vmul.f32 %v342, %v327
      %v375 = vmul.f32 %v343, %v327
      %v376 = vmul.f32 %v344, %v327
      %v377 = vmul.f32 %v345, %v327
      %v378 = vmul.f32 %v346, %v327
      %v379 = vmul.f32 %v347, %v327
      %v380 = vmul.f32 %v348, %v327
      %v381 = vmul.f32 %v349, %v327
      %v382 = vmul.f32 %v350, %v327
      %v383 = vmul.f32 %v351, %v327
      %v384 = vmul.f32 %v352, %v327
      %v385 = vmul.f32 %v353, %v327
      %v386 = vmul.f32 %v354, %v327
      %v387 = vmul.f32 %v355, %v327
      %v388 = vmul.f32 %v356, %v327
      %v389 = vmul.f32 %v357, %v327
      %v390 = vmul.f32 %v358, %v327
      %v391 = vmul.f32 %v359, %v327
      %vm392 = vcmp.ge.f32.partialorder %v360, 0.0
      %vm393 = vcmp.ge.f32.partialorder %v361, 0.0
      %vm394 = vcmp.ge.f32.partialorder %v362, 0.0
      %vm395 = vcmp.ge.f32.partialorder %v363, 0.0
      %vm396 = vcmp.ge.f32.partialorder %v364, 0.0
      %vm397 = vcmp.ge.f32.partialorder %v365, 0.0
      %vm398 = vcmp.ge.f32.partialorder %v366, 0.0
      %vm399 = vcmp.ge.f32.partialorder %v367, 0.0
      %vm400 = vcmp.ge.f32.partialorder %v368, 0.0
      %vm401 = vcmp.ge.f32.partialorder %v369, 0.0
      %vm402 = vcmp.ge.f32.partialorder %v370, 0.0
      %vm403 = vcmp.ge.f32.partialorder %v371, 0.0
      %vm404 = vcmp.ge.f32.partialorder %v372, 0.0
      %vm405 = vcmp.ge.f32.partialorder %v373, 0.0
      %vm406 = vcmp.ge.f32.partialorder %v374, 0.0
      %vm407 = vcmp.ge.f32.partialorder %v375, 0.0
      %vm408 = vcmp.ge.f32.partialorder %v376, 0.0
      %vm409 = vcmp.ge.f32.partialorder %v377, 0.0
      %vm410 = vcmp.ge.f32.partialorder %v378, 0.0
      %vm411 = vcmp.ge.f32.partialorder %v379, 0.0
      %vm412 = vcmp.ge.f32.partialorder %v380, 0.0
      %vm413 = vcmp.ge.f32.partialorder %v381, 0.0
      %vm414 = vcmp.ge.f32.partialorder %v382, 0.0
      %vm415 = vcmp.ge.f32.partialorder %v383, 0.0
      %vm416 = vcmp.ge.f32.partialorder %v384, 0.0
      %vm417 = vcmp.ge.f32.partialorder %v385, 0.0
      %vm418 = vcmp.ge.f32.partialorder %v386, 0.0
      %vm419 = vcmp.ge.f32.partialorder %v387, 0.0
      %vm420 = vcmp.ge.f32.partialorder %v388, 0.0
      %vm421 = vcmp.ge.f32.partialorder %v389, 0.0
      %vm422 = vcmp.ge.f32.partialorder %v390, 0.0
      %vm423 = vcmp.ge.f32.partialorder %v391, 0.0
      %v424 = vmul.f32 %v360, 0.1
      %v425 = vmul.f32 %v361, 0.1
      %v426 = vmul.f32 %v362, 0.1
      %v427 = vmul.f32 %v363, 0.1
      %v428 = vmul.f32 %v364, 0.1
      %v429 = vmul.f32 %v365, 0.1
      %v430 = vmul.f32 %v366, 0.1
      %v431 = vmul.f32 %v367, 0.1
      %v432 = vmul.f32 %v368, 0.1
      %v433 = vmul.f32 %v369, 0.1
      %v434 = vmul.f32 %v370, 0.1
      %v435 = vmul.f32 %v371, 0.1
      %v436 = vmul.f32 %v372, 0.1
      %v437 = vmul.f32 %v373, 0.1
      %v438 = vmul.f32 %v374, 0.1
      %v439 = vmul.f32 %v375, 0.1
      %v440 = vmul.f32 %v376, 0.1
      %v441 = vmul.f32 %v377, 0.1
      %v442 = vmul.f32 %v378, 0.1
      %v443 = vmul.f32 %v379, 0.1
      %v444 = vmul.f32 %v380, 0.1
      %v445 = vmul.f32 %v381, 0.1
      %v446 = vmul.f32 %v382, 0.1
      %v447 = vmul.f32 %v383, 0.1
      %v448 = vmul.f32 %v384, 0.1
      %v449 = vmul.f32 %v385, 0.1
      %v450 = vmul.f32 %v386, 0.1
      %v451 = vmul.f32 %v387, 0.1
      %v452 = vmul.f32 %v388, 0.1
      %v453 = vmul.f32 %v389, 0.1
      %v454 = vmul.f32 %v390, 0.1
      %v455 = vmul.f32 %v391, 0.1
      %v456 = vsel %vm392, %v360, %v424
      %v457 = vsel %vm393, %v361, %v425
      %v458 = vsel %vm394, %v362, %v426
      %v459 = vsel %vm395, %v363, %v427
      %v460 = vsel %vm396, %v364, %v428
      %v461 = vsel %vm397, %v365, %v429
      %v462 = vsel %vm398, %v366, %v430
      %v463 = vsel %vm399, %v367, %v431
      %v464 = vsel %vm400, %v368, %v432
      %v465 = vsel %vm401, %v369, %v433
      %v466 = vsel %vm402, %v370, %v434
      %v467 = vsel %vm403, %v371, %v435
      %v468 = vsel %vm404, %v372, %v436
      %v469 = vsel %vm405, %v373, %v437
      %v470 = vsel %vm406, %v374, %v438
      %v471 = vsel %vm407, %v375, %v439
      %v472 = vsel %vm408, %v376, %v440
      %v473 = vsel %vm409, %v377, %v441
      %v474 = vsel %vm410, %v378, %v442
      %v475 = vsel %vm411, %v379, %v443
      %v476 = vsel %vm412, %v380, %v444
      %v477 = vsel %vm413, %v381, %v445
      %v478 = vsel %vm414, %v382, %v446
      %v479 = vsel %vm415, %v383, %v447
      %v480 = vsel %vm416, %v384, %v448
      %v481 = vsel %vm417, %v385, %v449
      %v482 = vsel %vm418, %v386, %v450
      %v483 = vsel %vm419, %v387, %v451
      %v484 = vsel %vm420, %v388, %v452
      %v485 = vsel %vm421, %v389, %v453
      %v486 = vsel %vm422, %v390, %v454
      %v487 = vsel %vm423, %v391, %v455
      %488 = vst.msk [vmem:[%s116] sm:$0xff] %vm149, %v456
      %489 = vst.msk [vmem:[%s116 + $0x8] sm:$0xff] %vm149, %v457
      %490 = vst.msk [vmem:[%s116 + $0x10] sm:$0xff] %vm149, %v458
      %491 = vst.msk [vmem:[%s116 + $0x18] sm:$0xff] %vm149, %v459
      %492 = vst.msk [vmem:[%s116 + $0x20] sm:$0xff] %vm149, %v460
      %493 = vst.msk [vmem:[%s116 + $0x28] sm:$0xff] %vm149, %v461
      %494 = vst.msk [vmem:[%s116 + $0x30] sm:$0xff] %vm149, %v462
      %495 = vst.msk [vmem:[%s116 + $0x38] sm:$0xff] %vm149, %v463
      %496 = vst.msk [vmem:[%s116 + $0x40] sm:$0xff] %vm149, %v464
      %497 = vst.msk [vmem:[%s116 + $0x48] sm:$0xff] %vm149, %v465
      %498 = vst.msk [vmem:[%s116 + $0x50] sm:$0xff] %vm149, %v466
      %499 = vst.msk [vmem:[%s116 + $0x58] sm:$0xff] %vm149, %v467
      %500 = vst.msk [vmem:[%s116 + $0x60] sm:$0xff] %vm149, %v468
      %501 = vst.msk [vmem:[%s116 + $0x68] sm:$0xff] %vm149, %v469
      %502 = vst.msk [vmem:[%s116 + $0x70] sm:$0xff] %vm149, %v470
      %503 = vst.msk [vmem:[%s116 + $0x78] sm:$0xff] %vm149, %v471
      %504 = vst.msk [vmem:[%s116 + $0x80] sm:$0xff] %vm149, %v472
      %505 = vst.msk [vmem:[%s116 + $0x88] sm:$0xff] %vm149, %v473
      %506 = vst.msk [vmem:[%s116 + $0x90] sm:$0xff] %vm149, %v474
      %507 = vst.msk [vmem:[%s116 + $0x98] sm:$0xff] %vm149, %v475
      %508 = vst.msk [vmem:[%s116 + $0xa0] sm:$0xff] %vm149, %v476
      %509 = vst.msk [vmem:[%s116 + $0xa8] sm:$0xff] %vm149, %v477
      %510 = vst.msk [vmem:[%s116 + $0xb0] sm:$0xff] %vm149, %v478
      %511 = vst.msk [vmem:[%s116 + $0xb8] sm:$0xff] %vm149, %v479
      %512 = vst.msk [vmem:[%s116 + $0xc0] sm:$0xff] %vm149, %v480
      %513 = vst.msk [vmem:[%s116 + $0xc8] sm:$0xff] %vm149, %v481
      %514 = vst.msk [vmem:[%s116 + $0xd0] sm:$0xff] %vm149, %v482
      %515 = vst.msk [vmem:[%s116 + $0xd8] sm:$0xff] %vm149, %v483
      %516 = vst.msk [vmem:[%s116 + $0xe0] sm:$0xff] %vm149, %v484
      %517 = vst.msk [vmem:[%s116 + $0xe8] sm:$0xff] %vm149, %v485
      %518 = vst.msk [vmem:[%s116 + $0xf0] sm:$0xff] %vm149, %v486
      %519 = vst.msk [vmem:[%s116 + $0xf8] sm:$0xff] %vm149, %v487
      %p520 = scmp.lt.s32.totalorder %s12, 1
      %s521 = scalar_select %p520, %s12, 1
      %s522 = smul.addr %s521, 32
      %s523 = smul.addr %s522, 8
      %s524 = scalar_lea.vmem %s1, %s523
      // Predicated region
      $region25: #{encoder_2_forward.32} parent=23 // pred_check
        %p525 = pneg %p56
      $region26: #{encoder_2_forward.32} parent=23 // pred_check_branch
        %527 = sbr.rel (%p525) target = $region28
      $region27: #{encoder_2_forward.32} parent=23 // pred_region
        _
      $region28: #{encoder_2_forward.32} parent=23 // pred_fallthru
        _
    $region24: #{encoder_2_forward.32} parent=5 // pred_fallthru
      _
    %p528 = scmp.le.s32.totalorder 2, %s7
    // Predicated region
    $region29: #{encoder_2_forward.32} parent=5 // pred_check
      %p529 = pneg %p528
    $region30: #{encoder_2_forward.32} parent=5 // pred_check_branch
      %531 = sbr.rel (%p529) target = $region32
    $region31: #{encoder_2_forward.32} parent=5 // pred_region
      %s532 = ssub.s32 %s7, 2
      // Predicated region
      $region33: #{encoder_2_forward.32} parent=31 // pred_check
        %p533 = pneg %p62
      $region34: #{encoder_2_forward.32} parent=31 // pred_check_branch
        %535 = sbr.rel (%p533) target = $region36
      $region35: #{encoder_2_forward.32} parent=31 // pred_region
        %p536 = scmp.lt.s32.totalorder %s13, 1
        %s537 = scalar_select %p536, %s13, 1
        %s538 = smul.addr %s537, 32
        %s539 = smul.addr %s538, 8
        %s540 = scalar_lea.vmem %s1, %s539
      $region36: #{encoder_2_forward.32} parent=31 // pred_fallthru
        _
    $region32: #{encoder_2_forward.32} parent=5 // pred_fallthru
      _
  $region6: #{encoder_2_forward.32} parent=0 // loop_footer
    %s11 = sadd.s32 1, %s7
  $region7: #{encoder_2_forward.32} parent=0 // loop_footer_branch
    %6 = sbr.rel target = $region3
  $region8: #{encoder_2_forward.32} parent=0 // loop_exit
    _

// kernel: encoder_2_forward.31
$region0: #{encoder_2_forward.31}
  #allocation0 [shape = 'u32[]', space=smem, size = 0x4, offset = 0x4, fixed_abs, tag = 'smem constant byte address 0x4 - core index']
  #allocation1 [shape = 'u32[144,128]{1,0:T(1,128)}', space=vmem, size = 0x12000, scoped, tag = 'internal scratch']
  #allocation2 [shape = 'f32[256,128]{1,0:T(8,128)}', space=vmem, size = 0x20000, scoped, tag = 'scratch operand']
  %s0 = inlined_call_operand.vmem [shape: bf16[512,128], index: 0, kind: input, shape index: {}]
  %s1 = inlined_call_operand.vmem [shape: bf16[128,128], index: 1, kind: input, shape index: {}]
  %s2 = inlined_call_operand.vmem [shape: f32[1,128], index: 2, kind: input, shape index: {}]
  %s3 = inlined_call_operand.vmem [shape: f32[512,128], index: 3, kind: output, shape index: {}]
  %s4 = sld [smem:[#allocation0]]
  $region53: #{encoder_2_forward.31} parent=0
    _
  %s6 = ssub.s32 1, %s4
  %s7 = scalar_select 0, %s6, %s4
  loop: start=0, step=1, limit=4
  $region2: #{encoder_2_forward.31} parent=0 // loop_pre_header
    _
  $region3: #{encoder_2_forward.31} parent=0 // loop_header
    %s9 = sphi 0, %s13
    %p10 = scmp.ge.s32.totalorder %s9, 4
    %s16 = sphi 0, %s35
    %s17 = sphi 0, %s31
    %s18 = sphi 0, %s27
    %s19 = sphi 0, %s16
    %s20 = sphi 0, %s17
    %s21 = sphi 0, %s18
    %s22 = sphi 0, %s19
    %s23 = sphi 0, %s20
    %s24 = sphi 0, %s21
    %s40 = sphi 0, %s42
    %s43 = sphi 0, %s40
    %s44 = sphi 0, %s43
    %s60 = sphi 0, %s44
    %s68 = sphi 0, %s70
    %s71 = sphi 0, %s68
    %s72 = sphi 0, %s71
    %s88 = sphi 0, %s72
    %s94 = sphi 0, %s96
    %s97 = sphi 0, %s94
    %s98 = sphi 0, %s97
    %s114 = sphi 0, %s98
    %s122 = sphi 0, %s124
    %s125 = sphi 0, %s122
    %s126 = sphi 0, %s125
    %s142 = sphi 0, %s126
  $region4: #{encoder_2_forward.31} parent=0 // loop_header_branch
    %12 = sbr.rel (%p10) target = $region8
  $region5: #{encoder_2_forward.31} parent=0 // loop_body
    %s14 = ssub.s32 %s9, 1
    %s15 = ssub.s32 %s9, 2
    %s25 = sadd.s32 1, %s18
    %p26 = scmp.ge.s32.totalorder %s25, 1
    %s27 = scalar_select %p26, 0, %s25
    %s28 = sadd.s32 1, %s17
    %s29 = scalar_select %p26, %s28, %s17
    %p30 = scmp.ge.s32.totalorder %s29, 1
    %s31 = scalar_select %p30, 0, %s29
    %s32 = sadd.s32 1, %s16
    %s33 = scalar_select %p30, %s32, %s16
    %p34 = scmp.ge.s32.totalorder %s33, 2
    %s35 = scalar_select %p34, 0, %s33
    %s36 = ssub.s32 %s16, %s35
    %s37 = ssub.s32 %s18, %s27
    %s38 = sor.u32 %s36, %s37
    %p39 = scmp.eq.s32.totalorder %s38, 0
    %s41 = sadd.s32 %s40, 1
    %s42 = scalar_select %p39, %s40, %s41
    %p45 = pneg %p39
    %p46 = scmp.eq.s32.totalorder %s9, 1
    %p47 = por %p45, %p46
    %p48 = scmp.ne.s32.totalorder %s40, %s43
    %p49 = scmp.eq.s32.totalorder %s9, 0
    %p50 = por %p48, %p49
    %p51 = scmp.ne.s32.totalorder %s40, %s43
    %p52 = scmp.eq.s32.totalorder %s14, 1
    %p53 = por %p51, %p52
    %p54 = scmp.ne.s32.totalorder %s43, %s44
    %p55 = scmp.eq.s32.totalorder %s14, 0
    %p56 = por %p54, %p55
    %p57 = scmp.ne.s32.totalorder %s43, %s44
    %p58 = scmp.eq.s32.totalorder %s15, 1
    %p59 = por %p57, %p58
    %p61 = scmp.ne.s32.totalorder %s44, %s60
    %p62 = scmp.eq.s32.totalorder %s15, 0
    %p63 = por %p61, %p62
    %s64 = ssub.s32 %s18, %s27
    %s65 = ssub.s32 %s17, %s31
    %s66 = sor.u32 %s64, %s65
    %p67 = scmp.eq.s32.totalorder %s66, 0
    %s69 = sadd.s32 %s68, 1
    %s70 = scalar_select %p67, %s68, %s69
    %p73 = pneg %p67
    %p74 = scmp.eq.s32.totalorder %s9, 1
    %p75 = por %p73, %p74
    %p76 = scmp.ne.s32.totalorder %s68, %s71
    %p77 = scmp.eq.s32.totalorder %s9, 0
    %p78 = por %p76, %p77
    %p79 = scmp.ne.s32.totalorder %s68, %s71
    %p80 = scmp.eq.s32.totalorder %s14, 1
    %p81 = por %p79, %p80
    %p82 = scmp.ne.s32.totalorder %s71, %s72
    %p83 = scmp.eq.s32.totalorder %s14, 0
    %p84 = por %p82, %p83
    %p85 = scmp.ne.s32.totalorder %s71, %s72
    %p86 = scmp.eq.s32.totalorder %s15, 1
    %p87 = por %p85, %p86
    %p89 = scmp.ne.s32.totalorder %s72, %s88
    %p90 = scmp.eq.s32.totalorder %s15, 0
    %p91 = por %p89, %p90
    %s92 = ssub.s32 %s17, %s31
    %p93 = scmp.eq.s32.totalorder %s92, 0
    %s95 = sadd.s32 %s94, 1
    %s96 = scalar_select %p93, %s94, %s95
    %p99 = pneg %p93
    %p100 = scmp.eq.s32.totalorder %s9, 1
    %p101 = por %p99, %p100
    %p102 = scmp.ne.s32.totalorder %s94, %s97
    %p103 = scmp.eq.s32.totalorder %s9, 0
    %p104 = por %p102, %p103
    %p105 = scmp.ne.s32.totalorder %s94, %s97
    %p106 = scmp.eq.s32.totalorder %s14, 1
    %p107 = por %p105, %p106
    %p108 = scmp.ne.s32.totalorder %s97, %s98
    %p109 = scmp.eq.s32.totalorder %s14, 0
    %p110 = por %p108, %p109
    %p111 = scmp.ne.s32.totalorder %s97, %s98
    %p112 = scmp.eq.s32.totalorder %s15, 1
    %p113 = por %p111, %p112
    %p115 = scmp.ne.s32.totalorder %s98, %s114
    %p116 = scmp.eq.s32.totalorder %s15, 0
    %p117 = por %p115, %p116
    %s118 = ssub.s32 %s16, %s35
    %s119 = ssub.s32 %s17, %s31
    %s120 = sor.u32 %s118, %s119
    %p121 = scmp.eq.s32.totalorder %s120, 0
    %s123 = sadd.s32 %s122, 1
    %s124 = scalar_select %p121, %s122, %s123
    %p127 = pneg %p121
    %p128 = scmp.eq.s32.totalorder %s9, 1
    %p129 = por %p127, %p128
    %p130 = scmp.ne.s32.totalorder %s122, %s125
    %p131 = scmp.eq.s32.totalorder %s9, 0
    %p132 = por %p130, %p131
    %p133 = scmp.ne.s32.totalorder %s122, %s125
    %p134 = scmp.eq.s32.totalorder %s14, 1
    %p135 = por %p133, %p134
    %p136 = scmp.ne.s32.totalorder %s125, %s126
    %p137 = scmp.eq.s32.totalorder %s14, 0
    %p138 = por %p136, %p137
    %p139 = scmp.ne.s32.totalorder %s125, %s126
    %p140 = scmp.eq.s32.totalorder %s15, 1
    %p141 = por %p139, %p140
    %p143 = scmp.ne.s32.totalorder %s126, %s142
    %p144 = scmp.eq.s32.totalorder %s15, 0
    %p145 = por %p143, %p144
    %p146 = scmp.le.s32.totalorder 1, %s9
    %p147 = scmp.lt.s32.totalorder %s9, 3
    %p148 = pnand %p146, %p147
    %p149 = pneg %p148
    // Predicated region
    $region9: #{encoder_2_forward.31} parent=5 // pred_check
      _
    $region10: #{encoder_2_forward.31} parent=5 // pred_check_branch
      %151 = sbr.rel (%p148) target = $region12
    $region11: #{encoder_2_forward.31} parent=5 // pred_region
      %s152 = ssub.s32 %s9, 1
      // Predicated region
      $region13: #{encoder_2_forward.31} parent=11 // pred_check
        %p153 = pneg %p84
      $region14: #{encoder_2_forward.31} parent=11 // pred_check_branch
        %155 = sbr.rel (%p153) target = $region16
      $region15: #{encoder_2_forward.31} parent=11 // pred_region
        %s156 = smul.u32 16, %s21
        %p157 = scmp.lt.s32.totalorder %s156, 15
        %s158 = scalar_select %p157, %s156, 15
        %p159 = scmp.lt.s32.totalorder %s20, 0
        %s160 = scalar_select %p159, %s20, 0
        %s161 = sadd.s32 %s160, %s158
        %s162 = smul.addr %s161, 4
        %s163 = scalar_lea.vmem %s1, %s162
        %s164 = smul.u32 16, %s21
      $region16: #{encoder_2_forward.31} parent=11 // pred_fallthru
        _
      // Predicated region
      $region17: #{encoder_2_forward.31} parent=11 // pred_check
        %p165 = pneg %p110
      $region18: #{encoder_2_forward.31} parent=11 // pred_check_branch
        %167 = sbr.rel (%p165) target = $region20
      $region19: #{encoder_2_forward.31} parent=11 // pred_region
        %p168 = scmp.lt.s32.totalorder %s20, 0
        %s169 = scalar_select %p168, %s20, 0
        %s170 = scalar_lea.vmem %s2, %s169
      $region20: #{encoder_2_forward.31} parent=11 // pred_fallthru
        _
    $region12: #{encoder_2_forward.31} parent=5 // pred_fallthru
      _
    %p171 = scmp.lt.s32.totalorder %s9, 2
    // Predicated region
    $region21: #{encoder_2_forward.31} parent=5 // pred_check
      %p172 = pneg %p171
    $region22: #{encoder_2_forward.31} parent=5 // pred_check_branch
      %174 = sbr.rel (%p172) target = $region24
    $region23: #{encoder_2_forward.31} parent=5 // pred_region
      // Predicated region
      $region25: #{encoder_2_forward.31} parent=23 // pred_check
        %p175 = pneg %p50
      $region26: #{encoder_2_forward.31} parent=23 // pred_check_branch
        %177 = sbr.rel (%p175) target = $region28
      $region27: #{encoder_2_forward.31} parent=23 // pred_region
        %s178 = smul.u32 32, %s16
        %p179 = scmp.lt.s32.totalorder %s178, 63
        %s180 = scalar_select %p179, %s178, 63
        %p181 = scmp.lt.s32.totalorder %s18, 0
        %s182 = scalar_select %p181, %s18, 0
        %s183 = sadd.s32 %s182, %s180
        %s184 = smul.addr %s183, 4
        %s185 = scalar_lea.vmem %s0, %s184
        %s186 = smul.u32 32, %s16
      $region28: #{encoder_2_forward.31} parent=23 // pred_fallthru
        _
    $region24: #{encoder_2_forward.31} parent=5 // pred_fallthru
      _
    %p187 = scmp.le.s32.totalorder 1, %s9
    %p188 = scmp.lt.s32.totalorder %s9, 3
    %p189 = pnand %p187, %p188
    %p190 = pneg %p189
    // Predicated region
    $region29: #{encoder_2_forward.31} parent=5 // pred_check
      _
    $region30: #{encoder_2_forward.31} parent=5 // pred_check_branch
      %192 = sbr.rel (%p189) target = $region32
    $region31: #{encoder_2_forward.31} parent=5 // pred_region
      %s193 = ssub.s32 %s9, 1
      %s194 = smul.u32 32, %s19
      %p195 = scmp.lt.s32.totalorder %s194, 63
      %s196 = scalar_select %p195, %s194, 63
      %p197 = scmp.lt.s32.totalorder %s21, 0
      %s198 = scalar_select %p197, %s21, 0
      %s199 = sadd.s32 %s198, %s196
      %s200 = smul.addr %s199, 4
      %s201 = scalar_lea.vmem %s0, %s200
      %p202 = pneg %p56
      %p203 = pneg %p53
      %s204 = smul.u32 16, %s21
      %p205 = scmp.lt.s32.totalorder %s204, 15
      %s206 = scalar_select %p205, %s204, 15
      %p207 = scmp.lt.s32.totalorder %s20, 0
      %s208 = scalar_select %p207, %s20, 0
      %s209 = sadd.s32 %s208, %s206
      %s210 = smul.addr %s209, 4
      %s211 = scalar_lea.vmem %s1, %s210
      %p212 = pneg %p84
      %p213 = pneg %p81
      %p214 = scmp.lt.s32.totalorder %s20, 0
      %s215 = scalar_select %p214, %s20, 0
      %s216 = scalar_lea.vmem %s2, %s215
      %p217 = pneg %p110
      %p218 = pneg %p107
      %p219 = pneg %p138
      %p220 = pneg %p135
      %s221 = smul.u32 32, %s19
      %p222 = scmp.lt.s32.totalorder %s221, 63
      %s223 = scalar_select %p222, %s221, 63
      %p224 = scmp.lt.s32.totalorder %s20, 0
      %s225 = scalar_select %p224, %s20, 0
      %s226 = sadd.s32 %s225, %s223
      %s227 = smul.addr %s226, 8
      %s228 = scalar_lea.vmem %s3, %s227
      %s229 = smul.u32 32, %s19
      %p230 = scmp.lt.s32.totalorder %s229, 63
      %s231 = scalar_select %p230, %s229, 63
      %p232 = scmp.lt.s32.totalorder %s21, 0
      %s233 = scalar_select %p232, %s21, 0
      %s234 = sadd.s32 %s233, %s231
      %s235 = smul.addr %s234, 4
      %s236 = scalar_lea.vmem %s0, %s235
      %s237 = smul.u32 32, %s19
      %s238 = smul.u32 16, %s21
      %p239 = scmp.lt.s32.totalorder %s238, 15
      %s240 = scalar_select %p239, %s238, 15
      %p241 = scmp.lt.s32.totalorder %s20, 0
      %s242 = scalar_select %p241, %s20, 0
      %s243 = sadd.s32 %s242, %s240
      %s244 = smul.addr %s243, 4
      %s245 = scalar_lea.vmem %s1, %s244
      %s246 = smul.u32 16, %s21
      %p247 = scmp.lt.s32.totalorder %s20, 0
      %s248 = scalar_select %p247, %s20, 0
      %s249 = scalar_lea.vmem %s2, %s248
      %s250 = smul.u32 32, %s19
      %p251 = scmp.lt.s32.totalorder %s250, 63
      %s252 = scalar_select %p251, %s250, 63
      %p253 = scmp.lt.s32.totalorder %s20, 0
      %s254 = scalar_select %p253, %s20, 0
      %s255 = sadd.s32 %s254, %s252
      %s256 = smul.addr %s255, 8
      %s257 = scalar_lea.vmem %s3, %s256
      %s258 = smul.u32 32, %s19
      %p260 = scmp.eq.s32.totalorder %s21, 0
      // Predicated region
      $region33: #{encoder_2_forward.31} parent=31 // pred_check
        %p261 = pneg %p260
      $region34: #{encoder_2_forward.31} parent=31 // pred_check_branch
        %263 = sbr.rel (%p261) target = $region36
      $region35: #{encoder_2_forward.31} parent=31 // pred_region
        %264 = vst [vmem:[#allocation2] sm:$0xff] 0.0
        %265 = vst [vmem:[#allocation2 + $0x8] sm:$0xff] 0.0
        %266 = vst [vmem:[#allocation2 + $0x10] sm:$0xff] 0.0
        %267 = vst [vmem:[#allocation2 + $0x18] sm:$0xff] 0.0
        %268 = vst [vmem:[#allocation2 + $0x20] sm:$0xff] 0.0
        %269 = vst [vmem:[#allocation2 + $0x28] sm:$0xff] 0.0
        %270 = vst [vmem:[#allocation2 + $0x30] sm:$0xff] 0.0
        %271 = vst [vmem:[#allocation2 + $0x38] sm:$0xff] 0.0
        %272 = vst [vmem:[#allocation2 + $0x40] sm:$0xff] 0.0
        %273 = vst [vmem:[#allocation2 + $0x48] sm:$0xff] 0.0
        %274 = vst [vmem:[#allocation2 + $0x50] sm:$0xff] 0.0
        %275 = vst [vmem:[#allocation2 + $0x58] sm:$0xff] 0.0
        %276 = vst [vmem:[#allocation2 + $0x60] sm:$0xff] 0.0
        %277 = vst [vmem:[#allocation2 + $0x68] sm:$0xff] 0.0
        %278 = vst [vmem:[#allocation2 + $0x70] sm:$0xff] 0.0
        %279 = vst [vmem:[#allocation2 + $0x78] sm:$0xff] 0.0
        %280 = vst [vmem:[#allocation2 + $0x80] sm:$0xff] 0.0
        %281 = vst [vmem:[#allocation2 + $0x88] sm:$0xff] 0.0
        %282 = vst [vmem:[#allocation2 + $0x90] sm:$0xff] 0.0
        %283 = vst [vmem:[#allocation2 + $0x98] sm:$0xff] 0.0
        %284 = vst [vmem:[#allocation2 + $0xa0] sm:$0xff] 0.0
        %285 = vst [vmem:[#allocation2 + $0xa8] sm:$0xff] 0.0
        %286 = vst [vmem:[#allocation2 + $0xb0] sm:$0xff] 0.0
        %287 = vst [vmem:[#allocation2 + $0xb8] sm:$0xff] 0.0
        %288 = vst [vmem:[#allocation2 + $0xc0] sm:$0xff] 0.0
        %289 = vst [vmem:[#allocation2 + $0xc8] sm:$0xff] 0.0
        %290 = vst [vmem:[#allocation2 + $0xd0] sm:$0xff] 0.0
        %291 = vst [vmem:[#allocation2 + $0xd8] sm:$0xff] 0.0
        %292 = vst [vmem:[#allocation2 + $0xe0] sm:$0xff] 0.0
        %293 = vst [vmem:[#allocation2 + $0xe8] sm:$0xff] 0.0
        %294 = vst [vmem:[#allocation2 + $0xf0] sm:$0xff] 0.0
        %295 = vst [vmem:[#allocation2 + $0xf8] sm:$0xff] 0.0
      $region36: #{encoder_2_forward.31} parent=31 // pred_fallthru
        _
      %v296 = vld [vmem:[#allocation2] sm:$0xff]
      %v297 = vld [vmem:[#allocation2 + $0x8] sm:$0xff]
      %v298 = vld [vmem:[#allocation2 + $0x10] sm:$0xff]
      %v299 = vld [vmem:[#allocation2 + $0x18] sm:$0xff]
      %v300 = vld [vmem:[#allocation2 + $0x20] sm:$0xff]
      %v301 = vld [vmem:[#allocation2 + $0x28] sm:$0xff]
      %v302 = vld [vmem:[#allocation2 + $0x30] sm:$0xff]
      %v303 = vld [vmem:[#allocation2 + $0x38] sm:$0xff]
      %v304 = vld [vmem:[#allocation2 + $0x40] sm:$0xff]
      %v305 = vld [vmem:[#allocation2 + $0x48] sm:$0xff]
      %v306 = vld [vmem:[#allocation2 + $0x50] sm:$0xff]
      %v307 = vld [vmem:[#allocation2 + $0x58] sm:$0xff]
      %v308 = vld [vmem:[#allocation2 + $0x60] sm:$0xff]
      %v309 = vld [vmem:[#allocation2 + $0x68] sm:$0xff]
      %v310 = vld [vmem:[#allocation2 + $0x70] sm:$0xff]
      %v311 = vld [vmem:[#allocation2 + $0x78] sm:$0xff]
      %v312 = vld [vmem:[#allocation2 + $0x80] sm:$0xff]
      %v313 = vld [vmem:[#allocation2 + $0x88] sm:$0xff]
      %v314 = vld [vmem:[#allocation2 + $0x90] sm:$0xff]
      %v315 = vld [vmem:[#allocation2 + $0x98] sm:$0xff]
      %v316 = vld [vmem:[#allocation2 + $0xa0] sm:$0xff]
      %v317 = vld [vmem:[#allocation2 + $0xa8] sm:$0xff]
      %v318 = vld [vmem:[#allocation2 + $0xb0] sm:$0xff]
      %v319 = vld [vmem:[#allocation2 + $0xb8] sm:$0xff]
      %v320 = vld [vmem:[#allocation2 + $0xc0] sm:$0xff]
      %v321 = vld [vmem:[#allocation2 + $0xc8] sm:$0xff]
      %v322 = vld [vmem:[#allocation2 + $0xd0] sm:$0xff]
      %v323 = vld [vmem:[#allocation2 + $0xd8] sm:$0xff]
      %v324 = vld [vmem:[#allocation2 + $0xe0] sm:$0xff]
      %v325 = vld [vmem:[#allocation2 + $0xe8] sm:$0xff]
      %v326 = vld [vmem:[#allocation2 + $0xf0] sm:$0xff]
      %v327 = vld [vmem:[#allocation2 + $0xf8] sm:$0xff]
      %v328 = vld [vmem:[%s236] sm:$0xf]
      %v329 = vld [vmem:[%s236 + $0x4] sm:$0xf]
      %v330 = vld [vmem:[%s236 + $0x8] sm:$0xf]
      %v331 = vld [vmem:[%s236 + $0xc] sm:$0xf]
      %v332 = vld [vmem:[%s236 + $0x10] sm:$0xf]
      %v333 = vld [vmem:[%s236 + $0x14] sm:$0xf]
      %v334 = vld [vmem:[%s236 + $0x18] sm:$0xf]
      %v335 = vld [vmem:[%s236 + $0x1c] sm:$0xf]
      %v336 = vld [vmem:[%s236 + $0x20] sm:$0xf]
      %v337 = vld [vmem:[%s236 + $0x24] sm:$0xf]
      %v338 = vld [vmem:[%s236 + $0x28] sm:$0xf]
      %v339 = vld [vmem:[%s236 + $0x2c] sm:$0xf]
      %v340 = vld [vmem:[%s236 + $0x30] sm:$0xf]
      %v341 = vld [vmem:[%s236 + $0x34] sm:$0xf]
      %v342 = vld [vmem:[%s236 + $0x38] sm:$0xf]
      %v343 = vld [vmem:[%s236 + $0x3c] sm:$0xf]
      %v344 = vld [vmem:[%s236 + $0x40] sm:$0xf]
      %v345 = vld [vmem:[%s236 + $0x44] sm:$0xf]
      %v346 = vld [vmem:[%s236 + $0x48] sm:$0xf]
      %v347 = vld [vmem:[%s236 + $0x4c] sm:$0xf]
      %v348 = vld [vmem:[%s236 + $0x50] sm:$0xf]
      %v349 = vld [vmem:[%s236 + $0x54] sm:$0xf]
      %v350 = vld [vmem:[%s236 + $0x58] sm:$0xf]
      %v351 = vld [vmem:[%s236 + $0x5c] sm:$0xf]
      %v352 = vld [vmem:[%s236 + $0x60] sm:$0xf]
      %v353 = vld [vmem:[%s236 + $0x64] sm:$0xf]
      %v354 = vld [vmem:[%s236 + $0x68] sm:$0xf]
      %v355 = vld [vmem:[%s236 + $0x6c] sm:$0xf]
      %v356 = vld [vmem:[%s236 + $0x70] sm:$0xf]
      %v357 = vld [vmem:[%s236 + $0x74] sm:$0xf]
      %v358 = vld [vmem:[%s236 + $0x78] sm:$0xf]
      %v359 = vld [vmem:[%s236 + $0x7c] sm:$0xf]
      %v360 = vld [vmem:[%s245] sm:$0xf]
      %v361 = vld [vmem:[%s245 + $0x4] sm:$0xf]
      %v362 = vld [vmem:[%s245 + $0x8] sm:$0xf]
      %v363 = vld [vmem:[%s245 + $0xc] sm:$0xf]
      %v364 = vld [vmem:[%s245 + $0x10] sm:$0xf]
      %v365 = vld [vmem:[%s245 + $0x14] sm:$0xf]
      %v366 = vld [vmem:[%s245 + $0x18] sm:$0xf]
      %v367 = vld [vmem:[%s245 + $0x1c] sm:$0xf]
      %v368 = vld [vmem:[%s245 + $0x20] sm:$0xf]
      %v369 = vld [vmem:[%s245 + $0x24] sm:$0xf]
      %v370 = vld [vmem:[%s245 + $0x28] sm:$0xf]
      %v371 = vld [vmem:[%s245 + $0x2c] sm:$0xf]
      %v372 = vld [vmem:[%s245 + $0x30] sm:$0xf]
      %v373 = vld [vmem:[%s245 + $0x34] sm:$0xf]
      %v374 = vld [vmem:[%s245 + $0x38] sm:$0xf]
      %v375 = vld [vmem:[%s245 + $0x3c] sm:$0xf]
      %v408 = vunpack.c.l.b16 %v328
      %v409 = vunpack.c.l.b16 %v329
      %v410 = vunpack.c.l.b16 %v330
      %v411 = vunpack.c.l.b16 %v331
      %v412 = vunpack.c.l.b16 %v332
      %v413 = vunpack.c.l.b16 %v333
      %v414 = vunpack.c.l.b16 %v334
      %v415 = vunpack.c.l.b16 %v335
      %v416 = vunpack.c.l.b16 %v336
      %v417 = vunpack.c.l.b16 %v337
      %v418 = vunpack.c.l.b16 %v338
      %v419 = vunpack.c.l.b16 %v339
      %v420 = vunpack.c.l.b16 %v340
      %v421 = vunpack.c.l.b16 %v341
      %v422 = vunpack.c.l.b16 %v342
      %v423 = vunpack.c.l.b16 %v343
      %v424 = vunpack.c.l.b16 %v344
      %v425 = vunpack.c.l.b16 %v345
      %v426 = vunpack.c.l.b16 %v346
      %v427 = vunpack.c.l.b16 %v347
      %v428 = vunpack.c.l.b16 %v348
      %v429 = vunpack.c.l.b16 %v349
      %v430 = vunpack.c.l.b16 %v350
      %v431 = vunpack.c.l.b16 %v351
      %v432 = vunpack.c.l.b16 %v352
      %v433 = vunpack.c.l.b16 %v353
      %v434 = vunpack.c.l.b16 %v354
      %v435 = vunpack.c.l.b16 %v355
      %v436 = vunpack.c.l.b16 %v356
      %v437 = vunpack.c.l.b16 %v357
      %v438 = vunpack.c.l.b16 %v358
      %v439 = vunpack.c.l.b16 %v359
      %v440 = vpack.c.b16 %v409, %v408
      %v441 = vpack.c.b16 %v411, %v410
      %v442 = vpack.c.b16 %v413, %v412
      %v443 = vpack.c.b16 %v415, %v414
      %v444 = vpack.c.b16 %v417, %v416
      %v445 = vpack.c.b16 %v419, %v418
      %v446 = vpack.c.b16 %v421, %v420
      %v447 = vpack.c.b16 %v423, %v422
      %v448 = vpack.c.b16 %v425, %v424
      %v449 = vpack.c.b16 %v427, %v426
      %v450 = vpack.c.b16 %v429, %v428
      %v451 = vpack.c.b16 %v431, %v430
      %v452 = vpack.c.b16 %v433, %v432
      %v453 = vpack.c.b16 %v435, %v434
      %v454 = vpack.c.b16 %v437, %v436
      %v455 = vpack.c.b16 %v439, %v438
      %v488 = vunpack.c.l.b16 %v360
      %v489 = vunpack.c.l.b16 %v361
      %v490 = vunpack.c.l.b16 %v362
      %v491 = vunpack.c.l.b16 %v363
      %v492 = vunpack.c.l.b16 %v364
      %v493 = vunpack.c.l.b16 %v365
      %v494 = vunpack.c.l.b16 %v366
      %v495 = vunpack.c.l.b16 %v367
      %v496 = vunpack.c.l.b16 %v368
      %v497 = vunpack.c.l.b16 %v369
      %v498 = vunpack.c.l.b16 %v370
      %v499 = vunpack.c.l.b16 %v371
      %v500 = vunpack.c.l.b16 %v372
      %v501 = vunpack.c.l.b16 %v373
      %v502 = vunpack.c.l.b16 %v374
      %v503 = vunpack.c.l.b16 %v375
      %v504 = vpack.c.b16 %v489, %v488
      %v505 = vpack.c.b16 %v491, %v490
      %v506 = vpack.c.b16 %v493, %v492
      %v507 = vpack.c.b16 %v495, %v494
      %v508 = vpack.c.b16 %v497, %v496
      %v509 = vpack.c.b16 %v499, %v498
      %v510 = vpack.c.b16 %v501, %v500
      %v511 = vpack.c.b16 %v503, %v502
      %520 = vmatprep.subr.bf16.mxu0 0
      %521 = vmatpush1.bf16.msra.mxu0 %v511
      %522 = vmatprep.subr.bf16.mxu0 0
      %523 = vmatpush1.bf16.msra.mxu0 %v510
      %524 = vmatprep.subr.bf16.mxu0 0
      %525 = vmatpush1.bf16.msra.mxu0 %v509
      %526 = vmatprep.subr.bf16.mxu0 0
      %527 = vmatpush1.bf16.msra.mxu0 %v508
      %528 = vmatprep.subr.bf16.mxu0 0
      %529 = vmatpush1.bf16.msra.mxu0 %v507
      %530 = vmatprep.subr.bf16.mxu0 0
      %531 = vmatpush1.bf16.msra.mxu0 %v506
      %532 = vmatprep.subr.bf16.mxu0 0
      %533 = vmatpush1.bf16.msra.mxu0 %v505
      %534 = vmatprep.subr.bf16.mxu0 0
      %535 = vmatpush1.bf16.msra.mxu0 %v504
      %536 = vmatprep.subr.bf16.mxu0 0
      %537 = vmatpush2.bf16.msra.mxu0 0
      %538 = vmatprep.subr.bf16.mxu0 0
      %539 = vmatpush2.bf16.msra.mxu0 0
      %540 = vmatprep.subr.bf16.mxu0 0
      %541 = vmatpush2.bf16.msra.mxu0 0
      %542 = vmatprep.subr.bf16.mxu0 0
      %543 = vmatpush2.bf16.msra.mxu0 0
      %544 = vmatprep.subr.bf16.mxu0 0
      %545 = vmatpush2.bf16.msra.mxu0 0
      %546 = vmatprep.subr.bf16.mxu0 0
      %547 = vmatpush2.bf16.msra.mxu0 0
      %548 = vmatprep.subr.bf16.mxu0 0
      %549 = vmatpush2.bf16.msra.mxu0 0
      %550 = vmatprep.subr.bf16.mxu0 0
      %551 = vmatpush2.bf16.msra.mxu0 0
      %552 = vmatprep.mubr.bf16.mxu0 0
      %553 = vmatmul.mubr.bf16.gmra.mxu0 %v440
      %v554 = vpop.f32.mrf.mxu0
      %v555 = vadd.f32 0.0, %v554
      %v556 = vpop.f32.mrf.mxu0
      %v557 = vpop.f32.mrf.mxu0
      %v558 = vadd.f32 0.0, %v557
      %v559 = vpop.f32.mrf.mxu0
      %560 = vmatprep.mubr.bf16.mxu0 0
      %561 = vmatmul.mubr.bf16.gmra.mxu0 %v441
      %v562 = vpop.f32.mrf.mxu0
      %v563 = vadd.f32 0.0, %v562
      %v564 = vpop.f32.mrf.mxu0
      %v565 = vpop.f32.mrf.mxu0
      %v566 = vadd.f32 0.0, %v565
      %v567 = vpop.f32.mrf.mxu0
      %568 = vmatprep.mubr.bf16.mxu0 0
      %569 = vmatmul.mubr.bf16.gmra.mxu0 %v442
      %v570 = vpop.f32.mrf.mxu0
      %v571 = vadd.f32 0.0, %v570
      %v572 = vpop.f32.mrf.mxu0
      %v573 = vpop.f32.mrf.mxu0
      %v574 = vadd.f32 0.0, %v573
      %v575 = vpop.f32.mrf.mxu0
      %576 = vmatprep.mubr.bf16.mxu0 0
      %577 = vmatmul.mubr.bf16.gmra.mxu0 %v443
      %v578 = vpop.f32.mrf.mxu0
      %v579 = vadd.f32 0.0, %v578
      %v580 = vpop.f32.mrf.mxu0
      %v581 = vpop.f32.mrf.mxu0
      %v582 = vadd.f32 0.0, %v581
      %v583 = vpop.f32.mrf.mxu0
      %584 = vmatprep.mubr.bf16.mxu0 0
      %585 = vmatmul.mubr.bf16.gmra.mxu0 %v444
      %v586 = vpop.f32.mrf.mxu0
      %v587 = vadd.f32 0.0, %v586
      %v588 = vpop.f32.mrf.mxu0
      %v589 = vpop.f32.mrf.mxu0
      %v590 = vadd.f32 0.0, %v589
      %v591 = vpop.f32.mrf.mxu0
      %592 = vmatprep.mubr.bf16.mxu0 0
      %593 = vmatmul.mubr.bf16.gmra.mxu0 %v445
      %v594 = vpop.f32.mrf.mxu0
      %v595 = vadd.f32 0.0, %v594
      %v596 = vpop.f32.mrf.mxu0
      %v597 = vpop.f32.mrf.mxu0
      %v598 = vadd.f32 0.0, %v597
      %v599 = vpop.f32.mrf.mxu0
      %600 = vmatprep.mubr.bf16.mxu0 0
      %601 = vmatmul.mubr.bf16.gmra.mxu0 %v446
      %v602 = vpop.f32.mrf.mxu0
      %v603 = vadd.f32 0.0, %v602
      %v604 = vpop.f32.mrf.mxu0
      %v605 = vpop.f32.mrf.mxu0
      %v606 = vadd.f32 0.0, %v605
      %v607 = vpop.f32.mrf.mxu0
      %608 = vmatprep.mubr.bf16.mxu0 0
      %609 = vmatmul.mubr.bf16.gmra.mxu0 %v447
      %v610 = vpop.f32.mrf.mxu0
      %v611 = vadd.f32 0.0, %v610
      %v612 = vpop.f32.mrf.mxu0
      %v613 = vpop.f32.mrf.mxu0
      %v614 = vadd.f32 0.0, %v613
      %v615 = vpop.f32.mrf.mxu0
      %616 = vmatprep.mubr.bf16.mxu0 0
      %617 = vmatmul.mubr.bf16.gmra.mxu0 %v448
      %v618 = vpop.f32.mrf.mxu0
      %v619 = vadd.f32 0.0, %v618
      %v620 = vpop.f32.mrf.mxu0
      %v621 = vpop.f32.mrf.mxu0
      %v622 = vadd.f32 0.0, %v621
      %v623 = vpop.f32.mrf.mxu0
      %624 = vmatprep.mubr.bf16.mxu0 0
      %625 = vmatmul.mubr.bf16.gmra.mxu0 %v449
      %v626 = vpop.f32.mrf.mxu0
      %v627 = vadd.f32 0.0, %v626
      %v628 = vpop.f32.mrf.mxu0
      %v629 = vpop.f32.mrf.mxu0
      %v630 = vadd.f32 0.0, %v629
      %v631 = vpop.f32.mrf.mxu0
      %632 = vmatprep.mubr.bf16.mxu0 0
      %633 = vmatmul.mubr.bf16.gmra.mxu0 %v450
      %v634 = vpop.f32.mrf.mxu0
      %v635 = vadd.f32 0.0, %v634
      %v636 = vpop.f32.mrf.mxu0
      %v637 = vpop.f32.mrf.mxu0
      %v638 = vadd.f32 0.0, %v637
      %v639 = vpop.f32.mrf.mxu0
      %640 = vmatprep.mubr.bf16.mxu0 0
      %641 = vmatmul.mubr.bf16.gmra.mxu0 %v451
      %v642 = vpop.f32.mrf.mxu0
      %v643 = vadd.f32 0.0, %v642
      %v644 = vpop.f32.mrf.mxu0
      %v645 = vpop.f32.mrf.mxu0
      %v646 = vadd.f32 0.0, %v645
      %v647 = vpop.f32.mrf.mxu0
      %648 = vmatprep.mubr.bf16.mxu0 0
      %649 = vmatmul.mubr.bf16.gmra.mxu0 %v452
      %v650 = vpop.f32.mrf.mxu0
      %v651 = vadd.f32 0.0, %v650
      %v652 = vpop.f32.mrf.mxu0
      %v653 = vpop.f32.mrf.mxu0
      %v654 = vadd.f32 0.0, %v653
      %v655 = vpop.f32.mrf.mxu0
      %656 = vmatprep.mubr.bf16.mxu0 0
      %657 = vmatmul.mubr.bf16.gmra.mxu0 %v453
      %v658 = vpop.f32.mrf.mxu0
      %v659 = vadd.f32 0.0, %v658
      %v660 = vpop.f32.mrf.mxu0
      %v661 = vpop.f32.mrf.mxu0
      %v662 = vadd.f32 0.0, %v661
      %v663 = vpop.f32.mrf.mxu0
      %664 = vmatprep.mubr.bf16.mxu0 0
      %665 = vmatmul.mubr.bf16.gmra.mxu0 %v454
      %v666 = vpop.f32.mrf.mxu0
      %v667 = vadd.f32 0.0, %v666
      %v668 = vpop.f32.mrf.mxu0
      %v669 = vpop.f32.mrf.mxu0
      %v670 = vadd.f32 0.0, %v669
      %v671 = vpop.f32.mrf.mxu0
      %672 = vmatprep.mubr.bf16.mxu0 0
      %673 = vmatmul.mubr.bf16.gmra.mxu0 %v455
      %v674 = vpop.f32.mrf.mxu0
      %v675 = vadd.f32 0.0, %v674
      %v676 = vpop.f32.mrf.mxu0
      %v677 = vpop.f32.mrf.mxu0
      %v678 = vadd.f32 0.0, %v677
      %v679 = vpop.f32.mrf.mxu0
      %680 = vdwg.mxu0
      %v681 = vadd.f32 %v296, %v555
      %v682 = vadd.f32 %v297, %v558
      %v683 = vadd.f32 %v298, %v563
      %v684 = vadd.f32 %v299, %v566
      %v685 = vadd.f32 %v300, %v571
      %v686 = vadd.f32 %v301, %v574
      %v687 = vadd.f32 %v302, %v579
      %v688 = vadd.f32 %v303, %v582
      %v689 = vadd.f32 %v304, %v587
      %v690 = vadd.f32 %v305, %v590
      %v691 = vadd.f32 %v306, %v595
      %v692 = vadd.f32 %v307, %v598
      %v693 = vadd.f32 %v308, %v603
      %v694 = vadd.f32 %v309, %v606
      %v695 = vadd.f32 %v310, %v611
      %v696 = vadd.f32 %v311, %v614
      %v697 = vadd.f32 %v312, %v619
      %v698 = vadd.f32 %v313, %v622
      %v699 = vadd.f32 %v314, %v627
      %v700 = vadd.f32 %v315, %v630
      %v701 = vadd.f32 %v316, %v635
      %v702 = vadd.f32 %v317, %v638
      %v703 = vadd.f32 %v318, %v643
      %v704 = vadd.f32 %v319, %v646
      %v705 = vadd.f32 %v320, %v651
      %v706 = vadd.f32 %v321, %v654
      %v707 = vadd.f32 %v322, %v659
      %v708 = vadd.f32 %v323, %v662
      %v709 = vadd.f32 %v324, %v667
      %v710 = vadd.f32 %v325, %v670
      %v711 = vadd.f32 %v326, %v675
      %v712 = vadd.f32 %v327, %v678
      %713 = vst [vmem:[#allocation2] sm:$0xff] %v681
      %714 = vst [vmem:[#allocation2 + $0x8] sm:$0xff] %v682
      %715 = vst [vmem:[#allocation2 + $0x10] sm:$0xff] %v683
      %716 = vst [vmem:[#allocation2 + $0x18] sm:$0xff] %v684
      %717 = vst [vmem:[#allocation2 + $0x20] sm:$0xff] %v685
      %718 = vst [vmem:[#allocation2 + $0x28] sm:$0xff] %v686
      %719 = vst [vmem:[#allocation2 + $0x30] sm:$0xff] %v687
      %720 = vst [vmem:[#allocation2 + $0x38] sm:$0xff] %v688
      %721 = vst [vmem:[#allocation2 + $0x40] sm:$0xff] %v689
      %722 = vst [vmem:[#allocation2 + $0x48] sm:$0xff] %v690
      %723 = vst [vmem:[#allocation2 + $0x50] sm:$0xff] %v691
      %724 = vst [vmem:[#allocation2 + $0x58] sm:$0xff] %v692
      %725 = vst [vmem:[#allocation2 + $0x60] sm:$0xff] %v693
      %726 = vst [vmem:[#allocation2 + $0x68] sm:$0xff] %v694
      %727 = vst [vmem:[#allocation2 + $0x70] sm:$0xff] %v695
      %728 = vst [vmem:[#allocation2 + $0x78] sm:$0xff] %v696
      %729 = vst [vmem:[#allocation2 + $0x80] sm:$0xff] %v697
      %730 = vst [vmem:[#allocation2 + $0x88] sm:$0xff] %v698
      %731 = vst [vmem:[#allocation2 + $0x90] sm:$0xff] %v699
      %732 = vst [vmem:[#allocation2 + $0x98] sm:$0xff] %v700
      %733 = vst [vmem:[#allocation2 + $0xa0] sm:$0xff] %v701
      %734 = vst [vmem:[#allocation2 + $0xa8] sm:$0xff] %v702
      %735 = vst [vmem:[#allocation2 + $0xb0] sm:$0xff] %v703
      %736 = vst [vmem:[#allocation2 + $0xb8] sm:$0xff] %v704
      %737 = vst [vmem:[#allocation2 + $0xc0] sm:$0xff] %v705
      %738 = vst [vmem:[#allocation2 + $0xc8] sm:$0xff] %v706
      %739 = vst [vmem:[#allocation2 + $0xd0] sm:$0xff] %v707
      %740 = vst [vmem:[#allocation2 + $0xd8] sm:$0xff] %v708
      %741 = vst [vmem:[#allocation2 + $0xe0] sm:$0xff] %v709
      %742 = vst [vmem:[#allocation2 + $0xe8] sm:$0xff] %v710
      %743 = vst [vmem:[#allocation2 + $0xf0] sm:$0xff] %v711
      %744 = vst [vmem:[#allocation2 + $0xf8] sm:$0xff] %v712
      // Predicated region
      $region37: #{encoder_2_forward.31} parent=31 // pred_check
        %p745 = pneg %p260
      $region38: #{encoder_2_forward.31} parent=31 // pred_check_branch
        %747 = sbr.rel (%p745) target = $region40
      $region39: #{encoder_2_forward.31} parent=31 // pred_region
        %v748 = vld [vmem:[#allocation2] sm:$0xff]
        %v749 = vld [vmem:[#allocation2 + $0x8] sm:$0xff]
        %v750 = vld [vmem:[#allocation2 + $0x10] sm:$0xff]
        %v751 = vld [vmem:[#allocation2 + $0x18] sm:$0xff]
        %v752 = vld [vmem:[#allocation2 + $0x20] sm:$0xff]
        %v753 = vld [vmem:[#allocation2 + $0x28] sm:$0xff]
        %v754 = vld [vmem:[#allocation2 + $0x30] sm:$0xff]
        %v755 = vld [vmem:[#allocation2 + $0x38] sm:$0xff]
        %v756 = vld [vmem:[#allocation2 + $0x40] sm:$0xff]
        %v757 = vld [vmem:[#allocation2 + $0x48] sm:$0xff]
        %v758 = vld [vmem:[#allocation2 + $0x50] sm:$0xff]
        %v759 = vld [vmem:[#allocation2 + $0x58] sm:$0xff]
        %v760 = vld [vmem:[#allocation2 + $0x60] sm:$0xff]
        %v761 = vld [vmem:[#allocation2 + $0x68] sm:$0xff]
        %v762 = vld [vmem:[#allocation2 + $0x70] sm:$0xff]
        %v763 = vld [vmem:[#allocation2 + $0x78] sm:$0xff]
        %v764 = vld [vmem:[#allocation2 + $0x80] sm:$0xff]
        %v765 = vld [vmem:[#allocation2 + $0x88] sm:$0xff]
        %v766 = vld [vmem:[#allocation2 + $0x90] sm:$0xff]
        %v767 = vld [vmem:[#allocation2 + $0x98] sm:$0xff]
        %v768 = vld [vmem:[#allocation2 + $0xa0] sm:$0xff]
        %v769 = vld [vmem:[#allocation2 + $0xa8] sm:$0xff]
        %v770 = vld [vmem:[#allocation2 + $0xb0] sm:$0xff]
        %v771 = vld [vmem:[#allocation2 + $0xb8] sm:$0xff]
        %v772 = vld [vmem:[#allocation2 + $0xc0] sm:$0xff]
        %v773 = vld [vmem:[#allocation2 + $0xc8] sm:$0xff]
        %v774 = vld [vmem:[#allocation2 + $0xd0] sm:$0xff]
        %v775 = vld [vmem:[#allocation2 + $0xd8] sm:$0xff]
        %v776 = vld [vmem:[#allocation2 + $0xe0] sm:$0xff]
        %v777 = vld [vmem:[#allocation2 + $0xe8] sm:$0xff]
        %v778 = vld [vmem:[#allocation2 + $0xf0] sm:$0xff]
        %v779 = vld [vmem:[#allocation2 + $0xf8] sm:$0xff]
        %v780 = vld [vmem:[%s249] sm:$0x1]
        %v782 = vlaneseq
        %v783 = vshrl.u32 %v782, 7
        %v784 = vsub.s32 0, %v783
        %v785 = vrot.slane %v780, %v784
        %v787 = vadd.f32 %v748, %v785
        %v788 = vadd.f32 %v749, %v785
        %v789 = vadd.f32 %v750, %v785
        %v790 = vadd.f32 %v751, %v785
        %v791 = vadd.f32 %v752, %v785
        %v792 = vadd.f32 %v753, %v785
        %v793 = vadd.f32 %v754, %v785
        %v794 = vadd.f32 %v755, %v785
        %v795 = vadd.f32 %v756, %v785
        %v796 = vadd.f32 %v757, %v785
        %v797 = vadd.f32 %v758, %v785
        %v798 = vadd.f32 %v759, %v785
        %v799 = vadd.f32 %v760, %v785
        %v800 = vadd.f32 %v761, %v785
        %v801 = vadd.f32 %v762, %v785
        %v802 = vadd.f32 %v763, %v785
        %v803 = vadd.f32 %v764, %v785
        %v804 = vadd.f32 %v765, %v785
        %v805 = vadd.f32 %v766, %v785
        %v806 = vadd.f32 %v767, %v785
        %v807 = vadd.f32 %v768, %v785
        %v808 = vadd.f32 %v769, %v785
        %v809 = vadd.f32 %v770, %v785
        %v810 = vadd.f32 %v771, %v785
        %v811 = vadd.f32 %v772, %v785
        %v812 = vadd.f32 %v773, %v785
        %v813 = vadd.f32 %v774, %v785
        %v814 = vadd.f32 %v775, %v785
        %v815 = vadd.f32 %v776, %v785
        %v816 = vadd.f32 %v777, %v785
        %v817 = vadd.f32 %v778, %v785
        %v818 = vadd.f32 %v779, %v785
        %819 = vst [vmem:[%s257] sm:$0xff] %v787
        %820 = vst [vmem:[%s257 + $0x8] sm:$0xff] %v788
        %821 = vst [vmem:[%s257 + $0x10] sm:$0xff] %v789
        %822 = vst [vmem:[%s257 + $0x18] sm:$0xff] %v790
        %823 = vst [vmem:[%s257 + $0x20] sm:$0xff] %v791
        %824 = vst [vmem:[%s257 + $0x28] sm:$0xff] %v792
        %825 = vst [vmem:[%s257 + $0x30] sm:$0xff] %v793
        %826 = vst [vmem:[%s257 + $0x38] sm:$0xff] %v794
        %827 = vst [vmem:[%s257 + $0x40] sm:$0xff] %v795
        %828 = vst [vmem:[%s257 + $0x48] sm:$0xff] %v796
        %829 = vst [vmem:[%s257 + $0x50] sm:$0xff] %v797
        %830 = vst [vmem:[%s257 + $0x58] sm:$0xff] %v798
        %831 = vst [vmem:[%s257 + $0x60] sm:$0xff] %v799
        %832 = vst [vmem:[%s257 + $0x68] sm:$0xff] %v800
        %833 = vst [vmem:[%s257 + $0x70] sm:$0xff] %v801
        %834 = vst [vmem:[%s257 + $0x78] sm:$0xff] %v802
        %835 = vst [vmem:[%s257 + $0x80] sm:$0xff] %v803
        %836 = vst [vmem:[%s257 + $0x88] sm:$0xff] %v804
        %837 = vst [vmem:[%s257 + $0x90] sm:$0xff] %v805
        %838 = vst [vmem:[%s257 + $0x98] sm:$0xff] %v806
        %839 = vst [vmem:[%s257 + $0xa0] sm:$0xff] %v807
        %840 = vst [vmem:[%s257 + $0xa8] sm:$0xff] %v808
        %841 = vst [vmem:[%s257 + $0xb0] sm:$0xff] %v809
        %842 = vst [vmem:[%s257 + $0xb8] sm:$0xff] %v810
        %843 = vst [vmem:[%s257 + $0xc0] sm:$0xff] %v811
        %844 = vst [vmem:[%s257 + $0xc8] sm:$0xff] %v812
        %845 = vst [vmem:[%s257 + $0xd0] sm:$0xff] %v813
        %846 = vst [vmem:[%s257 + $0xd8] sm:$0xff] %v814
        %847 = vst [vmem:[%s257 + $0xe0] sm:$0xff] %v815
        %848 = vst [vmem:[%s257 + $0xe8] sm:$0xff] %v816
        %849 = vst [vmem:[%s257 + $0xf0] sm:$0xff] %v817
        %850 = vst [vmem:[%s257 + $0xf8] sm:$0xff] %v818
      $region40: #{encoder_2_forward.31} parent=31 // pred_fallthru
        _
      %s851 = smul.u32 32, %s19
      %p852 = scmp.lt.s32.totalorder %s851, 63
      %s853 = scalar_select %p852, %s851, 63
      %p854 = scmp.lt.s32.totalorder %s20, 0
      %s855 = scalar_select %p854, %s20, 0
      %s856 = sadd.s32 %s855, %s853
      %s857 = smul.addr %s856, 8
      %s858 = scalar_lea.vmem %s3, %s857
      // Predicated region
      $region41: #{encoder_2_forward.31} parent=31 // pred_check
        %p859 = pneg %p135
      $region42: #{encoder_2_forward.31} parent=31 // pred_check_branch
        %861 = sbr.rel (%p859) target = $region44
      $region43: #{encoder_2_forward.31} parent=31 // pred_region
        %s862 = smul.u32 32, %s19
      $region44: #{encoder_2_forward.31} parent=31 // pred_fallthru
        _
    $region32: #{encoder_2_forward.31} parent=5 // pred_fallthru
      _
    %p863 = scmp.le.s32.totalorder 2, %s9
    // Predicated region
    $region45: #{encoder_2_forward.31} parent=5 // pred_check
      %p864 = pneg %p863
    $region46: #{encoder_2_forward.31} parent=5 // pred_check_branch
      %866 = sbr.rel (%p864) target = $region48
    $region47: #{encoder_2_forward.31} parent=5 // pred_region
      %s867 = ssub.s32 %s9, 2
      // Predicated region
      $region49: #{encoder_2_forward.31} parent=47 // pred_check
        %p868 = pneg %p141
      $region50: #{encoder_2_forward.31} parent=47 // pred_check_branch
        %870 = sbr.rel (%p868) target = $region52
      $region51: #{encoder_2_forward.31} parent=47 // pred_region
        %s871 = smul.u32 32, %s22
        %p872 = scmp.lt.s32.totalorder %s871, 63
        %s873 = scalar_select %p872, %s871, 63
        %p874 = scmp.lt.s32.totalorder %s23, 0
        %s875 = scalar_select %p874, %s23, 0
        %s876 = sadd.s32 %s875, %s873
        %s877 = smul.addr %s876, 8
        %s878 = scalar_lea.vmem %s3, %s877
      $region52: #{encoder_2_forward.31} parent=47 // pred_fallthru
        _
    $region48: #{encoder_2_forward.31} parent=5 // pred_fallthru
      _
  $region6: #{encoder_2_forward.31} parent=0 // loop_footer
    %s13 = sadd.s32 1, %s9
  $region7: #{encoder_2_forward.31} parent=0 // loop_footer_branch
    %8 = sbr.rel target = $region3
  $region8: #{encoder_2_forward.31} parent=0 // loop_exit
    _

// kernel: encoder_2_forward.33
$region0: #{encoder_2_forward.33}
  #allocation0 [shape = 'u32[]', space=smem, size = 0x4, offset = 0x4, fixed_abs, tag = 'smem constant byte address 0x4 - core index']
  #allocation1 [shape = 'u32[144,128]{1,0:T(1,128)}', space=vmem, size = 0x12000, scoped, tag = 'internal scratch']
  #allocation2 [shape = 'f32[256,128]{1,0:T(8,128)}', space=vmem, size = 0x20000, scoped, tag = 'scratch operand']
  %s0 = inlined_call_operand.vmem [shape: bf16[512,256], index: 0, kind: input, shape index: {}]
  %s1 = inlined_call_operand.vmem [shape: bf16[256,128], index: 1, kind: input, shape index: {}]
  %s2 = inlined_call_operand.vmem [shape: f32[1,128], index: 2, kind: input, shape index: {}]
  %s3 = inlined_call_operand.vmem [shape: f32[512,128], index: 3, kind: output, shape index: {}]
  %s4 = sld [smem:[#allocation0]]
  $region53: #{encoder_2_forward.33} parent=0
    _
  %s6 = ssub.s32 1, %s4
  %s7 = scalar_select 0, %s6, %s4
  loop: start=0, step=1, limit=4
  $region2: #{encoder_2_forward.33} parent=0 // loop_pre_header
    _
  $region3: #{encoder_2_forward.33} parent=0 // loop_header
    %s9 = sphi 0, %s13
    %p10 = scmp.ge.s32.totalorder %s9, 4
    %s16 = sphi 0, %s35
    %s17 = sphi 0, %s31
    %s18 = sphi 0, %s27
    %s19 = sphi 0, %s16
    %s20 = sphi 0, %s17
    %s21 = sphi 0, %s18
    %s22 = sphi 0, %s19
    %s23 = sphi 0, %s20
    %s24 = sphi 0, %s21
    %s40 = sphi 0, %s42
    %s43 = sphi 0, %s40
    %s44 = sphi 0, %s43
    %s60 = sphi 0, %s44
    %s68 = sphi 0, %s70
    %s71 = sphi 0, %s68
    %s72 = sphi 0, %s71
    %s88 = sphi 0, %s72
    %s94 = sphi 0, %s96
    %s97 = sphi 0, %s94
    %s98 = sphi 0, %s97
    %s114 = sphi 0, %s98
    %s122 = sphi 0, %s124
    %s125 = sphi 0, %s122
    %s126 = sphi 0, %s125
    %s142 = sphi 0, %s126
  $region4: #{encoder_2_forward.33} parent=0 // loop_header_branch
    %12 = sbr.rel (%p10) target = $region8
  $region5: #{encoder_2_forward.33} parent=0 // loop_body
    %s14 = ssub.s32 %s9, 1
    %s15 = ssub.s32 %s9, 2
    %s25 = sadd.s32 1, %s18
    %p26 = scmp.ge.s32.totalorder %s25, 1
    %s27 = scalar_select %p26, 0, %s25
    %s28 = sadd.s32 1, %s17
    %s29 = scalar_select %p26, %s28, %s17
    %p30 = scmp.ge.s32.totalorder %s29, 1
    %s31 = scalar_select %p30, 0, %s29
    %s32 = sadd.s32 1, %s16
    %s33 = scalar_select %p30, %s32, %s16
    %p34 = scmp.ge.s32.totalorder %s33, 2
    %s35 = scalar_select %p34, 0, %s33
    %s36 = ssub.s32 %s16, %s35
    %s37 = ssub.s32 %s18, %s27
    %s38 = sor.u32 %s36, %s37
    %p39 = scmp.eq.s32.totalorder %s38, 0
    %s41 = sadd.s32 %s40, 1
    %s42 = scalar_select %p39, %s40, %s41
    %p45 = pneg %p39
    %p46 = scmp.eq.s32.totalorder %s9, 1
    %p47 = por %p45, %p46
    %p48 = scmp.ne.s32.totalorder %s40, %s43
    %p49 = scmp.eq.s32.totalorder %s9, 0
    %p50 = por %p48, %p49
    %p51 = scmp.ne.s32.totalorder %s40, %s43
    %p52 = scmp.eq.s32.totalorder %s14, 1
    %p53 = por %p51, %p52
    %p54 = scmp.ne.s32.totalorder %s43, %s44
    %p55 = scmp.eq.s32.totalorder %s14, 0
    %p56 = por %p54, %p55
    %p57 = scmp.ne.s32.totalorder %s43, %s44
    %p58 = scmp.eq.s32.totalorder %s15, 1
    %p59 = por %p57, %p58
    %p61 = scmp.ne.s32.totalorder %s44, %s60
    %p62 = scmp.eq.s32.totalorder %s15, 0
    %p63 = por %p61, %p62
    %s64 = ssub.s32 %s18, %s27
    %s65 = ssub.s32 %s17, %s31
    %s66 = sor.u32 %s64, %s65
    %p67 = scmp.eq.s32.totalorder %s66, 0
    %s69 = sadd.s32 %s68, 1
    %s70 = scalar_select %p67, %s68, %s69
    %p73 = pneg %p67
    %p74 = scmp.eq.s32.totalorder %s9, 1
    %p75 = por %p73, %p74
    %p76 = scmp.ne.s32.totalorder %s68, %s71
    %p77 = scmp.eq.s32.totalorder %s9, 0
    %p78 = por %p76, %p77
    %p79 = scmp.ne.s32.totalorder %s68, %s71
    %p80 = scmp.eq.s32.totalorder %s14, 1
    %p81 = por %p79, %p80
    %p82 = scmp.ne.s32.totalorder %s71, %s72
    %p83 = scmp.eq.s32.totalorder %s14, 0
    %p84 = por %p82, %p83
    %p85 = scmp.ne.s32.totalorder %s71, %s72
    %p86 = scmp.eq.s32.totalorder %s15, 1
    %p87 = por %p85, %p86
    %p89 = scmp.ne.s32.totalorder %s72, %s88
    %p90 = scmp.eq.s32.totalorder %s15, 0
    %p91 = por %p89, %p90
    %s92 = ssub.s32 %s17, %s31
    %p93 = scmp.eq.s32.totalorder %s92, 0
    %s95 = sadd.s32 %s94, 1
    %s96 = scalar_select %p93, %s94, %s95
    %p99 = pneg %p93
    %p100 = scmp.eq.s32.totalorder %s9, 1
    %p101 = por %p99, %p100
    %p102 = scmp.ne.s32.totalorder %s94, %s97
    %p103 = scmp.eq.s32.totalorder %s9, 0
    %p104 = por %p102, %p103
    %p105 = scmp.ne.s32.totalorder %s94, %s97
    %p106 = scmp.eq.s32.totalorder %s14, 1
    %p107 = por %p105, %p106
    %p108 = scmp.ne.s32.totalorder %s97, %s98
    %p109 = scmp.eq.s32.totalorder %s14, 0
    %p110 = por %p108, %p109
    %p111 = scmp.ne.s32.totalorder %s97, %s98
    %p112 = scmp.eq.s32.totalorder %s15, 1
    %p113 = por %p111, %p112
    %p115 = scmp.ne.s32.totalorder %s98, %s114
    %p116 = scmp.eq.s32.totalorder %s15, 0
    %p117 = por %p115, %p116
    %s118 = ssub.s32 %s16, %s35
    %s119 = ssub.s32 %s17, %s31
    %s120 = sor.u32 %s118, %s119
    %p121 = scmp.eq.s32.totalorder %s120, 0
    %s123 = sadd.s32 %s122, 1
    %s124 = scalar_select %p121, %s122, %s123
    %p127 = pneg %p121
    %p128 = scmp.eq.s32.totalorder %s9, 1
    %p129 = por %p127, %p128
    %p130 = scmp.ne.s32.totalorder %s122, %s125
    %p131 = scmp.eq.s32.totalorder %s9, 0
    %p132 = por %p130, %p131
    %p133 = scmp.ne.s32.totalorder %s122, %s125
    %p134 = scmp.eq.s32.totalorder %s14, 1
    %p135 = por %p133, %p134
    %p136 = scmp.ne.s32.totalorder %s125, %s126
    %p137 = scmp.eq.s32.totalorder %s14, 0
    %p138 = por %p136, %p137
    %p139 = scmp.ne.s32.totalorder %s125, %s126
    %p140 = scmp.eq.s32.totalorder %s15, 1
    %p141 = por %p139, %p140
    %p143 = scmp.ne.s32.totalorder %s126, %s142
    %p144 = scmp.eq.s32.totalorder %s15, 0
    %p145 = por %p143, %p144
    %p146 = scmp.le.s32.totalorder 1, %s9
    %p147 = scmp.lt.s32.totalorder %s9, 3
    %p148 = pnand %p146, %p147
    %p149 = pneg %p148
    // Predicated region
    $region9: #{encoder_2_forward.33} parent=5 // pred_check
      _
    $region10: #{encoder_2_forward.33} parent=5 // pred_check_branch
      %151 = sbr.rel (%p148) target = $region12
    $region11: #{encoder_2_forward.33} parent=5 // pred_region
      %s152 = ssub.s32 %s9, 1
      // Predicated region
      $region13: #{encoder_2_forward.33} parent=11 // pred_check
        %p153 = pneg %p84
      $region14: #{encoder_2_forward.33} parent=11 // pred_check_branch
        %155 = sbr.rel (%p153) target = $region16
      $region15: #{encoder_2_forward.33} parent=11 // pred_region
        %s156 = smul.u32 32, %s21
        %p157 = scmp.lt.s32.totalorder %s156, 31
        %s158 = scalar_select %p157, %s156, 31
        %p159 = scmp.lt.s32.totalorder %s20, 0
        %s160 = scalar_select %p159, %s20, 0
        %s161 = sadd.s32 %s160, %s158
        %s162 = smul.addr %s161, 4
        %s163 = scalar_lea.vmem %s1, %s162
        %s164 = smul.u32 32, %s21
      $region16: #{encoder_2_forward.33} parent=11 // pred_fallthru
        _
      // Predicated region
      $region17: #{encoder_2_forward.33} parent=11 // pred_check
        %p165 = pneg %p110
      $region18: #{encoder_2_forward.33} parent=11 // pred_check_branch
        %167 = sbr.rel (%p165) target = $region20
      $region19: #{encoder_2_forward.33} parent=11 // pred_region
        %p168 = scmp.lt.s32.totalorder %s20, 0
        %s169 = scalar_select %p168, %s20, 0
        %s170 = scalar_lea.vmem %s2, %s169
      $region20: #{encoder_2_forward.33} parent=11 // pred_fallthru
        _
    $region12: #{encoder_2_forward.33} parent=5 // pred_fallthru
      _
    %p171 = scmp.lt.s32.totalorder %s9, 2
    // Predicated region
    $region21: #{encoder_2_forward.33} parent=5 // pred_check
      %p172 = pneg %p171
    $region22: #{encoder_2_forward.33} parent=5 // pred_check_branch
      %174 = sbr.rel (%p172) target = $region24
    $region23: #{encoder_2_forward.33} parent=5 // pred_region
      // Predicated region
      $region25: #{encoder_2_forward.33} parent=23 // pred_check
        %p175 = pneg %p50
      $region26: #{encoder_2_forward.33} parent=23 // pred_check_branch
        %177 = sbr.rel (%p175) target = $region28
      $region27: #{encoder_2_forward.33} parent=23 // pred_region
        %s178 = smul.u32 32, %s16
        %s179 = smul.u32 2, %s18
        %p180 = scmp.lt.s32.totalorder %s178, 63
        %s181 = scalar_select %p180, %s178, 63
        %p182 = scmp.lt.s32.totalorder %s179, 1
        %s183 = scalar_select %p182, %s179, 1
        %s184 = smul.addr %s181, 2
        %s185 = sadd.s32 %s183, %s184
        %s186 = smul.addr %s185, 4
        %s187 = scalar_lea.vmem %s0, %s186
        %s188 = smul.u32 32, %s16
        %s189 = smul.u32 2, %s18
      $region28: #{encoder_2_forward.33} parent=23 // pred_fallthru
        _
    $region24: #{encoder_2_forward.33} parent=5 // pred_fallthru
      _
    %p190 = scmp.le.s32.totalorder 1, %s9
    %p191 = scmp.lt.s32.totalorder %s9, 3
    %p192 = pnand %p190, %p191
    %p193 = pneg %p192
    // Predicated region
    $region29: #{encoder_2_forward.33} parent=5 // pred_check
      _
    $region30: #{encoder_2_forward.33} parent=5 // pred_check_branch
      %195 = sbr.rel (%p192) target = $region32
    $region31: #{encoder_2_forward.33} parent=5 // pred_region
      %s196 = ssub.s32 %s9, 1
      %s197 = smul.u32 32, %s19
      %s198 = smul.u32 2, %s21
      %p199 = scmp.lt.s32.totalorder %s197, 63
      %s200 = scalar_select %p199, %s197, 63
      %p201 = scmp.lt.s32.totalorder %s198, 1
      %s202 = scalar_select %p201, %s198, 1
      %s203 = smul.addr %s200, 2
      %s204 = sadd.s32 %s202, %s203
      %s205 = smul.addr %s204, 4
      %s206 = scalar_lea.vmem %s0, %s205
      %p207 = pneg %p56
      %p208 = pneg %p53
      %s209 = smul.u32 32, %s21
      %p210 = scmp.lt.s32.totalorder %s209, 31
      %s211 = scalar_select %p210, %s209, 31
      %p212 = scmp.lt.s32.totalorder %s20, 0
      %s213 = scalar_select %p212, %s20, 0
      %s214 = sadd.s32 %s213, %s211
      %s215 = smul.addr %s214, 4
      %s216 = scalar_lea.vmem %s1, %s215
      %p217 = pneg %p84
      %p218 = pneg %p81
      %p219 = scmp.lt.s32.totalorder %s20, 0
      %s220 = scalar_select %p219, %s20, 0
      %s221 = scalar_lea.vmem %s2, %s220
      %p222 = pneg %p110
      %p223 = pneg %p107
      %p224 = pneg %p138
      %p225 = pneg %p135
      %s226 = smul.u32 32, %s19
      %p227 = scmp.lt.s32.totalorder %s226, 63
      %s228 = scalar_select %p227, %s226, 63
      %p229 = scmp.lt.s32.totalorder %s20, 0
      %s230 = scalar_select %p229, %s20, 0
      %s231 = sadd.s32 %s230, %s228
      %s232 = smul.addr %s231, 8
      %s233 = scalar_lea.vmem %s3, %s232
      %s234 = smul.u32 32, %s19
      %s235 = smul.u32 2, %s21
      %p236 = scmp.lt.s32.totalorder %s234, 63
      %s237 = scalar_select %p236, %s234, 63
      %p238 = scmp.lt.s32.totalorder %s235, 1
      %s239 = scalar_select %p238, %s235, 1
      %s240 = smul.addr %s237, 2
      %s241 = sadd.s32 %s239, %s240
      %s242 = smul.addr %s241, 4
      %s243 = scalar_lea.vmem %s0, %s242
      %s244 = smul.u32 32, %s19
      %s245 = smul.u32 2, %s21
      %s246 = smul.u32 32, %s21
      %p247 = scmp.lt.s32.totalorder %s246, 31
      %s248 = scalar_select %p247, %s246, 31
      %p249 = scmp.lt.s32.totalorder %s20, 0
      %s250 = scalar_select %p249, %s20, 0
      %s251 = sadd.s32 %s250, %s248
      %s252 = smul.addr %s251, 4
      %s253 = scalar_lea.vmem %s1, %s252
      %s254 = smul.u32 32, %s21
      %p255 = scmp.lt.s32.totalorder %s20, 0
      %s256 = scalar_select %p255, %s20, 0
      %s257 = scalar_lea.vmem %s2, %s256
      %s258 = smul.u32 32, %s19
      %p259 = scmp.lt.s32.totalorder %s258, 63
      %s260 = scalar_select %p259, %s258, 63
      %p261 = scmp.lt.s32.totalorder %s20, 0
      %s262 = scalar_select %p261, %s20, 0
      %s263 = sadd.s32 %s262, %s260
      %s264 = smul.addr %s263, 8
      %s265 = scalar_lea.vmem %s3, %s264
      %s266 = smul.u32 32, %s19
      %p268 = scmp.eq.s32.totalorder %s21, 0
      // Predicated region
      $region33: #{encoder_2_forward.33} parent=31 // pred_check
        %p269 = pneg %p268
      $region34: #{encoder_2_forward.33} parent=31 // pred_check_branch
        %271 = sbr.rel (%p269) target = $region36
      $region35: #{encoder_2_forward.33} parent=31 // pred_region
        %272 = vst [vmem:[#allocation2] sm:$0xff] 0.0
        %273 = vst [vmem:[#allocation2 + $0x8] sm:$0xff] 0.0
        %274 = vst [vmem:[#allocation2 + $0x10] sm:$0xff] 0.0
        %275 = vst [vmem:[#allocation2 + $0x18] sm:$0xff] 0.0
        %276 = vst [vmem:[#allocation2 + $0x20] sm:$0xff] 0.0
        %277 = vst [vmem:[#allocation2 + $0x28] sm:$0xff] 0.0
        %278 = vst [vmem:[#allocation2 + $0x30] sm:$0xff] 0.0
        %279 = vst [vmem:[#allocation2 + $0x38] sm:$0xff] 0.0
        %280 = vst [vmem:[#allocation2 + $0x40] sm:$0xff] 0.0
        %281 = vst [vmem:[#allocation2 + $0x48] sm:$0xff] 0.0
        %282 = vst [vmem:[#allocation2 + $0x50] sm:$0xff] 0.0
        %283 = vst [vmem:[#allocation2 + $0x58] sm:$0xff] 0.0
        %284 = vst [vmem:[#allocation2 + $0x60] sm:$0xff] 0.0
        %285 = vst [vmem:[#allocation2 + $0x68] sm:$0xff] 0.0
        %286 = vst [vmem:[#allocation2 + $0x70] sm:$0xff] 0.0
        %287 = vst [vmem:[#allocation2 + $0x78] sm:$0xff] 0.0
        %288 = vst [vmem:[#allocation2 + $0x80] sm:$0xff] 0.0
        %289 = vst [vmem:[#allocation2 + $0x88] sm:$0xff] 0.0
        %290 = vst [vmem:[#allocation2 + $0x90] sm:$0xff] 0.0
        %291 = vst [vmem:[#allocation2 + $0x98] sm:$0xff] 0.0
        %292 = vst [vmem:[#allocation2 + $0xa0] sm:$0xff] 0.0
        %293 = vst [vmem:[#allocation2 + $0xa8] sm:$0xff] 0.0
        %294 = vst [vmem:[#allocation2 + $0xb0] sm:$0xff] 0.0
        %295 = vst [vmem:[#allocation2 + $0xb8] sm:$0xff] 0.0
        %296 = vst [vmem:[#allocation2 + $0xc0] sm:$0xff] 0.0
        %297 = vst [vmem:[#allocation2 + $0xc8] sm:$0xff] 0.0
        %298 = vst [vmem:[#allocation2 + $0xd0] sm:$0xff] 0.0
        %299 = vst [vmem:[#allocation2 + $0xd8] sm:$0xff] 0.0
        %300 = vst [vmem:[#allocation2 + $0xe0] sm:$0xff] 0.0
        %301 = vst [vmem:[#allocation2 + $0xe8] sm:$0xff] 0.0
        %302 = vst [vmem:[#allocation2 + $0xf0] sm:$0xff] 0.0
        %303 = vst [vmem:[#allocation2 + $0xf8] sm:$0xff] 0.0
      $region36: #{encoder_2_forward.33} parent=31 // pred_fallthru
        _
      %v304 = vld [vmem:[#allocation2] sm:$0xff]
      %v305 = vld [vmem:[#allocation2 + $0x8] sm:$0xff]
      %v306 = vld [vmem:[#allocation2 + $0x10] sm:$0xff]
      %v307 = vld [vmem:[#allocation2 + $0x18] sm:$0xff]
      %v308 = vld [vmem:[#allocation2 + $0x20] sm:$0xff]
      %v309 = vld [vmem:[#allocation2 + $0x28] sm:$0xff]
      %v310 = vld [vmem:[#allocation2 + $0x30] sm:$0xff]
      %v311 = vld [vmem:[#allocation2 + $0x38] sm:$0xff]
      %v312 = vld [vmem:[#allocation2 + $0x40] sm:$0xff]
      %v313 = vld [vmem:[#allocation2 + $0x48] sm:$0xff]
      %v314 = vld [vmem:[#allocation2 + $0x50] sm:$0xff]
      %v315 = vld [vmem:[#allocation2 + $0x58] sm:$0xff]
      %v316 = vld [vmem:[#allocation2 + $0x60] sm:$0xff]
      %v317 = vld [vmem:[#allocation2 + $0x68] sm:$0xff]
      %v318 = vld [vmem:[#allocation2 + $0x70] sm:$0xff]
      %v319 = vld [vmem:[#allocation2 + $0x78] sm:$0xff]
      %v320 = vld [vmem:[#allocation2 + $0x80] sm:$0xff]
      %v321 = vld [vmem:[#allocation2 + $0x88] sm:$0xff]
      %v322 = vld [vmem:[#allocation2 + $0x90] sm:$0xff]
      %v323 = vld [vmem:[#allocation2 + $0x98] sm:$0xff]
      %v324 = vld [vmem:[#allocation2 + $0xa0] sm:$0xff]
      %v325 = vld [vmem:[#allocation2 + $0xa8] sm:$0xff]
      %v326 = vld [vmem:[#allocation2 + $0xb0] sm:$0xff]
      %v327 = vld [vmem:[#allocation2 + $0xb8] sm:$0xff]
      %v328 = vld [vmem:[#allocation2 + $0xc0] sm:$0xff]
      %v329 = vld [vmem:[#allocation2 + $0xc8] sm:$0xff]
      %v330 = vld [vmem:[#allocation2 + $0xd0] sm:$0xff]
      %v331 = vld [vmem:[#allocation2 + $0xd8] sm:$0xff]
      %v332 = vld [vmem:[#allocation2 + $0xe0] sm:$0xff]
      %v333 = vld [vmem:[#allocation2 + $0xe8] sm:$0xff]
      %v334 = vld [vmem:[#allocation2 + $0xf0] sm:$0xff]
      %v335 = vld [vmem:[#allocation2 + $0xf8] sm:$0xff]
      %v336 = vld [vmem:[%s243] sm:$0xff]
      %v337 = vld [vmem:[%s243 + $0x8] sm:$0xff]
      %v338 = vld [vmem:[%s243 + $0x10] sm:$0xff]
      %v339 = vld [vmem:[%s243 + $0x18] sm:$0xff]
      %v340 = vld [vmem:[%s243 + $0x20] sm:$0xff]
      %v341 = vld [vmem:[%s243 + $0x28] sm:$0xff]
      %v342 = vld [vmem:[%s243 + $0x30] sm:$0xff]
      %v343 = vld [vmem:[%s243 + $0x38] sm:$0xff]
      %v344 = vld [vmem:[%s243 + $0x40] sm:$0xff]
      %v345 = vld [vmem:[%s243 + $0x48] sm:$0xff]
      %v346 = vld [vmem:[%s243 + $0x50] sm:$0xff]
      %v347 = vld [vmem:[%s243 + $0x58] sm:$0xff]
      %v348 = vld [vmem:[%s243 + $0x60] sm:$0xff]
      %v349 = vld [vmem:[%s243 + $0x68] sm:$0xff]
      %v350 = vld [vmem:[%s243 + $0x70] sm:$0xff]
      %v351 = vld [vmem:[%s243 + $0x78] sm:$0xff]
      %v352 = vld [vmem:[%s243 + $0x80] sm:$0xff]
      %v353 = vld [vmem:[%s243 + $0x88] sm:$0xff]
      %v354 = vld [vmem:[%s243 + $0x90] sm:$0xff]
      %v355 = vld [vmem:[%s243 + $0x98] sm:$0xff]
      %v356 = vld [vmem:[%s243 + $0xa0] sm:$0xff]
      %v357 = vld [vmem:[%s243 + $0xa8] sm:$0xff]
      %v358 = vld [vmem:[%s243 + $0xb0] sm:$0xff]
      %v359 = vld [vmem:[%s243 + $0xb8] sm:$0xff]
      %v360 = vld [vmem:[%s243 + $0xc0] sm:$0xff]
      %v361 = vld [vmem:[%s243 + $0xc8] sm:$0xff]
      %v362 = vld [vmem:[%s243 + $0xd0] sm:$0xff]
      %v363 = vld [vmem:[%s243 + $0xd8] sm:$0xff]
      %v364 = vld [vmem:[%s243 + $0xe0] sm:$0xff]
      %v365 = vld [vmem:[%s243 + $0xe8] sm:$0xff]
      %v366 = vld [vmem:[%s243 + $0xf0] sm:$0xff]
      %v367 = vld [vmem:[%s243 + $0xf8] sm:$0xff]
      %v368 = vld [vmem:[%s253] sm:$0xf]
      %v369 = vld [vmem:[%s253 + $0x4] sm:$0xf]
      %v370 = vld [vmem:[%s253 + $0x8] sm:$0xf]
      %v371 = vld [vmem:[%s253 + $0xc] sm:$0xf]
      %v372 = vld [vmem:[%s253 + $0x10] sm:$0xf]
      %v373 = vld [vmem:[%s253 + $0x14] sm:$0xf]
      %v374 = vld [vmem:[%s253 + $0x18] sm:$0xf]
      %v375 = vld [vmem:[%s253 + $0x1c] sm:$0xf]
      %v376 = vld [vmem:[%s253 + $0x20] sm:$0xf]
      %v377 = vld [vmem:[%s253 + $0x24] sm:$0xf]
      %v378 = vld [vmem:[%s253 + $0x28] sm:$0xf]
      %v379 = vld [vmem:[%s253 + $0x2c] sm:$0xf]
      %v380 = vld [vmem:[%s253 + $0x30] sm:$0xf]
      %v381 = vld [vmem:[%s253 + $0x34] sm:$0xf]
      %v382 = vld [vmem:[%s253 + $0x38] sm:$0xf]
      %v383 = vld [vmem:[%s253 + $0x3c] sm:$0xf]
      %v384 = vld [vmem:[%s253 + $0x40] sm:$0xf]
      %v385 = vld [vmem:[%s253 + $0x44] sm:$0xf]
      %v386 = vld [vmem:[%s253 + $0x48] sm:$0xf]
      %v387 = vld [vmem:[%s253 + $0x4c] sm:$0xf]
      %v388 = vld [vmem:[%s253 + $0x50] sm:$0xf]
      %v389 = vld [vmem:[%s253 + $0x54] sm:$0xf]
      %v390 = vld [vmem:[%s253 + $0x58] sm:$0xf]
      %v391 = vld [vmem:[%s253 + $0x5c] sm:$0xf]
      %v392 = vld [vmem:[%s253 + $0x60] sm:$0xf]
      %v393 = vld [vmem:[%s253 + $0x64] sm:$0xf]
      %v394 = vld [vmem:[%s253 + $0x68] sm:$0xf]
      %v395 = vld [vmem:[%s253 + $0x6c] sm:$0xf]
      %v396 = vld [vmem:[%s253 + $0x70] sm:$0xf]
      %v397 = vld [vmem:[%s253 + $0x74] sm:$0xf]
      %v398 = vld [vmem:[%s253 + $0x78] sm:$0xf]
      %v399 = vld [vmem:[%s253 + $0x7c] sm:$0xf]
      %v432 = vunpack.c.l.b16 %v336
      %v433 = vunpack.c.h.b16 %v336
      %v434 = vunpack.c.l.b16 %v337
      %v435 = vunpack.c.h.b16 %v337
      %v436 = vunpack.c.l.b16 %v338
      %v437 = vunpack.c.h.b16 %v338
      %v438 = vunpack.c.l.b16 %v339
      %v439 = vunpack.c.h.b16 %v339
      %v440 = vunpack.c.l.b16 %v340
      %v441 = vunpack.c.h.b16 %v340
      %v442 = vunpack.c.l.b16 %v341
      %v443 = vunpack.c.h.b16 %v341
      %v444 = vunpack.c.l.b16 %v342
      %v445 = vunpack.c.h.b16 %v342
      %v446 = vunpack.c.l.b16 %v343
      %v447 = vunpack.c.h.b16 %v343
      %v448 = vunpack.c.l.b16 %v344
      %v449 = vunpack.c.h.b16 %v344
      %v450 = vunpack.c.l.b16 %v345
      %v451 = vunpack.c.h.b16 %v345
      %v452 = vunpack.c.l.b16 %v346
      %v453 = vunpack.c.h.b16 %v346
      %v454 = vunpack.c.l.b16 %v347
      %v455 = vunpack.c.h.b16 %v347
      %v456 = vunpack.c.l.b16 %v348
      %v457 = vunpack.c.h.b16 %v348
      %v458 = vunpack.c.l.b16 %v349
      %v459 = vunpack.c.h.b16 %v349
      %v460 = vunpack.c.l.b16 %v350
      %v461 = vunpack.c.h.b16 %v350
      %v462 = vunpack.c.l.b16 %v351
      %v463 = vunpack.c.h.b16 %v351
      %v464 = vunpack.c.l.b16 %v352
      %v465 = vunpack.c.h.b16 %v352
      %v466 = vunpack.c.l.b16 %v353
      %v467 = vunpack.c.h.b16 %v353
      %v468 = vunpack.c.l.b16 %v354
      %v469 = vunpack.c.h.b16 %v354
      %v470 = vunpack.c.l.b16 %v355
      %v471 = vunpack.c.h.b16 %v355
      %v472 = vunpack.c.l.b16 %v356
      %v473 = vunpack.c.h.b16 %v356
      %v474 = vunpack.c.l.b16 %v357
      %v475 = vunpack.c.h.b16 %v357
      %v476 = vunpack.c.l.b16 %v358
      %v477 = vunpack.c.h.b16 %v358
      %v478 = vunpack.c.l.b16 %v359
      %v479 = vunpack.c.h.b16 %v359
      %v480 = vunpack.c.l.b16 %v360
      %v481 = vunpack.c.h.b16 %v360
      %v482 = vunpack.c.l.b16 %v361
      %v483 = vunpack.c.h.b16 %v361
      %v484 = vunpack.c.l.b16 %v362
      %v485 = vunpack.c.h.b16 %v362
      %v486 = vunpack.c.l.b16 %v363
      %v487 = vunpack.c.h.b16 %v363
      %v488 = vunpack.c.l.b16 %v364
      %v489 = vunpack.c.h.b16 %v364
      %v490 = vunpack.c.l.b16 %v365
      %v491 = vunpack.c.h.b16 %v365
      %v492 = vunpack.c.l.b16 %v366
      %v493 = vunpack.c.h.b16 %v366
      %v494 = vunpack.c.l.b16 %v367
      %v495 = vunpack.c.h.b16 %v367
      %v496 = vpack.c.b16 %v434, %v432
      %v497 = vpack.c.b16 %v435, %v433
      %v498 = vpack.c.b16 %v438, %v436
      %v499 = vpack.c.b16 %v439, %v437
      %v500 = vpack.c.b16 %v442, %v440
      %v501 = vpack.c.b16 %v443, %v441
      %v502 = vpack.c.b16 %v446, %v444
      %v503 = vpack.c.b16 %v447, %v445
      %v504 = vpack.c.b16 %v450, %v448
      %v505 = vpack.c.b16 %v451, %v449
      %v506 = vpack.c.b16 %v454, %v452
      %v507 = vpack.c.b16 %v455, %v453
      %v508 = vpack.c.b16 %v458, %v456
      %v509 = vpack.c.b16 %v459, %v457
      %v510 = vpack.c.b16 %v462, %v460
      %v511 = vpack.c.b16 %v463, %v461
      %v512 = vpack.c.b16 %v466, %v464
      %v513 = vpack.c.b16 %v467, %v465
      %v514 = vpack.c.b16 %v470, %v468
      %v515 = vpack.c.b16 %v471, %v469
      %v516 = vpack.c.b16 %v474, %v472
      %v517 = vpack.c.b16 %v475, %v473
      %v518 = vpack.c.b16 %v478, %v476
      %v519 = vpack.c.b16 %v479, %v477
      %v520 = vpack.c.b16 %v482, %v480
      %v521 = vpack.c.b16 %v483, %v481
      %v522 = vpack.c.b16 %v486, %v484
      %v523 = vpack.c.b16 %v487, %v485
      %v524 = vpack.c.b16 %v490, %v488
      %v525 = vpack.c.b16 %v491, %v489
      %v526 = vpack.c.b16 %v494, %v492
      %v527 = vpack.c.b16 %v495, %v493
      %v592 = vunpack.c.l.b16 %v368
      %v593 = vunpack.c.l.b16 %v369
      %v594 = vunpack.c.l.b16 %v370
      %v595 = vunpack.c.l.b16 %v371
      %v596 = vunpack.c.l.b16 %v372
      %v597 = vunpack.c.l.b16 %v373
      %v598 = vunpack.c.l.b16 %v374
      %v599 = vunpack.c.l.b16 %v375
      %v600 = vunpack.c.l.b16 %v376
      %v601 = vunpack.c.l.b16 %v377
      %v602 = vunpack.c.l.b16 %v378
      %v603 = vunpack.c.l.b16 %v379
      %v604 = vunpack.c.l.b16 %v380
      %v605 = vunpack.c.l.b16 %v381
      %v606 = vunpack.c.l.b16 %v382
      %v607 = vunpack.c.l.b16 %v383
      %v608 = vunpack.c.l.b16 %v384
      %v609 = vunpack.c.l.b16 %v385
      %v610 = vunpack.c.l.b16 %v386
      %v611 = vunpack.c.l.b16 %v387
      %v612 = vunpack.c.l.b16 %v388
      %v613 = vunpack.c.l.b16 %v389
      %v614 = vunpack.c.l.b16 %v390
      %v615 = vunpack.c.l.b16 %v391
      %v616 = vunpack.c.l.b16 %v392
      %v617 = vunpack.c.l.b16 %v393
      %v618 = vunpack.c.l.b16 %v394
      %v619 = vunpack.c.l.b16 %v395
      %v620 = vunpack.c.l.b16 %v396
      %v621 = vunpack.c.l.b16 %v397
      %v622 = vunpack.c.l.b16 %v398
      %v623 = vunpack.c.l.b16 %v399
      %v624 = vpack.c.b16 %v593, %v592
      %v625 = vpack.c.b16 %v595, %v594
      %v626 = vpack.c.b16 %v597, %v596
      %v627 = vpack.c.b16 %v599, %v598
      %v628 = vpack.c.b16 %v601, %v600
      %v629 = vpack.c.b16 %v603, %v602
      %v630 = vpack.c.b16 %v605, %v604
      %v631 = vpack.c.b16 %v607, %v606
      %v632 = vpack.c.b16 %v609, %v608
      %v633 = vpack.c.b16 %v611, %v610
      %v634 = vpack.c.b16 %v613, %v612
      %v635 = vpack.c.b16 %v615, %v614
      %v636 = vpack.c.b16 %v617, %v616
      %v637 = vpack.c.b16 %v619, %v618
      %v638 = vpack.c.b16 %v621, %v620
      %v639 = vpack.c.b16 %v623, %v622
      %656 = vmatprep.subr.bf16.mxu0 0
      %657 = vmatpush1.bf16.msra.mxu0 %v631
      %658 = vmatprep.subr.bf16.mxu0 0
      %659 = vmatpush1.bf16.msra.mxu0 %v630
      %660 = vmatprep.subr.bf16.mxu0 0
      %661 = vmatpush1.bf16.msra.mxu0 %v629
      %662 = vmatprep.subr.bf16.mxu0 0
      %663 = vmatpush1.bf16.msra.mxu0 %v628
      %664 = vmatprep.subr.bf16.mxu0 0
      %665 = vmatpush1.bf16.msra.mxu0 %v627
      %666 = vmatprep.subr.bf16.mxu0 0
      %667 = vmatpush1.bf16.msra.mxu0 %v626
      %668 = vmatprep.subr.bf16.mxu0 0
      %669 = vmatpush1.bf16.msra.mxu0 %v625
      %670 = vmatprep.subr.bf16.mxu0 0
      %671 = vmatpush1.bf16.msra.mxu0 %v624
      %672 = vmatprep.subr.bf16.mxu0 0
      %673 = vmatpush2.bf16.msra.mxu0 %v639
      %674 = vmatprep.subr.bf16.mxu0 0
      %675 = vmatpush2.bf16.msra.mxu0 %v638
      %676 = vmatprep.subr.bf16.mxu0 0
      %677 = vmatpush2.bf16.msra.mxu0 %v637
      %678 = vmatprep.subr.bf16.mxu0 0
      %679 = vmatpush2.bf16.msra.mxu0 %v636
      %680 = vmatprep.subr.bf16.mxu0 0
      %681 = vmatpush2.bf16.msra.mxu0 %v635
      %682 = vmatprep.subr.bf16.mxu0 0
      %683 = vmatpush2.bf16.msra.mxu0 %v634
      %684 = vmatprep.subr.bf16.mxu0 0
      %685 = vmatpush2.bf16.msra.mxu0 %v633
      %686 = vmatprep.subr.bf16.mxu0 0
      %687 = vmatpush2.bf16.msra.mxu0 %v632
      %688 = vmatprep.mubr.bf16.mxu0 %v497
      %689 = vmatmul.mubr.bf16.gmra.mxu0 %v496
      %v690 = vpop.f32.mrf.mxu0
      %v691 = vadd.f32 0.0, %v690
      %v692 = vpop.f32.mrf.mxu0
      %v693 = vpop.f32.mrf.mxu0
      %v694 = vadd.f32 0.0, %v693
      %v695 = vpop.f32.mrf.mxu0
      %696 = vmatprep.mubr.bf16.mxu0 %v499
      %697 = vmatmul.mubr.bf16.gmra.mxu0 %v498
      %v698 = vpop.f32.mrf.mxu0
      %v699 = vadd.f32 0.0, %v698
      %v700 = vpop.f32.mrf.mxu0
      %v701 = vpop.f32.mrf.mxu0
      %v702 = vadd.f32 0.0, %v701
      %v703 = vpop.f32.mrf.mxu0
      %704 = vmatprep.mubr.bf16.mxu0 %v501
      %705 = vmatmul.mubr.bf16.gmra.mxu0 %v500
      %v706 = vpop.f32.mrf.mxu0
      %v707 = vadd.f32 0.0, %v706
      %v708 = vpop.f32.mrf.mxu0
      %v709 = vpop.f32.mrf.mxu0
      %v710 = vadd.f32 0.0, %v709
      %v711 = vpop.f32.mrf.mxu0
      %712 = vmatprep.mubr.bf16.mxu0 %v503
      %713 = vmatmul.mubr.bf16.gmra.mxu0 %v502
      %v714 = vpop.f32.mrf.mxu0
      %v715 = vadd.f32 0.0, %v714
      %v716 = vpop.f32.mrf.mxu0
      %v717 = vpop.f32.mrf.mxu0
      %v718 = vadd.f32 0.0, %v717
      %v719 = vpop.f32.mrf.mxu0
      %720 = vmatprep.mubr.bf16.mxu0 %v505
      %721 = vmatmul.mubr.bf16.gmra.mxu0 %v504
      %v722 = vpop.f32.mrf.mxu0
      %v723 = vadd.f32 0.0, %v722
      %v724 = vpop.f32.mrf.mxu0
      %v725 = vpop.f32.mrf.mxu0
      %v726 = vadd.f32 0.0, %v725
      %v727 = vpop.f32.mrf.mxu0
      %728 = vmatprep.mubr.bf16.mxu0 %v507
      %729 = vmatmul.mubr.bf16.gmra.mxu0 %v506
      %v730 = vpop.f32.mrf.mxu0
      %v731 = vadd.f32 0.0, %v730
      %v732 = vpop.f32.mrf.mxu0
      %v733 = vpop.f32.mrf.mxu0
      %v734 = vadd.f32 0.0, %v733
      %v735 = vpop.f32.mrf.mxu0
      %736 = vmatprep.mubr.bf16.mxu0 %v509
      %737 = vmatmul.mubr.bf16.gmra.mxu0 %v508
      %v738 = vpop.f32.mrf.mxu0
      %v739 = vadd.f32 0.0, %v738
      %v740 = vpop.f32.mrf.mxu0
      %v741 = vpop.f32.mrf.mxu0
      %v742 = vadd.f32 0.0, %v741
      %v743 = vpop.f32.mrf.mxu0
      %744 = vmatprep.mubr.bf16.mxu0 %v511
      %745 = vmatmul.mubr.bf16.gmra.mxu0 %v510
      %v746 = vpop.f32.mrf.mxu0
      %v747 = vadd.f32 0.0, %v746
      %v748 = vpop.f32.mrf.mxu0
      %v749 = vpop.f32.mrf.mxu0
      %v750 = vadd.f32 0.0, %v749
      %v751 = vpop.f32.mrf.mxu0
      %752 = vmatprep.mubr.bf16.mxu0 %v513
      %753 = vmatmul.mubr.bf16.gmra.mxu0 %v512
      %v754 = vpop.f32.mrf.mxu0
      %v755 = vadd.f32 0.0, %v754
      %v756 = vpop.f32.mrf.mxu0
      %v757 = vpop.f32.mrf.mxu0
      %v758 = vadd.f32 0.0, %v757
      %v759 = vpop.f32.mrf.mxu0
      %760 = vmatprep.mubr.bf16.mxu0 %v515
      %761 = vmatmul.mubr.bf16.gmra.mxu0 %v514
      %v762 = vpop.f32.mrf.mxu0
      %v763 = vadd.f32 0.0, %v762
      %v764 = vpop.f32.mrf.mxu0
      %v765 = vpop.f32.mrf.mxu0
      %v766 = vadd.f32 0.0, %v765
      %v767 = vpop.f32.mrf.mxu0
      %768 = vmatprep.mubr.bf16.mxu0 %v517
      %769 = vmatmul.mubr.bf16.gmra.mxu0 %v516
      %v770 = vpop.f32.mrf.mxu0
      %v771 = vadd.f32 0.0, %v770
      %v772 = vpop.f32.mrf.mxu0
      %v773 = vpop.f32.mrf.mxu0
      %v774 = vadd.f32 0.0, %v773
      %v775 = vpop.f32.mrf.mxu0
      %776 = vmatprep.mubr.bf16.mxu0 %v519
      %777 = vmatmul.mubr.bf16.gmra.mxu0 %v518
      %v778 = vpop.f32.mrf.mxu0
      %v779 = vadd.f32 0.0, %v778
      %v780 = vpop.f32.mrf.mxu0
      %v781 = vpop.f32.mrf.mxu0
      %v782 = vadd.f32 0.0, %v781
      %v783 = vpop.f32.mrf.mxu0
      %784 = vmatprep.mubr.bf16.mxu0 %v521
      %785 = vmatmul.mubr.bf16.gmra.mxu0 %v520
      %v786 = vpop.f32.mrf.mxu0
      %v787 = vadd.f32 0.0, %v786
      %v788 = vpop.f32.mrf.mxu0
      %v789 = vpop.f32.mrf.mxu0
      %v790 = vadd.f32 0.0, %v789
      %v791 = vpop.f32.mrf.mxu0
      %792 = vmatprep.mubr.bf16.mxu0 %v523
      %793 = vmatmul.mubr.bf16.gmra.mxu0 %v522
      %v794 = vpop.f32.mrf.mxu0
      %v795 = vadd.f32 0.0, %v794
      %v796 = vpop.f32.mrf.mxu0
      %v797 = vpop.f32.mrf.mxu0
      %v798 = vadd.f32 0.0, %v797
      %v799 = vpop.f32.mrf.mxu0
      %800 = vmatprep.mubr.bf16.mxu0 %v525
      %801 = vmatmul.mubr.bf16.gmra.mxu0 %v524
      %v802 = vpop.f32.mrf.mxu0
      %v803 = vadd.f32 0.0, %v802
      %v804 = vpop.f32.mrf.mxu0
      %v805 = vpop.f32.mrf.mxu0
      %v806 = vadd.f32 0.0, %v805
      %v807 = vpop.f32.mrf.mxu0
      %808 = vmatprep.mubr.bf16.mxu0 %v527
      %809 = vmatmul.mubr.bf16.gmra.mxu0 %v526
      %v810 = vpop.f32.mrf.mxu0
      %v811 = vadd.f32 0.0, %v810
      %v812 = vpop.f32.mrf.mxu0
      %v813 = vpop.f32.mrf.mxu0
      %v814 = vadd.f32 0.0, %v813
      %v815 = vpop.f32.mrf.mxu0
      %816 = vdwg.mxu0
      %v817 = vadd.f32 %v304, %v691
      %v818 = vadd.f32 %v305, %v694
      %v819 = vadd.f32 %v306, %v699
      %v820 = vadd.f32 %v307, %v702
      %v821 = vadd.f32 %v308, %v707
      %v822 = vadd.f32 %v309, %v710
      %v823 = vadd.f32 %v310, %v715
      %v824 = vadd.f32 %v311, %v718
      %v825 = vadd.f32 %v312, %v723
      %v826 = vadd.f32 %v313, %v726
      %v827 = vadd.f32 %v314, %v731
      %v828 = vadd.f32 %v315, %v734
      %v829 = vadd.f32 %v316, %v739
      %v830 = vadd.f32 %v317, %v742
      %v831 = vadd.f32 %v318, %v747
      %v832 = vadd.f32 %v319, %v750
      %v833 = vadd.f32 %v320, %v755
      %v834 = vadd.f32 %v321, %v758
      %v835 = vadd.f32 %v322, %v763
      %v836 = vadd.f32 %v323, %v766
      %v837 = vadd.f32 %v324, %v771
      %v838 = vadd.f32 %v325, %v774
      %v839 = vadd.f32 %v326, %v779
      %v840 = vadd.f32 %v327, %v782
      %v841 = vadd.f32 %v328, %v787
      %v842 = vadd.f32 %v329, %v790
      %v843 = vadd.f32 %v330, %v795
      %v844 = vadd.f32 %v331, %v798
      %v845 = vadd.f32 %v332, %v803
      %v846 = vadd.f32 %v333, %v806
      %v847 = vadd.f32 %v334, %v811
      %v848 = vadd.f32 %v335, %v814
      %849 = vst [vmem:[#allocation2] sm:$0xff] %v817
      %850 = vst [vmem:[#allocation2 + $0x8] sm:$0xff] %v818
      %851 = vst [vmem:[#allocation2 + $0x10] sm:$0xff] %v819
      %852 = vst [vmem:[#allocation2 + $0x18] sm:$0xff] %v820
      %853 = vst [vmem:[#allocation2 + $0x20] sm:$0xff] %v821
      %854 = vst [vmem:[#allocation2 + $0x28] sm:$0xff] %v822
      %855 = vst [vmem:[#allocation2 + $0x30] sm:$0xff] %v823
      %856 = vst [vmem:[#allocation2 + $0x38] sm:$0xff] %v824
      %857 = vst [vmem:[#allocation2 + $0x40] sm:$0xff] %v825
      %858 = vst [vmem:[#allocation2 + $0x48] sm:$0xff] %v826
      %859 = vst [vmem:[#allocation2 + $0x50] sm:$0xff] %v827
      %860 = vst [vmem:[#allocation2 + $0x58] sm:$0xff] %v828
      %861 = vst [vmem:[#allocation2 + $0x60] sm:$0xff] %v829
      %862 = vst [vmem:[#allocation2 + $0x68] sm:$0xff] %v830
      %863 = vst [vmem:[#allocation2 + $0x70] sm:$0xff] %v831
      %864 = vst [vmem:[#allocation2 + $0x78] sm:$0xff] %v832
      %865 = vst [vmem:[#allocation2 + $0x80] sm:$0xff] %v833
      %866 = vst [vmem:[#allocation2 + $0x88] sm:$0xff] %v834
      %867 = vst [vmem:[#allocation2 + $0x90] sm:$0xff] %v835
      %868 = vst [vmem:[#allocation2 + $0x98] sm:$0xff] %v836
      %869 = vst [vmem:[#allocation2 + $0xa0] sm:$0xff] %v837
      %870 = vst [vmem:[#allocation2 + $0xa8] sm:$0xff] %v838
      %871 = vst [vmem:[#allocation2 + $0xb0] sm:$0xff] %v839
      %872 = vst [vmem:[#allocation2 + $0xb8] sm:$0xff] %v840
      %873 = vst [vmem:[#allocation2 + $0xc0] sm:$0xff] %v841
      %874 = vst [vmem:[#allocation2 + $0xc8] sm:$0xff] %v842
      %875 = vst [vmem:[#allocation2 + $0xd0] sm:$0xff] %v843
      %876 = vst [vmem:[#allocation2 + $0xd8] sm:$0xff] %v844
      %877 = vst [vmem:[#allocation2 + $0xe0] sm:$0xff] %v845
      %878 = vst [vmem:[#allocation2 + $0xe8] sm:$0xff] %v846
      %879 = vst [vmem:[#allocation2 + $0xf0] sm:$0xff] %v847
      %880 = vst [vmem:[#allocation2 + $0xf8] sm:$0xff] %v848
      // Predicated region
      $region37: #{encoder_2_forward.33} parent=31 // pred_check
        %p881 = pneg %p268
      $region38: #{encoder_2_forward.33} parent=31 // pred_check_branch
        %883 = sbr.rel (%p881) target = $region40
      $region39: #{encoder_2_forward.33} parent=31 // pred_region
        %v884 = vld [vmem:[#allocation2] sm:$0xff]
        %v885 = vld [vmem:[#allocation2 + $0x8] sm:$0xff]
        %v886 = vld [vmem:[#allocation2 + $0x10] sm:$0xff]
        %v887 = vld [vmem:[#allocation2 + $0x18] sm:$0xff]
        %v888 = vld [vmem:[#allocation2 + $0x20] sm:$0xff]
        %v889 = vld [vmem:[#allocation2 + $0x28] sm:$0xff]
        %v890 = vld [vmem:[#allocation2 + $0x30] sm:$0xff]
        %v891 = vld [vmem:[#allocation2 + $0x38] sm:$0xff]
        %v892 = vld [vmem:[#allocation2 + $0x40] sm:$0xff]
        %v893 = vld [vmem:[#allocation2 + $0x48] sm:$0xff]
        %v894 = vld [vmem:[#allocation2 + $0x50] sm:$0xff]
        %v895 = vld [vmem:[#allocation2 + $0x58] sm:$0xff]
        %v896 = vld [vmem:[#allocation2 + $0x60] sm:$0xff]
        %v897 = vld [vmem:[#allocation2 + $0x68] sm:$0xff]
        %v898 = vld [vmem:[#allocation2 + $0x70] sm:$0xff]
        %v899 = vld [vmem:[#allocation2 + $0x78] sm:$0xff]
        %v900 = vld [vmem:[#allocation2 + $0x80] sm:$0xff]
        %v901 = vld [vmem:[#allocation2 + $0x88] sm:$0xff]
        %v902 = vld [vmem:[#allocation2 + $0x90] sm:$0xff]
        %v903 = vld [vmem:[#allocation2 + $0x98] sm:$0xff]
        %v904 = vld [vmem:[#allocation2 + $0xa0] sm:$0xff]
        %v905 = vld [vmem:[#allocation2 + $0xa8] sm:$0xff]
        %v906 = vld [vmem:[#allocation2 + $0xb0] sm:$0xff]
        %v907 = vld [vmem:[#allocation2 + $0xb8] sm:$0xff]
        %v908 = vld [vmem:[#allocation2 + $0xc0] sm:$0xff]
        %v909 = vld [vmem:[#allocation2 + $0xc8] sm:$0xff]
        %v910 = vld [vmem:[#allocation2 + $0xd0] sm:$0xff]
        %v911 = vld [vmem:[#allocation2 + $0xd8] sm:$0xff]
        %v912 = vld [vmem:[#allocation2 + $0xe0] sm:$0xff]
        %v913 = vld [vmem:[#allocation2 + $0xe8] sm:$0xff]
        %v914 = vld [vmem:[#allocation2 + $0xf0] sm:$0xff]
        %v915 = vld [vmem:[#allocation2 + $0xf8] sm:$0xff]
        %v916 = vld [vmem:[%s257] sm:$0x1]
        %v918 = vlaneseq
        %v919 = vshrl.u32 %v918, 7
        %v920 = vsub.s32 0, %v919
        %v921 = vrot.slane %v916, %v920
        %v923 = vadd.f32 %v884, %v921
        %v924 = vadd.f32 %v885, %v921
        %v925 = vadd.f32 %v886, %v921
        %v926 = vadd.f32 %v887, %v921
        %v927 = vadd.f32 %v888, %v921
        %v928 = vadd.f32 %v889, %v921
        %v929 = vadd.f32 %v890, %v921
        %v930 = vadd.f32 %v891, %v921
        %v931 = vadd.f32 %v892, %v921
        %v932 = vadd.f32 %v893, %v921
        %v933 = vadd.f32 %v894, %v921
        %v934 = vadd.f32 %v895, %v921
        %v935 = vadd.f32 %v896, %v921
        %v936 = vadd.f32 %v897, %v921
        %v937 = vadd.f32 %v898, %v921
        %v938 = vadd.f32 %v899, %v921
        %v939 = vadd.f32 %v900, %v921
        %v940 = vadd.f32 %v901, %v921
        %v941 = vadd.f32 %v902, %v921
        %v942 = vadd.f32 %v903, %v921
        %v943 = vadd.f32 %v904, %v921
        %v944 = vadd.f32 %v905, %v921
        %v945 = vadd.f32 %v906, %v921
        %v946 = vadd.f32 %v907, %v921
        %v947 = vadd.f32 %v908, %v921
        %v948 = vadd.f32 %v909, %v921
        %v949 = vadd.f32 %v910, %v921
        %v950 = vadd.f32 %v911, %v921
        %v951 = vadd.f32 %v912, %v921
        %v952 = vadd.f32 %v913, %v921
        %v953 = vadd.f32 %v914, %v921
        %v954 = vadd.f32 %v915, %v921
        %955 = vst [vmem:[%s265] sm:$0xff] %v923
        %956 = vst [vmem:[%s265 + $0x8] sm:$0xff] %v924
        %957 = vst [vmem:[%s265 + $0x10] sm:$0xff] %v925
        %958 = vst [vmem:[%s265 + $0x18] sm:$0xff] %v926
        %959 = vst [vmem:[%s265 + $0x20] sm:$0xff] %v927
        %960 = vst [vmem:[%s265 + $0x28] sm:$0xff] %v928
        %961 = vst [vmem:[%s265 + $0x30] sm:$0xff] %v929
        %962 = vst [vmem:[%s265 + $0x38] sm:$0xff] %v930
        %963 = vst [vmem:[%s265 + $0x40] sm:$0xff] %v931
        %964 = vst [vmem:[%s265 + $0x48] sm:$0xff] %v932
        %965 = vst [vmem:[%s265 + $0x50] sm:$0xff] %v933
        %966 = vst [vmem:[%s265 + $0x58] sm:$0xff] %v934
        %967 = vst [vmem:[%s265 + $0x60] sm:$0xff] %v935
        %968 = vst [vmem:[%s265 + $0x68] sm:$0xff] %v936
        %969 = vst [vmem:[%s265 + $0x70] sm:$0xff] %v937
        %970 = vst [vmem:[%s265 + $0x78] sm:$0xff] %v938
        %971 = vst [vmem:[%s265 + $0x80] sm:$0xff] %v939
        %972 = vst [vmem:[%s265 + $0x88] sm:$0xff] %v940
        %973 = vst [vmem:[%s265 + $0x90] sm:$0xff] %v941
        %974 = vst [vmem:[%s265 + $0x98] sm:$0xff] %v942
        %975 = vst [vmem:[%s265 + $0xa0] sm:$0xff] %v943
        %976 = vst [vmem:[%s265 + $0xa8] sm:$0xff] %v944
        %977 = vst [vmem:[%s265 + $0xb0] sm:$0xff] %v945
        %978 = vst [vmem:[%s265 + $0xb8] sm:$0xff] %v946
        %979 = vst [vmem:[%s265 + $0xc0] sm:$0xff] %v947
        %980 = vst [vmem:[%s265 + $0xc8] sm:$0xff] %v948
        %981 = vst [vmem:[%s265 + $0xd0] sm:$0xff] %v949
        %982 = vst [vmem:[%s265 + $0xd8] sm:$0xff] %v950
        %983 = vst [vmem:[%s265 + $0xe0] sm:$0xff] %v951
        %984 = vst [vmem:[%s265 + $0xe8] sm:$0xff] %v952
        %985 = vst [vmem:[%s265 + $0xf0] sm:$0xff] %v953
        %986 = vst [vmem:[%s265 + $0xf8] sm:$0xff] %v954
      $region40: #{encoder_2_forward.33} parent=31 // pred_fallthru
        _
      %s987 = smul.u32 32, %s19
      %p988 = scmp.lt.s32.totalorder %s987, 63
      %s989 = scalar_select %p988, %s987, 63
      %p990 = scmp.lt.s32.totalorder %s20, 0
      %s991 = scalar_select %p990, %s20, 0
      %s992 = sadd.s32 %s991, %s989
      %s993 = smul.addr %s992, 8
      %s994 = scalar_lea.vmem %s3, %s993
      // Predicated region
      $region41: #{encoder_2_forward.33} parent=31 // pred_check
        %p995 = pneg %p135
      $region42: #{encoder_2_forward.33} parent=31 // pred_check_branch
        %997 = sbr.rel (%p995) target = $region44
      $region43: #{encoder_2_forward.33} parent=31 // pred_region
        %s998 = smul.u32 32, %s19
      $region44: #{encoder_2_forward.33} parent=31 // pred_fallthru
        _
    $region32: #{encoder_2_forward.33} parent=5 // pred_fallthru
      _
    %p999 = scmp.le.s32.totalorder 2, %s9
    // Predicated region
    $region45: #{encoder_2_forward.33} parent=5 // pred_check
      %p1000 = pneg %p999
    $region46: #{encoder_2_forward.33} parent=5 // pred_check_branch
      %1002 = sbr.rel (%p1000) target = $region48
    $region47: #{encoder_2_forward.33} parent=5 // pred_region
      %s1003 = ssub.s32 %s9, 2
      // Predicated region
      $region49: #{encoder_2_forward.33} parent=47 // pred_check
        %p1004 = pneg %p141
      $region50: #{encoder_2_forward.33} parent=47 // pred_check_branch
        %1006 = sbr.rel (%p1004) target = $region52
      $region51: #{encoder_2_forward.33} parent=47 // pred_region
        %s1007 = smul.u32 32, %s22
        %p1008 = scmp.lt.s32.totalorder %s1007, 63
        %s1009 = scalar_select %p1008, %s1007, 63
        %p1010 = scmp.lt.s32.totalorder %s23, 0
        %s1011 = scalar_select %p1010, %s23, 0
        %s1012 = sadd.s32 %s1011, %s1009
        %s1013 = smul.addr %s1012, 8
        %s1014 = scalar_lea.vmem %s3, %s1013
      $region52: #{encoder_2_forward.33} parent=47 // pred_fallthru
        _
    $region48: #{encoder_2_forward.33} parent=5 // pred_fallthru
      _
  $region6: #{encoder_2_forward.33} parent=0 // loop_footer
    %s13 = sadd.s32 1, %s9
  $region7: #{encoder_2_forward.33} parent=0 // loop_footer_branch
    %8 = sbr.rel target = $region3
  $region8: #{encoder_2_forward.33} parent=0 // loop_exit
    _

// kernel: encoder_2_forward.35
$region0: #{encoder_2_forward.35}
  #allocation0 [shape = 'u32[]', space=smem, size = 0x4, offset = 0x4, fixed_abs, tag = 'smem constant byte address 0x4 - core index']
  #allocation1 [shape = 'u32[144,128]{1,0:T(1,128)}', space=vmem, size = 0x12000, scoped, tag = 'internal scratch']
  #allocation2 [shape = 'f32[128,128]{1,0:T(8,128)}', space=vmem, size = 0x10000, scoped, tag = 'scratch operand']
  %s0 = inlined_call_operand.vmem [shape: bf16[128,256], index: 0, kind: input, shape index: {}]
  %s1 = inlined_call_operand.vmem [shape: bf16[256,128], index: 1, kind: input, shape index: {}]
  %s2 = inlined_call_operand.vmem [shape: f32[1,128], index: 2, kind: input, shape index: {}]
  %s3 = inlined_call_operand.vmem [shape: f32[128,128], index: 3, kind: output, shape index: {}]
  %s4 = sld [smem:[#allocation0]]
  $region30: #{encoder_2_forward.35} parent=0
    _
  %s6 = ssub.s32 1, %s4
  %s7 = scalar_select 0, %s6, %s4
  // Predicated region
  $region2: #{encoder_2_forward.35} parent=0 // pred_check
    _
  $region3: #{encoder_2_forward.35} parent=0 // pred_check_branch
    %9 = sbr.rel (0) target = $region5
  $region4: #{encoder_2_forward.35} parent=0 // pred_region
    _
  $region5: #{encoder_2_forward.35} parent=0 // pred_fallthru
    _
  // Predicated region
  $region6: #{encoder_2_forward.35} parent=0 // pred_check
    _
  $region7: #{encoder_2_forward.35} parent=0 // pred_check_branch
    %11 = sbr.rel (0) target = $region9
  $region8: #{encoder_2_forward.35} parent=0 // pred_region
    _
  $region9: #{encoder_2_forward.35} parent=0 // pred_fallthru
    _
  // Predicated region
  $region10: #{encoder_2_forward.35} parent=0 // pred_check
    _
  $region11: #{encoder_2_forward.35} parent=0 // pred_check_branch
    %13 = sbr.rel (0) target = $region13
  $region12: #{encoder_2_forward.35} parent=0 // pred_region
    _
  $region13: #{encoder_2_forward.35} parent=0 // pred_fallthru
    _
  %p15 = scmp.eq.s32.totalorder 0, 0
  // Predicated region
  $region14: #{encoder_2_forward.35} parent=0 // pred_check
    %p16 = pneg %p15
  $region15: #{encoder_2_forward.35} parent=0 // pred_check_branch
    %18 = sbr.rel (%p16) target = $region17
  $region16: #{encoder_2_forward.35} parent=0 // pred_region
    %19 = vst [vmem:[#allocation2] sm:$0xff] 0.0
    %20 = vst [vmem:[#allocation2 + $0x8] sm:$0xff] 0.0
    %21 = vst [vmem:[#allocation2 + $0x10] sm:$0xff] 0.0
    %22 = vst [vmem:[#allocation2 + $0x18] sm:$0xff] 0.0
    %23 = vst [vmem:[#allocation2 + $0x20] sm:$0xff] 0.0
    %24 = vst [vmem:[#allocation2 + $0x28] sm:$0xff] 0.0
    %25 = vst [vmem:[#allocation2 + $0x30] sm:$0xff] 0.0
    %26 = vst [vmem:[#allocation2 + $0x38] sm:$0xff] 0.0
    %27 = vst [vmem:[#allocation2 + $0x40] sm:$0xff] 0.0
    %28 = vst [vmem:[#allocation2 + $0x48] sm:$0xff] 0.0
    %29 = vst [vmem:[#allocation2 + $0x50] sm:$0xff] 0.0
    %30 = vst [vmem:[#allocation2 + $0x58] sm:$0xff] 0.0
    %31 = vst [vmem:[#allocation2 + $0x60] sm:$0xff] 0.0
    %32 = vst [vmem:[#allocation2 + $0x68] sm:$0xff] 0.0
    %33 = vst [vmem:[#allocation2 + $0x70] sm:$0xff] 0.0
    %34 = vst [vmem:[#allocation2 + $0x78] sm:$0xff] 0.0
  $region17: #{encoder_2_forward.35} parent=0 // pred_fallthru
    _
  %v35 = vld [vmem:[#allocation2] sm:$0xff]
  %v36 = vld [vmem:[#allocation2 + $0x8] sm:$0xff]
  %v37 = vld [vmem:[#allocation2 + $0x10] sm:$0xff]
  %v38 = vld [vmem:[#allocation2 + $0x18] sm:$0xff]
  %v39 = vld [vmem:[#allocation2 + $0x20] sm:$0xff]
  %v40 = vld [vmem:[#allocation2 + $0x28] sm:$0xff]
  %v41 = vld [vmem:[#allocation2 + $0x30] sm:$0xff]
  %v42 = vld [vmem:[#allocation2 + $0x38] sm:$0xff]
  %v43 = vld [vmem:[#allocation2 + $0x40] sm:$0xff]
  %v44 = vld [vmem:[#allocation2 + $0x48] sm:$0xff]
  %v45 = vld [vmem:[#allocation2 + $0x50] sm:$0xff]
  %v46 = vld [vmem:[#allocation2 + $0x58] sm:$0xff]
  %v47 = vld [vmem:[#allocation2 + $0x60] sm:$0xff]
  %v48 = vld [vmem:[#allocation2 + $0x68] sm:$0xff]
  %v49 = vld [vmem:[#allocation2 + $0x70] sm:$0xff]
  %v50 = vld [vmem:[#allocation2 + $0x78] sm:$0xff]
  %v51 = vld [vmem:[%s0] sm:$0xff]
  %v52 = vld [vmem:[%s0 + $0x8] sm:$0xff]
  %v53 = vld [vmem:[%s0 + $0x10] sm:$0xff]
  %v54 = vld [vmem:[%s0 + $0x18] sm:$0xff]
  %v55 = vld [vmem:[%s0 + $0x20] sm:$0xff]
  %v56 = vld [vmem:[%s0 + $0x28] sm:$0xff]
  %v57 = vld [vmem:[%s0 + $0x30] sm:$0xff]
  %v58 = vld [vmem:[%s0 + $0x38] sm:$0xff]
  %v59 = vld [vmem:[%s0 + $0x40] sm:$0xff]
  %v60 = vld [vmem:[%s0 + $0x48] sm:$0xff]
  %v61 = vld [vmem:[%s0 + $0x50] sm:$0xff]
  %v62 = vld [vmem:[%s0 + $0x58] sm:$0xff]
  %v63 = vld [vmem:[%s0 + $0x60] sm:$0xff]
  %v64 = vld [vmem:[%s0 + $0x68] sm:$0xff]
  %v65 = vld [vmem:[%s0 + $0x70] sm:$0xff]
  %v66 = vld [vmem:[%s0 + $0x78] sm:$0xff]
  %v67 = vld [vmem:[%s1] sm:$0xf]
  %v68 = vld [vmem:[%s1 + $0x4] sm:$0xf]
  %v69 = vld [vmem:[%s1 + $0x8] sm:$0xf]
  %v70 = vld [vmem:[%s1 + $0xc] sm:$0xf]
  %v71 = vld [vmem:[%s1 + $0x10] sm:$0xf]
  %v72 = vld [vmem:[%s1 + $0x14] sm:$0xf]
  %v73 = vld [vmem:[%s1 + $0x18] sm:$0xf]
  %v74 = vld [vmem:[%s1 + $0x1c] sm:$0xf]
  %v75 = vld [vmem:[%s1 + $0x20] sm:$0xf]
  %v76 = vld [vmem:[%s1 + $0x24] sm:$0xf]
  %v77 = vld [vmem:[%s1 + $0x28] sm:$0xf]
  %v78 = vld [vmem:[%s1 + $0x2c] sm:$0xf]
  %v79 = vld [vmem:[%s1 + $0x30] sm:$0xf]
  %v80 = vld [vmem:[%s1 + $0x34] sm:$0xf]
  %v81 = vld [vmem:[%s1 + $0x38] sm:$0xf]
  %v82 = vld [vmem:[%s1 + $0x3c] sm:$0xf]
  %v83 = vld [vmem:[%s1 + $0x40] sm:$0xf]
  %v84 = vld [vmem:[%s1 + $0x44] sm:$0xf]
  %v85 = vld [vmem:[%s1 + $0x48] sm:$0xf]
  %v86 = vld [vmem:[%s1 + $0x4c] sm:$0xf]
  %v87 = vld [vmem:[%s1 + $0x50] sm:$0xf]
  %v88 = vld [vmem:[%s1 + $0x54] sm:$0xf]
  %v89 = vld [vmem:[%s1 + $0x58] sm:$0xf]
  %v90 = vld [vmem:[%s1 + $0x5c] sm:$0xf]
  %v91 = vld [vmem:[%s1 + $0x60] sm:$0xf]
  %v92 = vld [vmem:[%s1 + $0x64] sm:$0xf]
  %v93 = vld [vmem:[%s1 + $0x68] sm:$0xf]
  %v94 = vld [vmem:[%s1 + $0x6c] sm:$0xf]
  %v95 = vld [vmem:[%s1 + $0x70] sm:$0xf]
  %v96 = vld [vmem:[%s1 + $0x74] sm:$0xf]
  %v97 = vld [vmem:[%s1 + $0x78] sm:$0xf]
  %v98 = vld [vmem:[%s1 + $0x7c] sm:$0xf]
  %v115 = vunpack.c.l.b16 %v51
  %v116 = vunpack.c.h.b16 %v51
  %v117 = vunpack.c.l.b16 %v52
  %v118 = vunpack.c.h.b16 %v52
  %v119 = vunpack.c.l.b16 %v53
  %v120 = vunpack.c.h.b16 %v53
  %v121 = vunpack.c.l.b16 %v54
  %v122 = vunpack.c.h.b16 %v54
  %v123 = vunpack.c.l.b16 %v55
  %v124 = vunpack.c.h.b16 %v55
  %v125 = vunpack.c.l.b16 %v56
  %v126 = vunpack.c.h.b16 %v56
  %v127 = vunpack.c.l.b16 %v57
  %v128 = vunpack.c.h.b16 %v57
  %v129 = vunpack.c.l.b16 %v58
  %v130 = vunpack.c.h.b16 %v58
  %v131 = vunpack.c.l.b16 %v59
  %v132 = vunpack.c.h.b16 %v59
  %v133 = vunpack.c.l.b16 %v60
  %v134 = vunpack.c.h.b16 %v60
  %v135 = vunpack.c.l.b16 %v61
  %v136 = vunpack.c.h.b16 %v61
  %v137 = vunpack.c.l.b16 %v62
  %v138 = vunpack.c.h.b16 %v62
  %v139 = vunpack.c.l.b16 %v63
  %v140 = vunpack.c.h.b16 %v63
  %v141 = vunpack.c.l.b16 %v64
  %v142 = vunpack.c.h.b16 %v64
  %v143 = vunpack.c.l.b16 %v65
  %v144 = vunpack.c.h.b16 %v65
  %v145 = vunpack.c.l.b16 %v66
  %v146 = vunpack.c.h.b16 %v66
  %v147 = vpack.c.b16 %v117, %v115
  %v148 = vpack.c.b16 %v118, %v116
  %v149 = vpack.c.b16 %v121, %v119
  %v150 = vpack.c.b16 %v122, %v120
  %v151 = vpack.c.b16 %v125, %v123
  %v152 = vpack.c.b16 %v126, %v124
  %v153 = vpack.c.b16 %v129, %v127
  %v154 = vpack.c.b16 %v130, %v128
  %v155 = vpack.c.b16 %v133, %v131
  %v156 = vpack.c.b16 %v134, %v132
  %v157 = vpack.c.b16 %v137, %v135
  %v158 = vpack.c.b16 %v138, %v136
  %v159 = vpack.c.b16 %v141, %v139
  %v160 = vpack.c.b16 %v142, %v140
  %v161 = vpack.c.b16 %v145, %v143
  %v162 = vpack.c.b16 %v146, %v144
  %v211 = vunpack.c.l.b16 %v67
  %v212 = vunpack.c.l.b16 %v68
  %v213 = vunpack.c.l.b16 %v69
  %v214 = vunpack.c.l.b16 %v70
  %v215 = vunpack.c.l.b16 %v71
  %v216 = vunpack.c.l.b16 %v72
  %v217 = vunpack.c.l.b16 %v73
  %v218 = vunpack.c.l.b16 %v74
  %v219 = vunpack.c.l.b16 %v75
  %v220 = vunpack.c.l.b16 %v76
  %v221 = vunpack.c.l.b16 %v77
  %v222 = vunpack.c.l.b16 %v78
  %v223 = vunpack.c.l.b16 %v79
  %v224 = vunpack.c.l.b16 %v80
  %v225 = vunpack.c.l.b16 %v81
  %v226 = vunpack.c.l.b16 %v82
  %v227 = vunpack.c.l.b16 %v83
  %v228 = vunpack.c.l.b16 %v84
  %v229 = vunpack.c.l.b16 %v85
  %v230 = vunpack.c.l.b16 %v86
  %v231 = vunpack.c.l.b16 %v87
  %v232 = vunpack.c.l.b16 %v88
  %v233 = vunpack.c.l.b16 %v89
  %v234 = vunpack.c.l.b16 %v90
  %v235 = vunpack.c.l.b16 %v91
  %v236 = vunpack.c.l.b16 %v92
  %v237 = vunpack.c.l.b16 %v93
  %v238 = vunpack.c.l.b16 %v94
  %v239 = vunpack.c.l.b16 %v95
  %v240 = vunpack.c.l.b16 %v96
  %v241 = vunpack.c.l.b16 %v97
  %v242 = vunpack.c.l.b16 %v98
  %v243 = vpack.c.b16 %v212, %v211
  %v244 = vpack.c.b16 %v214, %v213
  %v245 = vpack.c.b16 %v216, %v215
  %v246 = vpack.c.b16 %v218, %v217
  %v247 = vpack.c.b16 %v220, %v219
  %v248 = vpack.c.b16 %v222, %v221
  %v249 = vpack.c.b16 %v224, %v223
  %v250 = vpack.c.b16 %v226, %v225
  %v251 = vpack.c.b16 %v228, %v227
  %v252 = vpack.c.b16 %v230, %v229
  %v253 = vpack.c.b16 %v232, %v231
  %v254 = vpack.c.b16 %v234, %v233
  %v255 = vpack.c.b16 %v236, %v235
  %v256 = vpack.c.b16 %v238, %v237
  %v257 = vpack.c.b16 %v240, %v239
  %v258 = vpack.c.b16 %v242, %v241
  %275 = vmatprep.subr.bf16.mxu0 0
  %276 = vmatpush1.bf16.msra.mxu0 %v250
  %277 = vmatprep.subr.bf16.mxu0 0
  %278 = vmatpush1.bf16.msra.mxu0 %v249
  %279 = vmatprep.subr.bf16.mxu0 0
  %280 = vmatpush1.bf16.msra.mxu0 %v248
  %281 = vmatprep.subr.bf16.mxu0 0
  %282 = vmatpush1.bf16.msra.mxu0 %v247
  %283 = vmatprep.subr.bf16.mxu0 0
  %284 = vmatpush1.bf16.msra.mxu0 %v246
  %285 = vmatprep.subr.bf16.mxu0 0
  %286 = vmatpush1.bf16.msra.mxu0 %v245
  %287 = vmatprep.subr.bf16.mxu0 0
  %288 = vmatpush1.bf16.msra.mxu0 %v244
  %289 = vmatprep.subr.bf16.mxu0 0
  %290 = vmatpush1.bf16.msra.mxu0 %v243
  %291 = vmatprep.subr.bf16.mxu0 0
  %292 = vmatpush2.bf16.msra.mxu0 %v258
  %293 = vmatprep.subr.bf16.mxu0 0
  %294 = vmatpush2.bf16.msra.mxu0 %v257
  %295 = vmatprep.subr.bf16.mxu0 0
  %296 = vmatpush2.bf16.msra.mxu0 %v256
  %297 = vmatprep.subr.bf16.mxu0 0
  %298 = vmatpush2.bf16.msra.mxu0 %v255
  %299 = vmatprep.subr.bf16.mxu0 0
  %300 = vmatpush2.bf16.msra.mxu0 %v254
  %301 = vmatprep.subr.bf16.mxu0 0
  %302 = vmatpush2.bf16.msra.mxu0 %v253
  %303 = vmatprep.subr.bf16.mxu0 0
  %304 = vmatpush2.bf16.msra.mxu0 %v252
  %305 = vmatprep.subr.bf16.mxu0 0
  %306 = vmatpush2.bf16.msra.mxu0 %v251
  %307 = vmatprep.mubr.bf16.mxu0 %v148
  %308 = vmatmul.mubr.bf16.gmra.mxu0 %v147
  %v309 = vpop.f32.mrf.mxu0
  %v310 = vadd.f32 0.0, %v309
  %v311 = vpop.f32.mrf.mxu0
  %v312 = vpop.f32.mrf.mxu0
  %v313 = vadd.f32 0.0, %v312
  %v314 = vpop.f32.mrf.mxu0
  %315 = vmatprep.mubr.bf16.mxu0 %v150
  %316 = vmatmul.mubr.bf16.gmra.mxu0 %v149
  %v317 = vpop.f32.mrf.mxu0
  %v318 = vadd.f32 0.0, %v317
  %v319 = vpop.f32.mrf.mxu0
  %v320 = vpop.f32.mrf.mxu0
  %v321 = vadd.f32 0.0, %v320
  %v322 = vpop.f32.mrf.mxu0
  %323 = vmatprep.mubr.bf16.mxu0 %v152
  %324 = vmatmul.mubr.bf16.gmra.mxu0 %v151
  %v325 = vpop.f32.mrf.mxu0
  %v326 = vadd.f32 0.0, %v325
  %v327 = vpop.f32.mrf.mxu0
  %v328 = vpop.f32.mrf.mxu0
  %v329 = vadd.f32 0.0, %v328
  %v330 = vpop.f32.mrf.mxu0
  %331 = vmatprep.mubr.bf16.mxu0 %v154
  %332 = vmatmul.mubr.bf16.gmra.mxu0 %v153
  %v333 = vpop.f32.mrf.mxu0
  %v334 = vadd.f32 0.0, %v333
  %v335 = vpop.f32.mrf.mxu0
  %v336 = vpop.f32.mrf.mxu0
  %v337 = vadd.f32 0.0, %v336
  %v338 = vpop.f32.mrf.mxu0
  %339 = vmatprep.mubr.bf16.mxu0 %v156
  %340 = vmatmul.mubr.bf16.gmra.mxu0 %v155
  %v341 = vpop.f32.mrf.mxu0
  %v342 = vadd.f32 0.0, %v341
  %v343 = vpop.f32.mrf.mxu0
  %v344 = vpop.f32.mrf.mxu0
  %v345 = vadd.f32 0.0, %v344
  %v346 = vpop.f32.mrf.mxu0
  %347 = vmatprep.mubr.bf16.mxu0 %v158
  %348 = vmatmul.mubr.bf16.gmra.mxu0 %v157
  %v349 = vpop.f32.mrf.mxu0
  %v350 = vadd.f32 0.0, %v349
  %v351 = vpop.f32.mrf.mxu0
  %v352 = vpop.f32.mrf.mxu0
  %v353 = vadd.f32 0.0, %v352
  %v354 = vpop.f32.mrf.mxu0
  %355 = vmatprep.mubr.bf16.mxu0 %v160
  %356 = vmatmul.mubr.bf16.gmra.mxu0 %v159
  %v357 = vpop.f32.mrf.mxu0
  %v358 = vadd.f32 0.0, %v357
  %v359 = vpop.f32.mrf.mxu0
  %v360 = vpop.f32.mrf.mxu0
  %v361 = vadd.f32 0.0, %v360
  %v362 = vpop.f32.mrf.mxu0
  %363 = vmatprep.mubr.bf16.mxu0 %v162
  %364 = vmatmul.mubr.bf16.gmra.mxu0 %v161
  %v365 = vpop.f32.mrf.mxu0
  %v366 = vadd.f32 0.0, %v365
  %v367 = vpop.f32.mrf.mxu0
  %v368 = vpop.f32.mrf.mxu0
  %v369 = vadd.f32 0.0, %v368
  %v370 = vpop.f32.mrf.mxu0
  %371 = vdwg.mxu0
  %v372 = vadd.f32 %v35, %v310
  %v373 = vadd.f32 %v36, %v313
  %v374 = vadd.f32 %v37, %v318
  %v375 = vadd.f32 %v38, %v321
  %v376 = vadd.f32 %v39, %v326
  %v377 = vadd.f32 %v40, %v329
  %v378 = vadd.f32 %v41, %v334
  %v379 = vadd.f32 %v42, %v337
  %v380 = vadd.f32 %v43, %v342
  %v381 = vadd.f32 %v44, %v345
  %v382 = vadd.f32 %v45, %v350
  %v383 = vadd.f32 %v46, %v353
  %v384 = vadd.f32 %v47, %v358
  %v385 = vadd.f32 %v48, %v361
  %v386 = vadd.f32 %v49, %v366
  %v387 = vadd.f32 %v50, %v369
  %388 = vst [vmem:[#allocation2] sm:$0xff] %v372
  %389 = vst [vmem:[#allocation2 + $0x8] sm:$0xff] %v373
  %390 = vst [vmem:[#allocation2 + $0x10] sm:$0xff] %v374
  %391 = vst [vmem:[#allocation2 + $0x18] sm:$0xff] %v375
  %392 = vst [vmem:[#allocation2 + $0x20] sm:$0xff] %v376
  %393 = vst [vmem:[#allocation2 + $0x28] sm:$0xff] %v377
  %394 = vst [vmem:[#allocation2 + $0x30] sm:$0xff] %v378
  %395 = vst [vmem:[#allocation2 + $0x38] sm:$0xff] %v379
  %396 = vst [vmem:[#allocation2 + $0x40] sm:$0xff] %v380
  %397 = vst [vmem:[#allocation2 + $0x48] sm:$0xff] %v381
  %398 = vst [vmem:[#allocation2 + $0x50] sm:$0xff] %v382
  %399 = vst [vmem:[#allocation2 + $0x58] sm:$0xff] %v383
  %400 = vst [vmem:[#allocation2 + $0x60] sm:$0xff] %v384
  %401 = vst [vmem:[#allocation2 + $0x68] sm:$0xff] %v385
  %402 = vst [vmem:[#allocation2 + $0x70] sm:$0xff] %v386
  %403 = vst [vmem:[#allocation2 + $0x78] sm:$0xff] %v387
  // Predicated region
  $region18: #{encoder_2_forward.35} parent=0 // pred_check
    %p404 = pneg %p15
  $region19: #{encoder_2_forward.35} parent=0 // pred_check_branch
    %406 = sbr.rel (%p404) target = $region21
  $region20: #{encoder_2_forward.35} parent=0 // pred_region
    %v407 = vld [vmem:[#allocation2] sm:$0xff]
    %v408 = vld [vmem:[#allocation2 + $0x8] sm:$0xff]
    %v409 = vld [vmem:[#allocation2 + $0x10] sm:$0xff]
    %v410 = vld [vmem:[#allocation2 + $0x18] sm:$0xff]
    %v411 = vld [vmem:[#allocation2 + $0x20] sm:$0xff]
    %v412 = vld [vmem:[#allocation2 + $0x28] sm:$0xff]
    %v413 = vld [vmem:[#allocation2 + $0x30] sm:$0xff]
    %v414 = vld [vmem:[#allocation2 + $0x38] sm:$0xff]
    %v415 = vld [vmem:[#allocation2 + $0x40] sm:$0xff]
    %v416 = vld [vmem:[#allocation2 + $0x48] sm:$0xff]
    %v417 = vld [vmem:[#allocation2 + $0x50] sm:$0xff]
    %v418 = vld [vmem:[#allocation2 + $0x58] sm:$0xff]
    %v419 = vld [vmem:[#allocation2 + $0x60] sm:$0xff]
    %v420 = vld [vmem:[#allocation2 + $0x68] sm:$0xff]
    %v421 = vld [vmem:[#allocation2 + $0x70] sm:$0xff]
    %v422 = vld [vmem:[#allocation2 + $0x78] sm:$0xff]
    %v423 = vld [vmem:[%s2] sm:$0x1]
    %v425 = vlaneseq
    %v426 = vshrl.u32 %v425, 7
    %v427 = vsub.s32 0, %v426
    %v428 = vrot.slane %v423, %v427
    %v430 = vadd.f32 %v407, %v428
    %v431 = vadd.f32 %v408, %v428
    %v432 = vadd.f32 %v409, %v428
    %v433 = vadd.f32 %v410, %v428
    %v434 = vadd.f32 %v411, %v428
    %v435 = vadd.f32 %v412, %v428
    %v436 = vadd.f32 %v413, %v428
    %v437 = vadd.f32 %v414, %v428
    %v438 = vadd.f32 %v415, %v428
    %v439 = vadd.f32 %v416, %v428
    %v440 = vadd.f32 %v417, %v428
    %v441 = vadd.f32 %v418, %v428
    %v442 = vadd.f32 %v419, %v428
    %v443 = vadd.f32 %v420, %v428
    %v444 = vadd.f32 %v421, %v428
    %v445 = vadd.f32 %v422, %v428
    %446 = vst [vmem:[%s3] sm:$0xff] %v430
    %447 = vst [vmem:[%s3 + $0x8] sm:$0xff] %v431
    %448 = vst [vmem:[%s3 + $0x10] sm:$0xff] %v432
    %449 = vst [vmem:[%s3 + $0x18] sm:$0xff] %v433
    %450 = vst [vmem:[%s3 + $0x20] sm:$0xff] %v434
    %451 = vst [vmem:[%s3 + $0x28] sm:$0xff] %v435
    %452 = vst [vmem:[%s3 + $0x30] sm:$0xff] %v436
    %453 = vst [vmem:[%s3 + $0x38] sm:$0xff] %v437
    %454 = vst [vmem:[%s3 + $0x40] sm:$0xff] %v438
    %455 = vst [vmem:[%s3 + $0x48] sm:$0xff] %v439
    %456 = vst [vmem:[%s3 + $0x50] sm:$0xff] %v440
    %457 = vst [vmem:[%s3 + $0x58] sm:$0xff] %v441
    %458 = vst [vmem:[%s3 + $0x60] sm:$0xff] %v442
    %459 = vst [vmem:[%s3 + $0x68] sm:$0xff] %v443
    %460 = vst [vmem:[%s3 + $0x70] sm:$0xff] %v444
    %461 = vst [vmem:[%s3 + $0x78] sm:$0xff] %v445
  $region21: #{encoder_2_forward.35} parent=0 // pred_fallthru
    _
  // Predicated region
  $region22: #{encoder_2_forward.35} parent=0 // pred_check
    _
  $region23: #{encoder_2_forward.35} parent=0 // pred_check_branch
    %463 = sbr.rel (0) target = $region25
  $region24: #{encoder_2_forward.35} parent=0 // pred_region
    _
  $region25: #{encoder_2_forward.35} parent=0 // pred_fallthru
    _
  // Predicated region
  $region26: #{encoder_2_forward.35} parent=0 // pred_check
    _
  $region27: #{encoder_2_forward.35} parent=0 // pred_check_branch
    %465 = sbr.rel (0) target = $region29
  $region28: #{encoder_2_forward.35} parent=0 // pred_region
    _
  $region29: #{encoder_2_forward.35} parent=0 // pred_fallthru
    _

// kernel: encoder_2_forward.36
$region0: #{encoder_2_forward.36}
  #allocation0 [shape = 'u32[]', space=smem, size = 0x4, offset = 0x4, fixed_abs, tag = 'smem constant byte address 0x4 - core index']
  #allocation1 [shape = 'u32[144,128]{1,0:T(1,128)}', space=vmem, size = 0x12000, scoped, tag = 'internal scratch']
  %s0 = inlined_call_operand.vmem [shape: f32[2,64,32], index: 0, kind: input, shape index: {}]
  %s1 = inlined_call_operand.vmem [shape: f32[2,64,32], index: 1, kind: output, shape index: {}]
  %s2 = sld [smem:[#allocation0]]
  $region37: #{encoder_2_forward.36} parent=0
    _
  %s4 = ssub.s32 1, %s2
  %s5 = scalar_select 0, %s4, %s2
  loop: start=0, step=1, limit=4
  $region2: #{encoder_2_forward.36} parent=0 // loop_pre_header
    _
  $region3: #{encoder_2_forward.36} parent=0 // loop_header
    %s7 = sphi 0, %s11
    %p8 = scmp.ge.s32.totalorder %s7, 4
    %s17 = sphi 0, %s19
    %s20 = sphi 0, %s17
    %s21 = sphi 0, %s20
    %s37 = sphi 0, %s21
    %s43 = sphi 0, %s45
    %s46 = sphi 0, %s43
    %s47 = sphi 0, %s46
    %s63 = sphi 0, %s47
  $region4: #{encoder_2_forward.36} parent=0 // loop_header_branch
    %10 = sbr.rel (%p8) target = $region8
  $region5: #{encoder_2_forward.36} parent=0 // loop_body
    %s12 = ssub.s32 %s7, 1
    %s13 = ssub.s32 %s7, 2
    %s14 = sadd.s32 %s7, 1
    %s15 = ssub.s32 %s7, %s14
    %p16 = scmp.eq.s32.totalorder %s15, 0
    %s18 = sadd.s32 %s17, 1
    %s19 = scalar_select %p16, %s17, %s18
    %p22 = pneg %p16
    %p23 = scmp.eq.s32.totalorder %s7, 1
    %p24 = por %p22, %p23
    %p25 = scmp.ne.s32.totalorder %s17, %s20
    %p26 = scmp.eq.s32.totalorder %s7, 0
    %p27 = por %p25, %p26
    %p28 = scmp.ne.s32.totalorder %s17, %s20
    %p29 = scmp.eq.s32.totalorder %s12, 1
    %p30 = por %p28, %p29
    %p31 = scmp.ne.s32.totalorder %s20, %s21
    %p32 = scmp.eq.s32.totalorder %s12, 0
    %p33 = por %p31, %p32
    %p34 = scmp.ne.s32.totalorder %s20, %s21
    %p35 = scmp.eq.s32.totalorder %s13, 1
    %p36 = por %p34, %p35
    %p38 = scmp.ne.s32.totalorder %s21, %s37
    %p39 = scmp.eq.s32.totalorder %s13, 0
    %p40 = por %p38, %p39
    %s41 = ssub.s32 %s7, %s14
    %p42 = scmp.eq.s32.totalorder %s41, 0
    %s44 = sadd.s32 %s43, 1
    %s45 = scalar_select %p42, %s43, %s44
    %p48 = pneg %p42
    %p49 = scmp.eq.s32.totalorder %s7, 1
    %p50 = por %p48, %p49
    %p51 = scmp.ne.s32.totalorder %s43, %s46
    %p52 = scmp.eq.s32.totalorder %s7, 0
    %p53 = por %p51, %p52
    %p54 = scmp.ne.s32.totalorder %s43, %s46
    %p55 = scmp.eq.s32.totalorder %s12, 1
    %p56 = por %p54, %p55
    %p57 = scmp.ne.s32.totalorder %s46, %s47
    %p58 = scmp.eq.s32.totalorder %s12, 0
    %p59 = por %p57, %p58
    %p60 = scmp.ne.s32.totalorder %s46, %s47
    %p61 = scmp.eq.s32.totalorder %s13, 1
    %p62 = por %p60, %p61
    %p64 = scmp.ne.s32.totalorder %s47, %s63
    %p65 = scmp.eq.s32.totalorder %s13, 0
    %p66 = por %p64, %p65
    %p67 = scmp.le.s32.totalorder 1, %s7
    %p68 = scmp.lt.s32.totalorder %s7, 3
    %p69 = pnand %p67, %p68
    %p70 = pneg %p69
    // Predicated region
    $region9: #{encoder_2_forward.36} parent=5 // pred_check
      _
    $region10: #{encoder_2_forward.36} parent=5 // pred_check_branch
      %72 = sbr.rel (%p69) target = $region12
    $region11: #{encoder_2_forward.36} parent=5 // pred_region
      %s73 = ssub.s32 %s7, 1
    $region12: #{encoder_2_forward.36} parent=5 // pred_fallthru
      _
    %p74 = scmp.lt.s32.totalorder %s7, 2
    // Predicated region
    $region13: #{encoder_2_forward.36} parent=5 // pred_check
      %p75 = pneg %p74
    $region14: #{encoder_2_forward.36} parent=5 // pred_check_branch
      %77 = sbr.rel (%p75) target = $region16
    $region15: #{encoder_2_forward.36} parent=5 // pred_region
      // Predicated region
      $region17: #{encoder_2_forward.36} parent=15 // pred_check
        %p78 = pneg %p27
      $region18: #{encoder_2_forward.36} parent=15 // pred_check_branch
        %80 = sbr.rel (%p78) target = $region20
      $region19: #{encoder_2_forward.36} parent=15 // pred_region
        %p81 = scmp.lt.s32.totalorder %s7, 1
        %s82 = scalar_select %p81, %s7, 1
        %s83 = smul.addr %s82, 8
        %s84 = smul.addr %s83, 8
        %s85 = scalar_lea.vmem %s0, %s84
      $region20: #{encoder_2_forward.36} parent=15 // pred_fallthru
        _
    $region16: #{encoder_2_forward.36} parent=5 // pred_fallthru
      _
    %p86 = scmp.le.s32.totalorder 1, %s7
    %p87 = scmp.lt.s32.totalorder %s7, 3
    %p88 = pnand %p86, %p87
    %p89 = pneg %p88
    // Predicated region
    $region21: #{encoder_2_forward.36} parent=5 // pred_check
      _
    $region22: #{encoder_2_forward.36} parent=5 // pred_check_branch
      %91 = sbr.rel (%p88) target = $region24
    $region23: #{encoder_2_forward.36} parent=5 // pred_region
      %s92 = ssub.s32 %s7, 1
      %p93 = scmp.lt.s32.totalorder %s12, 1
      %s94 = scalar_select %p93, %s12, 1
      %s95 = smul.addr %s94, 8
      %s96 = smul.addr %s95, 8
      %s97 = scalar_lea.vmem %s0, %s96
      %p98 = pneg %p33
      %p99 = pneg %p30
      %p100 = pneg %p59
      %p101 = pneg %p56
      %p102 = scmp.lt.s32.totalorder %s12, 1
      %s103 = scalar_select %p102, %s12, 1
      %s104 = smul.addr %s103, 8
      %s105 = smul.addr %s104, 8
      %s106 = scalar_lea.vmem %s1, %s105
      %p107 = scmp.lt.s32.totalorder %s12, 1
      %s108 = scalar_select %p107, %s12, 1
      %s109 = smul.addr %s108, 8
      %s110 = smul.addr %s109, 8
      %s111 = scalar_lea.vmem %s0, %s110
      %p112 = scmp.lt.s32.totalorder %s12, 1
      %s113 = scalar_select %p112, %s12, 1
      %s114 = smul.addr %s113, 8
      %s115 = smul.addr %s114, 8
      %s116 = scalar_lea.vmem %s1, %s115
      %v117 = vld [vmem:[%s111] sm:$0xff]
      %v118 = vld [vmem:[%s111 + $0x8] sm:$0xff]
      %v119 = vld [vmem:[%s111 + $0x10] sm:$0xff]
      %v120 = vld [vmem:[%s111 + $0x18] sm:$0xff]
      %v121 = vld [vmem:[%s111 + $0x20] sm:$0xff]
      %v122 = vld [vmem:[%s111 + $0x28] sm:$0xff]
      %v123 = vld [vmem:[%s111 + $0x30] sm:$0xff]
      %v124 = vld [vmem:[%s111 + $0x38] sm:$0xff]
      %vm125 = vcmask 261120
      %v126 = vsel %vm125, %v117, 0.0
      %v127 = vsel %vm125, %v118, 0.0
      %v128 = vadd.f32 %v126, %v127
      %v129 = vsel %vm125, %v119, 0.0
      %v130 = vadd.f32 %v128, %v129
      %v131 = vsel %vm125, %v120, 0.0
      %v132 = vadd.f32 %v130, %v131
      %v133 = vsel %vm125, %v121, 0.0
      %v134 = vadd.f32 %v132, %v133
      %v135 = vsel %vm125, %v122, 0.0
      %v136 = vadd.f32 %v134, %v135
      %v137 = vsel %vm125, %v123, 0.0
      %v138 = vadd.f32 %v136, %v137
      %v139 = vsel %vm125, %v124, 0.0
      %v140 = vadd.f32 %v138, %v139
      %v141 = vrot.slane %v140, 4
      %v142 = vadd.f32 %v140, %v141
      %v143 = vrot.slane %v142, 2
      %v144 = vadd.f32 %v142, %v143
      %v145 = vrot.slane %v144, 1
      %v146 = vadd.f32 %v144, %v145
      %v147 = vmul.f32 %v117, %v117
      %v148 = vmul.f32 %v118, %v118
      %v149 = vmul.f32 %v119, %v119
      %v150 = vmul.f32 %v120, %v120
      %v151 = vmul.f32 %v121, %v121
      %v152 = vmul.f32 %v122, %v122
      %v153 = vmul.f32 %v123, %v123
      %v154 = vmul.f32 %v124, %v124
      %v155 = vsel %vm125, %v147, 0.0
      %v156 = vsel %vm125, %v148, 0.0
      %v157 = vadd.f32 %v155, %v156
      %v158 = vsel %vm125, %v149, 0.0
      %v159 = vadd.f32 %v157, %v158
      %v160 = vsel %vm125, %v150, 0.0
      %v161 = vadd.f32 %v159, %v160
      %v162 = vsel %vm125, %v151, 0.0
      %v163 = vadd.f32 %v161, %v162
      %v164 = vsel %vm125, %v152, 0.0
      %v165 = vadd.f32 %v163, %v164
      %v166 = vsel %vm125, %v153, 0.0
      %v167 = vadd.f32 %v165, %v166
      %v168 = vsel %vm125, %v154, 0.0
      %v169 = vadd.f32 %v167, %v168
      %v170 = vrot.slane %v169, 4
      %v171 = vadd.f32 %v169, %v170
      %v172 = vrot.slane %v171, 2
      %v173 = vadd.f32 %v171, %v172
      %v174 = vrot.slane %v173, 1
      %v175 = vadd.f32 %v173, %v174
      %v176 = vrcp.pop 64.0
      %v177 = vmul.f32 %v146, %v176
      %v178 = vmul.f32 %v175, %v176
      %v179 = vmul.f32 %v177, %v177
      %v180 = vsub.f32 %v178, %v179
      %v181 = vmax.f32 %v180, 0.0
      %v182 = vadd.f32 %v181, 1e-05
      %v183 = vrsqrt.pop %v182
      %v184 = vsub.f32 %v117, %v177
      %v185 = vsub.f32 %v118, %v177
      %v186 = vsub.f32 %v119, %v177
      %v187 = vsub.f32 %v120, %v177
      %v188 = vsub.f32 %v121, %v177
      %v189 = vsub.f32 %v122, %v177
      %v190 = vsub.f32 %v123, %v177
      %v191 = vsub.f32 %v124, %v177
      %v192 = vmul.f32 %v184, %v183
      %v193 = vmul.f32 %v185, %v183
      %v194 = vmul.f32 %v186, %v183
      %v195 = vmul.f32 %v187, %v183
      %v196 = vmul.f32 %v188, %v183
      %v197 = vmul.f32 %v189, %v183
      %v198 = vmul.f32 %v190, %v183
      %v199 = vmul.f32 %v191, %v183
      %vm200 = vcmp.ge.f32.partialorder %v192, 0.0
      %vm201 = vcmp.ge.f32.partialorder %v193, 0.0
      %vm202 = vcmp.ge.f32.partialorder %v194, 0.0
      %vm203 = vcmp.ge.f32.partialorder %v195, 0.0
      %vm204 = vcmp.ge.f32.partialorder %v196, 0.0
      %vm205 = vcmp.ge.f32.partialorder %v197, 0.0
      %vm206 = vcmp.ge.f32.partialorder %v198, 0.0
      %vm207 = vcmp.ge.f32.partialorder %v199, 0.0
      %v208 = vmul.f32 %v192, 0.1
      %v209 = vmul.f32 %v193, 0.1
      %v210 = vmul.f32 %v194, 0.1
      %v211 = vmul.f32 %v195, 0.1
      %v212 = vmul.f32 %v196, 0.1
      %v213 = vmul.f32 %v197, 0.1
      %v214 = vmul.f32 %v198, 0.1
      %v215 = vmul.f32 %v199, 0.1
      %v216 = vsel %vm200, %v192, %v208
      %v217 = vsel %vm201, %v193, %v209
      %v218 = vsel %vm202, %v194, %v210
      %v219 = vsel %vm203, %v195, %v211
      %v220 = vsel %vm204, %v196, %v212
      %v221 = vsel %vm205, %v197, %v213
      %v222 = vsel %vm206, %v198, %v214
      %v223 = vsel %vm207, %v199, %v215
      %224 = vst.msk [vmem:[%s116] sm:$0xff] %vm125, %v216
      %225 = vst.msk [vmem:[%s116 + $0x8] sm:$0xff] %vm125, %v217
      %226 = vst.msk [vmem:[%s116 + $0x10] sm:$0xff] %vm125, %v218
      %227 = vst.msk [vmem:[%s116 + $0x18] sm:$0xff] %vm125, %v219
      %228 = vst.msk [vmem:[%s116 + $0x20] sm:$0xff] %vm125, %v220
      %229 = vst.msk [vmem:[%s116 + $0x28] sm:$0xff] %vm125, %v221
      %230 = vst.msk [vmem:[%s116 + $0x30] sm:$0xff] %vm125, %v222
      %231 = vst.msk [vmem:[%s116 + $0x38] sm:$0xff] %vm125, %v223
      %p232 = scmp.lt.s32.totalorder %s12, 1
      %s233 = scalar_select %p232, %s12, 1
      %s234 = smul.addr %s233, 8
      %s235 = smul.addr %s234, 8
      %s236 = scalar_lea.vmem %s1, %s235
      // Predicated region
      $region25: #{encoder_2_forward.36} parent=23 // pred_check
        %p237 = pneg %p56
      $region26: #{encoder_2_forward.36} parent=23 // pred_check_branch
        %239 = sbr.rel (%p237) target = $region28
      $region27: #{encoder_2_forward.36} parent=23 // pred_region
        _
      $region28: #{encoder_2_forward.36} parent=23 // pred_fallthru
        _
    $region24: #{encoder_2_forward.36} parent=5 // pred_fallthru
      _
    %p240 = scmp.le.s32.totalorder 2, %s7
    // Predicated region
    $region29: #{encoder_2_forward.36} parent=5 // pred_check
      %p241 = pneg %p240
    $region30: #{encoder_2_forward.36} parent=5 // pred_check_branch
      %243 = sbr.rel (%p241) target = $region32
    $region31: #{encoder_2_forward.36} parent=5 // pred_region
      %s244 = ssub.s32 %s7, 2
      // Predicated region
      $region33: #{encoder_2_forward.36} parent=31 // pred_check
        %p245 = pneg %p62
      $region34: #{encoder_2_forward.36} parent=31 // pred_check_branch
        %247 = sbr.rel (%p245) target = $region36
      $region35: #{encoder_2_forward.36} parent=31 // pred_region
        %p248 = scmp.lt.s32.totalorder %s13, 1
        %s249 = scalar_select %p248, %s13, 1
        %s250 = smul.addr %s249, 8
        %s251 = smul.addr %s250, 8
        %s252 = scalar_lea.vmem %s1, %s251
      $region36: #{encoder_2_forward.36} parent=31 // pred_fallthru
        _
    $region32: #{encoder_2_forward.36} parent=5 // pred_fallthru
      _
  $region6: #{encoder_2_forward.36} parent=0 // loop_footer
    %s11 = sadd.s32 1, %s7
  $region7: #{encoder_2_forward.36} parent=0 // loop_footer_branch
    %6 = sbr.rel target = $region3
  $region8: #{encoder_2_forward.36} parent=0 // loop_exit
    _

// kernel: encoder_2_forward.37
$region0: #{encoder_2_forward.37}
  #allocation0 [shape = 'u32[]', space=smem, size = 0x4, offset = 0x4, fixed_abs, tag = 'smem constant byte address 0x4 - core index']
  #allocation1 [shape = 'u32[144,128]{1,0:T(1,128)}', space=vmem, size = 0x12000, scoped, tag = 'internal scratch']
  #allocation2 [shape = 'f32[128,128]{1,0:T(8,128)}', space=vmem, size = 0x10000, scoped, tag = 'scratch operand']
  %s0 = inlined_call_operand.vmem [shape: bf16[128,384], index: 0, kind: input, shape index: {}]
  %s1 = inlined_call_operand.vmem [shape: bf16[384,128], index: 1, kind: input, shape index: {}]
  %s2 = inlined_call_operand.vmem [shape: f32[1,128], index: 2, kind: input, shape index: {}]
  %s3 = inlined_call_operand.vmem [shape: f32[128,128], index: 3, kind: output, shape index: {}]
  %s4 = sld [smem:[#allocation0]]
  $region30: #{encoder_2_forward.37} parent=0
    _
  %s6 = ssub.s32 1, %s4
  %s7 = scalar_select 0, %s6, %s4
  // Predicated region
  $region2: #{encoder_2_forward.37} parent=0 // pred_check
    _
  $region3: #{encoder_2_forward.37} parent=0 // pred_check_branch
    %9 = sbr.rel (0) target = $region5
  $region4: #{encoder_2_forward.37} parent=0 // pred_region
    _
  $region5: #{encoder_2_forward.37} parent=0 // pred_fallthru
    _
  // Predicated region
  $region6: #{encoder_2_forward.37} parent=0 // pred_check
    _
  $region7: #{encoder_2_forward.37} parent=0 // pred_check_branch
    %11 = sbr.rel (0) target = $region9
  $region8: #{encoder_2_forward.37} parent=0 // pred_region
    _
  $region9: #{encoder_2_forward.37} parent=0 // pred_fallthru
    _
  // Predicated region
  $region10: #{encoder_2_forward.37} parent=0 // pred_check
    _
  $region11: #{encoder_2_forward.37} parent=0 // pred_check_branch
    %13 = sbr.rel (0) target = $region13
  $region12: #{encoder_2_forward.37} parent=0 // pred_region
    _
  $region13: #{encoder_2_forward.37} parent=0 // pred_fallthru
    _
  %p15 = scmp.eq.s32.totalorder 0, 0
  // Predicated region
  $region14: #{encoder_2_forward.37} parent=0 // pred_check
    %p16 = pneg %p15
  $region15: #{encoder_2_forward.37} parent=0 // pred_check_branch
    %18 = sbr.rel (%p16) target = $region17
  $region16: #{encoder_2_forward.37} parent=0 // pred_region
    %19 = vst [vmem:[#allocation2] sm:$0xff] 0.0
    %20 = vst [vmem:[#allocation2 + $0x8] sm:$0xff] 0.0
    %21 = vst [vmem:[#allocation2 + $0x10] sm:$0xff] 0.0
    %22 = vst [vmem:[#allocation2 + $0x18] sm:$0xff] 0.0
    %23 = vst [vmem:[#allocation2 + $0x20] sm:$0xff] 0.0
    %24 = vst [vmem:[#allocation2 + $0x28] sm:$0xff] 0.0
    %25 = vst [vmem:[#allocation2 + $0x30] sm:$0xff] 0.0
    %26 = vst [vmem:[#allocation2 + $0x38] sm:$0xff] 0.0
    %27 = vst [vmem:[#allocation2 + $0x40] sm:$0xff] 0.0
    %28 = vst [vmem:[#allocation2 + $0x48] sm:$0xff] 0.0
    %29 = vst [vmem:[#allocation2 + $0x50] sm:$0xff] 0.0
    %30 = vst [vmem:[#allocation2 + $0x58] sm:$0xff] 0.0
    %31 = vst [vmem:[#allocation2 + $0x60] sm:$0xff] 0.0
    %32 = vst [vmem:[#allocation2 + $0x68] sm:$0xff] 0.0
    %33 = vst [vmem:[#allocation2 + $0x70] sm:$0xff] 0.0
    %34 = vst [vmem:[#allocation2 + $0x78] sm:$0xff] 0.0
  $region17: #{encoder_2_forward.37} parent=0 // pred_fallthru
    _
  %v35 = vld [vmem:[#allocation2] sm:$0xff]
  %v36 = vld [vmem:[#allocation2 + $0x8] sm:$0xff]
  %v37 = vld [vmem:[#allocation2 + $0x10] sm:$0xff]
  %v38 = vld [vmem:[#allocation2 + $0x18] sm:$0xff]
  %v39 = vld [vmem:[#allocation2 + $0x20] sm:$0xff]
  %v40 = vld [vmem:[#allocation2 + $0x28] sm:$0xff]
  %v41 = vld [vmem:[#allocation2 + $0x30] sm:$0xff]
  %v42 = vld [vmem:[#allocation2 + $0x38] sm:$0xff]
  %v43 = vld [vmem:[#allocation2 + $0x40] sm:$0xff]
  %v44 = vld [vmem:[#allocation2 + $0x48] sm:$0xff]
  %v45 = vld [vmem:[#allocation2 + $0x50] sm:$0xff]
  %v46 = vld [vmem:[#allocation2 + $0x58] sm:$0xff]
  %v47 = vld [vmem:[#allocation2 + $0x60] sm:$0xff]
  %v48 = vld [vmem:[#allocation2 + $0x68] sm:$0xff]
  %v49 = vld [vmem:[#allocation2 + $0x70] sm:$0xff]
  %v50 = vld [vmem:[#allocation2 + $0x78] sm:$0xff]
  %v51 = vld [vmem:[%s0] sm:$0xff]
  %v52 = vld [vmem:[%s0 + $0x8] sm:$0xf]
  %v53 = vld [vmem:[%s0 + $0xc] sm:$0xff]
  %v54 = vld [vmem:[%s0 + $0x14] sm:$0xf]
  %v55 = vld [vmem:[%s0 + $0x18] sm:$0xff]
  %v56 = vld [vmem:[%s0 + $0x20] sm:$0xf]
  %v57 = vld [vmem:[%s0 + $0x24] sm:$0xff]
  %v58 = vld [vmem:[%s0 + $0x2c] sm:$0xf]
  %v59 = vld [vmem:[%s0 + $0x30] sm:$0xff]
  %v60 = vld [vmem:[%s0 + $0x38] sm:$0xf]
  %v61 = vld [vmem:[%s0 + $0x3c] sm:$0xff]
  %v62 = vld [vmem:[%s0 + $0x44] sm:$0xf]
  %v63 = vld [vmem:[%s0 + $0x48] sm:$0xff]
  %v64 = vld [vmem:[%s0 + $0x50] sm:$0xf]
  %v65 = vld [vmem:[%s0 + $0x54] sm:$0xff]
  %v66 = vld [vmem:[%s0 + $0x5c] sm:$0xf]
  %v67 = vld [vmem:[%s0 + $0x60] sm:$0xff]
  %v68 = vld [vmem:[%s0 + $0x68] sm:$0xf]
  %v69 = vld [vmem:[%s0 + $0x6c] sm:$0xff]
  %v70 = vld [vmem:[%s0 + $0x74] sm:$0xf]
  %v71 = vld [vmem:[%s0 + $0x78] sm:$0xff]
  %v72 = vld [vmem:[%s0 + $0x80] sm:$0xf]
  %v73 = vld [vmem:[%s0 + $0x84] sm:$0xff]
  %v74 = vld [vmem:[%s0 + $0x8c] sm:$0xf]
  %v75 = vld [vmem:[%s0 + $0x90] sm:$0xff]
  %v76 = vld [vmem:[%s0 + $0x98] sm:$0xf]
  %v77 = vld [vmem:[%s0 + $0x9c] sm:$0xff]
  %v78 = vld [vmem:[%s0 + $0xa4] sm:$0xf]
  %v79 = vld [vmem:[%s0 + $0xa8] sm:$0xff]
  %v80 = vld [vmem:[%s0 + $0xb0] sm:$0xf]
  %v81 = vld [vmem:[%s0 + $0xb4] sm:$0xff]
  %v82 = vld [vmem:[%s0 + $0xbc] sm:$0xf]
  %v83 = vld [vmem:[%s1] sm:$0xf]
  %v84 = vld [vmem:[%s1 + $0x4] sm:$0xf]
  %v85 = vld [vmem:[%s1 + $0x8] sm:$0xf]
  %v86 = vld [vmem:[%s1 + $0xc] sm:$0xf]
  %v87 = vld [vmem:[%s1 + $0x10] sm:$0xf]
  %v88 = vld [vmem:[%s1 + $0x14] sm:$0xf]
  %v89 = vld [vmem:[%s1 + $0x18] sm:$0xf]
  %v90 = vld [vmem:[%s1 + $0x1c] sm:$0xf]
  %v91 = vld [vmem:[%s1 + $0x20] sm:$0xf]
  %v92 = vld [vmem:[%s1 + $0x24] sm:$0xf]
  %v93 = vld [vmem:[%s1 + $0x28] sm:$0xf]
  %v94 = vld [vmem:[%s1 + $0x2c] sm:$0xf]
  %v95 = vld [vmem:[%s1 + $0x30] sm:$0xf]
  %v96 = vld [vmem:[%s1 + $0x34] sm:$0xf]
  %v97 = vld [vmem:[%s1 + $0x38] sm:$0xf]
  %v98 = vld [vmem:[%s1 + $0x3c] sm:$0xf]
  %v99 = vld [vmem:[%s1 + $0x40] sm:$0xf]
  %v100 = vld [vmem:[%s1 + $0x44] sm:$0xf]
  %v101 = vld [vmem:[%s1 + $0x48] sm:$0xf]
  %v102 = vld [vmem:[%s1 + $0x4c] sm:$0xf]
  %v103 = vld [vmem:[%s1 + $0x50] sm:$0xf]
  %v104 = vld [vmem:[%s1 + $0x54] sm:$0xf]
  %v105 = vld [vmem:[%s1 + $0x58] sm:$0xf]
  %v106 = vld [vmem:[%s1 + $0x5c] sm:$0xf]
  %v107 = vld [vmem:[%s1 + $0x60] sm:$0xf]
  %v108 = vld [vmem:[%s1 + $0x64] sm:$0xf]
  %v109 = vld [vmem:[%s1 + $0x68] sm:$0xf]
  %v110 = vld [vmem:[%s1 + $0x6c] sm:$0xf]
  %v111 = vld [vmem:[%s1 + $0x70] sm:$0xf]
  %v112 = vld [vmem:[%s1 + $0x74] sm:$0xf]
  %v113 = vld [vmem:[%s1 + $0x78] sm:$0xf]
  %v114 = vld [vmem:[%s1 + $0x7c] sm:$0xf]
  %v115 = vld [vmem:[%s1 + $0x80] sm:$0xf]
  %v116 = vld [vmem:[%s1 + $0x84] sm:$0xf]
  %v117 = vld [vmem:[%s1 + $0x88] sm:$0xf]
  %v118 = vld [vmem:[%s1 + $0x8c] sm:$0xf]
  %v119 = vld [vmem:[%s1 + $0x90] sm:$0xf]
  %v120 = vld [vmem:[%s1 + $0x94] sm:$0xf]
  %v121 = vld [vmem:[%s1 + $0x98] sm:$0xf]
  %v122 = vld [vmem:[%s1 + $0x9c] sm:$0xf]
  %v123 = vld [vmem:[%s1 + $0xa0] sm:$0xf]
  %v124 = vld [vmem:[%s1 + $0xa4] sm:$0xf]
  %v125 = vld [vmem:[%s1 + $0xa8] sm:$0xf]
  %v126 = vld [vmem:[%s1 + $0xac] sm:$0xf]
  %v127 = vld [vmem:[%s1 + $0xb0] sm:$0xf]
  %v128 = vld [vmem:[%s1 + $0xb4] sm:$0xf]
  %v129 = vld [vmem:[%s1 + $0xb8] sm:$0xf]
  %v130 = vld [vmem:[%s1 + $0xbc] sm:$0xf]
  %v163 = vunpack.c.l.b16 %v51
  %v164 = vunpack.c.h.b16 %v51
  %v165 = vunpack.c.l.b16 %v52
  %v166 = vunpack.c.l.b16 %v53
  %v167 = vunpack.c.h.b16 %v53
  %v168 = vunpack.c.l.b16 %v54
  %v169 = vunpack.c.l.b16 %v55
  %v170 = vunpack.c.h.b16 %v55
  %v171 = vunpack.c.l.b16 %v56
  %v172 = vunpack.c.l.b16 %v57
  %v173 = vunpack.c.h.b16 %v57
  %v174 = vunpack.c.l.b16 %v58
  %v175 = vunpack.c.l.b16 %v59
  %v176 = vunpack.c.h.b16 %v59
  %v177 = vunpack.c.l.b16 %v60
  %v178 = vunpack.c.l.b16 %v61
  %v179 = vunpack.c.h.b16 %v61
  %v180 = vunpack.c.l.b16 %v62
  %v181 = vunpack.c.l.b16 %v63
  %v182 = vunpack.c.h.b16 %v63
  %v183 = vunpack.c.l.b16 %v64
  %v184 = vunpack.c.l.b16 %v65
  %v185 = vunpack.c.h.b16 %v65
  %v186 = vunpack.c.l.b16 %v66
  %v187 = vunpack.c.l.b16 %v67
  %v188 = vunpack.c.h.b16 %v67
  %v189 = vunpack.c.l.b16 %v68
  %v190 = vunpack.c.l.b16 %v69
  %v191 = vunpack.c.h.b16 %v69
  %v192 = vunpack.c.l.b16 %v70
  %v193 = vunpack.c.l.b16 %v71
  %v194 = vunpack.c.h.b16 %v71
  %v195 = vunpack.c.l.b16 %v72
  %v196 = vunpack.c.l.b16 %v73
  %v197 = vunpack.c.h.b16 %v73
  %v198 = vunpack.c.l.b16 %v74
  %v199 = vunpack.c.l.b16 %v75
  %v200 = vunpack.c.h.b16 %v75
  %v201 = vunpack.c.l.b16 %v76
  %v202 = vunpack.c.l.b16 %v77
  %v203 = vunpack.c.h.b16 %v77
  %v204 = vunpack.c.l.b16 %v78
  %v205 = vunpack.c.l.b16 %v79
  %v206 = vunpack.c.h.b16 %v79
  %v207 = vunpack.c.l.b16 %v80
  %v208 = vunpack.c.l.b16 %v81
  %v209 = vunpack.c.h.b16 %v81
  %v210 = vunpack.c.l.b16 %v82
  %v211 = vpack.c.b16 %v166, %v163
  %v212 = vpack.c.b16 %v167, %v164
  %v213 = vpack.c.b16 %v168, %v165
  %v214 = vpack.c.b16 %v172, %v169
  %v215 = vpack.c.b16 %v173, %v170
  %v216 = vpack.c.b16 %v174, %v171
  %v217 = vpack.c.b16 %v178, %v175
  %v218 = vpack.c.b16 %v179, %v176
  %v219 = vpack.c.b16 %v180, %v177
  %v220 = vpack.c.b16 %v184, %v181
  %v221 = vpack.c.b16 %v185, %v182
  %v222 = vpack.c.b16 %v186, %v183
  %v223 = vpack.c.b16 %v190, %v187
  %v224 = vpack.c.b16 %v191, %v188
  %v225 = vpack.c.b16 %v192, %v189
  %v226 = vpack.c.b16 %v196, %v193
  %v227 = vpack.c.b16 %v197, %v194
  %v228 = vpack.c.b16 %v198, %v195
  %v229 = vpack.c.b16 %v202, %v199
  %v230 = vpack.c.b16 %v203, %v200
  %v231 = vpack.c.b16 %v204, %v201
  %v232 = vpack.c.b16 %v208, %v205
  %v233 = vpack.c.b16 %v209, %v206
  %v234 = vpack.c.b16 %v210, %v207
  %v307 = vunpack.c.l.b16 %v83
  %v308 = vunpack.c.l.b16 %v84
  %v309 = vunpack.c.l.b16 %v85
  %v310 = vunpack.c.l.b16 %v86
  %v311 = vunpack.c.l.b16 %v87
  %v312 = vunpack.c.l.b16 %v88
  %v313 = vunpack.c.l.b16 %v89
  %v314 = vunpack.c.l.b16 %v90
  %v315 = vunpack.c.l.b16 %v91
  %v316 = vunpack.c.l.b16 %v92
  %v317 = vunpack.c.l.b16 %v93
  %v318 = vunpack.c.l.b16 %v94
  %v319 = vunpack.c.l.b16 %v95
  %v320 = vunpack.c.l.b16 %v96
  %v321 = vunpack.c.l.b16 %v97
  %v322 = vunpack.c.l.b16 %v98
  %v323 = vunpack.c.l.b16 %v99
  %v324 = vunpack.c.l.b16 %v100
  %v325 = vunpack.c.l.b16 %v101
  %v326 = vunpack.c.l.b16 %v102
  %v327 = vunpack.c.l.b16 %v103
  %v328 = vunpack.c.l.b16 %v104
  %v329 = vunpack.c.l.b16 %v105
  %v330 = vunpack.c.l.b16 %v106
  %v331 = vunpack.c.l.b16 %v107
  %v332 = vunpack.c.l.b16 %v108
  %v333 = vunpack.c.l.b16 %v109
  %v334 = vunpack.c.l.b16 %v110
  %v335 = vunpack.c.l.b16 %v111
  %v336 = vunpack.c.l.b16 %v112
  %v337 = vunpack.c.l.b16 %v113
  %v338 = vunpack.c.l.b16 %v114
  %v339 = vunpack.c.l.b16 %v115
  %v340 = vunpack.c.l.b16 %v116
  %v341 = vunpack.c.l.b16 %v117
  %v342 = vunpack.c.l.b16 %v118
  %v343 = vunpack.c.l.b16 %v119
  %v344 = vunpack.c.l.b16 %v120
  %v345 = vunpack.c.l.b16 %v121
  %v346 = vunpack.c.l.b16 %v122
  %v347 = vunpack.c.l.b16 %v123
  %v348 = vunpack.c.l.b16 %v124
  %v349 = vunpack.c.l.b16 %v125
  %v350 = vunpack.c.l.b16 %v126
  %v351 = vunpack.c.l.b16 %v127
  %v352 = vunpack.c.l.b16 %v128
  %v353 = vunpack.c.l.b16 %v129
  %v354 = vunpack.c.l.b16 %v130
  %v355 = vpack.c.b16 %v308, %v307
  %v356 = vpack.c.b16 %v310, %v309
  %v357 = vpack.c.b16 %v312, %v311
  %v358 = vpack.c.b16 %v314, %v313
  %v359 = vpack.c.b16 %v316, %v315
  %v360 = vpack.c.b16 %v318, %v317
  %v361 = vpack.c.b16 %v320, %v319
  %v362 = vpack.c.b16 %v322, %v321
  %v363 = vpack.c.b16 %v324, %v323
  %v364 = vpack.c.b16 %v326, %v325
  %v365 = vpack.c.b16 %v328, %v327
  %v366 = vpack.c.b16 %v330, %v329
  %v367 = vpack.c.b16 %v332, %v331
  %v368 = vpack.c.b16 %v334, %v333
  %v369 = vpack.c.b16 %v336, %v335
  %v370 = vpack.c.b16 %v338, %v337
  %v371 = vpack.c.b16 %v340, %v339
  %v372 = vpack.c.b16 %v342, %v341
  %v373 = vpack.c.b16 %v344, %v343
  %v374 = vpack.c.b16 %v346, %v345
  %v375 = vpack.c.b16 %v348, %v347
  %v376 = vpack.c.b16 %v350, %v349
  %v377 = vpack.c.b16 %v352, %v351
  %v378 = vpack.c.b16 %v354, %v353
  %403 = vmatprep.subr.bf16.mxu0 0
  %404 = vmatpush1.bf16.msra.mxu0 %v362
  %405 = vmatprep.subr.bf16.mxu0 0
  %406 = vmatpush1.bf16.msra.mxu0 %v361
  %407 = vmatprep.subr.bf16.mxu0 0
  %408 = vmatpush1.bf16.msra.mxu0 %v360
  %409 = vmatprep.subr.bf16.mxu0 0
  %410 = vmatpush1.bf16.msra.mxu0 %v359
  %411 = vmatprep.subr.bf16.mxu0 0
  %412 = vmatpush1.bf16.msra.mxu0 %v358
  %413 = vmatprep.subr.bf16.mxu0 0
  %414 = vmatpush1.bf16.msra.mxu0 %v357
  %415 = vmatprep.subr.bf16.mxu0 0
  %416 = vmatpush1.bf16.msra.mxu0 %v356
  %417 = vmatprep.subr.bf16.mxu0 0
  %418 = vmatpush1.bf16.msra.mxu0 %v355
  %419 = vmatprep.subr.bf16.mxu0 0
  %420 = vmatpush2.bf16.msra.mxu0 %v370
  %421 = vmatprep.subr.bf16.mxu0 0
  %422 = vmatpush2.bf16.msra.mxu0 %v369
  %423 = vmatprep.subr.bf16.mxu0 0
  %424 = vmatpush2.bf16.msra.mxu0 %v368
  %425 = vmatprep.subr.bf16.mxu0 0
  %426 = vmatpush2.bf16.msra.mxu0 %v367
  %427 = vmatprep.subr.bf16.mxu0 0
  %428 = vmatpush2.bf16.msra.mxu0 %v366
  %429 = vmatprep.subr.bf16.mxu0 0
  %430 = vmatpush2.bf16.msra.mxu0 %v365
  %431 = vmatprep.subr.bf16.mxu0 0
  %432 = vmatpush2.bf16.msra.mxu0 %v364
  %433 = vmatprep.subr.bf16.mxu0 0
  %434 = vmatpush2.bf16.msra.mxu0 %v363
  %435 = vmatprep.mubr.bf16.mxu0 %v212
  %436 = vmatmul.mubr.bf16.gmra.mxu0 %v211
  %v437 = vpop.f32.mrf.mxu0
  %v438 = vadd.f32 0.0, %v437
  %v439 = vpop.f32.mrf.mxu0
  %v440 = vpop.f32.mrf.mxu0
  %v441 = vadd.f32 0.0, %v440
  %v442 = vpop.f32.mrf.mxu0
  %443 = vmatprep.mubr.bf16.mxu0 %v215
  %444 = vmatmul.mubr.bf16.gmra.mxu0 %v214
  %v445 = vpop.f32.mrf.mxu0
  %v446 = vadd.f32 0.0, %v445
  %v447 = vpop.f32.mrf.mxu0
  %v448 = vpop.f32.mrf.mxu0
  %v449 = vadd.f32 0.0, %v448
  %v450 = vpop.f32.mrf.mxu0
  %451 = vmatprep.mubr.bf16.mxu0 %v218
  %452 = vmatmul.mubr.bf16.gmra.mxu0 %v217
  %v453 = vpop.f32.mrf.mxu0
  %v454 = vadd.f32 0.0, %v453
  %v455 = vpop.f32.mrf.mxu0
  %v456 = vpop.f32.mrf.mxu0
  %v457 = vadd.f32 0.0, %v456
  %v458 = vpop.f32.mrf.mxu0
  %459 = vmatprep.mubr.bf16.mxu0 %v221
  %460 = vmatmul.mubr.bf16.gmra.mxu0 %v220
  %v461 = vpop.f32.mrf.mxu0
  %v462 = vadd.f32 0.0, %v461
  %v463 = vpop.f32.mrf.mxu0
  %v464 = vpop.f32.mrf.mxu0
  %v465 = vadd.f32 0.0, %v464
  %v466 = vpop.f32.mrf.mxu0
  %467 = vmatprep.mubr.bf16.mxu0 %v224
  %468 = vmatmul.mubr.bf16.gmra.mxu0 %v223
  %v469 = vpop.f32.mrf.mxu0
  %v470 = vadd.f32 0.0, %v469
  %v471 = vpop.f32.mrf.mxu0
  %v472 = vpop.f32.mrf.mxu0
  %v473 = vadd.f32 0.0, %v472
  %v474 = vpop.f32.mrf.mxu0
  %475 = vmatprep.mubr.bf16.mxu0 %v227
  %476 = vmatmul.mubr.bf16.gmra.mxu0 %v226
  %v477 = vpop.f32.mrf.mxu0
  %v478 = vadd.f32 0.0, %v477
  %v479 = vpop.f32.mrf.mxu0
  %v480 = vpop.f32.mrf.mxu0
  %v481 = vadd.f32 0.0, %v480
  %v482 = vpop.f32.mrf.mxu0
  %483 = vmatprep.mubr.bf16.mxu0 %v230
  %484 = vmatmul.mubr.bf16.gmra.mxu0 %v229
  %v485 = vpop.f32.mrf.mxu0
  %v486 = vadd.f32 0.0, %v485
  %v487 = vpop.f32.mrf.mxu0
  %v488 = vpop.f32.mrf.mxu0
  %v489 = vadd.f32 0.0, %v488
  %v490 = vpop.f32.mrf.mxu0
  %491 = vmatprep.mubr.bf16.mxu0 %v233
  %492 = vmatmul.mubr.bf16.gmra.mxu0 %v232
  %v493 = vpop.f32.mrf.mxu0
  %v494 = vadd.f32 0.0, %v493
  %v495 = vpop.f32.mrf.mxu0
  %v496 = vpop.f32.mrf.mxu0
  %v497 = vadd.f32 0.0, %v496
  %v498 = vpop.f32.mrf.mxu0
  %499 = vdwg.mxu0
  %500 = vmatprep.subr.bf16.mxu0 0
  %501 = vmatpush1.bf16.msra.mxu0 %v378
  %502 = vmatprep.subr.bf16.mxu0 0
  %503 = vmatpush1.bf16.msra.mxu0 %v377
  %504 = vmatprep.subr.bf16.mxu0 0
  %505 = vmatpush1.bf16.msra.mxu0 %v376
  %506 = vmatprep.subr.bf16.mxu0 0
  %507 = vmatpush1.bf16.msra.mxu0 %v375
  %508 = vmatprep.subr.bf16.mxu0 0
  %509 = vmatpush1.bf16.msra.mxu0 %v374
  %510 = vmatprep.subr.bf16.mxu0 0
  %511 = vmatpush1.bf16.msra.mxu0 %v373
  %512 = vmatprep.subr.bf16.mxu0 0
  %513 = vmatpush1.bf16.msra.mxu0 %v372
  %514 = vmatprep.subr.bf16.mxu0 0
  %515 = vmatpush1.bf16.msra.mxu0 %v371
  %516 = vmatprep.subr.bf16.mxu0 0
  %517 = vmatpush2.bf16.msra.mxu0 0
  %518 = vmatprep.subr.bf16.mxu0 0
  %519 = vmatpush2.bf16.msra.mxu0 0
  %520 = vmatprep.subr.bf16.mxu0 0
  %521 = vmatpush2.bf16.msra.mxu0 0
  %522 = vmatprep.subr.bf16.mxu0 0
  %523 = vmatpush2.bf16.msra.mxu0 0
  %524 = vmatprep.subr.bf16.mxu0 0
  %525 = vmatpush2.bf16.msra.mxu0 0
  %526 = vmatprep.subr.bf16.mxu0 0
  %527 = vmatpush2.bf16.msra.mxu0 0
  %528 = vmatprep.subr.bf16.mxu0 0
  %529 = vmatpush2.bf16.msra.mxu0 0
  %530 = vmatprep.subr.bf16.mxu0 0
  %531 = vmatpush2.bf16.msra.mxu0 0
  %532 = vmatprep.mubr.bf16.mxu0 0
  %533 = vmatmul.mubr.bf16.gmra.mxu0 %v213
  %v534 = vpop.f32.mrf.mxu0
  %v535 = vadd.f32 %v438, %v534
  %v536 = vpop.f32.mrf.mxu0
  %v537 = vpop.f32.mrf.mxu0
  %v538 = vadd.f32 %v441, %v537
  %v539 = vpop.f32.mrf.mxu0
  %540 = vmatprep.mubr.bf16.mxu0 0
  %541 = vmatmul.mubr.bf16.gmra.mxu0 %v216
  %v542 = vpop.f32.mrf.mxu0
  %v543 = vadd.f32 %v446, %v542
  %v544 = vpop.f32.mrf.mxu0
  %v545 = vpop.f32.mrf.mxu0
  %v546 = vadd.f32 %v449, %v545
  %v547 = vpop.f32.mrf.mxu0
  %548 = vmatprep.mubr.bf16.mxu0 0
  %549 = vmatmul.mubr.bf16.gmra.mxu0 %v219
  %v550 = vpop.f32.mrf.mxu0
  %v551 = vadd.f32 %v454, %v550
  %v552 = vpop.f32.mrf.mxu0
  %v553 = vpop.f32.mrf.mxu0
  %v554 = vadd.f32 %v457, %v553
  %v555 = vpop.f32.mrf.mxu0
  %556 = vmatprep.mubr.bf16.mxu0 0
  %557 = vmatmul.mubr.bf16.gmra.mxu0 %v222
  %v558 = vpop.f32.mrf.mxu0
  %v559 = vadd.f32 %v462, %v558
  %v560 = vpop.f32.mrf.mxu0
  %v561 = vpop.f32.mrf.mxu0
  %v562 = vadd.f32 %v465, %v561
  %v563 = vpop.f32.mrf.mxu0
  %564 = vmatprep.mubr.bf16.mxu0 0
  %565 = vmatmul.mubr.bf16.gmra.mxu0 %v225
  %v566 = vpop.f32.mrf.mxu0
  %v567 = vadd.f32 %v470, %v566
  %v568 = vpop.f32.mrf.mxu0
  %v569 = vpop.f32.mrf.mxu0
  %v570 = vadd.f32 %v473, %v569
  %v571 = vpop.f32.mrf.mxu0
  %572 = vmatprep.mubr.bf16.mxu0 0
  %573 = vmatmul.mubr.bf16.gmra.mxu0 %v228
  %v574 = vpop.f32.mrf.mxu0
  %v575 = vadd.f32 %v478, %v574
  %v576 = vpop.f32.mrf.mxu0
  %v577 = vpop.f32.mrf.mxu0
  %v578 = vadd.f32 %v481, %v577
  %v579 = vpop.f32.mrf.mxu0
  %580 = vmatprep.mubr.bf16.mxu0 0
  %581 = vmatmul.mubr.bf16.gmra.mxu0 %v231
  %v582 = vpop.f32.mrf.mxu0
  %v583 = vadd.f32 %v486, %v582
  %v584 = vpop.f32.mrf.mxu0
  %v585 = vpop.f32.mrf.mxu0
  %v586 = vadd.f32 %v489, %v585
  %v587 = vpop.f32.mrf.mxu0
  %588 = vmatprep.mubr.bf16.mxu0 0
  %589 = vmatmul.mubr.bf16.gmra.mxu0 %v234
  %v590 = vpop.f32.mrf.mxu0
  %v591 = vadd.f32 %v494, %v590
  %v592 = vpop.f32.mrf.mxu0
  %v593 = vpop.f32.mrf.mxu0
  %v594 = vadd.f32 %v497, %v593
  %v595 = vpop.f32.mrf.mxu0
  %596 = vdwg.mxu0
  %v597 = vadd.f32 %v35, %v535
  %v598 = vadd.f32 %v36, %v538
  %v599 = vadd.f32 %v37, %v543
  %v600 = vadd.f32 %v38, %v546
  %v601 = vadd.f32 %v39, %v551
  %v602 = vadd.f32 %v40, %v554
  %v603 = vadd.f32 %v41, %v559
  %v604 = vadd.f32 %v42, %v562
  %v605 = vadd.f32 %v43, %v567
  %v606 = vadd.f32 %v44, %v570
  %v607 = vadd.f32 %v45, %v575
  %v608 = vadd.f32 %v46, %v578
  %v609 = vadd.f32 %v47, %v583
  %v610 = vadd.f32 %v48, %v586
  %v611 = vadd.f32 %v49, %v591
  %v612 = vadd.f32 %v50, %v594
  %613 = vst [vmem:[#allocation2] sm:$0xff] %v597
  %614 = vst [vmem:[#allocation2 + $0x8] sm:$0xff] %v598
  %615 = vst [vmem:[#allocation2 + $0x10] sm:$0xff] %v599
  %616 = vst [vmem:[#allocation2 + $0x18] sm:$0xff] %v600
  %617 = vst [vmem:[#allocation2 + $0x20] sm:$0xff] %v601
  %618 = vst [vmem:[#allocation2 + $0x28] sm:$0xff] %v602
  %619 = vst [vmem:[#allocation2 + $0x30] sm:$0xff] %v603
  %620 = vst [vmem:[#allocation2 + $0x38] sm:$0xff] %v604
  %621 = vst [vmem:[#allocation2 + $0x40] sm:$0xff] %v605
  %622 = vst [vmem:[#allocation2 + $0x48] sm:$0xff] %v606
  %623 = vst [vmem:[#allocation2 + $0x50] sm:$0xff] %v607
  %624 = vst [vmem:[#allocation2 + $0x58] sm:$0xff] %v608
  %625 = vst [vmem:[#allocation2 + $0x60] sm:$0xff] %v609
  %626 = vst [vmem:[#allocation2 + $0x68] sm:$0xff] %v610
  %627 = vst [vmem:[#allocation2 + $0x70] sm:$0xff] %v611
  %628 = vst [vmem:[#allocation2 + $0x78] sm:$0xff] %v612
  // Predicated region
  $region18: #{encoder_2_forward.37} parent=0 // pred_check
    %p629 = pneg %p15
  $region19: #{encoder_2_forward.37} parent=0 // pred_check_branch
    %631 = sbr.rel (%p629) target = $region21
  $region20: #{encoder_2_forward.37} parent=0 // pred_region
    %v632 = vld [vmem:[#allocation2] sm:$0xff]
    %v633 = vld [vmem:[#allocation2 + $0x8] sm:$0xff]
    %v634 = vld [vmem:[#allocation2 + $0x10] sm:$0xff]
    %v635 = vld [vmem:[#allocation2 + $0x18] sm:$0xff]
    %v636 = vld [vmem:[#allocation2 + $0x20] sm:$0xff]
    %v637 = vld [vmem:[#allocation2 + $0x28] sm:$0xff]
    %v638 = vld [vmem:[#allocation2 + $0x30] sm:$0xff]
    %v639 = vld [vmem:[#allocation2 + $0x38] sm:$0xff]
    %v640 = vld [vmem:[#allocation2 + $0x40] sm:$0xff]
    %v641 = vld [vmem:[#allocation2 + $0x48] sm:$0xff]
    %v642 = vld [vmem:[#allocation2 + $0x50] sm:$0xff]
    %v643 = vld [vmem:[#allocation2 + $0x58] sm:$0xff]
    %v644 = vld [vmem:[#allocation2 + $0x60] sm:$0xff]
    %v645 = vld [vmem:[#allocation2 + $0x68] sm:$0xff]
    %v646 = vld [vmem:[#allocation2 + $0x70] sm:$0xff]
    %v647 = vld [vmem:[#allocation2 + $0x78] sm:$0xff]
    %v648 = vld [vmem:[%s2] sm:$0x1]
    %v650 = vlaneseq
    %v651 = vshrl.u32 %v650, 7
    %v652 = vsub.s32 0, %v651
    %v653 = vrot.slane %v648, %v652
    %v655 = vadd.f32 %v632, %v653
    %v656 = vadd.f32 %v633, %v653
    %v657 = vadd.f32 %v634, %v653
    %v658 = vadd.f32 %v635, %v653
    %v659 = vadd.f32 %v636, %v653
    %v660 = vadd.f32 %v637, %v653
    %v661 = vadd.f32 %v638, %v653
    %v662 = vadd.f32 %v639, %v653
    %v663 = vadd.f32 %v640, %v653
    %v664 = vadd.f32 %v641, %v653
    %v665 = vadd.f32 %v642, %v653
    %v666 = vadd.f32 %v643, %v653
    %v667 = vadd.f32 %v644, %v653
    %v668 = vadd.f32 %v645, %v653
    %v669 = vadd.f32 %v646, %v653
    %v670 = vadd.f32 %v647, %v653
    %671 = vst [vmem:[%s3] sm:$0xff] %v655
    %672 = vst [vmem:[%s3 + $0x8] sm:$0xff] %v656
    %673 = vst [vmem:[%s3 + $0x10] sm:$0xff] %v657
    %674 = vst [vmem:[%s3 + $0x18] sm:$0xff] %v658
    %675 = vst [vmem:[%s3 + $0x20] sm:$0xff] %v659
    %676 = vst [vmem:[%s3 + $0x28] sm:$0xff] %v660
    %677 = vst [vmem:[%s3 + $0x30] sm:$0xff] %v661
    %678 = vst [vmem:[%s3 + $0x38] sm:$0xff] %v662
    %679 = vst [vmem:[%s3 + $0x40] sm:$0xff] %v663
    %680 = vst [vmem:[%s3 + $0x48] sm:$0xff] %v664
    %681 = vst [vmem:[%s3 + $0x50] sm:$0xff] %v665
    %682 = vst [vmem:[%s3 + $0x58] sm:$0xff] %v666
    %683 = vst [vmem:[%s3 + $0x60] sm:$0xff] %v667
    %684 = vst [vmem:[%s3 + $0x68] sm:$0xff] %v668
    %685 = vst [vmem:[%s3 + $0x70] sm:$0xff] %v669
    %686 = vst [vmem:[%s3 + $0x78] sm:$0xff] %v670
  $region21: #{encoder_2_forward.37} parent=0 // pred_fallthru
    _
  // Predicated region
  $region22: #{encoder_2_forward.37} parent=0 // pred_check
    _
  $region23: #{encoder_2_forward.37} parent=0 // pred_check_branch
    %688 = sbr.rel (0) target = $region25
  $region24: #{encoder_2_forward.37} parent=0 // pred_region
    _
  $region25: #{encoder_2_forward.37} parent=0 // pred_fallthru
    _
  // Predicated region
  $region26: #{encoder_2_forward.37} parent=0 // pred_check
    _
  $region27: #{encoder_2_forward.37} parent=0 // pred_check_branch
    %690 = sbr.rel (0) target = $region29
  $region28: #{encoder_2_forward.37} parent=0 // pred_region
    _
  $region29: #{encoder_2_forward.37} parent=0 // pred_fallthru
    _

// kernel: encoder_2_forward.40
$region0: #{encoder_2_forward.40}
  #allocation0 [shape = 'u32[]', space=smem, size = 0x4, offset = 0x4, fixed_abs, tag = 'smem constant byte address 0x4 - core index']
  #allocation1 [shape = 'u32[144,128]{1,0:T(1,128)}', space=vmem, size = 0x12000, scoped, tag = 'internal scratch']
  %s0 = inlined_call_operand.vmem [shape: f32[2,16,32], index: 0, kind: input, shape index: {}]
  %s1 = inlined_call_operand.vmem [shape: f32[2,16,32], index: 1, kind: output, shape index: {}]
  %s2 = sld [smem:[#allocation0]]
  $region37: #{encoder_2_forward.40} parent=0
    _
  %s4 = ssub.s32 1, %s2
  %s5 = scalar_select 0, %s4, %s2
  loop: start=0, step=1, limit=4
  $region2: #{encoder_2_forward.40} parent=0 // loop_pre_header
    _
  $region3: #{encoder_2_forward.40} parent=0 // loop_header
    %s7 = sphi 0, %s11
    %p8 = scmp.ge.s32.totalorder %s7, 4
    %s17 = sphi 0, %s19
    %s20 = sphi 0, %s17
    %s21 = sphi 0, %s20
    %s37 = sphi 0, %s21
    %s43 = sphi 0, %s45
    %s46 = sphi 0, %s43
    %s47 = sphi 0, %s46
    %s63 = sphi 0, %s47
  $region4: #{encoder_2_forward.40} parent=0 // loop_header_branch
    %10 = sbr.rel (%p8) target = $region8
  $region5: #{encoder_2_forward.40} parent=0 // loop_body
    %s12 = ssub.s32 %s7, 1
    %s13 = ssub.s32 %s7, 2
    %s14 = sadd.s32 %s7, 1
    %s15 = ssub.s32 %s7, %s14
    %p16 = scmp.eq.s32.totalorder %s15, 0
    %s18 = sadd.s32 %s17, 1
    %s19 = scalar_select %p16, %s17, %s18
    %p22 = pneg %p16
    %p23 = scmp.eq.s32.totalorder %s7, 1
    %p24 = por %p22, %p23
    %p25 = scmp.ne.s32.totalorder %s17, %s20
    %p26 = scmp.eq.s32.totalorder %s7, 0
    %p27 = por %p25, %p26
    %p28 = scmp.ne.s32.totalorder %s17, %s20
    %p29 = scmp.eq.s32.totalorder %s12, 1
    %p30 = por %p28, %p29
    %p31 = scmp.ne.s32.totalorder %s20, %s21
    %p32 = scmp.eq.s32.totalorder %s12, 0
    %p33 = por %p31, %p32
    %p34 = scmp.ne.s32.totalorder %s20, %s21
    %p35 = scmp.eq.s32.totalorder %s13, 1
    %p36 = por %p34, %p35
    %p38 = scmp.ne.s32.totalorder %s21, %s37
    %p39 = scmp.eq.s32.totalorder %s13, 0
    %p40 = por %p38, %p39
    %s41 = ssub.s32 %s7, %s14
    %p42 = scmp.eq.s32.totalorder %s41, 0
    %s44 = sadd.s32 %s43, 1
    %s45 = scalar_select %p42, %s43, %s44
    %p48 = pneg %p42
    %p49 = scmp.eq.s32.totalorder %s7, 1
    %p50 = por %p48, %p49
    %p51 = scmp.ne.s32.totalorder %s43, %s46
    %p52 = scmp.eq.s32.totalorder %s7, 0
    %p53 = por %p51, %p52
    %p54 = scmp.ne.s32.totalorder %s43, %s46
    %p55 = scmp.eq.s32.totalorder %s12, 1
    %p56 = por %p54, %p55
    %p57 = scmp.ne.s32.totalorder %s46, %s47
    %p58 = scmp.eq.s32.totalorder %s12, 0
    %p59 = por %p57, %p58
    %p60 = scmp.ne.s32.totalorder %s46, %s47
    %p61 = scmp.eq.s32.totalorder %s13, 1
    %p62 = por %p60, %p61
    %p64 = scmp.ne.s32.totalorder %s47, %s63
    %p65 = scmp.eq.s32.totalorder %s13, 0
    %p66 = por %p64, %p65
    %p67 = scmp.le.s32.totalorder 1, %s7
    %p68 = scmp.lt.s32.totalorder %s7, 3
    %p69 = pnand %p67, %p68
    %p70 = pneg %p69
    // Predicated region
    $region9: #{encoder_2_forward.40} parent=5 // pred_check
      _
    $region10: #{encoder_2_forward.40} parent=5 // pred_check_branch
      %72 = sbr.rel (%p69) target = $region12
    $region11: #{encoder_2_forward.40} parent=5 // pred_region
      %s73 = ssub.s32 %s7, 1
    $region12: #{encoder_2_forward.40} parent=5 // pred_fallthru
      _
    %p74 = scmp.lt.s32.totalorder %s7, 2
    // Predicated region
    $region13: #{encoder_2_forward.40} parent=5 // pred_check
      %p75 = pneg %p74
    $region14: #{encoder_2_forward.40} parent=5 // pred_check_branch
      %77 = sbr.rel (%p75) target = $region16
    $region15: #{encoder_2_forward.40} parent=5 // pred_region
      // Predicated region
      $region17: #{encoder_2_forward.40} parent=15 // pred_check
        %p78 = pneg %p27
      $region18: #{encoder_2_forward.40} parent=15 // pred_check_branch
        %80 = sbr.rel (%p78) target = $region20
      $region19: #{encoder_2_forward.40} parent=15 // pred_region
        %p81 = scmp.lt.s32.totalorder %s7, 1
        %s82 = scalar_select %p81, %s7, 1
        %s83 = smul.addr %s82, 2
        %s84 = smul.addr %s83, 8
        %s85 = scalar_lea.vmem %s0, %s84
      $region20: #{encoder_2_forward.40} parent=15 // pred_fallthru
        _
    $region16: #{encoder_2_forward.40} parent=5 // pred_fallthru
      _
    %p86 = scmp.le.s32.totalorder 1, %s7
    %p87 = scmp.lt.s32.totalorder %s7, 3
    %p88 = pnand %p86, %p87
    %p89 = pneg %p88
    // Predicated region
    $region21: #{encoder_2_forward.40} parent=5 // pred_check
      _
    $region22: #{encoder_2_forward.40} parent=5 // pred_check_branch
      %91 = sbr.rel (%p88) target = $region24
    $region23: #{encoder_2_forward.40} parent=5 // pred_region
      %s92 = ssub.s32 %s7, 1
      %p93 = scmp.lt.s32.totalorder %s12, 1
      %s94 = scalar_select %p93, %s12, 1
      %s95 = smul.addr %s94, 2
      %s96 = smul.addr %s95, 8
      %s97 = scalar_lea.vmem %s0, %s96
      %p98 = pneg %p33
      %p99 = pneg %p30
      %p100 = pneg %p59
      %p101 = pneg %p56
      %p102 = scmp.lt.s32.totalorder %s12, 1
      %s103 = scalar_select %p102, %s12, 1
      %s104 = smul.addr %s103, 2
      %s105 = smul.addr %s104, 8
      %s106 = scalar_lea.vmem %s1, %s105
      %p107 = scmp.lt.s32.totalorder %s12, 1
      %s108 = scalar_select %p107, %s12, 1
      %s109 = smul.addr %s108, 2
      %s110 = smul.addr %s109, 8
      %s111 = scalar_lea.vmem %s0, %s110
      %p112 = scmp.lt.s32.totalorder %s12, 1
      %s113 = scalar_select %p112, %s12, 1
      %s114 = smul.addr %s113, 2
      %s115 = smul.addr %s114, 8
      %s116 = scalar_lea.vmem %s1, %s115
      %v117 = vld [vmem:[%s111] sm:$0xff]
      %v118 = vld [vmem:[%s111 + $0x8] sm:$0xff]
      %vm119 = vcmask 261120
      %v120 = vsel %vm119, %v117, 0.0
      %v121 = vsel %vm119, %v118, 0.0
      %v122 = vadd.f32 %v120, %v121
      %v123 = vrot.slane %v122, 4
      %v124 = vadd.f32 %v122, %v123
      %v125 = vrot.slane %v124, 2
      %v126 = vadd.f32 %v124, %v125
      %v127 = vrot.slane %v126, 1
      %v128 = vadd.f32 %v126, %v127
      %v129 = vmul.f32 %v117, %v117
      %v130 = vmul.f32 %v118, %v118
      %v131 = vsel %vm119, %v129, 0.0
      %v132 = vsel %vm119, %v130, 0.0
      %v133 = vadd.f32 %v131, %v132
      %v134 = vrot.slane %v133, 4
      %v135 = vadd.f32 %v133, %v134
      %v136 = vrot.slane %v135, 2
      %v137 = vadd.f32 %v135, %v136
      %v138 = vrot.slane %v137, 1
      %v139 = vadd.f32 %v137, %v138
      %v140 = vrcp.pop 16.0
      %v141 = vmul.f32 %v128, %v140
      %v142 = vmul.f32 %v139, %v140
      %v143 = vmul.f32 %v141, %v141
      %v144 = vsub.f32 %v142, %v143
      %v145 = vmax.f32 %v144, 0.0
      %v146 = vadd.f32 %v145, 1e-05
      %v147 = vrsqrt.pop %v146
      %v148 = vsub.f32 %v117, %v141
      %v149 = vsub.f32 %v118, %v141
      %v150 = vmul.f32 %v148, %v147
      %v151 = vmul.f32 %v149, %v147
      %vm152 = vcmp.ge.f32.partialorder %v150, 0.0
      %vm153 = vcmp.ge.f32.partialorder %v151, 0.0
      %v154 = vmul.f32 %v150, 0.1
      %v155 = vmul.f32 %v151, 0.1
      %v156 = vsel %vm152, %v150, %v154
      %v157 = vsel %vm153, %v151, %v155
      %158 = vst.msk [vmem:[%s116] sm:$0xff] %vm119, %v156
      %159 = vst.msk [vmem:[%s116 + $0x8] sm:$0xff] %vm119, %v157
      %p160 = scmp.lt.s32.totalorder %s12, 1
      %s161 = scalar_select %p160, %s12, 1
      %s162 = smul.addr %s161, 2
      %s163 = smul.addr %s162, 8
      %s164 = scalar_lea.vmem %s1, %s163
      // Predicated region
      $region25: #{encoder_2_forward.40} parent=23 // pred_check
        %p165 = pneg %p56
      $region26: #{encoder_2_forward.40} parent=23 // pred_check_branch
        %167 = sbr.rel (%p165) target = $region28
      $region27: #{encoder_2_forward.40} parent=23 // pred_region
        _
      $region28: #{encoder_2_forward.40} parent=23 // pred_fallthru
        _
    $region24: #{encoder_2_forward.40} parent=5 // pred_fallthru
      _
    %p168 = scmp.le.s32.totalorder 2, %s7
    // Predicated region
    $region29: #{encoder_2_forward.40} parent=5 // pred_check
      %p169 = pneg %p168
    $region30: #{encoder_2_forward.40} parent=5 // pred_check_branch
      %171 = sbr.rel (%p169) target = $region32
    $region31: #{encoder_2_forward.40} parent=5 // pred_region
      %s172 = ssub.s32 %s7, 2
      // Predicated region
      $region33: #{encoder_2_forward.40} parent=31 // pred_check
        %p173 = pneg %p62
      $region34: #{encoder_2_forward.40} parent=31 // pred_check_branch
        %175 = sbr.rel (%p173) target = $region36
      $region35: #{encoder_2_forward.40} parent=31 // pred_region
        %p176 = scmp.lt.s32.totalorder %s13, 1
        %s177 = scalar_select %p176, %s13, 1
        %s178 = smul.addr %s177, 2
        %s179 = smul.addr %s178, 8
        %s180 = scalar_lea.vmem %s1, %s179
      $region36: #{encoder_2_forward.40} parent=31 // pred_fallthru
        _
    $region32: #{encoder_2_forward.40} parent=5 // pred_fallthru
      _
  $region6: #{encoder_2_forward.40} parent=0 // loop_footer
    %s11 = sadd.s32 1, %s7
  $region7: #{encoder_2_forward.40} parent=0 // loop_footer_branch
    %6 = sbr.rel target = $region3
  $region8: #{encoder_2_forward.40} parent=0 // loop_exit
    _

// kernel: encoder_2_forward.39
$region0: #{encoder_2_forward.39}
  #allocation0 [shape = 'u32[]', space=smem, size = 0x4, offset = 0x4, fixed_abs, tag = 'smem constant byte address 0x4 - core index']
  #allocation1 [shape = 'u32[144,128]{1,0:T(1,128)}', space=vmem, size = 0x12000, scoped, tag = 'internal scratch']
  #allocation2 [shape = 'f32[32,128]{1,0:T(8,128)}', space=vmem, size = 0x4000, scoped, tag = 'scratch operand']
  %s0 = inlined_call_operand.vmem [shape: bf16[32,512], index: 0, kind: input, shape index: {}]
  %s1 = inlined_call_operand.vmem [shape: bf16[512,128], index: 1, kind: input, shape index: {}]
  %s2 = inlined_call_operand.vmem [shape: f32[1,128], index: 2, kind: input, shape index: {}]
  %s3 = inlined_call_operand.vmem [shape: f32[32,128], index: 3, kind: output, shape index: {}]
  %s4 = sld [smem:[#allocation0]]
  $region30: #{encoder_2_forward.39} parent=0
    _
  %s6 = ssub.s32 1, %s4
  %s7 = scalar_select 0, %s6, %s4
  // Predicated region
  $region2: #{encoder_2_forward.39} parent=0 // pred_check
    _
  $region3: #{encoder_2_forward.39} parent=0 // pred_check_branch
    %9 = sbr.rel (0) target = $region5
  $region4: #{encoder_2_forward.39} parent=0 // pred_region
    _
  $region5: #{encoder_2_forward.39} parent=0 // pred_fallthru
    _
  // Predicated region
  $region6: #{encoder_2_forward.39} parent=0 // pred_check
    _
  $region7: #{encoder_2_forward.39} parent=0 // pred_check_branch
    %11 = sbr.rel (0) target = $region9
  $region8: #{encoder_2_forward.39} parent=0 // pred_region
    _
  $region9: #{encoder_2_forward.39} parent=0 // pred_fallthru
    _
  // Predicated region
  $region10: #{encoder_2_forward.39} parent=0 // pred_check
    _
  $region11: #{encoder_2_forward.39} parent=0 // pred_check_branch
    %13 = sbr.rel (0) target = $region13
  $region12: #{encoder_2_forward.39} parent=0 // pred_region
    _
  $region13: #{encoder_2_forward.39} parent=0 // pred_fallthru
    _
  %p15 = scmp.eq.s32.totalorder 0, 0
  // Predicated region
  $region14: #{encoder_2_forward.39} parent=0 // pred_check
    %p16 = pneg %p15
  $region15: #{encoder_2_forward.39} parent=0 // pred_check_branch
    %18 = sbr.rel (%p16) target = $region17
  $region16: #{encoder_2_forward.39} parent=0 // pred_region
    %19 = vst [vmem:[#allocation2] sm:$0xff] 0.0
    %20 = vst [vmem:[#allocation2 + $0x8] sm:$0xff] 0.0
    %21 = vst [vmem:[#allocation2 + $0x10] sm:$0xff] 0.0
    %22 = vst [vmem:[#allocation2 + $0x18] sm:$0xff] 0.0
  $region17: #{encoder_2_forward.39} parent=0 // pred_fallthru
    _
  %v23 = vld [vmem:[#allocation2] sm:$0xff]
  %v24 = vld [vmem:[#allocation2 + $0x8] sm:$0xff]
  %v25 = vld [vmem:[#allocation2 + $0x10] sm:$0xff]
  %v26 = vld [vmem:[#allocation2 + $0x18] sm:$0xff]
  %v27 = vld [vmem:[%s0] sm:$0xff]
  %v28 = vld [vmem:[%s0 + $0x8] sm:$0xff]
  %v29 = vld [vmem:[%s0 + $0x10] sm:$0xff]
  %v30 = vld [vmem:[%s0 + $0x18] sm:$0xff]
  %v31 = vld [vmem:[%s0 + $0x20] sm:$0xff]
  %v32 = vld [vmem:[%s0 + $0x28] sm:$0xff]
  %v33 = vld [vmem:[%s0 + $0x30] sm:$0xff]
  %v34 = vld [vmem:[%s0 + $0x38] sm:$0xff]
  %v35 = vld [vmem:[%s1] sm:$0xf]
  %v36 = vld [vmem:[%s1 + $0x4] sm:$0xf]
  %v37 = vld [vmem:[%s1 + $0x8] sm:$0xf]
  %v38 = vld [vmem:[%s1 + $0xc] sm:$0xf]
  %v39 = vld [vmem:[%s1 + $0x10] sm:$0xf]
  %v40 = vld [vmem:[%s1 + $0x14] sm:$0xf]
  %v41 = vld [vmem:[%s1 + $0x18] sm:$0xf]
  %v42 = vld [vmem:[%s1 + $0x1c] sm:$0xf]
  %v43 = vld [vmem:[%s1 + $0x20] sm:$0xf]
  %v44 = vld [vmem:[%s1 + $0x24] sm:$0xf]
  %v45 = vld [vmem:[%s1 + $0x28] sm:$0xf]
  %v46 = vld [vmem:[%s1 + $0x2c] sm:$0xf]
  %v47 = vld [vmem:[%s1 + $0x30] sm:$0xf]
  %v48 = vld [vmem:[%s1 + $0x34] sm:$0xf]
  %v49 = vld [vmem:[%s1 + $0x38] sm:$0xf]
  %v50 = vld [vmem:[%s1 + $0x3c] sm:$0xf]
  %v51 = vld [vmem:[%s1 + $0x40] sm:$0xf]
  %v52 = vld [vmem:[%s1 + $0x44] sm:$0xf]
  %v53 = vld [vmem:[%s1 + $0x48] sm:$0xf]
  %v54 = vld [vmem:[%s1 + $0x4c] sm:$0xf]
  %v55 = vld [vmem:[%s1 + $0x50] sm:$0xf]
  %v56 = vld [vmem:[%s1 + $0x54] sm:$0xf]
  %v57 = vld [vmem:[%s1 + $0x58] sm:$0xf]
  %v58 = vld [vmem:[%s1 + $0x5c] sm:$0xf]
  %v59 = vld [vmem:[%s1 + $0x60] sm:$0xf]
  %v60 = vld [vmem:[%s1 + $0x64] sm:$0xf]
  %v61 = vld [vmem:[%s1 + $0x68] sm:$0xf]
  %v62 = vld [vmem:[%s1 + $0x6c] sm:$0xf]
  %v63 = vld [vmem:[%s1 + $0x70] sm:$0xf]
  %v64 = vld [vmem:[%s1 + $0x74] sm:$0xf]
  %v65 = vld [vmem:[%s1 + $0x78] sm:$0xf]
  %v66 = vld [vmem:[%s1 + $0x7c] sm:$0xf]
  %v67 = vld [vmem:[%s1 + $0x80] sm:$0xf]
  %v68 = vld [vmem:[%s1 + $0x84] sm:$0xf]
  %v69 = vld [vmem:[%s1 + $0x88] sm:$0xf]
  %v70 = vld [vmem:[%s1 + $0x8c] sm:$0xf]
  %v71 = vld [vmem:[%s1 + $0x90] sm:$0xf]
  %v72 = vld [vmem:[%s1 + $0x94] sm:$0xf]
  %v73 = vld [vmem:[%s1 + $0x98] sm:$0xf]
  %v74 = vld [vmem:[%s1 + $0x9c] sm:$0xf]
  %v75 = vld [vmem:[%s1 + $0xa0] sm:$0xf]
  %v76 = vld [vmem:[%s1 + $0xa4] sm:$0xf]
  %v77 = vld [vmem:[%s1 + $0xa8] sm:$0xf]
  %v78 = vld [vmem:[%s1 + $0xac] sm:$0xf]
  %v79 = vld [vmem:[%s1 + $0xb0] sm:$0xf]
  %v80 = vld [vmem:[%s1 + $0xb4] sm:$0xf]
  %v81 = vld [vmem:[%s1 + $0xb8] sm:$0xf]
  %v82 = vld [vmem:[%s1 + $0xbc] sm:$0xf]
  %v83 = vld [vmem:[%s1 + $0xc0] sm:$0xf]
  %v84 = vld [vmem:[%s1 + $0xc4] sm:$0xf]
  %v85 = vld [vmem:[%s1 + $0xc8] sm:$0xf]
  %v86 = vld [vmem:[%s1 + $0xcc] sm:$0xf]
  %v87 = vld [vmem:[%s1 + $0xd0] sm:$0xf]
  %v88 = vld [vmem:[%s1 + $0xd4] sm:$0xf]
  %v89 = vld [vmem:[%s1 + $0xd8] sm:$0xf]
  %v90 = vld [vmem:[%s1 + $0xdc] sm:$0xf]
  %v91 = vld [vmem:[%s1 + $0xe0] sm:$0xf]
  %v92 = vld [vmem:[%s1 + $0xe4] sm:$0xf]
  %v93 = vld [vmem:[%s1 + $0xe8] sm:$0xf]
  %v94 = vld [vmem:[%s1 + $0xec] sm:$0xf]
  %v95 = vld [vmem:[%s1 + $0xf0] sm:$0xf]
  %v96 = vld [vmem:[%s1 + $0xf4] sm:$0xf]
  %v97 = vld [vmem:[%s1 + $0xf8] sm:$0xf]
  %v98 = vld [vmem:[%s1 + $0xfc] sm:$0xf]
  %v107 = vunpack.c.l.b16 %v27
  %v108 = vunpack.c.h.b16 %v27
  %v109 = vunpack.c.l.b16 %v28
  %v110 = vunpack.c.h.b16 %v28
  %v111 = vunpack.c.l.b16 %v29
  %v112 = vunpack.c.h.b16 %v29
  %v113 = vunpack.c.l.b16 %v30
  %v114 = vunpack.c.h.b16 %v30
  %v115 = vunpack.c.l.b16 %v31
  %v116 = vunpack.c.h.b16 %v31
  %v117 = vunpack.c.l.b16 %v32
  %v118 = vunpack.c.h.b16 %v32
  %v119 = vunpack.c.l.b16 %v33
  %v120 = vunpack.c.h.b16 %v33
  %v121 = vunpack.c.l.b16 %v34
  %v122 = vunpack.c.h.b16 %v34
  %v123 = vpack.c.b16 %v111, %v107
  %v124 = vpack.c.b16 %v112, %v108
  %v125 = vpack.c.b16 %v113, %v109
  %v126 = vpack.c.b16 %v114, %v110
  %v127 = vpack.c.b16 %v119, %v115
  %v128 = vpack.c.b16 %v120, %v116
  %v129 = vpack.c.b16 %v121, %v117
  %v130 = vpack.c.b16 %v122, %v118
  %v203 = vunpack.c.l.b16 %v35
  %v204 = vunpack.c.l.b16 %v36
  %v205 = vunpack.c.l.b16 %v37
  %v206 = vunpack.c.l.b16 %v38
  %v207 = vunpack.c.l.b16 %v39
  %v208 = vunpack.c.l.b16 %v40
  %v209 = vunpack.c.l.b16 %v41
  %v210 = vunpack.c.l.b16 %v42
  %v211 = vunpack.c.l.b16 %v43
  %v212 = vunpack.c.l.b16 %v44
  %v213 = vunpack.c.l.b16 %v45
  %v214 = vunpack.c.l.b16 %v46
  %v215 = vunpack.c.l.b16 %v47
  %v216 = vunpack.c.l.b16 %v48
  %v217 = vunpack.c.l.b16 %v49
  %v218 = vunpack.c.l.b16 %v50
  %v219 = vunpack.c.l.b16 %v51
  %v220 = vunpack.c.l.b16 %v52
  %v221 = vunpack.c.l.b16 %v53
  %v222 = vunpack.c.l.b16 %v54
  %v223 = vunpack.c.l.b16 %v55
  %v224 = vunpack.c.l.b16 %v56
  %v225 = vunpack.c.l.b16 %v57
  %v226 = vunpack.c.l.b16 %v58
  %v227 = vunpack.c.l.b16 %v59
  %v228 = vunpack.c.l.b16 %v60
  %v229 = vunpack.c.l.b16 %v61
  %v230 = vunpack.c.l.b16 %v62
  %v231 = vunpack.c.l.b16 %v63
  %v232 = vunpack.c.l.b16 %v64
  %v233 = vunpack.c.l.b16 %v65
  %v234 = vunpack.c.l.b16 %v66
  %v235 = vunpack.c.l.b16 %v67
  %v236 = vunpack.c.l.b16 %v68
  %v237 = vunpack.c.l.b16 %v69
  %v238 = vunpack.c.l.b16 %v70
  %v239 = vunpack.c.l.b16 %v71
  %v240 = vunpack.c.l.b16 %v72
  %v241 = vunpack.c.l.b16 %v73
  %v242 = vunpack.c.l.b16 %v74
  %v243 = vunpack.c.l.b16 %v75
  %v244 = vunpack.c.l.b16 %v76
  %v245 = vunpack.c.l.b16 %v77
  %v246 = vunpack.c.l.b16 %v78
  %v247 = vunpack.c.l.b16 %v79
  %v248 = vunpack.c.l.b16 %v80
  %v249 = vunpack.c.l.b16 %v81
  %v250 = vunpack.c.l.b16 %v82
  %v251 = vunpack.c.l.b16 %v83
  %v252 = vunpack.c.l.b16 %v84
  %v253 = vunpack.c.l.b16 %v85
  %v254 = vunpack.c.l.b16 %v86
  %v255 = vunpack.c.l.b16 %v87
  %v256 = vunpack.c.l.b16 %v88
  %v257 = vunpack.c.l.b16 %v89
  %v258 = vunpack.c.l.b16 %v90
  %v259 = vunpack.c.l.b16 %v91
  %v260 = vunpack.c.l.b16 %v92
  %v261 = vunpack.c.l.b16 %v93
  %v262 = vunpack.c.l.b16 %v94
  %v263 = vunpack.c.l.b16 %v95
  %v264 = vunpack.c.l.b16 %v96
  %v265 = vunpack.c.l.b16 %v97
  %v266 = vunpack.c.l.b16 %v98
  %v267 = vpack.c.b16 %v204, %v203
  %v268 = vpack.c.b16 %v206, %v205
  %v269 = vpack.c.b16 %v208, %v207
  %v270 = vpack.c.b16 %v210, %v209
  %v271 = vpack.c.b16 %v212, %v211
  %v272 = vpack.c.b16 %v214, %v213
  %v273 = vpack.c.b16 %v216, %v215
  %v274 = vpack.c.b16 %v218, %v217
  %v275 = vpack.c.b16 %v220, %v219
  %v276 = vpack.c.b16 %v222, %v221
  %v277 = vpack.c.b16 %v224, %v223
  %v278 = vpack.c.b16 %v226, %v225
  %v279 = vpack.c.b16 %v228, %v227
  %v280 = vpack.c.b16 %v230, %v229
  %v281 = vpack.c.b16 %v232, %v231
  %v282 = vpack.c.b16 %v234, %v233
  %v283 = vpack.c.b16 %v236, %v235
  %v284 = vpack.c.b16 %v238, %v237
  %v285 = vpack.c.b16 %v240, %v239
  %v286 = vpack.c.b16 %v242, %v241
  %v287 = vpack.c.b16 %v244, %v243
  %v288 = vpack.c.b16 %v246, %v245
  %v289 = vpack.c.b16 %v248, %v247
  %v290 = vpack.c.b16 %v250, %v249
  %v291 = vpack.c.b16 %v252, %v251
  %v292 = vpack.c.b16 %v254, %v253
  %v293 = vpack.c.b16 %v256, %v255
  %v294 = vpack.c.b16 %v258, %v257
  %v295 = vpack.c.b16 %v260, %v259
  %v296 = vpack.c.b16 %v262, %v261
  %v297 = vpack.c.b16 %v264, %v263
  %v298 = vpack.c.b16 %v266, %v265
  %331 = vmatprep.subr.bf16.mxu0 0
  %332 = vmatpush1.bf16.msra.mxu0 %v274
  %333 = vmatprep.subr.bf16.mxu0 0
  %334 = vmatpush1.bf16.msra.mxu0 %v273
  %335 = vmatprep.subr.bf16.mxu0 0
  %336 = vmatpush1.bf16.msra.mxu0 %v272
  %337 = vmatprep.subr.bf16.mxu0 0
  %338 = vmatpush1.bf16.msra.mxu0 %v271
  %339 = vmatprep.subr.bf16.mxu0 0
  %340 = vmatpush1.bf16.msra.mxu0 %v270
  %341 = vmatprep.subr.bf16.mxu0 0
  %342 = vmatpush1.bf16.msra.mxu0 %v269
  %343 = vmatprep.subr.bf16.mxu0 0
  %344 = vmatpush1.bf16.msra.mxu0 %v268
  %345 = vmatprep.subr.bf16.mxu0 0
  %346 = vmatpush1.bf16.msra.mxu0 %v267
  %347 = vmatprep.subr.bf16.mxu0 0
  %348 = vmatpush2.bf16.msra.mxu0 %v282
  %349 = vmatprep.subr.bf16.mxu0 0
  %350 = vmatpush2.bf16.msra.mxu0 %v281
  %351 = vmatprep.subr.bf16.mxu0 0
  %352 = vmatpush2.bf16.msra.mxu0 %v280
  %353 = vmatprep.subr.bf16.mxu0 0
  %354 = vmatpush2.bf16.msra.mxu0 %v279
  %355 = vmatprep.subr.bf16.mxu0 0
  %356 = vmatpush2.bf16.msra.mxu0 %v278
  %357 = vmatprep.subr.bf16.mxu0 0
  %358 = vmatpush2.bf16.msra.mxu0 %v277
  %359 = vmatprep.subr.bf16.mxu0 0
  %360 = vmatpush2.bf16.msra.mxu0 %v276
  %361 = vmatprep.subr.bf16.mxu0 0
  %362 = vmatpush2.bf16.msra.mxu0 %v275
  %363 = vmatprep.mubr.bf16.mxu0 %v124
  %364 = vmatmul.mubr.bf16.gmra.mxu0 %v123
  %v365 = vpop.f32.mrf.mxu0
  %v366 = vadd.f32 0.0, %v365
  %v367 = vpop.f32.mrf.mxu0
  %v368 = vpop.f32.mrf.mxu0
  %v369 = vadd.f32 0.0, %v368
  %v370 = vpop.f32.mrf.mxu0
  %371 = vmatprep.mubr.bf16.mxu0 %v128
  %372 = vmatmul.mubr.bf16.gmra.mxu0 %v127
  %v373 = vpop.f32.mrf.mxu0
  %v374 = vadd.f32 0.0, %v373
  %v375 = vpop.f32.mrf.mxu0
  %v376 = vpop.f32.mrf.mxu0
  %v377 = vadd.f32 0.0, %v376
  %v378 = vpop.f32.mrf.mxu0
  %379 = vdwg.mxu0
  %380 = vmatprep.subr.bf16.mxu0 0
  %381 = vmatpush1.bf16.msra.mxu0 %v290
  %382 = vmatprep.subr.bf16.mxu0 0
  %383 = vmatpush1.bf16.msra.mxu0 %v289
  %384 = vmatprep.subr.bf16.mxu0 0
  %385 = vmatpush1.bf16.msra.mxu0 %v288
  %386 = vmatprep.subr.bf16.mxu0 0
  %387 = vmatpush1.bf16.msra.mxu0 %v287
  %388 = vmatprep.subr.bf16.mxu0 0
  %389 = vmatpush1.bf16.msra.mxu0 %v286
  %390 = vmatprep.subr.bf16.mxu0 0
  %391 = vmatpush1.bf16.msra.mxu0 %v285
  %392 = vmatprep.subr.bf16.mxu0 0
  %393 = vmatpush1.bf16.msra.mxu0 %v284
  %394 = vmatprep.subr.bf16.mxu0 0
  %395 = vmatpush1.bf16.msra.mxu0 %v283
  %396 = vmatprep.subr.bf16.mxu0 0
  %397 = vmatpush2.bf16.msra.mxu0 %v298
  %398 = vmatprep.subr.bf16.mxu0 0
  %399 = vmatpush2.bf16.msra.mxu0 %v297
  %400 = vmatprep.subr.bf16.mxu0 0
  %401 = vmatpush2.bf16.msra.mxu0 %v296
  %402 = vmatprep.subr.bf16.mxu0 0
  %403 = vmatpush2.bf16.msra.mxu0 %v295
  %404 = vmatprep.subr.bf16.mxu0 0
  %405 = vmatpush2.bf16.msra.mxu0 %v294
  %406 = vmatprep.subr.bf16.mxu0 0
  %407 = vmatpush2.bf16.msra.mxu0 %v293
  %408 = vmatprep.subr.bf16.mxu0 0
  %409 = vmatpush2.bf16.msra.mxu0 %v292
  %410 = vmatprep.subr.bf16.mxu0 0
  %411 = vmatpush2.bf16.msra.mxu0 %v291
  %412 = vmatprep.mubr.bf16.mxu0 %v126
  %413 = vmatmul.mubr.bf16.gmra.mxu0 %v125
  %v414 = vpop.f32.mrf.mxu0
  %v415 = vadd.f32 %v366, %v414
  %v416 = vpop.f32.mrf.mxu0
  %v417 = vpop.f32.mrf.mxu0
  %v418 = vadd.f32 %v369, %v417
  %v419 = vpop.f32.mrf.mxu0
  %420 = vmatprep.mubr.bf16.mxu0 %v130
  %421 = vmatmul.mubr.bf16.gmra.mxu0 %v129
  %v422 = vpop.f32.mrf.mxu0
  %v423 = vadd.f32 %v374, %v422
  %v424 = vpop.f32.mrf.mxu0
  %v425 = vpop.f32.mrf.mxu0
  %v426 = vadd.f32 %v377, %v425
  %v427 = vpop.f32.mrf.mxu0
  %428 = vdwg.mxu0
  %v429 = vadd.f32 %v23, %v415
  %v430 = vadd.f32 %v24, %v418
  %v431 = vadd.f32 %v25, %v423
  %v432 = vadd.f32 %v26, %v426
  %433 = vst [vmem:[#allocation2] sm:$0xff] %v429
  %434 = vst [vmem:[#allocation2 + $0x8] sm:$0xff] %v430
  %435 = vst [vmem:[#allocation2 + $0x10] sm:$0xff] %v431
  %436 = vst [vmem:[#allocation2 + $0x18] sm:$0xff] %v432
  // Predicated region
  $region18: #{encoder_2_forward.39} parent=0 // pred_check
    %p437 = pneg %p15
  $region19: #{encoder_2_forward.39} parent=0 // pred_check_branch
    %439 = sbr.rel (%p437) target = $region21
  $region20: #{encoder_2_forward.39} parent=0 // pred_region
    %v440 = vld [vmem:[#allocation2] sm:$0xff]
    %v441 = vld [vmem:[#allocation2 + $0x8] sm:$0xff]
    %v442 = vld [vmem:[#allocation2 + $0x10] sm:$0xff]
    %v443 = vld [vmem:[#allocation2 + $0x18] sm:$0xff]
    %v444 = vld [vmem:[%s2] sm:$0x1]
    %v446 = vlaneseq
    %v447 = vshrl.u32 %v446, 7
    %v448 = vsub.s32 0, %v447
    %v449 = vrot.slane %v444, %v448
    %v451 = vadd.f32 %v440, %v449
    %v452 = vadd.f32 %v441, %v449
    %v453 = vadd.f32 %v442, %v449
    %v454 = vadd.f32 %v443, %v449
    %455 = vst [vmem:[%s3] sm:$0xff] %v451
    %456 = vst [vmem:[%s3 + $0x8] sm:$0xff] %v452
    %457 = vst [vmem:[%s3 + $0x10] sm:$0xff] %v453
    %458 = vst [vmem:[%s3 + $0x18] sm:$0xff] %v454
  $region21: #{encoder_2_forward.39} parent=0 // pred_fallthru
    _
  // Predicated region
  $region22: #{encoder_2_forward.39} parent=0 // pred_check
    _
  $region23: #{encoder_2_forward.39} parent=0 // pred_check_branch
    %460 = sbr.rel (0) target = $region25
  $region24: #{encoder_2_forward.39} parent=0 // pred_region
    _
  $region25: #{encoder_2_forward.39} parent=0 // pred_fallthru
    _
  // Predicated region
  $region26: #{encoder_2_forward.39} parent=0 // pred_check
    _
  $region27: #{encoder_2_forward.39} parent=0 // pred_check_branch
    %462 = sbr.rel (0) target = $region29
  $region28: #{encoder_2_forward.39} parent=0 // pred_region
    _
  $region29: #{encoder_2_forward.39} parent=0 // pred_fallthru
    _

// kernel: encoder_2_forward.41
$region0: #{encoder_2_forward.41}
  #allocation0 [shape = 'u32[]', space=smem, size = 0x4, offset = 0x4, fixed_abs, tag = 'smem constant byte address 0x4 - core index']
  #allocation1 [shape = 'u32[144,128]{1,0:T(1,128)}', space=vmem, size = 0x12000, scoped, tag = 'internal scratch']
  #allocation2 [shape = 'f32[32,128]{1,0:T(8,128)}', space=vmem, size = 0x4000, scoped, tag = 'scratch operand']
  %s0 = inlined_call_operand.vmem [shape: bf16[32,384], index: 0, kind: input, shape index: {}]
  %s1 = inlined_call_operand.vmem [shape: bf16[384,128], index: 1, kind: input, shape index: {}]
  %s2 = inlined_call_operand.vmem [shape: f32[1,128], index: 2, kind: input, shape index: {}]
  %s3 = inlined_call_operand.vmem [shape: f32[32,128], index: 3, kind: output, shape index: {}]
  %s4 = sld [smem:[#allocation0]]
  $region30: #{encoder_2_forward.41} parent=0
    _
  %s6 = ssub.s32 1, %s4
  %s7 = scalar_select 0, %s6, %s4
  // Predicated region
  $region2: #{encoder_2_forward.41} parent=0 // pred_check
    _
  $region3: #{encoder_2_forward.41} parent=0 // pred_check_branch
    %9 = sbr.rel (0) target = $region5
  $region4: #{encoder_2_forward.41} parent=0 // pred_region
    _
  $region5: #{encoder_2_forward.41} parent=0 // pred_fallthru
    _
  // Predicated region
  $region6: #{encoder_2_forward.41} parent=0 // pred_check
    _
  $region7: #{encoder_2_forward.41} parent=0 // pred_check_branch
    %11 = sbr.rel (0) target = $region9
  $region8: #{encoder_2_forward.41} parent=0 // pred_region
    _
  $region9: #{encoder_2_forward.41} parent=0 // pred_fallthru
    _
  // Predicated region
  $region10: #{encoder_2_forward.41} parent=0 // pred_check
    _
  $region11: #{encoder_2_forward.41} parent=0 // pred_check_branch
    %13 = sbr.rel (0) target = $region13
  $region12: #{encoder_2_forward.41} parent=0 // pred_region
    _
  $region13: #{encoder_2_forward.41} parent=0 // pred_fallthru
    _
  %p15 = scmp.eq.s32.totalorder 0, 0
  // Predicated region
  $region14: #{encoder_2_forward.41} parent=0 // pred_check
    %p16 = pneg %p15
  $region15: #{encoder_2_forward.41} parent=0 // pred_check_branch
    %18 = sbr.rel (%p16) target = $region17
  $region16: #{encoder_2_forward.41} parent=0 // pred_region
    %19 = vst [vmem:[#allocation2] sm:$0xff] 0.0
    %20 = vst [vmem:[#allocation2 + $0x8] sm:$0xff] 0.0
    %21 = vst [vmem:[#allocation2 + $0x10] sm:$0xff] 0.0
    %22 = vst [vmem:[#allocation2 + $0x18] sm:$0xff] 0.0
  $region17: #{encoder_2_forward.41} parent=0 // pred_fallthru
    _
  %v23 = vld [vmem:[#allocation2] sm:$0xff]
  %v24 = vld [vmem:[#allocation2 + $0x8] sm:$0xff]
  %v25 = vld [vmem:[#allocation2 + $0x10] sm:$0xff]
  %v26 = vld [vmem:[#allocation2 + $0x18] sm:$0xff]
  %v27 = vld [vmem:[%s0] sm:$0xff]
  %v28 = vld [vmem:[%s0 + $0x8] sm:$0xf]
  %v29 = vld [vmem:[%s0 + $0xc] sm:$0xff]
  %v30 = vld [vmem:[%s0 + $0x14] sm:$0xf]
  %v31 = vld [vmem:[%s0 + $0x18] sm:$0xff]
  %v32 = vld [vmem:[%s0 + $0x20] sm:$0xf]
  %v33 = vld [vmem:[%s0 + $0x24] sm:$0xff]
  %v34 = vld [vmem:[%s0 + $0x2c] sm:$0xf]
  %v35 = vld [vmem:[%s1] sm:$0xf]
  %v36 = vld [vmem:[%s1 + $0x4] sm:$0xf]
  %v37 = vld [vmem:[%s1 + $0x8] sm:$0xf]
  %v38 = vld [vmem:[%s1 + $0xc] sm:$0xf]
  %v39 = vld [vmem:[%s1 + $0x10] sm:$0xf]
  %v40 = vld [vmem:[%s1 + $0x14] sm:$0xf]
  %v41 = vld [vmem:[%s1 + $0x18] sm:$0xf]
  %v42 = vld [vmem:[%s1 + $0x1c] sm:$0xf]
  %v43 = vld [vmem:[%s1 + $0x20] sm:$0xf]
  %v44 = vld [vmem:[%s1 + $0x24] sm:$0xf]
  %v45 = vld [vmem:[%s1 + $0x28] sm:$0xf]
  %v46 = vld [vmem:[%s1 + $0x2c] sm:$0xf]
  %v47 = vld [vmem:[%s1 + $0x30] sm:$0xf]
  %v48 = vld [vmem:[%s1 + $0x34] sm:$0xf]
  %v49 = vld [vmem:[%s1 + $0x38] sm:$0xf]
  %v50 = vld [vmem:[%s1 + $0x3c] sm:$0xf]
  %v51 = vld [vmem:[%s1 + $0x40] sm:$0xf]
  %v52 = vld [vmem:[%s1 + $0x44] sm:$0xf]
  %v53 = vld [vmem:[%s1 + $0x48] sm:$0xf]
  %v54 = vld [vmem:[%s1 + $0x4c] sm:$0xf]
  %v55 = vld [vmem:[%s1 + $0x50] sm:$0xf]
  %v56 = vld [vmem:[%s1 + $0x54] sm:$0xf]
  %v57 = vld [vmem:[%s1 + $0x58] sm:$0xf]
  %v58 = vld [vmem:[%s1 + $0x5c] sm:$0xf]
  %v59 = vld [vmem:[%s1 + $0x60] sm:$0xf]
  %v60 = vld [vmem:[%s1 + $0x64] sm:$0xf]
  %v61 = vld [vmem:[%s1 + $0x68] sm:$0xf]
  %v62 = vld [vmem:[%s1 + $0x6c] sm:$0xf]
  %v63 = vld [vmem:[%s1 + $0x70] sm:$0xf]
  %v64 = vld [vmem:[%s1 + $0x74] sm:$0xf]
  %v65 = vld [vmem:[%s1 + $0x78] sm:$0xf]
  %v66 = vld [vmem:[%s1 + $0x7c] sm:$0xf]
  %v67 = vld [vmem:[%s1 + $0x80] sm:$0xf]
  %v68 = vld [vmem:[%s1 + $0x84] sm:$0xf]
  %v69 = vld [vmem:[%s1 + $0x88] sm:$0xf]
  %v70 = vld [vmem:[%s1 + $0x8c] sm:$0xf]
  %v71 = vld [vmem:[%s1 + $0x90] sm:$0xf]
  %v72 = vld [vmem:[%s1 + $0x94] sm:$0xf]
  %v73 = vld [vmem:[%s1 + $0x98] sm:$0xf]
  %v74 = vld [vmem:[%s1 + $0x9c] sm:$0xf]
  %v75 = vld [vmem:[%s1 + $0xa0] sm:$0xf]
  %v76 = vld [vmem:[%s1 + $0xa4] sm:$0xf]
  %v77 = vld [vmem:[%s1 + $0xa8] sm:$0xf]
  %v78 = vld [vmem:[%s1 + $0xac] sm:$0xf]
  %v79 = vld [vmem:[%s1 + $0xb0] sm:$0xf]
  %v80 = vld [vmem:[%s1 + $0xb4] sm:$0xf]
  %v81 = vld [vmem:[%s1 + $0xb8] sm:$0xf]
  %v82 = vld [vmem:[%s1 + $0xbc] sm:$0xf]
  %v91 = vunpack.c.l.b16 %v27
  %v92 = vunpack.c.h.b16 %v27
  %v93 = vunpack.c.l.b16 %v28
  %v94 = vunpack.c.l.b16 %v29
  %v95 = vunpack.c.h.b16 %v29
  %v96 = vunpack.c.l.b16 %v30
  %v97 = vunpack.c.l.b16 %v31
  %v98 = vunpack.c.h.b16 %v31
  %v99 = vunpack.c.l.b16 %v32
  %v100 = vunpack.c.l.b16 %v33
  %v101 = vunpack.c.h.b16 %v33
  %v102 = vunpack.c.l.b16 %v34
  %v103 = vpack.c.b16 %v94, %v91
  %v104 = vpack.c.b16 %v95, %v92
  %v105 = vpack.c.b16 %v96, %v93
  %v106 = vpack.c.b16 %v100, %v97
  %v107 = vpack.c.b16 %v101, %v98
  %v108 = vpack.c.b16 %v102, %v99
  %v163 = vunpack.c.l.b16 %v35
  %v164 = vunpack.c.l.b16 %v36
  %v165 = vunpack.c.l.b16 %v37
  %v166 = vunpack.c.l.b16 %v38
  %v167 = vunpack.c.l.b16 %v39
  %v168 = vunpack.c.l.b16 %v40
  %v169 = vunpack.c.l.b16 %v41
  %v170 = vunpack.c.l.b16 %v42
  %v171 = vunpack.c.l.b16 %v43
  %v172 = vunpack.c.l.b16 %v44
  %v173 = vunpack.c.l.b16 %v45
  %v174 = vunpack.c.l.b16 %v46
  %v175 = vunpack.c.l.b16 %v47
  %v176 = vunpack.c.l.b16 %v48
  %v177 = vunpack.c.l.b16 %v49
  %v178 = vunpack.c.l.b16 %v50
  %v179 = vunpack.c.l.b16 %v51
  %v180 = vunpack.c.l.b16 %v52
  %v181 = vunpack.c.l.b16 %v53
  %v182 = vunpack.c.l.b16 %v54
  %v183 = vunpack.c.l.b16 %v55
  %v184 = vunpack.c.l.b16 %v56
  %v185 = vunpack.c.l.b16 %v57
  %v186 = vunpack.c.l.b16 %v58
  %v187 = vunpack.c.l.b16 %v59
  %v188 = vunpack.c.l.b16 %v60
  %v189 = vunpack.c.l.b16 %v61
  %v190 = vunpack.c.l.b16 %v62
  %v191 = vunpack.c.l.b16 %v63
  %v192 = vunpack.c.l.b16 %v64
  %v193 = vunpack.c.l.b16 %v65
  %v194 = vunpack.c.l.b16 %v66
  %v195 = vunpack.c.l.b16 %v67
  %v196 = vunpack.c.l.b16 %v68
  %v197 = vunpack.c.l.b16 %v69
  %v198 = vunpack.c.l.b16 %v70
  %v199 = vunpack.c.l.b16 %v71
  %v200 = vunpack.c.l.b16 %v72
  %v201 = vunpack.c.l.b16 %v73
  %v202 = vunpack.c.l.b16 %v74
  %v203 = vunpack.c.l.b16 %v75
  %v204 = vunpack.c.l.b16 %v76
  %v205 = vunpack.c.l.b16 %v77
  %v206 = vunpack.c.l.b16 %v78
  %v207 = vunpack.c.l.b16 %v79
  %v208 = vunpack.c.l.b16 %v80
  %v209 = vunpack.c.l.b16 %v81
  %v210 = vunpack.c.l.b16 %v82
  %v211 = vpack.c.b16 %v164, %v163
  %v212 = vpack.c.b16 %v166, %v165
  %v213 = vpack.c.b16 %v168, %v167
  %v214 = vpack.c.b16 %v170, %v169
  %v215 = vpack.c.b16 %v172, %v171
  %v216 = vpack.c.b16 %v174, %v173
  %v217 = vpack.c.b16 %v176, %v175
  %v218 = vpack.c.b16 %v178, %v177
  %v219 = vpack.c.b16 %v180, %v179
  %v220 = vpack.c.b16 %v182, %v181
  %v221 = vpack.c.b16 %v184, %v183
  %v222 = vpack.c.b16 %v186, %v185
  %v223 = vpack.c.b16 %v188, %v187
  %v224 = vpack.c.b16 %v190, %v189
  %v225 = vpack.c.b16 %v192, %v191
  %v226 = vpack.c.b16 %v194, %v193
  %v227 = vpack.c.b16 %v196, %v195
  %v228 = vpack.c.b16 %v198, %v197
  %v229 = vpack.c.b16 %v200, %v199
  %v230 = vpack.c.b16 %v202, %v201
  %v231 = vpack.c.b16 %v204, %v203
  %v232 = vpack.c.b16 %v206, %v205
  %v233 = vpack.c.b16 %v208, %v207
  %v234 = vpack.c.b16 %v210, %v209
  %259 = vmatprep.subr.bf16.mxu0 0
  %260 = vmatpush1.bf16.msra.mxu0 %v218
  %261 = vmatprep.subr.bf16.mxu0 0
  %262 = vmatpush1.bf16.msra.mxu0 %v217
  %263 = vmatprep.subr.bf16.mxu0 0
  %264 = vmatpush1.bf16.msra.mxu0 %v216
  %265 = vmatprep.subr.bf16.mxu0 0
  %266 = vmatpush1.bf16.msra.mxu0 %v215
  %267 = vmatprep.subr.bf16.mxu0 0
  %268 = vmatpush1.bf16.msra.mxu0 %v214
  %269 = vmatprep.subr.bf16.mxu0 0
  %270 = vmatpush1.bf16.msra.mxu0 %v213
  %271 = vmatprep.subr.bf16.mxu0 0
  %272 = vmatpush1.bf16.msra.mxu0 %v212
  %273 = vmatprep.subr.bf16.mxu0 0
  %274 = vmatpush1.bf16.msra.mxu0 %v211
  %275 = vmatprep.subr.bf16.mxu0 0
  %276 = vmatpush2.bf16.msra.mxu0 %v226
  %277 = vmatprep.subr.bf16.mxu0 0
  %278 = vmatpush2.bf16.msra.mxu0 %v225
  %279 = vmatprep.subr.bf16.mxu0 0
  %280 = vmatpush2.bf16.msra.mxu0 %v224
  %281 = vmatprep.subr.bf16.mxu0 0
  %282 = vmatpush2.bf16.msra.mxu0 %v223
  %283 = vmatprep.subr.bf16.mxu0 0
  %284 = vmatpush2.bf16.msra.mxu0 %v222
  %285 = vmatprep.subr.bf16.mxu0 0
  %286 = vmatpush2.bf16.msra.mxu0 %v221
  %287 = vmatprep.subr.bf16.mxu0 0
  %288 = vmatpush2.bf16.msra.mxu0 %v220
  %289 = vmatprep.subr.bf16.mxu0 0
  %290 = vmatpush2.bf16.msra.mxu0 %v219
  %291 = vmatprep.mubr.bf16.mxu0 %v104
  %292 = vmatmul.mubr.bf16.gmra.mxu0 %v103
  %v293 = vpop.f32.mrf.mxu0
  %v294 = vadd.f32 0.0, %v293
  %v295 = vpop.f32.mrf.mxu0
  %v296 = vpop.f32.mrf.mxu0
  %v297 = vadd.f32 0.0, %v296
  %v298 = vpop.f32.mrf.mxu0
  %299 = vmatprep.mubr.bf16.mxu0 %v107
  %300 = vmatmul.mubr.bf16.gmra.mxu0 %v106
  %v301 = vpop.f32.mrf.mxu0
  %v302 = vadd.f32 0.0, %v301
  %v303 = vpop.f32.mrf.mxu0
  %v304 = vpop.f32.mrf.mxu0
  %v305 = vadd.f32 0.0, %v304
  %v306 = vpop.f32.mrf.mxu0
  %307 = vdwg.mxu0
  %308 = vmatprep.subr.bf16.mxu0 0
  %309 = vmatpush1.bf16.msra.mxu0 %v234
  %310 = vmatprep.subr.bf16.mxu0 0
  %311 = vmatpush1.bf16.msra.mxu0 %v233
  %312 = vmatprep.subr.bf16.mxu0 0
  %313 = vmatpush1.bf16.msra.mxu0 %v232
  %314 = vmatprep.subr.bf16.mxu0 0
  %315 = vmatpush1.bf16.msra.mxu0 %v231
  %316 = vmatprep.subr.bf16.mxu0 0
  %317 = vmatpush1.bf16.msra.mxu0 %v230
  %318 = vmatprep.subr.bf16.mxu0 0
  %319 = vmatpush1.bf16.msra.mxu0 %v229
  %320 = vmatprep.subr.bf16.mxu0 0
  %321 = vmatpush1.bf16.msra.mxu0 %v228
  %322 = vmatprep.subr.bf16.mxu0 0
  %323 = vmatpush1.bf16.msra.mxu0 %v227
  %324 = vmatprep.subr.bf16.mxu0 0
  %325 = vmatpush2.bf16.msra.mxu0 0
  %326 = vmatprep.subr.bf16.mxu0 0
  %327 = vmatpush2.bf16.msra.mxu0 0
  %328 = vmatprep.subr.bf16.mxu0 0
  %329 = vmatpush2.bf16.msra.mxu0 0
  %330 = vmatprep.subr.bf16.mxu0 0
  %331 = vmatpush2.bf16.msra.mxu0 0
  %332 = vmatprep.subr.bf16.mxu0 0
  %333 = vmatpush2.bf16.msra.mxu0 0
  %334 = vmatprep.subr.bf16.mxu0 0
  %335 = vmatpush2.bf16.msra.mxu0 0
  %336 = vmatprep.subr.bf16.mxu0 0
  %337 = vmatpush2.bf16.msra.mxu0 0
  %338 = vmatprep.subr.bf16.mxu0 0
  %339 = vmatpush2.bf16.msra.mxu0 0
  %340 = vmatprep.mubr.bf16.mxu0 0
  %341 = vmatmul.mubr.bf16.gmra.mxu0 %v105
  %v342 = vpop.f32.mrf.mxu0
  %v343 = vadd.f32 %v294, %v342
  %v344 = vpop.f32.mrf.mxu0
  %v345 = vpop.f32.mrf.mxu0
  %v346 = vadd.f32 %v297, %v345
  %v347 = vpop.f32.mrf.mxu0
  %348 = vmatprep.mubr.bf16.mxu0 0
  %349 = vmatmul.mubr.bf16.gmra.mxu0 %v108
  %v350 = vpop.f32.mrf.mxu0
  %v351 = vadd.f32 %v302, %v350
  %v352 = vpop.f32.mrf.mxu0
  %v353 = vpop.f32.mrf.mxu0
  %v354 = vadd.f32 %v305, %v353
  %v355 = vpop.f32.mrf.mxu0
  %356 = vdwg.mxu0
  %v357 = vadd.f32 %v23, %v343
  %v358 = vadd.f32 %v24, %v346
  %v359 = vadd.f32 %v25, %v351
  %v360 = vadd.f32 %v26, %v354
  %361 = vst [vmem:[#allocation2] sm:$0xff] %v357
  %362 = vst [vmem:[#allocation2 + $0x8] sm:$0xff] %v358
  %363 = vst [vmem:[#allocation2 + $0x10] sm:$0xff] %v359
  %364 = vst [vmem:[#allocation2 + $0x18] sm:$0xff] %v360
  // Predicated region
  $region18: #{encoder_2_forward.41} parent=0 // pred_check
    %p365 = pneg %p15
  $region19: #{encoder_2_forward.41} parent=0 // pred_check_branch
    %367 = sbr.rel (%p365) target = $region21
  $region20: #{encoder_2_forward.41} parent=0 // pred_region
    %v368 = vld [vmem:[#allocation2] sm:$0xff]
    %v369 = vld [vmem:[#allocation2 + $0x8] sm:$0xff]
    %v370 = vld [vmem:[#allocation2 + $0x10] sm:$0xff]
    %v371 = vld [vmem:[#allocation2 + $0x18] sm:$0xff]
    %v372 = vld [vmem:[%s2] sm:$0x1]
    %v374 = vlaneseq
    %v375 = vshrl.u32 %v374, 7
    %v376 = vsub.s32 0, %v375
    %v377 = vrot.slane %v372, %v376
    %v379 = vadd.f32 %v368, %v377
    %v380 = vadd.f32 %v369, %v377
    %v381 = vadd.f32 %v370, %v377
    %v382 = vadd.f32 %v371, %v377
    %383 = vst [vmem:[%s3] sm:$0xff] %v379
    %384 = vst [vmem:[%s3 + $0x8] sm:$0xff] %v380
    %385 = vst [vmem:[%s3 + $0x10] sm:$0xff] %v381
    %386 = vst [vmem:[%s3 + $0x18] sm:$0xff] %v382
  $region21: #{encoder_2_forward.41} parent=0 // pred_fallthru
    _
  // Predicated region
  $region22: #{encoder_2_forward.41} parent=0 // pred_check
    _
  $region23: #{encoder_2_forward.41} parent=0 // pred_check_branch
    %388 = sbr.rel (0) target = $region25
  $region24: #{encoder_2_forward.41} parent=0 // pred_region
    _
  $region25: #{encoder_2_forward.41} parent=0 // pred_fallthru
    _
  // Predicated region
  $region26: #{encoder_2_forward.41} parent=0 // pred_check
    _
  $region27: #{encoder_2_forward.41} parent=0 // pred_check_branch
    %390 = sbr.rel (0) target = $region29
  $region28: #{encoder_2_forward.41} parent=0 // pred_region
    _
  $region29: #{encoder_2_forward.41} parent=0 // pred_fallthru
    _

// kernel: encoder_2_forward.44
$region0: #{encoder_2_forward.44}
  #allocation0 [shape = 'u32[]', space=smem, size = 0x4, offset = 0x4, fixed_abs, tag = 'smem constant byte address 0x4 - core index']
  #allocation1 [shape = 'u32[144,128]{1,0:T(1,128)}', space=vmem, size = 0x12000, scoped, tag = 'internal scratch']
  %s0 = inlined_call_operand.vmem [shape: f32[2,8,32], index: 0, kind: input, shape index: {}]
  %s1 = inlined_call_operand.vmem [shape: f32[2,8,32], index: 1, kind: output, shape index: {}]
  %s2 = sld [smem:[#allocation0]]
  $region37: #{encoder_2_forward.44} parent=0
    _
  %s4 = ssub.s32 1, %s2
  %s5 = scalar_select 0, %s4, %s2
  loop: start=0, step=1, limit=4
  $region2: #{encoder_2_forward.44} parent=0 // loop_pre_header
    _
  $region3: #{encoder_2_forward.44} parent=0 // loop_header
    %s7 = sphi 0, %s11
    %p8 = scmp.ge.s32.totalorder %s7, 4
    %s17 = sphi 0, %s19
    %s20 = sphi 0, %s17
    %s21 = sphi 0, %s20
    %s37 = sphi 0, %s21
    %s43 = sphi 0, %s45
    %s46 = sphi 0, %s43
    %s47 = sphi 0, %s46
    %s63 = sphi 0, %s47
  $region4: #{encoder_2_forward.44} parent=0 // loop_header_branch
    %10 = sbr.rel (%p8) target = $region8
  $region5: #{encoder_2_forward.44} parent=0 // loop_body
    %s12 = ssub.s32 %s7, 1
    %s13 = ssub.s32 %s7, 2
    %s14 = sadd.s32 %s7, 1
    %s15 = ssub.s32 %s7, %s14
    %p16 = scmp.eq.s32.totalorder %s15, 0
    %s18 = sadd.s32 %s17, 1
    %s19 = scalar_select %p16, %s17, %s18
    %p22 = pneg %p16
    %p23 = scmp.eq.s32.totalorder %s7, 1
    %p24 = por %p22, %p23
    %p25 = scmp.ne.s32.totalorder %s17, %s20
    %p26 = scmp.eq.s32.totalorder %s7, 0
    %p27 = por %p25, %p26
    %p28 = scmp.ne.s32.totalorder %s17, %s20
    %p29 = scmp.eq.s32.totalorder %s12, 1
    %p30 = por %p28, %p29
    %p31 = scmp.ne.s32.totalorder %s20, %s21
    %p32 = scmp.eq.s32.totalorder %s12, 0
    %p33 = por %p31, %p32
    %p34 = scmp.ne.s32.totalorder %s20, %s21
    %p35 = scmp.eq.s32.totalorder %s13, 1
    %p36 = por %p34, %p35
    %p38 = scmp.ne.s32.totalorder %s21, %s37
    %p39 = scmp.eq.s32.totalorder %s13, 0
    %p40 = por %p38, %p39
    %s41 = ssub.s32 %s7, %s14
    %p42 = scmp.eq.s32.totalorder %s41, 0
    %s44 = sadd.s32 %s43, 1
    %s45 = scalar_select %p42, %s43, %s44
    %p48 = pneg %p42
    %p49 = scmp.eq.s32.totalorder %s7, 1
    %p50 = por %p48, %p49
    %p51 = scmp.ne.s32.totalorder %s43, %s46
    %p52 = scmp.eq.s32.totalorder %s7, 0
    %p53 = por %p51, %p52
    %p54 = scmp.ne.s32.totalorder %s43, %s46
    %p55 = scmp.eq.s32.totalorder %s12, 1
    %p56 = por %p54, %p55
    %p57 = scmp.ne.s32.totalorder %s46, %s47
    %p58 = scmp.eq.s32.totalorder %s12, 0
    %p59 = por %p57, %p58
    %p60 = scmp.ne.s32.totalorder %s46, %s47
    %p61 = scmp.eq.s32.totalorder %s13, 1
    %p62 = por %p60, %p61
    %p64 = scmp.ne.s32.totalorder %s47, %s63
    %p65 = scmp.eq.s32.totalorder %s13, 0
    %p66 = por %p64, %p65
    %p67 = scmp.le.s32.totalorder 1, %s7
    %p68 = scmp.lt.s32.totalorder %s7, 3
    %p69 = pnand %p67, %p68
    %p70 = pneg %p69
    // Predicated region
    $region9: #{encoder_2_forward.44} parent=5 // pred_check
      _
    $region10: #{encoder_2_forward.44} parent=5 // pred_check_branch
      %72 = sbr.rel (%p69) target = $region12
    $region11: #{encoder_2_forward.44} parent=5 // pred_region
      %s73 = ssub.s32 %s7, 1
    $region12: #{encoder_2_forward.44} parent=5 // pred_fallthru
      _
    %p74 = scmp.lt.s32.totalorder %s7, 2
    // Predicated region
    $region13: #{encoder_2_forward.44} parent=5 // pred_check
      %p75 = pneg %p74
    $region14: #{encoder_2_forward.44} parent=5 // pred_check_branch
      %77 = sbr.rel (%p75) target = $region16
    $region15: #{encoder_2_forward.44} parent=5 // pred_region
      // Predicated region
      $region17: #{encoder_2_forward.44} parent=15 // pred_check
        %p78 = pneg %p27
      $region18: #{encoder_2_forward.44} parent=15 // pred_check_branch
        %80 = sbr.rel (%p78) target = $region20
      $region19: #{encoder_2_forward.44} parent=15 // pred_region
        %p81 = scmp.lt.s32.totalorder %s7, 1
        %s82 = scalar_select %p81, %s7, 1
        %s83 = smul.addr %s82, 8
        %s84 = scalar_lea.vmem %s0, %s83
      $region20: #{encoder_2_forward.44} parent=15 // pred_fallthru
        _
    $region16: #{encoder_2_forward.44} parent=5 // pred_fallthru
      _
    %p85 = scmp.le.s32.totalorder 1, %s7
    %p86 = scmp.lt.s32.totalorder %s7, 3
    %p87 = pnand %p85, %p86
    %p88 = pneg %p87
    // Predicated region
    $region21: #{encoder_2_forward.44} parent=5 // pred_check
      _
    $region22: #{encoder_2_forward.44} parent=5 // pred_check_branch
      %90 = sbr.rel (%p87) target = $region24
    $region23: #{encoder_2_forward.44} parent=5 // pred_region
      %s91 = ssub.s32 %s7, 1
      %p92 = scmp.lt.s32.totalorder %s12, 1
      %s93 = scalar_select %p92, %s12, 1
      %s94 = smul.addr %s93, 8
      %s95 = scalar_lea.vmem %s0, %s94
      %p96 = pneg %p33
      %p97 = pneg %p30
      %p98 = pneg %p59
      %p99 = pneg %p56
      %p100 = scmp.lt.s32.totalorder %s12, 1
      %s101 = scalar_select %p100, %s12, 1
      %s102 = smul.addr %s101, 8
      %s103 = scalar_lea.vmem %s1, %s102
      %p104 = scmp.lt.s32.totalorder %s12, 1
      %s105 = scalar_select %p104, %s12, 1
      %s106 = smul.addr %s105, 8
      %s107 = scalar_lea.vmem %s0, %s106
      %p108 = scmp.lt.s32.totalorder %s12, 1
      %s109 = scalar_select %p108, %s12, 1
      %s110 = smul.addr %s109, 8
      %s111 = scalar_lea.vmem %s1, %s110
      %v112 = vld [vmem:[%s107] sm:$0xff]
      %vm113 = vcmask 261120
      %v114 = vsel %vm113, %v112, 0.0
      %v115 = vrot.slane %v114, 4
      %v116 = vadd.f32 %v114, %v115
      %v117 = vrot.slane %v116, 2
      %v118 = vadd.f32 %v116, %v117
      %v119 = vrot.slane %v118, 1
      %v120 = vadd.f32 %v118, %v119
      %v121 = vmul.f32 %v112, %v112
      %v122 = vsel %vm113, %v121, 0.0
      %v123 = vrot.slane %v122, 4
      %v124 = vadd.f32 %v122, %v123
      %v125 = vrot.slane %v124, 2
      %v126 = vadd.f32 %v124, %v125
      %v127 = vrot.slane %v126, 1
      %v128 = vadd.f32 %v126, %v127
      %v129 = vrcp.pop 4.0
      %v130 = vmul.f32 %v120, %v129
      %v131 = vmul.f32 %v128, %v129
      %v132 = vmul.f32 %v130, %v130
      %v133 = vsub.f32 %v131, %v132
      %v134 = vmax.f32 %v133, 0.0
      %v135 = vadd.f32 %v134, 1e-05
      %v136 = vrsqrt.pop %v135
      %v137 = vsub.f32 %v112, %v130
      %v138 = vmul.f32 %v137, %v136
      %vm139 = vcmp.ge.f32.partialorder %v138, 0.0
      %v140 = vmul.f32 %v138, 0.1
      %v141 = vsel %vm139, %v138, %v140
      %142 = vst.msk [vmem:[%s111] sm:$0xff] %vm113, %v141
      %p143 = scmp.lt.s32.totalorder %s12, 1
      %s144 = scalar_select %p143, %s12, 1
      %s145 = smul.addr %s144, 8
      %s146 = scalar_lea.vmem %s1, %s145
      // Predicated region
      $region25: #{encoder_2_forward.44} parent=23 // pred_check
        %p147 = pneg %p56
      $region26: #{encoder_2_forward.44} parent=23 // pred_check_branch
        %149 = sbr.rel (%p147) target = $region28
      $region27: #{encoder_2_forward.44} parent=23 // pred_region
        _
      $region28: #{encoder_2_forward.44} parent=23 // pred_fallthru
        _
    $region24: #{encoder_2_forward.44} parent=5 // pred_fallthru
      _
    %p150 = scmp.le.s32.totalorder 2, %s7
    // Predicated region
    $region29: #{encoder_2_forward.44} parent=5 // pred_check
      %p151 = pneg %p150
    $region30: #{encoder_2_forward.44} parent=5 // pred_check_branch
      %153 = sbr.rel (%p151) target = $region32
    $region31: #{encoder_2_forward.44} parent=5 // pred_region
      %s154 = ssub.s32 %s7, 2
      // Predicated region
      $region33: #{encoder_2_forward.44} parent=31 // pred_check
        %p155 = pneg %p62
      $region34: #{encoder_2_forward.44} parent=31 // pred_check_branch
        %157 = sbr.rel (%p155) target = $region36
      $region35: #{encoder_2_forward.44} parent=31 // pred_region
        %p158 = scmp.lt.s32.totalorder %s13, 1
        %s159 = scalar_select %p158, %s13, 1
        %s160 = smul.addr %s159, 8
        %s161 = scalar_lea.vmem %s1, %s160
      $region36: #{encoder_2_forward.44} parent=31 // pred_fallthru
        _
    $region32: #{encoder_2_forward.44} parent=5 // pred_fallthru
      _
  $region6: #{encoder_2_forward.44} parent=0 // loop_footer
    %s11 = sadd.s32 1, %s7
  $region7: #{encoder_2_forward.44} parent=0 // loop_footer_branch
    %6 = sbr.rel target = $region3
  $region8: #{encoder_2_forward.44} parent=0 // loop_exit
    _

// kernel: encoder_2_forward.43
$region0: #{encoder_2_forward.43}
  #allocation0 [shape = 'u32[]', space=smem, size = 0x4, offset = 0x4, fixed_abs, tag = 'smem constant byte address 0x4 - core index']
  #allocation1 [shape = 'u32[144,128]{1,0:T(1,128)}', space=vmem, size = 0x12000, scoped, tag = 'internal scratch']
  #allocation2 [shape = 'f32[8,128]{1,0:T(8,128)}', space=vmem, size = 0x1000, scoped, tag = 'scratch operand']
  %s0 = inlined_call_operand.vmem [shape: bf16[8,512], index: 0, kind: input, shape index: {}]
  %s1 = inlined_call_operand.vmem [shape: bf16[512,128], index: 1, kind: input, shape index: {}]
  %s2 = inlined_call_operand.vmem [shape: f32[1,128], index: 2, kind: input, shape index: {}]
  %s3 = inlined_call_operand.vmem [shape: f32[8,128], index: 3, kind: output, shape index: {}]
  %s4 = sld [smem:[#allocation0]]
  $region30: #{encoder_2_forward.43} parent=0
    _
  %s6 = ssub.s32 1, %s4
  %s7 = scalar_select 0, %s6, %s4
  // Predicated region
  $region2: #{encoder_2_forward.43} parent=0 // pred_check
    _
  $region3: #{encoder_2_forward.43} parent=0 // pred_check_branch
    %9 = sbr.rel (0) target = $region5
  $region4: #{encoder_2_forward.43} parent=0 // pred_region
    _
  $region5: #{encoder_2_forward.43} parent=0 // pred_fallthru
    _
  // Predicated region
  $region6: #{encoder_2_forward.43} parent=0 // pred_check
    _
  $region7: #{encoder_2_forward.43} parent=0 // pred_check_branch
    %11 = sbr.rel (0) target = $region9
  $region8: #{encoder_2_forward.43} parent=0 // pred_region
    _
  $region9: #{encoder_2_forward.43} parent=0 // pred_fallthru
    _
  // Predicated region
  $region10: #{encoder_2_forward.43} parent=0 // pred_check
    _
  $region11: #{encoder_2_forward.43} parent=0 // pred_check_branch
    %13 = sbr.rel (0) target = $region13
  $region12: #{encoder_2_forward.43} parent=0 // pred_region
    _
  $region13: #{encoder_2_forward.43} parent=0 // pred_fallthru
    _
  %p15 = scmp.eq.s32.totalorder 0, 0
  // Predicated region
  $region14: #{encoder_2_forward.43} parent=0 // pred_check
    %p16 = pneg %p15
  $region15: #{encoder_2_forward.43} parent=0 // pred_check_branch
    %18 = sbr.rel (%p16) target = $region17
  $region16: #{encoder_2_forward.43} parent=0 // pred_region
    %19 = vst [vmem:[#allocation2] sm:$0xff] 0.0
  $region17: #{encoder_2_forward.43} parent=0 // pred_fallthru
    _
  %v20 = vld [vmem:[#allocation2] sm:$0xff]
  %v21 = vld [vmem:[%s0] sm:$0xff]
  %v22 = vld [vmem:[%s0 + $0x8] sm:$0xff]
  %v23 = vld [vmem:[%s1] sm:$0xf]
  %v24 = vld [vmem:[%s1 + $0x4] sm:$0xf]
  %v25 = vld [vmem:[%s1 + $0x8] sm:$0xf]
  %v26 = vld [vmem:[%s1 + $0xc] sm:$0xf]
  %v27 = vld [vmem:[%s1 + $0x10] sm:$0xf]
  %v28 = vld [vmem:[%s1 + $0x14] sm:$0xf]
  %v29 = vld [vmem:[%s1 + $0x18] sm:$0xf]
  %v30 = vld [vmem:[%s1 + $0x1c] sm:$0xf]
  %v31 = vld [vmem:[%s1 + $0x20] sm:$0xf]
  %v32 = vld [vmem:[%s1 + $0x24] sm:$0xf]
  %v33 = vld [vmem:[%s1 + $0x28] sm:$0xf]
  %v34 = vld [vmem:[%s1 + $0x2c] sm:$0xf]
  %v35 = vld [vmem:[%s1 + $0x30] sm:$0xf]
  %v36 = vld [vmem:[%s1 + $0x34] sm:$0xf]
  %v37 = vld [vmem:[%s1 + $0x38] sm:$0xf]
  %v38 = vld [vmem:[%s1 + $0x3c] sm:$0xf]
  %v39 = vld [vmem:[%s1 + $0x40] sm:$0xf]
  %v40 = vld [vmem:[%s1 + $0x44] sm:$0xf]
  %v41 = vld [vmem:[%s1 + $0x48] sm:$0xf]
  %v42 = vld [vmem:[%s1 + $0x4c] sm:$0xf]
  %v43 = vld [vmem:[%s1 + $0x50] sm:$0xf]
  %v44 = vld [vmem:[%s1 + $0x54] sm:$0xf]
  %v45 = vld [vmem:[%s1 + $0x58] sm:$0xf]
  %v46 = vld [vmem:[%s1 + $0x5c] sm:$0xf]
  %v47 = vld [vmem:[%s1 + $0x60] sm:$0xf]
  %v48 = vld [vmem:[%s1 + $0x64] sm:$0xf]
  %v49 = vld [vmem:[%s1 + $0x68] sm:$0xf]
  %v50 = vld [vmem:[%s1 + $0x6c] sm:$0xf]
  %v51 = vld [vmem:[%s1 + $0x70] sm:$0xf]
  %v52 = vld [vmem:[%s1 + $0x74] sm:$0xf]
  %v53 = vld [vmem:[%s1 + $0x78] sm:$0xf]
  %v54 = vld [vmem:[%s1 + $0x7c] sm:$0xf]
  %v55 = vld [vmem:[%s1 + $0x80] sm:$0xf]
  %v56 = vld [vmem:[%s1 + $0x84] sm:$0xf]
  %v57 = vld [vmem:[%s1 + $0x88] sm:$0xf]
  %v58 = vld [vmem:[%s1 + $0x8c] sm:$0xf]
  %v59 = vld [vmem:[%s1 + $0x90] sm:$0xf]
  %v60 = vld [vmem:[%s1 + $0x94] sm:$0xf]
  %v61 = vld [vmem:[%s1 + $0x98] sm:$0xf]
  %v62 = vld [vmem:[%s1 + $0x9c] sm:$0xf]
  %v63 = vld [vmem:[%s1 + $0xa0] sm:$0xf]
  %v64 = vld [vmem:[%s1 + $0xa4] sm:$0xf]
  %v65 = vld [vmem:[%s1 + $0xa8] sm:$0xf]
  %v66 = vld [vmem:[%s1 + $0xac] sm:$0xf]
  %v67 = vld [vmem:[%s1 + $0xb0] sm:$0xf]
  %v68 = vld [vmem:[%s1 + $0xb4] sm:$0xf]
  %v69 = vld [vmem:[%s1 + $0xb8] sm:$0xf]
  %v70 = vld [vmem:[%s1 + $0xbc] sm:$0xf]
  %v71 = vld [vmem:[%s1 + $0xc0] sm:$0xf]
  %v72 = vld [vmem:[%s1 + $0xc4] sm:$0xf]
  %v73 = vld [vmem:[%s1 + $0xc8] sm:$0xf]
  %v74 = vld [vmem:[%s1 + $0xcc] sm:$0xf]
  %v75 = vld [vmem:[%s1 + $0xd0] sm:$0xf]
  %v76 = vld [vmem:[%s1 + $0xd4] sm:$0xf]
  %v77 = vld [vmem:[%s1 + $0xd8] sm:$0xf]
  %v78 = vld [vmem:[%s1 + $0xdc] sm:$0xf]
  %v79 = vld [vmem:[%s1 + $0xe0] sm:$0xf]
  %v80 = vld [vmem:[%s1 + $0xe4] sm:$0xf]
  %v81 = vld [vmem:[%s1 + $0xe8] sm:$0xf]
  %v82 = vld [vmem:[%s1 + $0xec] sm:$0xf]
  %v83 = vld [vmem:[%s1 + $0xf0] sm:$0xf]
  %v84 = vld [vmem:[%s1 + $0xf4] sm:$0xf]
  %v85 = vld [vmem:[%s1 + $0xf8] sm:$0xf]
  %v86 = vld [vmem:[%s1 + $0xfc] sm:$0xf]
  %v89 = vunpack.c.l.b16 %v21
  %v90 = vunpack.c.h.b16 %v21
  %v91 = vunpack.c.l.b16 %v22
  %v92 = vunpack.c.h.b16 %v22
  %v93 = vpack.c.b16 %v89, %v89
  %v94 = vpack.c.b16 %v90, %v90
  %v95 = vpack.c.b16 %v91, %v91
  %v96 = vpack.c.b16 %v92, %v92
  %v165 = vunpack.c.l.b16 %v23
  %v166 = vunpack.c.l.b16 %v24
  %v167 = vunpack.c.l.b16 %v25
  %v168 = vunpack.c.l.b16 %v26
  %v169 = vunpack.c.l.b16 %v27
  %v170 = vunpack.c.l.b16 %v28
  %v171 = vunpack.c.l.b16 %v29
  %v172 = vunpack.c.l.b16 %v30
  %v173 = vunpack.c.l.b16 %v31
  %v174 = vunpack.c.l.b16 %v32
  %v175 = vunpack.c.l.b16 %v33
  %v176 = vunpack.c.l.b16 %v34
  %v177 = vunpack.c.l.b16 %v35
  %v178 = vunpack.c.l.b16 %v36
  %v179 = vunpack.c.l.b16 %v37
  %v180 = vunpack.c.l.b16 %v38
  %v181 = vunpack.c.l.b16 %v39
  %v182 = vunpack.c.l.b16 %v40
  %v183 = vunpack.c.l.b16 %v41
  %v184 = vunpack.c.l.b16 %v42
  %v185 = vunpack.c.l.b16 %v43
  %v186 = vunpack.c.l.b16 %v44
  %v187 = vunpack.c.l.b16 %v45
  %v188 = vunpack.c.l.b16 %v46
  %v189 = vunpack.c.l.b16 %v47
  %v190 = vunpack.c.l.b16 %v48
  %v191 = vunpack.c.l.b16 %v49
  %v192 = vunpack.c.l.b16 %v50
  %v193 = vunpack.c.l.b16 %v51
  %v194 = vunpack.c.l.b16 %v52
  %v195 = vunpack.c.l.b16 %v53
  %v196 = vunpack.c.l.b16 %v54
  %v197 = vunpack.c.l.b16 %v55
  %v198 = vunpack.c.l.b16 %v56
  %v199 = vunpack.c.l.b16 %v57
  %v200 = vunpack.c.l.b16 %v58
  %v201 = vunpack.c.l.b16 %v59
  %v202 = vunpack.c.l.b16 %v60
  %v203 = vunpack.c.l.b16 %v61
  %v204 = vunpack.c.l.b16 %v62
  %v205 = vunpack.c.l.b16 %v63
  %v206 = vunpack.c.l.b16 %v64
  %v207 = vunpack.c.l.b16 %v65
  %v208 = vunpack.c.l.b16 %v66
  %v209 = vunpack.c.l.b16 %v67
  %v210 = vunpack.c.l.b16 %v68
  %v211 = vunpack.c.l.b16 %v69
  %v212 = vunpack.c.l.b16 %v70
  %v213 = vunpack.c.l.b16 %v71
  %v214 = vunpack.c.l.b16 %v72
  %v215 = vunpack.c.l.b16 %v73
  %v216 = vunpack.c.l.b16 %v74
  %v217 = vunpack.c.l.b16 %v75
  %v218 = vunpack.c.l.b16 %v76
  %v219 = vunpack.c.l.b16 %v77
  %v220 = vunpack.c.l.b16 %v78
  %v221 = vunpack.c.l.b16 %v79
  %v222 = vunpack.c.l.b16 %v80
  %v223 = vunpack.c.l.b16 %v81
  %v224 = vunpack.c.l.b16 %v82
  %v225 = vunpack.c.l.b16 %v83
  %v226 = vunpack.c.l.b16 %v84
  %v227 = vunpack.c.l.b16 %v85
  %v228 = vunpack.c.l.b16 %v86
  %v229 = vpack.c.b16 %v166, %v165
  %v230 = vpack.c.b16 %v168, %v167
  %v231 = vpack.c.b16 %v170, %v169
  %v232 = vpack.c.b16 %v172, %v171
  %v233 = vpack.c.b16 %v174, %v173
  %v234 = vpack.c.b16 %v176, %v175
  %v235 = vpack.c.b16 %v178, %v177
  %v236 = vpack.c.b16 %v180, %v179
  %v237 = vpack.c.b16 %v182, %v181
  %v238 = vpack.c.b16 %v184, %v183
  %v239 = vpack.c.b16 %v186, %v185
  %v240 = vpack.c.b16 %v188, %v187
  %v241 = vpack.c.b16 %v190, %v189
  %v242 = vpack.c.b16 %v192, %v191
  %v243 = vpack.c.b16 %v194, %v193
  %v244 = vpack.c.b16 %v196, %v195
  %v245 = vpack.c.b16 %v198, %v197
  %v246 = vpack.c.b16 %v200, %v199
  %v247 = vpack.c.b16 %v202, %v201
  %v248 = vpack.c.b16 %v204, %v203
  %v249 = vpack.c.b16 %v206, %v205
  %v250 = vpack.c.b16 %v208, %v207
  %v251 = vpack.c.b16 %v210, %v209
  %v252 = vpack.c.b16 %v212, %v211
  %v253 = vpack.c.b16 %v214, %v213
  %v254 = vpack.c.b16 %v216, %v215
  %v255 = vpack.c.b16 %v218, %v217
  %v256 = vpack.c.b16 %v220, %v219
  %v257 = vpack.c.b16 %v222, %v221
  %v258 = vpack.c.b16 %v224, %v223
  %v259 = vpack.c.b16 %v226, %v225
  %v260 = vpack.c.b16 %v228, %v227
  %293 = vmatprep.subr.bf16.mxu0 0
  %294 = vmatpush1.bf16.msra.mxu0 %v236
  %295 = vmatprep.subr.bf16.mxu0 0
  %296 = vmatpush1.bf16.msra.mxu0 %v235
  %297 = vmatprep.subr.bf16.mxu0 0
  %298 = vmatpush1.bf16.msra.mxu0 %v234
  %299 = vmatprep.subr.bf16.mxu0 0
  %300 = vmatpush1.bf16.msra.mxu0 %v233
  %301 = vmatprep.subr.bf16.mxu0 0
  %302 = vmatpush1.bf16.msra.mxu0 %v232
  %303 = vmatprep.subr.bf16.mxu0 0
  %304 = vmatpush1.bf16.msra.mxu0 %v231
  %305 = vmatprep.subr.bf16.mxu0 0
  %306 = vmatpush1.bf16.msra.mxu0 %v230
  %307 = vmatprep.subr.bf16.mxu0 0
  %308 = vmatpush1.bf16.msra.mxu0 %v229
  %309 = vmatprep.subr.bf16.mxu0 0
  %310 = vmatpush2.bf16.msra.mxu0 %v244
  %311 = vmatprep.subr.bf16.mxu0 0
  %312 = vmatpush2.bf16.msra.mxu0 %v243
  %313 = vmatprep.subr.bf16.mxu0 0
  %314 = vmatpush2.bf16.msra.mxu0 %v242
  %315 = vmatprep.subr.bf16.mxu0 0
  %316 = vmatpush2.bf16.msra.mxu0 %v241
  %317 = vmatprep.subr.bf16.mxu0 0
  %318 = vmatpush2.bf16.msra.mxu0 %v240
  %319 = vmatprep.subr.bf16.mxu0 0
  %320 = vmatpush2.bf16.msra.mxu0 %v239
  %321 = vmatprep.subr.bf16.mxu0 0
  %322 = vmatpush2.bf16.msra.mxu0 %v238
  %323 = vmatprep.subr.bf16.mxu0 0
  %324 = vmatpush2.bf16.msra.mxu0 %v237
  %325 = vmatprep.mubr.bf16.mxu0 %v94
  %326 = vmatmul.mubr.bf16.gmra.mxu0 %v93
  %v327 = vpop.f32.mrf.mxu0
  %v328 = vadd.f32 0.0, %v327
  %v329 = vpop.f32.mrf.mxu0
  %v330 = vpop.f32.mrf.mxu0
  %v331 = vpop.f32.mrf.mxu0
  %332 = vdwg.mxu0
  %333 = vmatprep.subr.bf16.mxu0 0
  %334 = vmatpush1.bf16.msra.mxu0 %v252
  %335 = vmatprep.subr.bf16.mxu0 0
  %336 = vmatpush1.bf16.msra.mxu0 %v251
  %337 = vmatprep.subr.bf16.mxu0 0
  %338 = vmatpush1.bf16.msra.mxu0 %v250
  %339 = vmatprep.subr.bf16.mxu0 0
  %340 = vmatpush1.bf16.msra.mxu0 %v249
  %341 = vmatprep.subr.bf16.mxu0 0
  %342 = vmatpush1.bf16.msra.mxu0 %v248
  %343 = vmatprep.subr.bf16.mxu0 0
  %344 = vmatpush1.bf16.msra.mxu0 %v247
  %345 = vmatprep.subr.bf16.mxu0 0
  %346 = vmatpush1.bf16.msra.mxu0 %v246
  %347 = vmatprep.subr.bf16.mxu0 0
  %348 = vmatpush1.bf16.msra.mxu0 %v245
  %349 = vmatprep.subr.bf16.mxu0 0
  %350 = vmatpush2.bf16.msra.mxu0 %v260
  %351 = vmatprep.subr.bf16.mxu0 0
  %352 = vmatpush2.bf16.msra.mxu0 %v259
  %353 = vmatprep.subr.bf16.mxu0 0
  %354 = vmatpush2.bf16.msra.mxu0 %v258
  %355 = vmatprep.subr.bf16.mxu0 0
  %356 = vmatpush2.bf16.msra.mxu0 %v257
  %357 = vmatprep.subr.bf16.mxu0 0
  %358 = vmatpush2.bf16.msra.mxu0 %v256
  %359 = vmatprep.subr.bf16.mxu0 0
  %360 = vmatpush2.bf16.msra.mxu0 %v255
  %361 = vmatprep.subr.bf16.mxu0 0
  %362 = vmatpush2.bf16.msra.mxu0 %v254
  %363 = vmatprep.subr.bf16.mxu0 0
  %364 = vmatpush2.bf16.msra.mxu0 %v253
  %365 = vmatprep.mubr.bf16.mxu0 %v96
  %366 = vmatmul.mubr.bf16.gmra.mxu0 %v95
  %v367 = vpop.f32.mrf.mxu0
  %v368 = vadd.f32 %v328, %v367
  %v369 = vpop.f32.mrf.mxu0
  %v370 = vpop.f32.mrf.mxu0
  %v371 = vpop.f32.mrf.mxu0
  %372 = vdwg.mxu0
  %v373 = vadd.f32 %v20, %v368
  %374 = vst [vmem:[#allocation2] sm:$0xff] %v373
  // Predicated region
  $region18: #{encoder_2_forward.43} parent=0 // pred_check
    %p375 = pneg %p15
  $region19: #{encoder_2_forward.43} parent=0 // pred_check_branch
    %377 = sbr.rel (%p375) target = $region21
  $region20: #{encoder_2_forward.43} parent=0 // pred_region
    %v378 = vld [vmem:[#allocation2] sm:$0xff]
    %v379 = vld [vmem:[%s2] sm:$0x1]
    %v381 = vlaneseq
    %v382 = vshrl.u32 %v381, 7
    %v383 = vsub.s32 0, %v382
    %v384 = vrot.slane %v379, %v383
    %v386 = vadd.f32 %v378, %v384
    %387 = vst [vmem:[%s3] sm:$0xff] %v386
  $region21: #{encoder_2_forward.43} parent=0 // pred_fallthru
    _
  // Predicated region
  $region22: #{encoder_2_forward.43} parent=0 // pred_check
    _
  $region23: #{encoder_2_forward.43} parent=0 // pred_check_branch
    %389 = sbr.rel (0) target = $region25
  $region24: #{encoder_2_forward.43} parent=0 // pred_region
    _
  $region25: #{encoder_2_forward.43} parent=0 // pred_fallthru
    _
  // Predicated region
  $region26: #{encoder_2_forward.43} parent=0 // pred_check
    _
  $region27: #{encoder_2_forward.43} parent=0 // pred_check_branch
    %391 = sbr.rel (0) target = $region29
  $region28: #{encoder_2_forward.43} parent=0 // pred_region
    _
  $region29: #{encoder_2_forward.43} parent=0 // pred_fallthru
    _

// kernel: encoder_2_forward.45
$region0: #{encoder_2_forward.45}
  #allocation0 [shape = 'u32[]', space=smem, size = 0x4, offset = 0x4, fixed_abs, tag = 'smem constant byte address 0x4 - core index']
  #allocation1 [shape = 'u32[144,128]{1,0:T(1,128)}', space=vmem, size = 0x12000, scoped, tag = 'internal scratch']
  #allocation2 [shape = 'f32[8,128]{1,0:T(8,128)}', space=vmem, size = 0x1000, scoped, tag = 'scratch operand']
  %s0 = inlined_call_operand.vmem [shape: bf16[8,384], index: 0, kind: input, shape index: {}]
  %s1 = inlined_call_operand.vmem [shape: bf16[384,128], index: 1, kind: input, shape index: {}]
  %s2 = inlined_call_operand.vmem [shape: f32[1,128], index: 2, kind: input, shape index: {}]
  %s3 = inlined_call_operand.vmem [shape: f32[8,128], index: 3, kind: output, shape index: {}]
  %s4 = sld [smem:[#allocation0]]
  $region30: #{encoder_2_forward.45} parent=0
    _
  %s6 = ssub.s32 1, %s4
  %s7 = scalar_select 0, %s6, %s4
  // Predicated region
  $region2: #{encoder_2_forward.45} parent=0 // pred_check
    _
  $region3: #{encoder_2_forward.45} parent=0 // pred_check_branch
    %9 = sbr.rel (0) target = $region5
  $region4: #{encoder_2_forward.45} parent=0 // pred_region
    _
  $region5: #{encoder_2_forward.45} parent=0 // pred_fallthru
    _
  // Predicated region
  $region6: #{encoder_2_forward.45} parent=0 // pred_check
    _
  $region7: #{encoder_2_forward.45} parent=0 // pred_check_branch
    %11 = sbr.rel (0) target = $region9
  $region8: #{encoder_2_forward.45} parent=0 // pred_region
    _
  $region9: #{encoder_2_forward.45} parent=0 // pred_fallthru
    _
  // Predicated region
  $region10: #{encoder_2_forward.45} parent=0 // pred_check
    _
  $region11: #{encoder_2_forward.45} parent=0 // pred_check_branch
    %13 = sbr.rel (0) target = $region13
  $region12: #{encoder_2_forward.45} parent=0 // pred_region
    _
  $region13: #{encoder_2_forward.45} parent=0 // pred_fallthru
    _
  %p15 = scmp.eq.s32.totalorder 0, 0
  // Predicated region
  $region14: #{encoder_2_forward.45} parent=0 // pred_check
    %p16 = pneg %p15
  $region15: #{encoder_2_forward.45} parent=0 // pred_check_branch
    %18 = sbr.rel (%p16) target = $region17
  $region16: #{encoder_2_forward.45} parent=0 // pred_region
    %19 = vst [vmem:[#allocation2] sm:$0xff] 0.0
  $region17: #{encoder_2_forward.45} parent=0 // pred_fallthru
    _
  %v20 = vld [vmem:[#allocation2] sm:$0xff]
  %v21 = vld [vmem:[%s0] sm:$0xff]
  %v22 = vld [vmem:[%s0 + $0x8] sm:$0xf]
  %v23 = vld [vmem:[%s1] sm:$0xf]
  %v24 = vld [vmem:[%s1 + $0x4] sm:$0xf]
  %v25 = vld [vmem:[%s1 + $0x8] sm:$0xf]
  %v26 = vld [vmem:[%s1 + $0xc] sm:$0xf]
  %v27 = vld [vmem:[%s1 + $0x10] sm:$0xf]
  %v28 = vld [vmem:[%s1 + $0x14] sm:$0xf]
  %v29 = vld [vmem:[%s1 + $0x18] sm:$0xf]
  %v30 = vld [vmem:[%s1 + $0x1c] sm:$0xf]
  %v31 = vld [vmem:[%s1 + $0x20] sm:$0xf]
  %v32 = vld [vmem:[%s1 + $0x24] sm:$0xf]
  %v33 = vld [vmem:[%s1 + $0x28] sm:$0xf]
  %v34 = vld [vmem:[%s1 + $0x2c] sm:$0xf]
  %v35 = vld [vmem:[%s1 + $0x30] sm:$0xf]
  %v36 = vld [vmem:[%s1 + $0x34] sm:$0xf]
  %v37 = vld [vmem:[%s1 + $0x38] sm:$0xf]
  %v38 = vld [vmem:[%s1 + $0x3c] sm:$0xf]
  %v39 = vld [vmem:[%s1 + $0x40] sm:$0xf]
  %v40 = vld [vmem:[%s1 + $0x44] sm:$0xf]
  %v41 = vld [vmem:[%s1 + $0x48] sm:$0xf]
  %v42 = vld [vmem:[%s1 + $0x4c] sm:$0xf]
  %v43 = vld [vmem:[%s1 + $0x50] sm:$0xf]
  %v44 = vld [vmem:[%s1 + $0x54] sm:$0xf]
  %v45 = vld [vmem:[%s1 + $0x58] sm:$0xf]
  %v46 = vld [vmem:[%s1 + $0x5c] sm:$0xf]
  %v47 = vld [vmem:[%s1 + $0x60] sm:$0xf]
  %v48 = vld [vmem:[%s1 + $0x64] sm:$0xf]
  %v49 = vld [vmem:[%s1 + $0x68] sm:$0xf]
  %v50 = vld [vmem:[%s1 + $0x6c] sm:$0xf]
  %v51 = vld [vmem:[%s1 + $0x70] sm:$0xf]
  %v52 = vld [vmem:[%s1 + $0x74] sm:$0xf]
  %v53 = vld [vmem:[%s1 + $0x78] sm:$0xf]
  %v54 = vld [vmem:[%s1 + $0x7c] sm:$0xf]
  %v55 = vld [vmem:[%s1 + $0x80] sm:$0xf]
  %v56 = vld [vmem:[%s1 + $0x84] sm:$0xf]
  %v57 = vld [vmem:[%s1 + $0x88] sm:$0xf]
  %v58 = vld [vmem:[%s1 + $0x8c] sm:$0xf]
  %v59 = vld [vmem:[%s1 + $0x90] sm:$0xf]
  %v60 = vld [vmem:[%s1 + $0x94] sm:$0xf]
  %v61 = vld [vmem:[%s1 + $0x98] sm:$0xf]
  %v62 = vld [vmem:[%s1 + $0x9c] sm:$0xf]
  %v63 = vld [vmem:[%s1 + $0xa0] sm:$0xf]
  %v64 = vld [vmem:[%s1 + $0xa4] sm:$0xf]
  %v65 = vld [vmem:[%s1 + $0xa8] sm:$0xf]
  %v66 = vld [vmem:[%s1 + $0xac] sm:$0xf]
  %v67 = vld [vmem:[%s1 + $0xb0] sm:$0xf]
  %v68 = vld [vmem:[%s1 + $0xb4] sm:$0xf]
  %v69 = vld [vmem:[%s1 + $0xb8] sm:$0xf]
  %v70 = vld [vmem:[%s1 + $0xbc] sm:$0xf]
  %v73 = vunpack.c.l.b16 %v21
  %v74 = vunpack.c.h.b16 %v21
  %v75 = vunpack.c.l.b16 %v22
  %v76 = vpack.c.b16 %v73, %v73
  %v77 = vpack.c.b16 %v74, %v74
  %v78 = vpack.c.b16 %v75, %v75
  %v130 = vunpack.c.l.b16 %v23
  %v131 = vunpack.c.l.b16 %v24
  %v132 = vunpack.c.l.b16 %v25
  %v133 = vunpack.c.l.b16 %v26
  %v134 = vunpack.c.l.b16 %v27
  %v135 = vunpack.c.l.b16 %v28
  %v136 = vunpack.c.l.b16 %v29
  %v137 = vunpack.c.l.b16 %v30
  %v138 = vunpack.c.l.b16 %v31
  %v139 = vunpack.c.l.b16 %v32
  %v140 = vunpack.c.l.b16 %v33
  %v141 = vunpack.c.l.b16 %v34
  %v142 = vunpack.c.l.b16 %v35
  %v143 = vunpack.c.l.b16 %v36
  %v144 = vunpack.c.l.b16 %v37
  %v145 = vunpack.c.l.b16 %v38
  %v146 = vunpack.c.l.b16 %v39
  %v147 = vunpack.c.l.b16 %v40
  %v148 = vunpack.c.l.b16 %v41
  %v149 = vunpack.c.l.b16 %v42
  %v150 = vunpack.c.l.b16 %v43
  %v151 = vunpack.c.l.b16 %v44
  %v152 = vunpack.c.l.b16 %v45
  %v153 = vunpack.c.l.b16 %v46
  %v154 = vunpack.c.l.b16 %v47
  %v155 = vunpack.c.l.b16 %v48
  %v156 = vunpack.c.l.b16 %v49
  %v157 = vunpack.c.l.b16 %v50
  %v158 = vunpack.c.l.b16 %v51
  %v159 = vunpack.c.l.b16 %v52
  %v160 = vunpack.c.l.b16 %v53
  %v161 = vunpack.c.l.b16 %v54
  %v162 = vunpack.c.l.b16 %v55
  %v163 = vunpack.c.l.b16 %v56
  %v164 = vunpack.c.l.b16 %v57
  %v165 = vunpack.c.l.b16 %v58
  %v166 = vunpack.c.l.b16 %v59
  %v167 = vunpack.c.l.b16 %v60
  %v168 = vunpack.c.l.b16 %v61
  %v169 = vunpack.c.l.b16 %v62
  %v170 = vunpack.c.l.b16 %v63
  %v171 = vunpack.c.l.b16 %v64
  %v172 = vunpack.c.l.b16 %v65
  %v173 = vunpack.c.l.b16 %v66
  %v174 = vunpack.c.l.b16 %v67
  %v175 = vunpack.c.l.b16 %v68
  %v176 = vunpack.c.l.b16 %v69
  %v177 = vunpack.c.l.b16 %v70
  %v178 = vpack.c.b16 %v131, %v130
  %v179 = vpack.c.b16 %v133, %v132
  %v180 = vpack.c.b16 %v135, %v134
  %v181 = vpack.c.b16 %v137, %v136
  %v182 = vpack.c.b16 %v139, %v138
  %v183 = vpack.c.b16 %v141, %v140
  %v184 = vpack.c.b16 %v143, %v142
  %v185 = vpack.c.b16 %v145, %v144
  %v186 = vpack.c.b16 %v147, %v146
  %v187 = vpack.c.b16 %v149, %v148
  %v188 = vpack.c.b16 %v151, %v150
  %v189 = vpack.c.b16 %v153, %v152
  %v190 = vpack.c.b16 %v155, %v154
  %v191 = vpack.c.b16 %v157, %v156
  %v192 = vpack.c.b16 %v159, %v158
  %v193 = vpack.c.b16 %v161, %v160
  %v194 = vpack.c.b16 %v163, %v162
  %v195 = vpack.c.b16 %v165, %v164
  %v196 = vpack.c.b16 %v167, %v166
  %v197 = vpack.c.b16 %v169, %v168
  %v198 = vpack.c.b16 %v171, %v170
  %v199 = vpack.c.b16 %v173, %v172
  %v200 = vpack.c.b16 %v175, %v174
  %v201 = vpack.c.b16 %v177, %v176
  %226 = vmatprep.subr.bf16.mxu0 0
  %227 = vmatpush1.bf16.msra.mxu0 %v185
  %228 = vmatprep.subr.bf16.mxu0 0
  %229 = vmatpush1.bf16.msra.mxu0 %v184
  %230 = vmatprep.subr.bf16.mxu0 0
  %231 = vmatpush1.bf16.msra.mxu0 %v183
  %232 = vmatprep.subr.bf16.mxu0 0
  %233 = vmatpush1.bf16.msra.mxu0 %v182
  %234 = vmatprep.subr.bf16.mxu0 0
  %235 = vmatpush1.bf16.msra.mxu0 %v181
  %236 = vmatprep.subr.bf16.mxu0 0
  %237 = vmatpush1.bf16.msra.mxu0 %v180
  %238 = vmatprep.subr.bf16.mxu0 0
  %239 = vmatpush1.bf16.msra.mxu0 %v179
  %240 = vmatprep.subr.bf16.mxu0 0
  %241 = vmatpush1.bf16.msra.mxu0 %v178
  %242 = vmatprep.subr.bf16.mxu0 0
  %243 = vmatpush2.bf16.msra.mxu0 %v193
  %244 = vmatprep.subr.bf16.mxu0 0
  %245 = vmatpush2.bf16.msra.mxu0 %v192
  %246 = vmatprep.subr.bf16.mxu0 0
  %247 = vmatpush2.bf16.msra.mxu0 %v191
  %248 = vmatprep.subr.bf16.mxu0 0
  %249 = vmatpush2.bf16.msra.mxu0 %v190
  %250 = vmatprep.subr.bf16.mxu0 0
  %251 = vmatpush2.bf16.msra.mxu0 %v189
  %252 = vmatprep.subr.bf16.mxu0 0
  %253 = vmatpush2.bf16.msra.mxu0 %v188
  %254 = vmatprep.subr.bf16.mxu0 0
  %255 = vmatpush2.bf16.msra.mxu0 %v187
  %256 = vmatprep.subr.bf16.mxu0 0
  %257 = vmatpush2.bf16.msra.mxu0 %v186
  %258 = vmatprep.mubr.bf16.mxu0 %v77
  %259 = vmatmul.mubr.bf16.gmra.mxu0 %v76
  %v260 = vpop.f32.mrf.mxu0
  %v261 = vadd.f32 0.0, %v260
  %v262 = vpop.f32.mrf.mxu0
  %v263 = vpop.f32.mrf.mxu0
  %v264 = vpop.f32.mrf.mxu0
  %265 = vdwg.mxu0
  %266 = vmatprep.subr.bf16.mxu0 0
  %267 = vmatpush1.bf16.msra.mxu0 %v201
  %268 = vmatprep.subr.bf16.mxu0 0
  %269 = vmatpush1.bf16.msra.mxu0 %v200
  %270 = vmatprep.subr.bf16.mxu0 0
  %271 = vmatpush1.bf16.msra.mxu0 %v199
  %272 = vmatprep.subr.bf16.mxu0 0
  %273 = vmatpush1.bf16.msra.mxu0 %v198
  %274 = vmatprep.subr.bf16.mxu0 0
  %275 = vmatpush1.bf16.msra.mxu0 %v197
  %276 = vmatprep.subr.bf16.mxu0 0
  %277 = vmatpush1.bf16.msra.mxu0 %v196
  %278 = vmatprep.subr.bf16.mxu0 0
  %279 = vmatpush1.bf16.msra.mxu0 %v195
  %280 = vmatprep.subr.bf16.mxu0 0
  %281 = vmatpush1.bf16.msra.mxu0 %v194
  %282 = vmatprep.subr.bf16.mxu0 0
  %283 = vmatpush2.bf16.msra.mxu0 0
  %284 = vmatprep.subr.bf16.mxu0 0
  %285 = vmatpush2.bf16.msra.mxu0 0
  %286 = vmatprep.subr.bf16.mxu0 0
  %287 = vmatpush2.bf16.msra.mxu0 0
  %288 = vmatprep.subr.bf16.mxu0 0
  %289 = vmatpush2.bf16.msra.mxu0 0
  %290 = vmatprep.subr.bf16.mxu0 0
  %291 = vmatpush2.bf16.msra.mxu0 0
  %292 = vmatprep.subr.bf16.mxu0 0
  %293 = vmatpush2.bf16.msra.mxu0 0
  %294 = vmatprep.subr.bf16.mxu0 0
  %295 = vmatpush2.bf16.msra.mxu0 0
  %296 = vmatprep.subr.bf16.mxu0 0
  %297 = vmatpush2.bf16.msra.mxu0 0
  %298 = vmatprep.mubr.bf16.mxu0 0
  %299 = vmatmul.mubr.bf16.gmra.mxu0 %v78
  %v300 = vpop.f32.mrf.mxu0
  %v301 = vadd.f32 %v261, %v300
  %v302 = vpop.f32.mrf.mxu0
  %v303 = vpop.f32.mrf.mxu0
  %v304 = vpop.f32.mrf.mxu0
  %305 = vdwg.mxu0
  %v306 = vadd.f32 %v20, %v301
  %307 = vst [vmem:[#allocation2] sm:$0xff] %v306
  // Predicated region
  $region18: #{encoder_2_forward.45} parent=0 // pred_check
    %p308 = pneg %p15
  $region19: #{encoder_2_forward.45} parent=0 // pred_check_branch
    %310 = sbr.rel (%p308) target = $region21
  $region20: #{encoder_2_forward.45} parent=0 // pred_region
    %v311 = vld [vmem:[#allocation2] sm:$0xff]
    %v312 = vld [vmem:[%s2] sm:$0x1]
    %v314 = vlaneseq
    %v315 = vshrl.u32 %v314, 7
    %v316 = vsub.s32 0, %v315
    %v317 = vrot.slane %v312, %v316
    %v319 = vadd.f32 %v311, %v317
    %320 = vst [vmem:[%s3] sm:$0xff] %v319
  $region21: #{encoder_2_forward.45} parent=0 // pred_fallthru
    _
  // Predicated region
  $region22: #{encoder_2_forward.45} parent=0 // pred_check
    _
  $region23: #{encoder_2_forward.45} parent=0 // pred_check_branch
    %322 = sbr.rel (0) target = $region25
  $region24: #{encoder_2_forward.45} parent=0 // pred_region
    _
  $region25: #{encoder_2_forward.45} parent=0 // pred_fallthru
    _
  // Predicated region
  $region26: #{encoder_2_forward.45} parent=0 // pred_check
    _
  $region27: #{encoder_2_forward.45} parent=0 // pred_check_branch
    %324 = sbr.rel (0) target = $region29
  $region28: #{encoder_2_forward.45} parent=0 // pred_region
    _
  $region29: #{encoder_2_forward.45} parent=0 // pred_fallthru
    _

// kernel: encoder_2_forward.47
$region0: #{encoder_2_forward.47}
  #allocation0 [shape = 'u32[]', space=smem, size = 0x4, offset = 0x4, fixed_abs, tag = 'smem constant byte address 0x4 - core index']
  #allocation1 [shape = 'u32[144,128]{1,0:T(1,128)}', space=vmem, size = 0x12000, scoped, tag = 'internal scratch']
  %s0 = inlined_call_operand.vmem [shape: f32[2,8,64], index: 0, kind: input, shape index: {}]
  %s1 = inlined_call_operand.vmem [shape: f32[2,8,32], index: 1, kind: output, shape index: {}]
  %s2 = sld [smem:[#allocation0]]
  $region37: #{encoder_2_forward.47} parent=0
    _
  %s4 = ssub.s32 1, %s2
  %s5 = scalar_select 0, %s4, %s2
  loop: start=0, step=1, limit=4
  $region2: #{encoder_2_forward.47} parent=0 // loop_pre_header
    _
  $region3: #{encoder_2_forward.47} parent=0 // loop_header
    %s7 = sphi 0, %s11
    %p8 = scmp.ge.s32.totalorder %s7, 4
    %s17 = sphi 0, %s19
    %s20 = sphi 0, %s17
    %s21 = sphi 0, %s20
    %s37 = sphi 0, %s21
    %s43 = sphi 0, %s45
    %s46 = sphi 0, %s43
    %s47 = sphi 0, %s46
    %s63 = sphi 0, %s47
  $region4: #{encoder_2_forward.47} parent=0 // loop_header_branch
    %10 = sbr.rel (%p8) target = $region8
  $region5: #{encoder_2_forward.47} parent=0 // loop_body
    %s12 = ssub.s32 %s7, 1
    %s13 = ssub.s32 %s7, 2
    %s14 = sadd.s32 %s7, 1
    %s15 = ssub.s32 %s7, %s14
    %p16 = scmp.eq.s32.totalorder %s15, 0
    %s18 = sadd.s32 %s17, 1
    %s19 = scalar_select %p16, %s17, %s18
    %p22 = pneg %p16
    %p23 = scmp.eq.s32.totalorder %s7, 1
    %p24 = por %p22, %p23
    %p25 = scmp.ne.s32.totalorder %s17, %s20
    %p26 = scmp.eq.s32.totalorder %s7, 0
    %p27 = por %p25, %p26
    %p28 = scmp.ne.s32.totalorder %s17, %s20
    %p29 = scmp.eq.s32.totalorder %s12, 1
    %p30 = por %p28, %p29
    %p31 = scmp.ne.s32.totalorder %s20, %s21
    %p32 = scmp.eq.s32.totalorder %s12, 0
    %p33 = por %p31, %p32
    %p34 = scmp.ne.s32.totalorder %s20, %s21
    %p35 = scmp.eq.s32.totalorder %s13, 1
    %p36 = por %p34, %p35
    %p38 = scmp.ne.s32.totalorder %s21, %s37
    %p39 = scmp.eq.s32.totalorder %s13, 0
    %p40 = por %p38, %p39
    %s41 = ssub.s32 %s7, %s14
    %p42 = scmp.eq.s32.totalorder %s41, 0
    %s44 = sadd.s32 %s43, 1
    %s45 = scalar_select %p42, %s43, %s44
    %p48 = pneg %p42
    %p49 = scmp.eq.s32.totalorder %s7, 1
    %p50 = por %p48, %p49
    %p51 = scmp.ne.s32.totalorder %s43, %s46
    %p52 = scmp.eq.s32.totalorder %s7, 0
    %p53 = por %p51, %p52
    %p54 = scmp.ne.s32.totalorder %s43, %s46
    %p55 = scmp.eq.s32.totalorder %s12, 1
    %p56 = por %p54, %p55
    %p57 = scmp.ne.s32.totalorder %s46, %s47
    %p58 = scmp.eq.s32.totalorder %s12, 0
    %p59 = por %p57, %p58
    %p60 = scmp.ne.s32.totalorder %s46, %s47
    %p61 = scmp.eq.s32.totalorder %s13, 1
    %p62 = por %p60, %p61
    %p64 = scmp.ne.s32.totalorder %s47, %s63
    %p65 = scmp.eq.s32.totalorder %s13, 0
    %p66 = por %p64, %p65
    %p67 = scmp.le.s32.totalorder 1, %s7
    %p68 = scmp.lt.s32.totalorder %s7, 3
    %p69 = pnand %p67, %p68
    %p70 = pneg %p69
    // Predicated region
    $region9: #{encoder_2_forward.47} parent=5 // pred_check
      _
    $region10: #{encoder_2_forward.47} parent=5 // pred_check_branch
      %72 = sbr.rel (%p69) target = $region12
    $region11: #{encoder_2_forward.47} parent=5 // pred_region
      %s73 = ssub.s32 %s7, 1
    $region12: #{encoder_2_forward.47} parent=5 // pred_fallthru
      _
    %p74 = scmp.lt.s32.totalorder %s7, 2
    // Predicated region
    $region13: #{encoder_2_forward.47} parent=5 // pred_check
      %p75 = pneg %p74
    $region14: #{encoder_2_forward.47} parent=5 // pred_check_branch
      %77 = sbr.rel (%p75) target = $region16
    $region15: #{encoder_2_forward.47} parent=5 // pred_region
      // Predicated region
      $region17: #{encoder_2_forward.47} parent=15 // pred_check
        %p78 = pneg %p27
      $region18: #{encoder_2_forward.47} parent=15 // pred_check_branch
        %80 = sbr.rel (%p78) target = $region20
      $region19: #{encoder_2_forward.47} parent=15 // pred_region
        %p81 = scmp.lt.s32.totalorder %s7, 1
        %s82 = scalar_select %p81, %s7, 1
        %s83 = smul.addr %s82, 8
        %s84 = scalar_lea.vmem %s0, %s83
      $region20: #{encoder_2_forward.47} parent=15 // pred_fallthru
        _
    $region16: #{encoder_2_forward.47} parent=5 // pred_fallthru
      _
    %p85 = scmp.le.s32.totalorder 1, %s7
    %p86 = scmp.lt.s32.totalorder %s7, 3
    %p87 = pnand %p85, %p86
    %p88 = pneg %p87
    // Predicated region
    $region21: #{encoder_2_forward.47} parent=5 // pred_check
      _
    $region22: #{encoder_2_forward.47} parent=5 // pred_check_branch
      %90 = sbr.rel (%p87) target = $region24
    $region23: #{encoder_2_forward.47} parent=5 // pred_region
      %s91 = ssub.s32 %s7, 1
      %p92 = scmp.lt.s32.totalorder %s12, 1
      %s93 = scalar_select %p92, %s12, 1
      %s94 = smul.addr %s93, 8
      %s95 = scalar_lea.vmem %s0, %s94
      %p96 = pneg %p33
      %p97 = pneg %p30
      %p98 = pneg %p59
      %p99 = pneg %p56
      %p100 = scmp.lt.s32.totalorder %s12, 1
      %s101 = scalar_select %p100, %s12, 1
      %s102 = smul.addr %s101, 8
      %s103 = scalar_lea.vmem %s1, %s102
      %p104 = scmp.lt.s32.totalorder %s12, 1
      %s105 = scalar_select %p104, %s12, 1
      %s106 = smul.addr %s105, 8
      %s107 = scalar_lea.vmem %s0, %s106
      %p108 = scmp.lt.s32.totalorder %s12, 1
      %s109 = scalar_select %p108, %s12, 1
      %s110 = smul.addr %s109, 8
      %s111 = scalar_lea.vmem %s1, %s110
      %v112 = vld [vmem:[%s107] sm:$0xff]
      %vm113 = vcmp.ge.f32.partialorder %v112, 0.0
      %v114 = vmul.f32 %v112, 0.2
      %v115 = vsel %vm113, %v112, %v114
      %v116 = vxor.u32 %v112, 2147483648
      %v117 = vmul.f32 %v116, 1.442695
      %v118 = vpow.pop %v117
      %v119 = vadd.f32 %v118, 1.0
      %v120 = vrcp.pop %v119
      %v121 = vmul.f32 1.0, %v120
      %123 = vrot.lane.b32.xlu0 %v121, 96
      %v124 = vpop.permute.xlu0 %123
      %v126 = vmul.f32 %v115, %v124
      %vm127 = vcmask 261120
      %v128 = vsel %vm127, %v126, 0.0
      %v129 = vrot.slane %v128, 4
      %v130 = vadd.f32 %v128, %v129
      %v131 = vrot.slane %v130, 2
      %v132 = vadd.f32 %v130, %v131
      %v133 = vrot.slane %v132, 1
      %v134 = vadd.f32 %v132, %v133
      %v135 = vmul.f32 %v126, %v126
      %v136 = vsel %vm127, %v135, 0.0
      %v137 = vrot.slane %v136, 4
      %v138 = vadd.f32 %v136, %v137
      %v139 = vrot.slane %v138, 2
      %v140 = vadd.f32 %v138, %v139
      %v141 = vrot.slane %v140, 1
      %v142 = vadd.f32 %v140, %v141
      %v143 = vrcp.pop 4.0
      %v144 = vmul.f32 %v134, %v143
      %v145 = vmul.f32 %v142, %v143
      %v146 = vmul.f32 %v144, %v144
      %v147 = vsub.f32 %v145, %v146
      %v148 = vmax.f32 %v147, 0.0
      %v149 = vadd.f32 %v148, 1e-05
      %v150 = vrsqrt.pop %v149
      %v151 = vsub.f32 %v126, %v144
      %v152 = vmul.f32 %v151, %v150
      %153 = vst.msk [vmem:[%s111] sm:$0xff] %vm127, %v152
      %p154 = scmp.lt.s32.totalorder %s12, 1
      %s155 = scalar_select %p154, %s12, 1
      %s156 = smul.addr %s155, 8
      %s157 = scalar_lea.vmem %s1, %s156
      // Predicated region
      $region25: #{encoder_2_forward.47} parent=23 // pred_check
        %p158 = pneg %p56
      $region26: #{encoder_2_forward.47} parent=23 // pred_check_branch
        %160 = sbr.rel (%p158) target = $region28
      $region27: #{encoder_2_forward.47} parent=23 // pred_region
        _
      $region28: #{encoder_2_forward.47} parent=23 // pred_fallthru
        _
    $region24: #{encoder_2_forward.47} parent=5 // pred_fallthru
      _
    %p161 = scmp.le.s32.totalorder 2, %s7
    // Predicated region
    $region29: #{encoder_2_forward.47} parent=5 // pred_check
      %p162 = pneg %p161
    $region30: #{encoder_2_forward.47} parent=5 // pred_check_branch
      %164 = sbr.rel (%p162) target = $region32
    $region31: #{encoder_2_forward.47} parent=5 // pred_region
      %s165 = ssub.s32 %s7, 2
      // Predicated region
      $region33: #{encoder_2_forward.47} parent=31 // pred_check
        %p166 = pneg %p62
      $region34: #{encoder_2_forward.47} parent=31 // pred_check_branch
        %168 = sbr.rel (%p166) target = $region36
      $region35: #{encoder_2_forward.47} parent=31 // pred_region
        %p169 = scmp.lt.s32.totalorder %s13, 1
        %s170 = scalar_select %p169, %s13, 1
        %s171 = smul.addr %s170, 8
        %s172 = scalar_lea.vmem %s1, %s171
      $region36: #{encoder_2_forward.47} parent=31 // pred_fallthru
        _
    $region32: #{encoder_2_forward.47} parent=5 // pred_fallthru
      _
  $region6: #{encoder_2_forward.47} parent=0 // loop_footer
    %s11 = sadd.s32 1, %s7
  $region7: #{encoder_2_forward.47} parent=0 // loop_footer_branch
    %6 = sbr.rel target = $region3
  $region8: #{encoder_2_forward.47} parent=0 // loop_exit
    _

// kernel: tile.23
$region0: #{tile.23}
  #allocation0 [shape = 's32[1]{0}', space=sflag, size = 0x4, scoped, tag = 'scoped memory for tile.23']
  %s0 = inlined_call_operand.vmem [shape: f32[32], index: 0, kind: input, shape index: {}]
  %s1 = inlined_call_operand.vmem [shape: f32[4,32], index: 1, kind: output, shape index: {}]
  // Predicated region
  $region2: #{tile.23} parent=0 // pred_check
    _
  $region3: #{tile.23} parent=0 // pred_check_branch
    %3 = sbr.rel (0) target = $region5
  $region4: #{tile.23} parent=0 // pred_region
    _
  $region5: #{tile.23} parent=0 // pred_fallthru
    _
  %v4 = vld [vmem:[%s0] ss:$0 sm:$0xff]
  %5 = vst [vmem:[%s1] sm:$0xf] %v4

// kernel: encoder_2_forward.53
$region0: #{encoder_2_forward.53}
  #allocation0 [shape = 'u32[]', space=smem, size = 0x4, offset = 0x4, fixed_abs, tag = 'smem constant byte address 0x4 - core index']
  #allocation1 [shape = 'u32[144,128]{1,0:T(1,128)}', space=vmem, size = 0x12000, scoped, tag = 'internal scratch']
  #allocation2 [shape = 'f32[8,128]{1,0:T(8,128)}', space=vmem, size = 0x1000, scoped, tag = 'scratch operand']
  %s0 = inlined_call_operand.vmem [shape: bf16[8,128], index: 0, kind: input, shape index: {}]
  %s1 = inlined_call_operand.vmem [shape: bf16[128,128], index: 1, kind: input, shape index: {}]
  %s2 = inlined_call_operand.vmem [shape: f32[1,128], index: 2, kind: input, shape index: {}]
  %s3 = inlined_call_operand.vmem [shape: f32[8,128], index: 3, kind: output, shape index: {}]
  %s4 = sld [smem:[#allocation0]]
  $region30: #{encoder_2_forward.53} parent=0
    _
  %s6 = ssub.s32 1, %s4
  %s7 = scalar_select 0, %s6, %s4
  // Predicated region
  $region2: #{encoder_2_forward.53} parent=0 // pred_check
    _
  $region3: #{encoder_2_forward.53} parent=0 // pred_check_branch
    %9 = sbr.rel (0) target = $region5
  $region4: #{encoder_2_forward.53} parent=0 // pred_region
    _
  $region5: #{encoder_2_forward.53} parent=0 // pred_fallthru
    _
  // Predicated region
  $region6: #{encoder_2_forward.53} parent=0 // pred_check
    _
  $region7: #{encoder_2_forward.53} parent=0 // pred_check_branch
    %11 = sbr.rel (0) target = $region9
  $region8: #{encoder_2_forward.53} parent=0 // pred_region
    _
  $region9: #{encoder_2_forward.53} parent=0 // pred_fallthru
    _
  // Predicated region
  $region10: #{encoder_2_forward.53} parent=0 // pred_check
    _
  $region11: #{encoder_2_forward.53} parent=0 // pred_check_branch
    %13 = sbr.rel (0) target = $region13
  $region12: #{encoder_2_forward.53} parent=0 // pred_region
    _
  $region13: #{encoder_2_forward.53} parent=0 // pred_fallthru
    _
  %p15 = scmp.eq.s32.totalorder 0, 0
  // Predicated region
  $region14: #{encoder_2_forward.53} parent=0 // pred_check
    %p16 = pneg %p15
  $region15: #{encoder_2_forward.53} parent=0 // pred_check_branch
    %18 = sbr.rel (%p16) target = $region17
  $region16: #{encoder_2_forward.53} parent=0 // pred_region
    %19 = vst [vmem:[#allocation2] sm:$0xff] 0.0
  $region17: #{encoder_2_forward.53} parent=0 // pred_fallthru
    _
  %v20 = vld [vmem:[#allocation2] sm:$0xff]
  %v21 = vld [vmem:[%s0] sm:$0xf]
  %v22 = vld [vmem:[%s1] sm:$0xf]
  %v23 = vld [vmem:[%s1 + $0x4] sm:$0xf]
  %v24 = vld [vmem:[%s1 + $0x8] sm:$0xf]
  %v25 = vld [vmem:[%s1 + $0xc] sm:$0xf]
  %v26 = vld [vmem:[%s1 + $0x10] sm:$0xf]
  %v27 = vld [vmem:[%s1 + $0x14] sm:$0xf]
  %v28 = vld [vmem:[%s1 + $0x18] sm:$0xf]
  %v29 = vld [vmem:[%s1 + $0x1c] sm:$0xf]
  %v30 = vld [vmem:[%s1 + $0x20] sm:$0xf]
  %v31 = vld [vmem:[%s1 + $0x24] sm:$0xf]
  %v32 = vld [vmem:[%s1 + $0x28] sm:$0xf]
  %v33 = vld [vmem:[%s1 + $0x2c] sm:$0xf]
  %v34 = vld [vmem:[%s1 + $0x30] sm:$0xf]
  %v35 = vld [vmem:[%s1 + $0x34] sm:$0xf]
  %v36 = vld [vmem:[%s1 + $0x38] sm:$0xf]
  %v37 = vld [vmem:[%s1 + $0x3c] sm:$0xf]
  %v54 = vunpack.c.l.b16 %v22
  %v55 = vunpack.c.l.b16 %v23
  %v56 = vunpack.c.l.b16 %v24
  %v57 = vunpack.c.l.b16 %v25
  %v58 = vunpack.c.l.b16 %v26
  %v59 = vunpack.c.l.b16 %v27
  %v60 = vunpack.c.l.b16 %v28
  %v61 = vunpack.c.l.b16 %v29
  %v62 = vunpack.c.l.b16 %v30
  %v63 = vunpack.c.l.b16 %v31
  %v64 = vunpack.c.l.b16 %v32
  %v65 = vunpack.c.l.b16 %v33
  %v66 = vunpack.c.l.b16 %v34
  %v67 = vunpack.c.l.b16 %v35
  %v68 = vunpack.c.l.b16 %v36
  %v69 = vunpack.c.l.b16 %v37
  %v70 = vpack.c.b16 %v55, %v54
  %v71 = vpack.c.b16 %v57, %v56
  %v72 = vpack.c.b16 %v59, %v58
  %v73 = vpack.c.b16 %v61, %v60
  %v74 = vpack.c.b16 %v63, %v62
  %v75 = vpack.c.b16 %v65, %v64
  %v76 = vpack.c.b16 %v67, %v66
  %v77 = vpack.c.b16 %v69, %v68
  %86 = vmatprep.subr.bf16.mxu0 0
  %87 = vmatpush1.bf16.msra.mxu0 %v77
  %88 = vmatprep.subr.bf16.mxu0 0
  %89 = vmatpush1.bf16.msra.mxu0 %v76
  %90 = vmatprep.subr.bf16.mxu0 0
  %91 = vmatpush1.bf16.msra.mxu0 %v75
  %92 = vmatprep.subr.bf16.mxu0 0
  %93 = vmatpush1.bf16.msra.mxu0 %v74
  %94 = vmatprep.subr.bf16.mxu0 0
  %95 = vmatpush1.bf16.msra.mxu0 %v73
  %96 = vmatprep.subr.bf16.mxu0 0
  %97 = vmatpush1.bf16.msra.mxu0 %v72
  %98 = vmatprep.subr.bf16.mxu0 0
  %99 = vmatpush1.bf16.msra.mxu0 %v71
  %100 = vmatprep.subr.bf16.mxu0 0
  %101 = vmatpush1.bf16.msra.mxu0 %v70
  %102 = vmatprep.subr.bf16.mxu0 0
  %103 = vmatpush2.bf16.msra.mxu0 0
  %104 = vmatprep.subr.bf16.mxu0 0
  %105 = vmatpush2.bf16.msra.mxu0 0
  %106 = vmatprep.subr.bf16.mxu0 0
  %107 = vmatpush2.bf16.msra.mxu0 0
  %108 = vmatprep.subr.bf16.mxu0 0
  %109 = vmatpush2.bf16.msra.mxu0 0
  %110 = vmatprep.subr.bf16.mxu0 0
  %111 = vmatpush2.bf16.msra.mxu0 0
  %112 = vmatprep.subr.bf16.mxu0 0
  %113 = vmatpush2.bf16.msra.mxu0 0
  %114 = vmatprep.subr.bf16.mxu0 0
  %115 = vmatpush2.bf16.msra.mxu0 0
  %116 = vmatprep.subr.bf16.mxu0 0
  %117 = vmatpush2.bf16.msra.mxu0 0
  %118 = vmatprep.mubr.bf16.mxu0 0
  %119 = vmatmul.mubr.bf16.gmra.mxu0 %v21
  %v120 = vpop.f32.mrf.mxu0
  %v121 = vadd.f32 0.0, %v120
  %v122 = vpop.f32.mrf.mxu0
  %v123 = vpop.f32.mrf.mxu0
  %v124 = vpop.f32.mrf.mxu0
  %125 = vdwg.mxu0
  %v126 = vadd.f32 %v20, %v121
  %127 = vst [vmem:[#allocation2] sm:$0xff] %v126
  // Predicated region
  $region18: #{encoder_2_forward.53} parent=0 // pred_check
    %p128 = pneg %p15
  $region19: #{encoder_2_forward.53} parent=0 // pred_check_branch
    %130 = sbr.rel (%p128) target = $region21
  $region20: #{encoder_2_forward.53} parent=0 // pred_region
    %v131 = vld [vmem:[#allocation2] sm:$0xff]
    %v132 = vld [vmem:[%s2] sm:$0x1]
    %v134 = vlaneseq
    %v135 = vshrl.u32 %v134, 7
    %v136 = vsub.s32 0, %v135
    %v137 = vrot.slane %v132, %v136
    %v139 = vadd.f32 %v131, %v137
    %140 = vst [vmem:[%s3] sm:$0xff] %v139
  $region21: #{encoder_2_forward.53} parent=0 // pred_fallthru
    _
  // Predicated region
  $region22: #{encoder_2_forward.53} parent=0 // pred_check
    _
  $region23: #{encoder_2_forward.53} parent=0 // pred_check_branch
    %142 = sbr.rel (0) target = $region25
  $region24: #{encoder_2_forward.53} parent=0 // pred_region
    _
  $region25: #{encoder_2_forward.53} parent=0 // pred_fallthru
    _
  // Predicated region
  $region26: #{encoder_2_forward.53} parent=0 // pred_check
    _
  $region27: #{encoder_2_forward.53} parent=0 // pred_check_branch
    %144 = sbr.rel (0) target = $region29
  $region28: #{encoder_2_forward.53} parent=0 // pred_region
    _
  $region29: #{encoder_2_forward.53} parent=0 // pred_fallthru
    _

// kernel: encoder_2_forward.54
$region0: #{encoder_2_forward.54}
  #allocation0 [shape = 'u32[]', space=smem, size = 0x4, offset = 0x4, fixed_abs, tag = 'smem constant byte address 0x4 - core index']
  #allocation1 [shape = 'u32[144,128]{1,0:T(1,128)}', space=vmem, size = 0x12000, scoped, tag = 'internal scratch']
  #allocation2 [shape = 'f32[8,128]{1,0:T(8,128)}', space=vmem, size = 0x1000, scoped, tag = 'scratch operand']
  %s0 = inlined_call_operand.vmem [shape: bf16[8,128], index: 0, kind: input, shape index: {}]
  %s1 = inlined_call_operand.vmem [shape: bf16[128,128], index: 1, kind: input, shape index: {}]
  %s2 = inlined_call_operand.vmem [shape: f32[1,128], index: 2, kind: input, shape index: {}]
  %s3 = inlined_call_operand.vmem [shape: f32[8,128], index: 3, kind: input, shape index: {}]
  %s4 = inlined_call_operand.vmem [shape: f32[8,128], index: 4, kind: output, shape index: {}]
  %s5 = sld [smem:[#allocation0]]
  $region34: #{encoder_2_forward.54} parent=0
    _
  %s7 = ssub.s32 1, %s5
  %s8 = scalar_select 0, %s7, %s5
  // Predicated region
  $region2: #{encoder_2_forward.54} parent=0 // pred_check
    _
  $region3: #{encoder_2_forward.54} parent=0 // pred_check_branch
    %10 = sbr.rel (0) target = $region5
  $region4: #{encoder_2_forward.54} parent=0 // pred_region
    _
  $region5: #{encoder_2_forward.54} parent=0 // pred_fallthru
    _
  // Predicated region
  $region6: #{encoder_2_forward.54} parent=0 // pred_check
    _
  $region7: #{encoder_2_forward.54} parent=0 // pred_check_branch
    %12 = sbr.rel (0) target = $region9
  $region8: #{encoder_2_forward.54} parent=0 // pred_region
    _
  $region9: #{encoder_2_forward.54} parent=0 // pred_fallthru
    _
  // Predicated region
  $region10: #{encoder_2_forward.54} parent=0 // pred_check
    _
  $region11: #{encoder_2_forward.54} parent=0 // pred_check_branch
    %14 = sbr.rel (0) target = $region13
  $region12: #{encoder_2_forward.54} parent=0 // pred_region
    _
  $region13: #{encoder_2_forward.54} parent=0 // pred_fallthru
    _
  // Predicated region
  $region14: #{encoder_2_forward.54} parent=0 // pred_check
    _
  $region15: #{encoder_2_forward.54} parent=0 // pred_check_branch
    %16 = sbr.rel (0) target = $region17
  $region16: #{encoder_2_forward.54} parent=0 // pred_region
    _
  $region17: #{encoder_2_forward.54} parent=0 // pred_fallthru
    _
  %p18 = scmp.eq.s32.totalorder 0, 0
  // Predicated region
  $region18: #{encoder_2_forward.54} parent=0 // pred_check
    %p19 = pneg %p18
  $region19: #{encoder_2_forward.54} parent=0 // pred_check_branch
    %21 = sbr.rel (%p19) target = $region21
  $region20: #{encoder_2_forward.54} parent=0 // pred_region
    %22 = vst [vmem:[#allocation2] sm:$0xff] 0.0
  $region21: #{encoder_2_forward.54} parent=0 // pred_fallthru
    _
  %v23 = vld [vmem:[#allocation2] sm:$0xff]
  %v24 = vld [vmem:[%s0] sm:$0xf]
  %v25 = vld [vmem:[%s1] sm:$0xf]
  %v26 = vld [vmem:[%s1 + $0x4] sm:$0xf]
  %v27 = vld [vmem:[%s1 + $0x8] sm:$0xf]
  %v28 = vld [vmem:[%s1 + $0xc] sm:$0xf]
  %v29 = vld [vmem:[%s1 + $0x10] sm:$0xf]
  %v30 = vld [vmem:[%s1 + $0x14] sm:$0xf]
  %v31 = vld [vmem:[%s1 + $0x18] sm:$0xf]
  %v32 = vld [vmem:[%s1 + $0x1c] sm:$0xf]
  %v33 = vld [vmem:[%s1 + $0x20] sm:$0xf]
  %v34 = vld [vmem:[%s1 + $0x24] sm:$0xf]
  %v35 = vld [vmem:[%s1 + $0x28] sm:$0xf]
  %v36 = vld [vmem:[%s1 + $0x2c] sm:$0xf]
  %v37 = vld [vmem:[%s1 + $0x30] sm:$0xf]
  %v38 = vld [vmem:[%s1 + $0x34] sm:$0xf]
  %v39 = vld [vmem:[%s1 + $0x38] sm:$0xf]
  %v40 = vld [vmem:[%s1 + $0x3c] sm:$0xf]
  %v57 = vunpack.c.l.b16 %v25
  %v58 = vunpack.c.l.b16 %v26
  %v59 = vunpack.c.l.b16 %v27
  %v60 = vunpack.c.l.b16 %v28
  %v61 = vunpack.c.l.b16 %v29
  %v62 = vunpack.c.l.b16 %v30
  %v63 = vunpack.c.l.b16 %v31
  %v64 = vunpack.c.l.b16 %v32
  %v65 = vunpack.c.l.b16 %v33
  %v66 = vunpack.c.l.b16 %v34
  %v67 = vunpack.c.l.b16 %v35
  %v68 = vunpack.c.l.b16 %v36
  %v69 = vunpack.c.l.b16 %v37
  %v70 = vunpack.c.l.b16 %v38
  %v71 = vunpack.c.l.b16 %v39
  %v72 = vunpack.c.l.b16 %v40
  %v73 = vpack.c.b16 %v58, %v57
  %v74 = vpack.c.b16 %v60, %v59
  %v75 = vpack.c.b16 %v62, %v61
  %v76 = vpack.c.b16 %v64, %v63
  %v77 = vpack.c.b16 %v66, %v65
  %v78 = vpack.c.b16 %v68, %v67
  %v79 = vpack.c.b16 %v70, %v69
  %v80 = vpack.c.b16 %v72, %v71
  %89 = vmatprep.subr.bf16.mxu0 0
  %90 = vmatpush1.bf16.msra.mxu0 %v80
  %91 = vmatprep.subr.bf16.mxu0 0
  %92 = vmatpush1.bf16.msra.mxu0 %v79
  %93 = vmatprep.subr.bf16.mxu0 0
  %94 = vmatpush1.bf16.msra.mxu0 %v78
  %95 = vmatprep.subr.bf16.mxu0 0
  %96 = vmatpush1.bf16.msra.mxu0 %v77
  %97 = vmatprep.subr.bf16.mxu0 0
  %98 = vmatpush1.bf16.msra.mxu0 %v76
  %99 = vmatprep.subr.bf16.mxu0 0
  %100 = vmatpush1.bf16.msra.mxu0 %v75
  %101 = vmatprep.subr.bf16.mxu0 0
  %102 = vmatpush1.bf16.msra.mxu0 %v74
  %103 = vmatprep.subr.bf16.mxu0 0
  %104 = vmatpush1.bf16.msra.mxu0 %v73
  %105 = vmatprep.subr.bf16.mxu0 0
  %106 = vmatpush2.bf16.msra.mxu0 0
  %107 = vmatprep.subr.bf16.mxu0 0
  %108 = vmatpush2.bf16.msra.mxu0 0
  %109 = vmatprep.subr.bf16.mxu0 0
  %110 = vmatpush2.bf16.msra.mxu0 0
  %111 = vmatprep.subr.bf16.mxu0 0
  %112 = vmatpush2.bf16.msra.mxu0 0
  %113 = vmatprep.subr.bf16.mxu0 0
  %114 = vmatpush2.bf16.msra.mxu0 0
  %115 = vmatprep.subr.bf16.mxu0 0
  %116 = vmatpush2.bf16.msra.mxu0 0
  %117 = vmatprep.subr.bf16.mxu0 0
  %118 = vmatpush2.bf16.msra.mxu0 0
  %119 = vmatprep.subr.bf16.mxu0 0
  %120 = vmatpush2.bf16.msra.mxu0 0
  %121 = vmatprep.mubr.bf16.mxu0 0
  %122 = vmatmul.mubr.bf16.gmra.mxu0 %v24
  %v123 = vpop.f32.mrf.mxu0
  %v124 = vadd.f32 0.0, %v123
  %v125 = vpop.f32.mrf.mxu0
  %v126 = vpop.f32.mrf.mxu0
  %v127 = vpop.f32.mrf.mxu0
  %128 = vdwg.mxu0
  %v129 = vadd.f32 %v23, %v124
  %130 = vst [vmem:[#allocation2] sm:$0xff] %v129
  // Predicated region
  $region22: #{encoder_2_forward.54} parent=0 // pred_check
    %p131 = pneg %p18
  $region23: #{encoder_2_forward.54} parent=0 // pred_check_branch
    %133 = sbr.rel (%p131) target = $region25
  $region24: #{encoder_2_forward.54} parent=0 // pred_region
    %v134 = vld [vmem:[#allocation2] sm:$0xff]
    %v135 = vld [vmem:[%s2] sm:$0x1]
    %v137 = vlaneseq
    %v138 = vshrl.u32 %v137, 7
    %v139 = vsub.s32 0, %v138
    %v140 = vrot.slane %v135, %v139
    %v142 = vadd.f32 %v134, %v140
    %v143 = vld [vmem:[%s3] sm:$0xff]
    %v144 = vadd.f32 %v142, %v143
    %145 = vst [vmem:[%s4] sm:$0xff] %v144
  $region25: #{encoder_2_forward.54} parent=0 // pred_fallthru
    _
  // Predicated region
  $region26: #{encoder_2_forward.54} parent=0 // pred_check
    _
  $region27: #{encoder_2_forward.54} parent=0 // pred_check_branch
    %147 = sbr.rel (0) target = $region29
  $region28: #{encoder_2_forward.54} parent=0 // pred_region
    _
  $region29: #{encoder_2_forward.54} parent=0 // pred_fallthru
    _
  // Predicated region
  $region30: #{encoder_2_forward.54} parent=0 // pred_check
    _
  $region31: #{encoder_2_forward.54} parent=0 // pred_check_branch
    %149 = sbr.rel (0) target = $region33
  $region32: #{encoder_2_forward.54} parent=0 // pred_region
    _
  $region33: #{encoder_2_forward.54} parent=0 // pred_fallthru
    _

// kernel: encoder_2_forward.58
$region0: #{encoder_2_forward.58}
  #allocation0 [shape = 'u32[]', space=smem, size = 0x4, offset = 0x4, fixed_abs, tag = 'smem constant byte address 0x4 - core index']
  #allocation1 [shape = 'u32[144,128]{1,0:T(1,128)}', space=vmem, size = 0x12000, scoped, tag = 'internal scratch']
  #allocation2 [shape = 'f32[32,128]{1,0:T(8,128)}', space=vmem, size = 0x4000, scoped, tag = 'scratch operand']
  %s0 = inlined_call_operand.vmem [shape: bf16[32,128], index: 0, kind: input, shape index: {}]
  %s1 = inlined_call_operand.vmem [shape: bf16[128,128], index: 1, kind: input, shape index: {}]
  %s2 = inlined_call_operand.vmem [shape: f32[1,128], index: 2, kind: input, shape index: {}]
  %s3 = inlined_call_operand.vmem [shape: f32[32,128], index: 3, kind: output, shape index: {}]
  %s4 = sld [smem:[#allocation0]]
  $region30: #{encoder_2_forward.58} parent=0
    _
  %s6 = ssub.s32 1, %s4
  %s7 = scalar_select 0, %s6, %s4
  // Predicated region
  $region2: #{encoder_2_forward.58} parent=0 // pred_check
    _
  $region3: #{encoder_2_forward.58} parent=0 // pred_check_branch
    %9 = sbr.rel (0) target = $region5
  $region4: #{encoder_2_forward.58} parent=0 // pred_region
    _
  $region5: #{encoder_2_forward.58} parent=0 // pred_fallthru
    _
  // Predicated region
  $region6: #{encoder_2_forward.58} parent=0 // pred_check
    _
  $region7: #{encoder_2_forward.58} parent=0 // pred_check_branch
    %11 = sbr.rel (0) target = $region9
  $region8: #{encoder_2_forward.58} parent=0 // pred_region
    _
  $region9: #{encoder_2_forward.58} parent=0 // pred_fallthru
    _
  // Predicated region
  $region10: #{encoder_2_forward.58} parent=0 // pred_check
    _
  $region11: #{encoder_2_forward.58} parent=0 // pred_check_branch
    %13 = sbr.rel (0) target = $region13
  $region12: #{encoder_2_forward.58} parent=0 // pred_region
    _
  $region13: #{encoder_2_forward.58} parent=0 // pred_fallthru
    _
  %p15 = scmp.eq.s32.totalorder 0, 0
  // Predicated region
  $region14: #{encoder_2_forward.58} parent=0 // pred_check
    %p16 = pneg %p15
  $region15: #{encoder_2_forward.58} parent=0 // pred_check_branch
    %18 = sbr.rel (%p16) target = $region17
  $region16: #{encoder_2_forward.58} parent=0 // pred_region
    %19 = vst [vmem:[#allocation2] sm:$0xff] 0.0
    %20 = vst [vmem:[#allocation2 + $0x8] sm:$0xff] 0.0
    %21 = vst [vmem:[#allocation2 + $0x10] sm:$0xff] 0.0
    %22 = vst [vmem:[#allocation2 + $0x18] sm:$0xff] 0.0
  $region17: #{encoder_2_forward.58} parent=0 // pred_fallthru
    _
  %v23 = vld [vmem:[#allocation2] sm:$0xff]
  %v24 = vld [vmem:[#allocation2 + $0x8] sm:$0xff]
  %v25 = vld [vmem:[#allocation2 + $0x10] sm:$0xff]
  %v26 = vld [vmem:[#allocation2 + $0x18] sm:$0xff]
  %v27 = vld [vmem:[%s0] sm:$0xf]
  %v28 = vld [vmem:[%s0 + $0x4] sm:$0xf]
  %v29 = vld [vmem:[%s0 + $0x8] sm:$0xf]
  %v30 = vld [vmem:[%s0 + $0xc] sm:$0xf]
  %v31 = vld [vmem:[%s1] sm:$0xf]
  %v32 = vld [vmem:[%s1 + $0x4] sm:$0xf]
  %v33 = vld [vmem:[%s1 + $0x8] sm:$0xf]
  %v34 = vld [vmem:[%s1 + $0xc] sm:$0xf]
  %v35 = vld [vmem:[%s1 + $0x10] sm:$0xf]
  %v36 = vld [vmem:[%s1 + $0x14] sm:$0xf]
  %v37 = vld [vmem:[%s1 + $0x18] sm:$0xf]
  %v38 = vld [vmem:[%s1 + $0x1c] sm:$0xf]
  %v39 = vld [vmem:[%s1 + $0x20] sm:$0xf]
  %v40 = vld [vmem:[%s1 + $0x24] sm:$0xf]
  %v41 = vld [vmem:[%s1 + $0x28] sm:$0xf]
  %v42 = vld [vmem:[%s1 + $0x2c] sm:$0xf]
  %v43 = vld [vmem:[%s1 + $0x30] sm:$0xf]
  %v44 = vld [vmem:[%s1 + $0x34] sm:$0xf]
  %v45 = vld [vmem:[%s1 + $0x38] sm:$0xf]
  %v46 = vld [vmem:[%s1 + $0x3c] sm:$0xf]
  %v51 = vunpack.c.l.b16 %v27
  %v52 = vunpack.c.l.b16 %v28
  %v53 = vunpack.c.l.b16 %v29
  %v54 = vunpack.c.l.b16 %v30
  %v55 = vpack.c.b16 %v52, %v51
  %v56 = vpack.c.b16 %v54, %v53
  %v75 = vunpack.c.l.b16 %v31
  %v76 = vunpack.c.l.b16 %v32
  %v77 = vunpack.c.l.b16 %v33
  %v78 = vunpack.c.l.b16 %v34
  %v79 = vunpack.c.l.b16 %v35
  %v80 = vunpack.c.l.b16 %v36
  %v81 = vunpack.c.l.b16 %v37
  %v82 = vunpack.c.l.b16 %v38
  %v83 = vunpack.c.l.b16 %v39
  %v84 = vunpack.c.l.b16 %v40
  %v85 = vunpack.c.l.b16 %v41
  %v86 = vunpack.c.l.b16 %v42
  %v87 = vunpack.c.l.b16 %v43
  %v88 = vunpack.c.l.b16 %v44
  %v89 = vunpack.c.l.b16 %v45
  %v90 = vunpack.c.l.b16 %v46
  %v91 = vpack.c.b16 %v76, %v75
  %v92 = vpack.c.b16 %v78, %v77
  %v93 = vpack.c.b16 %v80, %v79
  %v94 = vpack.c.b16 %v82, %v81
  %v95 = vpack.c.b16 %v84, %v83
  %v96 = vpack.c.b16 %v86, %v85
  %v97 = vpack.c.b16 %v88, %v87
  %v98 = vpack.c.b16 %v90, %v89
  %107 = vmatprep.subr.bf16.mxu0 0
  %108 = vmatpush1.bf16.msra.mxu0 %v98
  %109 = vmatprep.subr.bf16.mxu0 0
  %110 = vmatpush1.bf16.msra.mxu0 %v97
  %111 = vmatprep.subr.bf16.mxu0 0
  %112 = vmatpush1.bf16.msra.mxu0 %v96
  %113 = vmatprep.subr.bf16.mxu0 0
  %114 = vmatpush1.bf16.msra.mxu0 %v95
  %115 = vmatprep.subr.bf16.mxu0 0
  %116 = vmatpush1.bf16.msra.mxu0 %v94
  %117 = vmatprep.subr.bf16.mxu0 0
  %118 = vmatpush1.bf16.msra.mxu0 %v93
  %119 = vmatprep.subr.bf16.mxu0 0
  %120 = vmatpush1.bf16.msra.mxu0 %v92
  %121 = vmatprep.subr.bf16.mxu0 0
  %122 = vmatpush1.bf16.msra.mxu0 %v91
  %123 = vmatprep.subr.bf16.mxu0 0
  %124 = vmatpush2.bf16.msra.mxu0 0
  %125 = vmatprep.subr.bf16.mxu0 0
  %126 = vmatpush2.bf16.msra.mxu0 0
  %127 = vmatprep.subr.bf16.mxu0 0
  %128 = vmatpush2.bf16.msra.mxu0 0
  %129 = vmatprep.subr.bf16.mxu0 0
  %130 = vmatpush2.bf16.msra.mxu0 0
  %131 = vmatprep.subr.bf16.mxu0 0
  %132 = vmatpush2.bf16.msra.mxu0 0
  %133 = vmatprep.subr.bf16.mxu0 0
  %134 = vmatpush2.bf16.msra.mxu0 0
  %135 = vmatprep.subr.bf16.mxu0 0
  %136 = vmatpush2.bf16.msra.mxu0 0
  %137 = vmatprep.subr.bf16.mxu0 0
  %138 = vmatpush2.bf16.msra.mxu0 0
  %139 = vmatprep.mubr.bf16.mxu0 0
  %140 = vmatmul.mubr.bf16.gmra.mxu0 %v55
  %v141 = vpop.f32.mrf.mxu0
  %v142 = vadd.f32 0.0, %v141
  %v143 = vpop.f32.mrf.mxu0
  %v144 = vpop.f32.mrf.mxu0
  %v145 = vadd.f32 0.0, %v144
  %v146 = vpop.f32.mrf.mxu0
  %147 = vmatprep.mubr.bf16.mxu0 0
  %148 = vmatmul.mubr.bf16.gmra.mxu0 %v56
  %v149 = vpop.f32.mrf.mxu0
  %v150 = vadd.f32 0.0, %v149
  %v151 = vpop.f32.mrf.mxu0
  %v152 = vpop.f32.mrf.mxu0
  %v153 = vadd.f32 0.0, %v152
  %v154 = vpop.f32.mrf.mxu0
  %155 = vdwg.mxu0
  %v156 = vadd.f32 %v23, %v142
  %v157 = vadd.f32 %v24, %v145
  %v158 = vadd.f32 %v25, %v150
  %v159 = vadd.f32 %v26, %v153
  %160 = vst [vmem:[#allocation2] sm:$0xff] %v156
  %161 = vst [vmem:[#allocation2 + $0x8] sm:$0xff] %v157
  %162 = vst [vmem:[#allocation2 + $0x10] sm:$0xff] %v158
  %163 = vst [vmem:[#allocation2 + $0x18] sm:$0xff] %v159
  // Predicated region
  $region18: #{encoder_2_forward.58} parent=0 // pred_check
    %p164 = pneg %p15
  $region19: #{encoder_2_forward.58} parent=0 // pred_check_branch
    %166 = sbr.rel (%p164) target = $region21
  $region20: #{encoder_2_forward.58} parent=0 // pred_region
    %v167 = vld [vmem:[#allocation2] sm:$0xff]
    %v168 = vld [vmem:[#allocation2 + $0x8] sm:$0xff]
    %v169 = vld [vmem:[#allocation2 + $0x10] sm:$0xff]
    %v170 = vld [vmem:[#allocation2 + $0x18] sm:$0xff]
    %v171 = vld [vmem:[%s2] sm:$0x1]
    %v173 = vlaneseq
    %v174 = vshrl.u32 %v173, 7
    %v175 = vsub.s32 0, %v174
    %v176 = vrot.slane %v171, %v175
    %v178 = vadd.f32 %v167, %v176
    %v179 = vadd.f32 %v168, %v176
    %v180 = vadd.f32 %v169, %v176
    %v181 = vadd.f32 %v170, %v176
    %182 = vst [vmem:[%s3] sm:$0xff] %v178
    %183 = vst [vmem:[%s3 + $0x8] sm:$0xff] %v179
    %184 = vst [vmem:[%s3 + $0x10] sm:$0xff] %v180
    %185 = vst [vmem:[%s3 + $0x18] sm:$0xff] %v181
  $region21: #{encoder_2_forward.58} parent=0 // pred_fallthru
    _
  // Predicated region
  $region22: #{encoder_2_forward.58} parent=0 // pred_check
    _
  $region23: #{encoder_2_forward.58} parent=0 // pred_check_branch
    %187 = sbr.rel (0) target = $region25
  $region24: #{encoder_2_forward.58} parent=0 // pred_region
    _
  $region25: #{encoder_2_forward.58} parent=0 // pred_fallthru
    _
  // Predicated region
  $region26: #{encoder_2_forward.58} parent=0 // pred_check
    _
  $region27: #{encoder_2_forward.58} parent=0 // pred_check_branch
    %189 = sbr.rel (0) target = $region29
  $region28: #{encoder_2_forward.58} parent=0 // pred_region
    _
  $region29: #{encoder_2_forward.58} parent=0 // pred_fallthru
    _

// kernel: encoder_2_forward.59
$region0: #{encoder_2_forward.59}
  #allocation0 [shape = 'u32[]', space=smem, size = 0x4, offset = 0x4, fixed_abs, tag = 'smem constant byte address 0x4 - core index']
  #allocation1 [shape = 'u32[144,128]{1,0:T(1,128)}', space=vmem, size = 0x12000, scoped, tag = 'internal scratch']
  #allocation2 [shape = 'f32[32,128]{1,0:T(8,128)}', space=vmem, size = 0x4000, scoped, tag = 'scratch operand']
  %s0 = inlined_call_operand.vmem [shape: bf16[32,128], index: 0, kind: input, shape index: {}]
  %s1 = inlined_call_operand.vmem [shape: bf16[128,128], index: 1, kind: input, shape index: {}]
  %s2 = inlined_call_operand.vmem [shape: f32[1,128], index: 2, kind: input, shape index: {}]
  %s3 = inlined_call_operand.vmem [shape: f32[32,128], index: 3, kind: input, shape index: {}]
  %s4 = inlined_call_operand.vmem [shape: f32[32,128], index: 4, kind: output, shape index: {}]
  %s5 = sld [smem:[#allocation0]]
  $region34: #{encoder_2_forward.59} parent=0
    _
  %s7 = ssub.s32 1, %s5
  %s8 = scalar_select 0, %s7, %s5
  // Predicated region
  $region2: #{encoder_2_forward.59} parent=0 // pred_check
    _
  $region3: #{encoder_2_forward.59} parent=0 // pred_check_branch
    %10 = sbr.rel (0) target = $region5
  $region4: #{encoder_2_forward.59} parent=0 // pred_region
    _
  $region5: #{encoder_2_forward.59} parent=0 // pred_fallthru
    _
  // Predicated region
  $region6: #{encoder_2_forward.59} parent=0 // pred_check
    _
  $region7: #{encoder_2_forward.59} parent=0 // pred_check_branch
    %12 = sbr.rel (0) target = $region9
  $region8: #{encoder_2_forward.59} parent=0 // pred_region
    _
  $region9: #{encoder_2_forward.59} parent=0 // pred_fallthru
    _
  // Predicated region
  $region10: #{encoder_2_forward.59} parent=0 // pred_check
    _
  $region11: #{encoder_2_forward.59} parent=0 // pred_check_branch
    %14 = sbr.rel (0) target = $region13
  $region12: #{encoder_2_forward.59} parent=0 // pred_region
    _
  $region13: #{encoder_2_forward.59} parent=0 // pred_fallthru
    _
  // Predicated region
  $region14: #{encoder_2_forward.59} parent=0 // pred_check
    _
  $region15: #{encoder_2_forward.59} parent=0 // pred_check_branch
    %16 = sbr.rel (0) target = $region17
  $region16: #{encoder_2_forward.59} parent=0 // pred_region
    _
  $region17: #{encoder_2_forward.59} parent=0 // pred_fallthru
    _
  %p18 = scmp.eq.s32.totalorder 0, 0
  // Predicated region
  $region18: #{encoder_2_forward.59} parent=0 // pred_check
    %p19 = pneg %p18
  $region19: #{encoder_2_forward.59} parent=0 // pred_check_branch
    %21 = sbr.rel (%p19) target = $region21
  $region20: #{encoder_2_forward.59} parent=0 // pred_region
    %22 = vst [vmem:[#allocation2] sm:$0xff] 0.0
    %23 = vst [vmem:[#allocation2 + $0x8] sm:$0xff] 0.0
    %24 = vst [vmem:[#allocation2 + $0x10] sm:$0xff] 0.0
    %25 = vst [vmem:[#allocation2 + $0x18] sm:$0xff] 0.0
  $region21: #{encoder_2_forward.59} parent=0 // pred_fallthru
    _
  %v26 = vld [vmem:[#allocation2] sm:$0xff]
  %v27 = vld [vmem:[#allocation2 + $0x8] sm:$0xff]
  %v28 = vld [vmem:[#allocation2 + $0x10] sm:$0xff]
  %v29 = vld [vmem:[#allocation2 + $0x18] sm:$0xff]
  %v30 = vld [vmem:[%s0] sm:$0xf]
  %v31 = vld [vmem:[%s0 + $0x4] sm:$0xf]
  %v32 = vld [vmem:[%s0 + $0x8] sm:$0xf]
  %v33 = vld [vmem:[%s0 + $0xc] sm:$0xf]
  %v34 = vld [vmem:[%s1] sm:$0xf]
  %v35 = vld [vmem:[%s1 + $0x4] sm:$0xf]
  %v36 = vld [vmem:[%s1 + $0x8] sm:$0xf]
  %v37 = vld [vmem:[%s1 + $0xc] sm:$0xf]
  %v38 = vld [vmem:[%s1 + $0x10] sm:$0xf]
  %v39 = vld [vmem:[%s1 + $0x14] sm:$0xf]
  %v40 = vld [vmem:[%s1 + $0x18] sm:$0xf]
  %v41 = vld [vmem:[%s1 + $0x1c] sm:$0xf]
  %v42 = vld [vmem:[%s1 + $0x20] sm:$0xf]
  %v43 = vld [vmem:[%s1 + $0x24] sm:$0xf]
  %v44 = vld [vmem:[%s1 + $0x28] sm:$0xf]
  %v45 = vld [vmem:[%s1 + $0x2c] sm:$0xf]
  %v46 = vld [vmem:[%s1 + $0x30] sm:$0xf]
  %v47 = vld [vmem:[%s1 + $0x34] sm:$0xf]
  %v48 = vld [vmem:[%s1 + $0x38] sm:$0xf]
  %v49 = vld [vmem:[%s1 + $0x3c] sm:$0xf]
  %v54 = vunpack.c.l.b16 %v30
  %v55 = vunpack.c.l.b16 %v31
  %v56 = vunpack.c.l.b16 %v32
  %v57 = vunpack.c.l.b16 %v33
  %v58 = vpack.c.b16 %v55, %v54
  %v59 = vpack.c.b16 %v57, %v56
  %v78 = vunpack.c.l.b16 %v34
  %v79 = vunpack.c.l.b16 %v35
  %v80 = vunpack.c.l.b16 %v36
  %v81 = vunpack.c.l.b16 %v37
  %v82 = vunpack.c.l.b16 %v38
  %v83 = vunpack.c.l.b16 %v39
  %v84 = vunpack.c.l.b16 %v40
  %v85 = vunpack.c.l.b16 %v41
  %v86 = vunpack.c.l.b16 %v42
  %v87 = vunpack.c.l.b16 %v43
  %v88 = vunpack.c.l.b16 %v44
  %v89 = vunpack.c.l.b16 %v45
  %v90 = vunpack.c.l.b16 %v46
  %v91 = vunpack.c.l.b16 %v47
  %v92 = vunpack.c.l.b16 %v48
  %v93 = vunpack.c.l.b16 %v49
  %v94 = vpack.c.b16 %v79, %v78
  %v95 = vpack.c.b16 %v81, %v80
  %v96 = vpack.c.b16 %v83, %v82
  %v97 = vpack.c.b16 %v85, %v84
  %v98 = vpack.c.b16 %v87, %v86
  %v99 = vpack.c.b16 %v89, %v88
  %v100 = vpack.c.b16 %v91, %v90
  %v101 = vpack.c.b16 %v93, %v92
  %110 = vmatprep.subr.bf16.mxu0 0
  %111 = vmatpush1.bf16.msra.mxu0 %v101
  %112 = vmatprep.subr.bf16.mxu0 0
  %113 = vmatpush1.bf16.msra.mxu0 %v100
  %114 = vmatprep.subr.bf16.mxu0 0
  %115 = vmatpush1.bf16.msra.mxu0 %v99
  %116 = vmatprep.subr.bf16.mxu0 0
  %117 = vmatpush1.bf16.msra.mxu0 %v98
  %118 = vmatprep.subr.bf16.mxu0 0
  %119 = vmatpush1.bf16.msra.mxu0 %v97
  %120 = vmatprep.subr.bf16.mxu0 0
  %121 = vmatpush1.bf16.msra.mxu0 %v96
  %122 = vmatprep.subr.bf16.mxu0 0
  %123 = vmatpush1.bf16.msra.mxu0 %v95
  %124 = vmatprep.subr.bf16.mxu0 0
  %125 = vmatpush1.bf16.msra.mxu0 %v94
  %126 = vmatprep.subr.bf16.mxu0 0
  %127 = vmatpush2.bf16.msra.mxu0 0
  %128 = vmatprep.subr.bf16.mxu0 0
  %129 = vmatpush2.bf16.msra.mxu0 0
  %130 = vmatprep.subr.bf16.mxu0 0
  %131 = vmatpush2.bf16.msra.mxu0 0
  %132 = vmatprep.subr.bf16.mxu0 0
  %133 = vmatpush2.bf16.msra.mxu0 0
  %134 = vmatprep.subr.bf16.mxu0 0
  %135 = vmatpush2.bf16.msra.mxu0 0
  %136 = vmatprep.subr.bf16.mxu0 0
  %137 = vmatpush2.bf16.msra.mxu0 0
  %138 = vmatprep.subr.bf16.mxu0 0
  %139 = vmatpush2.bf16.msra.mxu0 0
  %140 = vmatprep.subr.bf16.mxu0 0
  %141 = vmatpush2.bf16.msra.mxu0 0
  %142 = vmatprep.mubr.bf16.mxu0 0
  %143 = vmatmul.mubr.bf16.gmra.mxu0 %v58
  %v144 = vpop.f32.mrf.mxu0
  %v145 = vadd.f32 0.0, %v144
  %v146 = vpop.f32.mrf.mxu0
  %v147 = vpop.f32.mrf.mxu0
  %v148 = vadd.f32 0.0, %v147
  %v149 = vpop.f32.mrf.mxu0
  %150 = vmatprep.mubr.bf16.mxu0 0
  %151 = vmatmul.mubr.bf16.gmra.mxu0 %v59
  %v152 = vpop.f32.mrf.mxu0
  %v153 = vadd.f32 0.0, %v152
  %v154 = vpop.f32.mrf.mxu0
  %v155 = vpop.f32.mrf.mxu0
  %v156 = vadd.f32 0.0, %v155
  %v157 = vpop.f32.mrf.mxu0
  %158 = vdwg.mxu0
  %v159 = vadd.f32 %v26, %v145
  %v160 = vadd.f32 %v27, %v148
  %v161 = vadd.f32 %v28, %v153
  %v162 = vadd.f32 %v29, %v156
  %163 = vst [vmem:[#allocation2] sm:$0xff] %v159
  %164 = vst [vmem:[#allocation2 + $0x8] sm:$0xff] %v160
  %165 = vst [vmem:[#allocation2 + $0x10] sm:$0xff] %v161
  %166 = vst [vmem:[#allocation2 + $0x18] sm:$0xff] %v162
  // Predicated region
  $region22: #{encoder_2_forward.59} parent=0 // pred_check
    %p167 = pneg %p18
  $region23: #{encoder_2_forward.59} parent=0 // pred_check_branch
    %169 = sbr.rel (%p167) target = $region25
  $region24: #{encoder_2_forward.59} parent=0 // pred_region
    %v170 = vld [vmem:[#allocation2] sm:$0xff]
    %v171 = vld [vmem:[#allocation2 + $0x8] sm:$0xff]
    %v172 = vld [vmem:[#allocation2 + $0x10] sm:$0xff]
    %v173 = vld [vmem:[#allocation2 + $0x18] sm:$0xff]
    %v174 = vld [vmem:[%s2] sm:$0x1]
    %v176 = vlaneseq
    %v177 = vshrl.u32 %v176, 7
    %v178 = vsub.s32 0, %v177
    %v179 = vrot.slane %v174, %v178
    %v181 = vadd.f32 %v170, %v179
    %v182 = vadd.f32 %v171, %v179
    %v183 = vadd.f32 %v172, %v179
    %v184 = vadd.f32 %v173, %v179
    %v185 = vld [vmem:[%s3] sm:$0xff]
    %v186 = vld [vmem:[%s3 + $0x8] sm:$0xff]
    %v187 = vld [vmem:[%s3 + $0x10] sm:$0xff]
    %v188 = vld [vmem:[%s3 + $0x18] sm:$0xff]
    %v189 = vadd.f32 %v181, %v185
    %v190 = vadd.f32 %v182, %v186
    %v191 = vadd.f32 %v183, %v187
    %v192 = vadd.f32 %v184, %v188
    %193 = vst [vmem:[%s4] sm:$0xff] %v189
    %194 = vst [vmem:[%s4 + $0x8] sm:$0xff] %v190
    %195 = vst [vmem:[%s4 + $0x10] sm:$0xff] %v191
    %196 = vst [vmem:[%s4 + $0x18] sm:$0xff] %v192
  $region25: #{encoder_2_forward.59} parent=0 // pred_fallthru
    _
  // Predicated region
  $region26: #{encoder_2_forward.59} parent=0 // pred_check
    _
  $region27: #{encoder_2_forward.59} parent=0 // pred_check_branch
    %198 = sbr.rel (0) target = $region29
  $region28: #{encoder_2_forward.59} parent=0 // pred_region
    _
  $region29: #{encoder_2_forward.59} parent=0 // pred_fallthru
    _
  // Predicated region
  $region30: #{encoder_2_forward.59} parent=0 // pred_check
    _
  $region31: #{encoder_2_forward.59} parent=0 // pred_check_branch
    %200 = sbr.rel (0) target = $region33
  $region32: #{encoder_2_forward.59} parent=0 // pred_region
    _
  $region33: #{encoder_2_forward.59} parent=0 // pred_fallthru
    _

</llo_original>
